<compile_context>
chip_gen: v7x
topology: tpu7x:2x2x1
jax: 0.10.0
libtpu: 0.0.40
codegen_flags: <defaults>
</compile_context>

<pallas_src>
import functools
import math

import jax
import jax.numpy as jnp
from jax import lax
from jax.experimental import pallas as pl
from jax.experimental.pallas import tpu as pltpu


# ------------------------------ small helpers --------------------------------
def _round_up(x, m):
    return ((x + m - 1) // m) * m


_GATE_ORDER = (0, 1, 3, 2)  # PyTorch (i, f, g, o) -> kernel (i, f, o, g)


def _gate_pad_cols(w_t, H, H_pad):
    """(D_in, 4H) [i,f,g,o] -> (D_in, 4*H_pad) [i,f,o,g], zero-padded per gate."""
    d_in = w_t.shape[0]
    w = w_t.reshape(d_in, 4, H)
    w = jnp.take(w, jnp.array(_GATE_ORDER), axis=1)
    w = jnp.pad(w, ((0, 0), (0, 0), (0, H_pad - H)))
    return w.reshape(d_in, 4 * H_pad)


def _gate_pad_bias(b, H, H_pad):
    """(4H,) [i,f,g,o] -> (4*H_pad,) [i,f,o,g], zero-padded per gate."""
    b = jnp.take(b.reshape(4, H), jnp.array(_GATE_ORDER), axis=0)
    return jnp.pad(b, ((0, 0), (0, H_pad - H))).reshape(4 * H_pad)


# ------------------------- fused LSTM-stack + FC kernel ------------------------
def _fused_lstm_fc_kernel(*refs, num_layers, hidden_pad, tb, bb, seq_len, ragged):
    """Grid = (batch_blocks [parallel], time_chunks [arbitrary]).

    refs (inputs): x (Tb,Bb,D_pad) bf16, wih0 (D_pad,4Hp) bf16, b0 (1,4Hp) f32,
                   whh0 (Hp,4Hp) bf16, [wcat (L-1,2Hp,4Hp) bf16,
                   brest (L-1,1,4Hp) f32,] wfc (Hp,Cp) bf16, bfc (1,Cp) f32
    refs (output): out (Bb,Cp) f32 (written only at the last time chunk)
    refs (scratch): xp_sc (Tb,Bb,4Hp) f32  in-kernel layer-0 projection
                    cat_sc (max(L-1,1),Bb,2Hp) bf16  [h_below | h_self] per layer
                    c_sc (L,Bb,Hp) f32  cell states
    """
    if num_layers > 1:
        (x_ref, wih0_ref, b0_ref, whh0_ref, wcat_ref, brest_ref,
         wfc_ref, bfc_ref, out_ref, xp_sc, cat_sc, c_sc) = refs
    else:
        (x_ref, wih0_ref, b0_ref, whh0_ref,
         wfc_ref, bfc_ref, out_ref, xp_sc, cat_sc, c_sc) = refs
        wcat_ref = brest_ref = None

    Hp = hidden_pad
    chunk = pl.program_id(1)

    @pl.when(chunk == 0)
    def _():
        cat_sc[...] = jnp.zeros_like(cat_sc)
        c_sc[...] = jnp.zeros_like(c_sc)

    # ---- chunk prologue: layer-0 input projection (+ fused bias) for all Tb
    # steps at once — one big bf16 MXU matmul, raw input streamed from HBM.
    d_pad = x_ref.shape[-1]
    x2 = x_ref[...].reshape(tb * bb, d_pad)                       # bf16
    xp = jnp.dot(x2, wih0_ref[...], preferred_element_type=jnp.float32)
    xp_sc[...] = (xp + b0_ref[...]).reshape(tb, bb, 4 * Hp)

    def lstm_cell(gates, c_prev):
        # gates column order: i, f, o, g — one contiguous sigmoid slice.
        sig = jax.nn.sigmoid(gates[:, 0:3 * Hp])
        i_g = sig[:, 0 * Hp:1 * Hp]
        f_g = sig[:, 1 * Hp:2 * Hp]
        o_g = sig[:, 2 * Hp:3 * Hp]
        g_g = jnp.tanh(gates[:, 3 * Hp:4 * Hp])
        c_new = f_g * c_prev + i_g * g_g
        h_new = o_g * jnp.tanh(c_new)
        return h_new, c_new

    def step(t, carry):
        valid = None
        if ragged:
            valid = (chunk * tb + t) < seq_len
        # ---- layer 0: recurrent dot only (x-path precomputed above).
        h_prev0 = cat_sc[0, :, 0:Hp]                               # (Bb, Hp) bf16
        c_prev0 = c_sc[0]
        gates0 = xp_sc[t] + jnp.dot(h_prev0, whh0_ref[...],
                                    preferred_element_type=jnp.float32)
        h_new, c_new = lstm_cell(gates0, c_prev0)
        h_bf = h_new.astype(jnp.bfloat16)
        if ragged:
            h_bf = jnp.where(valid, h_bf, h_prev0)
            c_new = jnp.where(valid, c_new, c_prev0)
        cat_sc[0, :, 0:Hp] = h_bf
        c_sc[0] = c_new
        # ---- layers 1..L-1: one fused (Bb,2Hp)x(2Hp,4Hp) bf16 dot per layer;
        # hidden state lives directly in its concatenated slots (no concat op).
        for l in range(1, num_layers):
            cat_l = cat_sc[l - 1]                                  # (Bb, 2Hp) bf16
            c_prev = c_sc[l]
            gates = (jnp.dot(cat_l, wcat_ref[l - 1],
                             preferred_element_type=jnp.float32)
                     + brest_ref[l - 1])
            h_new, c_new = lstm_cell(gates, c_prev)
            h_bf = h_new.astype(jnp.bfloat16)
            if ragged:
                h_bf = jnp.where(valid, h_bf, cat_l[:, Hp:2 * Hp])
                c_new = jnp.where(valid, c_new, c_prev)
            cat_sc[l - 1, :, Hp:2 * Hp] = h_bf                     # self slot
            if l + 1 < num_layers:
                cat_sc[l, :, 0:Hp] = h_bf                          # below slot
            c_sc[l] = c_new
        return carry

    lax.fori_loop(0, tb, step, None, unroll=min(tb, 8))

    # Final FC on the last layer's hidden state, only at the last time chunk.
    @pl.when(chunk == pl.num_programs(1) - 1)
    def _():
        if num_layers > 1:
            h_last = cat_sc[num_layers - 2, :, Hp:2 * Hp]
        else:
            h_last = cat_sc[0, :, 0:Hp]
        out_ref[...] = (jnp.dot(h_last, wfc_ref[...],
                                preferred_element_type=jnp.float32)
                        + bfc_ref[...]).astype(out_ref.dtype)


# --------------------------------- forward ------------------------------------
@functools.partial(jax.jit, static_argnames=("num_layers", "num_classes"))
def lstm_model_forward(kp, x, *, num_layers, num_classes):
    """x: (B, T, input_size) batch-first (PyTorch convention). Returns (B, C)."""
    B, T, D = x.shape
    H_pad, G = kp["whh0"].shape            # G = 4 * H_pad
    C_pad = kp["wfc"].shape[1]
    D_pad = kp["wih0"].shape[0]

    # ----------------- device-aware tiling (trace-time host queries) ----------
    try:
        kind = jax.devices()[0].device_kind.lower()
    except Exception:
        kind = ""
    try:
        vmem_phys = int(pltpu.get_tpu_info().vmem_capacity_bytes)
    except Exception:
        vmem_phys = 64 << 20                      # conservative (v7x per-TC)

    big_mxu = ("v6" in kind) or ("v7" in kind)    # 256-wide MXU
    two_cores = "v7" in kind                      # 2 TensorCores per chip

    bb_cap = 256 if big_mxu else 128
    B8 = _round_up(B, 8)
    Bb = min(B8, bb_cap)
    nb = -(-B8 // Bb)
    if two_cores and nb == 1 and B8 >= 16:
        # Split the batch so both v7x TensorCores get a block.
        Bb = _round_up((B8 + 1) // 2, 8)
        nb = 2
    B_pad = nb * Bb

    # ----------------- VMEM-budgeted time-chunk length ------------------------
    budget = min(int(vmem_phys * 0.65), 96 << 20)
    # Double-buffered resident weights (bf16) + biases (f32).
    wt_bytes = 2 * (D_pad * G * 2 + H_pad * G * 2 + H_pad * C_pad * 2
                    + G * 4 + C_pad * 4)
    if num_layers > 1:
        wt_bytes += 2 * ((num_layers - 1) * 2 * H_pad * G * 2
                         + (num_layers - 1) * G * 4)
    fixed = (wt_bytes
             + 2 * Bb * C_pad * 4                            # out block (x2)
             + max(num_layers - 1, 1) * Bb * 2 * H_pad * 2   # cat scratch (bf16)
             + num_layers * Bb * H_pad * 4)                  # cell-state scratch
    per_tb = Bb * (G * 4 + 2 * D_pad * 2)    # xp scratch f32 + x block bf16 (x2)
    Tb = int(max(1, min(T, (budget - fixed) // per_tb)))
    nc = -(-T // Tb)
    T_pad = nc * Tb
    ragged = (T_pad != T)
    need = fixed + per_tb * Tb
    vmem_limit = int(min(vmem_phys - (2 << 20),
                         max(budget + (16 << 20), need + (16 << 20))))

    # Raw input, time-major, zero-padded, bf16 (streamed — no hoisted projection).
    xt = jnp.transpose(x, (1, 0, 2)).astype(jnp.bfloat16)           # (T, B, D)
    xt = jnp.pad(xt, ((0, T_pad - T), (0, B_pad - B), (0, D_pad - D)))

    kernel = functools.partial(_fused_lstm_fc_kernel,
                               num_layers=num_layers, hidden_pad=H_pad,
                               tb=Tb, bb=Bb, seq_len=T, ragged=ragged)

    in_specs = [
        pl.BlockSpec((Tb, Bb, D_pad), lambda b, c: (c, b, 0)),
        pl.BlockSpec((D_pad, G), lambda b, c: (0, 0)),
        pl.BlockSpec((1, G), lambda b, c: (0, 0)),
        pl.BlockSpec((H_pad, G), lambda b, c: (0, 0)),
    ]
    args = [xt, kp["wih0"], kp["b0"], kp["whh0"]]
    if num_layers > 1:
        in_specs += [pl.BlockSpec(kp["wcat"].shape, lambda b, c: (0, 0, 0)),
                     pl.BlockSpec(kp["brest"].shape, lambda b, c: (0, 0, 0))]
        args += [kp["wcat"], kp["brest"]]
    in_specs += [pl.BlockSpec((H_pad, C_pad), lambda b, c: (0, 0)),
                 pl.BlockSpec((1, C_pad), lambda b, c: (0, 0))]
    args += [kp["wfc"], kp["bfc"]]

    out_pad = pl.pallas_call(
        kernel,
        out_shape=jax.ShapeDtypeStruct((B_pad, C_pad), jnp.float32),
        grid_spec=pltpu.PrefetchScalarGridSpec(
            num_scalar_prefetch=0,
            grid=(nb, nc),
            in_specs=in_specs,
            out_specs=pl.BlockSpec((Bb, C_pad), lambda b, c: (b, 0)),
            scratch_shapes=[
                pltpu.VMEM((Tb, Bb, G), jnp.float32),
                pltpu.VMEM((max(num_layers - 1, 1), Bb, 2 * H_pad), jnp.bfloat16),
                pltpu.VMEM((num_layers, Bb, H_pad), jnp.float32),
            ],
        ),
        compiler_params=pltpu.CompilerParams(
            dimension_semantics=("parallel", "arbitrary"),
            vmem_limit_bytes=vmem_limit),
    )(*args)

    return out_pad[:B, :num_classes]


# ---------------------------- parameter handling -------------------------------
def init_lstm_model_params(key, input_size, hidden_size, num_layers, num_classes):
    """PyTorch-layout params (uniform +-1/sqrt(H)), gate order i,f,g,o."""
    bound = 1.0 / math.sqrt(hidden_size)
    layers = []
    for layer in range(num_layers):
        d_in = input_size if layer == 0 else hidden_size
        key, k1, k2, k3, k4 = jax.random.split(key, 5)
        layers.append({
            "w_ih": jax.random.uniform(k1, (4 * hidden_size, d_in),
                                       minval=-bound, maxval=bound,
                                       dtype=jnp.float32),
            "w_hh": jax.random.uniform(k2, (4 * hidden_size, hidden_size),
                                       minval=-bound, maxval=bound,
                                       dtype=jnp.float32),
            "b_ih": jax.random.uniform(k3, (4 * hidden_size,),
                                       minval=-bound, maxval=bound,
                                       dtype=jnp.float32),
            "b_hh": jax.random.uniform(k4, (4 * hidden_size,),
                                       minval=-bound, maxval=bound,
                                       dtype=jnp.float32),
        })
    key, k5, k6 = jax.random.split(key, 3)
    w_fc = jax.random.uniform(k5, (num_classes, hidden_size),
                              minval=-bound, maxval=bound, dtype=jnp.float32)
    b_fc = jax.random.uniform(k6, (num_classes,),
                              minval=-bound, maxval=bound, dtype=jnp.float32)
    return {"layers": layers, "w_fc": w_fc, "b_fc": b_fc}


def prepare_pallas_params(params, input_size, hidden_size, num_layers, num_classes):
    """Pad/transpose/concat PyTorch params into kernel layout (bf16 matmul weights)."""
    H = hidden_size
    H_pad = _round_up(H, 128)            # lane-dense gates / hidden state
    C_pad = _round_up(num_classes, 128)  # lane-dense FC output
    D_pad = _round_up(input_size, 128)
    bf = jnp.bfloat16
    layers = params["layers"]

    l0 = layers[0]
    wih0 = _gate_pad_cols(l0["w_ih"].T, H, H_pad)
    wih0 = jnp.pad(wih0, ((0, D_pad - input_size), (0, 0))).astype(bf)
    b0 = _gate_pad_bias(l0["b_ih"] + l0["b_hh"], H, H_pad)[None, :]   # f32
    whh0 = jnp.pad(_gate_pad_cols(l0["w_hh"].T, H, H_pad),
                   ((0, H_pad - H), (0, 0))).astype(bf)

    kp = {"wih0": wih0, "b0": b0, "whh0": whh0}

    if num_layers > 1:
        wcats, biases = [], []
        for l in range(1, num_layers):
            lp = layers[l]
            wih = jnp.pad(_gate_pad_cols(lp["w_ih"].T, H, H_pad),
                          ((0, H_pad - H), (0, 0)))
            whh = jnp.pad(_gate_pad_cols(lp["w_hh"].T, H, H_pad),
                          ((0, H_pad - H), (0, 0)))
            wcats.append(jnp.concatenate([wih, whh], axis=0))   # (2*H_pad, 4*H_pad)
            biases.append(_gate_pad_bias(lp["b_ih"] + lp["b_hh"], H, H_pad)[None, :])
        kp["wcat"] = jnp.stack(wcats, axis=0).astype(bf)
        kp["brest"] = jnp.stack(biases, axis=0)                  # f32

    kp["wfc"] = jnp.pad(params["w_fc"].T,
                        ((0, H_pad - H), (0, C_pad - num_classes))).astype(bf)
    kp["bfc"] = jnp.pad(params["b_fc"], ((0, C_pad - num_classes),))[None, :]
    return kp


# ----------------------------- pure-JAX reference ------------------------------
def _reference_forward(params, x):
    hp = lax.Precision.HIGHEST
    B = x.shape[0]
    h_seq = jnp.transpose(x, (1, 0, 2)).astype(jnp.float32)       # (T, B, D)
    for layer in params["layers"]:
        w_ih_t = layer["w_ih"].T
        w_hh_t = layer["w_hh"].T
        b = (layer["b_ih"] + layer["b_hh"])[None, :]
        H = layer["w_hh"].shape[1]
        h = jnp.zeros((B, H), jnp.float32)
        c = jnp.zeros((B, H), jnp.float32)
        outs = []
        for t in range(h_seq.shape[0]):
            gates = (jnp.dot(h_seq[t], w_ih_t, precision=hp)
                     + jnp.dot(h, w_hh_t, precision=hp) + b)
            i_g = jax.nn.sigmoid(gates[:, 0 * H:1 * H])
            f_g = jax.nn.sigmoid(gates[:, 1 * H:2 * H])
            g_g = jnp.tanh(gates[:, 2 * H:3 * H])
            o_g = jax.nn.sigmoid(gates[:, 3 * H:4 * H])
            c = f_g * c + i_g * g_g
            h = o_g * jnp.tanh(c)
            outs.append(h)
        h_seq = jnp.stack(outs, axis=0)
    return (jnp.dot(h_seq[-1], params["w_fc"].T, precision=hp)
            + params["b_fc"][None, :])


if __name__ == "__main__":
    B, T = 2, 8
    input_size, hidden_size, num_layers, num_classes = 16, 32, 2, 4

    key = jax.random.PRNGKey(0)
    key, pkey, xkey = jax.random.split(key, 3)
    params = init_lstm_model_params(pkey, input_size, hidden_size,
                                    num_layers, num_classes)
    kparams = prepare_pallas_params(params, input_size, hidden_size,
                                    num_layers, num_classes)
    x = jax.random.normal(xkey, (B, T, input_size), dtype=jnp.float32)

    out = lstm_model_forward(kparams, x, num_layers=num_layers,
                             num_classes=num_classes)
    jax.block_until_ready(out)

    ref = _reference_forward(params, x)
    assert out.shape == (B, num_classes)
    # bf16 matmul operands (f32 accumulation) -> looser tolerance vs f32 reference.
    err = float(jnp.max(jnp.abs(out - ref)))
    assert jnp.allclose(out, ref, atol=3e-2, rtol=3e-2), f"mismatch (max err {err})"

    print("KERNEL_OK")
</pallas_src>

<mosaic_0001>
module attributes {stable_mosaic.version = 11 : i64} {
  func.func @_fused_lstm_fc_kernel(%arg0: i32, %arg1: i32, %arg2: memref<8x8x128xbf16, #tpu.memory_space<vmem>>, %arg3: memref<128x512xbf16, #tpu.memory_space<vmem>>, %arg4: memref<1x512xf32, #tpu.memory_space<vmem>>, %arg5: memref<128x512xbf16, #tpu.memory_space<vmem>>, %arg6: memref<1x256x512xbf16, #tpu.memory_space<vmem>>, %arg7: memref<1x1x512xf32, #tpu.memory_space<vmem>>, %arg8: memref<128x128xbf16, #tpu.memory_space<vmem>>, %arg9: memref<1x128xf32, #tpu.memory_space<vmem>>, %arg10: memref<8x128xf32, #tpu.memory_space<vmem>>, %arg11: memref<8x8x512xf32, #tpu.memory_space<vmem>>, %arg12: memref<1x8x256xbf16, #tpu.memory_space<vmem>>, %arg13: memref<2x8x128xf32, #tpu.memory_space<vmem>>) attributes {dimension_semantics = [#tpu.dimension_semantics<parallel>, #tpu.dimension_semantics<arbitrary>], iteration_bounds = array<i64: 1, 1>, scalar_prefetch = 0 : i64, scratch_operands = 3 : i64, tpu.core_type = #tpu.core_type<tc>, window_params = [{transform_indices = @transform_0, window_bounds = array<i64: 8, 8, 128>}, {pipeline_mode = #tpu.pipeline_mode<synchronous>, transform_indices = @transform_1, window_bounds = array<i64: 128, 512>}, {pipeline_mode = #tpu.pipeline_mode<synchronous>, transform_indices = @transform_2, window_bounds = array<i64: 1, 512>}, {pipeline_mode = #tpu.pipeline_mode<synchronous>, transform_indices = @transform_3, window_bounds = array<i64: 128, 512>}, {pipeline_mode = #tpu.pipeline_mode<synchronous>, transform_indices = @transform_4, window_bounds = array<i64: 1, 256, 512>}, {pipeline_mode = #tpu.pipeline_mode<synchronous>, transform_indices = @transform_5, window_bounds = array<i64: 1, 1, 512>}, {pipeline_mode = #tpu.pipeline_mode<synchronous>, transform_indices = @transform_6, window_bounds = array<i64: 128, 128>}, {pipeline_mode = #tpu.pipeline_mode<synchronous>, transform_indices = @transform_7, window_bounds = array<i64: 1, 128>}, {transform_indices = @transform_8, window_bounds = array<i64: 8, 128>}]} {
    %c0_i32 = arith.constant 0 : i32
    %0 = arith.cmpi eq, %arg1, %c0_i32 : i32
    %1 = arith.extui %0 : i1 to i32
    %c0_i32_0 = arith.constant 0 : i32
    %2 = arith.cmpi ne, %1, %c0_i32_0 : i32
    scf.if %2 {
      %cst_315 = arith.constant 0.000000e+00 : bf16
      %551 = vector.broadcast %cst_315 : bf16 to vector<1x8x256xbf16>
      %c0_316 = arith.constant 0 : index
      %c0_317 = arith.constant 0 : index
      %c0_318 = arith.constant 0 : index
      %552 = vector.load %arg12[%c0_316, %c0_317, %c0_318] : memref<1x8x256xbf16, #tpu.memory_space<vmem>>, vector<1x8x256xbf16>
      tpu.vector_store %arg12[%c0_316, %c0_317, %c0_318], %551 {strides = array<i32>} : memref<1x8x256xbf16, #tpu.memory_space<vmem>>, vector<1x8x256xbf16>,
      %cst_319 = arith.constant 0.000000e+00 : f32
      %553 = vector.broadcast %cst_319 : f32 to vector<2x8x128xf32>
      %c0_320 = arith.constant 0 : index
      %c0_321 = arith.constant 0 : index
      %c0_322 = arith.constant 0 : index
      %554 = vector.load %arg13[%c0_320, %c0_321, %c0_322] : memref<2x8x128xf32, #tpu.memory_space<vmem>>, vector<2x8x128xf32>
      tpu.vector_store %arg13[%c0_320, %c0_321, %c0_322], %553 {strides = array<i32>} : memref<2x8x128xf32, #tpu.memory_space<vmem>>, vector<2x8x128xf32>,
    } else {
    }
    %c0 = arith.constant 0 : index
    %c0_1 = arith.constant 0 : index
    %c0_2 = arith.constant 0 : index
    %3 = vector.load %arg2[%c0, %c0_1, %c0_2] : memref<8x8x128xbf16, #tpu.memory_space<vmem>>, vector<8x8x128xbf16>
    %4 = vector.shape_cast %3 : vector<8x8x128xbf16> to vector<64x128xbf16>
    %c0_3 = arith.constant 0 : index
    %c0_4 = arith.constant 0 : index
    %5 = vector.load %arg3[%c0_3, %c0_4] : memref<128x512xbf16, #tpu.memory_space<vmem>>, vector<128x512xbf16>
    %cst = arith.constant dense<0.000000e+00> : vector<64x512xf32>
    %6 = tpu.matmul %4, %5, %cst {dimension_numbers = #tpu.dot_dimension_numbers<[1], [0], [0], [1], [0, 0, 1, 1], [], []>} : vector<64x128xbf16>, vector<128x512xbf16>, vector<64x512xf32> -> vector<64x512xf32>
    %c0_5 = arith.constant 0 : index
    %c0_6 = arith.constant 0 : index
    %7 = vector.load %arg4[%c0_5, %c0_6] : memref<1x512xf32, #tpu.memory_space<vmem>>, vector<1x512xf32>
    %8 = vector.broadcast %7 : vector<1x512xf32> to vector<64x512xf32>
    %9 = arith.addf %6, %8 : vector<64x512xf32>
    %10 = vector.shape_cast %9 : vector<64x512xf32> to vector<8x8x512xf32>
    %c0_7 = arith.constant 0 : index
    %c0_8 = arith.constant 0 : index
    %c0_9 = arith.constant 0 : index
    %11 = vector.load %arg11[%c0_7, %c0_8, %c0_9] : memref<8x8x512xf32, #tpu.memory_space<vmem>>, vector<8x8x512xf32>
    tpu.vector_store %arg11[%c0_7, %c0_8, %c0_9], %10 {strides = array<i32>} : memref<8x8x512xf32, #tpu.memory_space<vmem>>, vector<8x8x512xf32>,
    %c0_i32_10 = arith.constant 0 : i32
    %c0_11 = arith.constant 0 : index
    %c0_12 = arith.constant 0 : index
    %c0_13 = arith.constant 0 : index
    %12 = vector.load %arg12[%c0_11, %c0_12, %c0_13] : memref<1x8x256xbf16, #tpu.memory_space<vmem>>, vector<1x8x128xbf16>
    %13 = vector.shape_cast %12 : vector<1x8x128xbf16> to vector<8x128xbf16>
    %c0_14 = arith.constant 0 : index
    %c0_15 = arith.constant 0 : index
    %c0_16 = arith.constant 0 : index
    %14 = vector.load %arg13[%c0_14, %c0_15, %c0_16] : memref<2x8x128xf32, #tpu.memory_space<vmem>>, vector<1x8x128xf32>
    %15 = vector.shape_cast %14 : vector<1x8x128xf32> to vector<8x128xf32>
    %16 = arith.index_cast %c0_i32_10 : i32 to index
    %c0_17 = arith.constant 0 : index
    %c0_18 = arith.constant 0 : index
    %17 = vector.load %arg11[%16, %c0_17, %c0_18] : memref<8x8x512xf32, #tpu.memory_space<vmem>>, vector<1x8x512xf32>
    %18 = vector.shape_cast %17 : vector<1x8x512xf32> to vector<8x512xf32>
    %c0_19 = arith.constant 0 : index
    %c0_20 = arith.constant 0 : index
    %19 = vector.load %arg5[%c0_19, %c0_20] : memref<128x512xbf16, #tpu.memory_space<vmem>>, vector<128x512xbf16>
    %cst_21 = arith.constant dense<0.000000e+00> : vector<8x512xf32>
    %20 = tpu.matmul %13, %19, %cst_21 {dimension_numbers = #tpu.dot_dimension_numbers<[1], [0], [0], [1], [0, 0, 1, 1], [], []>} : vector<8x128xbf16>, vector<128x512xbf16>, vector<8x512xf32> -> vector<8x512xf32>
    %21 = arith.addf %18, %20 : vector<8x512xf32>
    %22 = vector.extract_strided_slice %21 {offsets = [0, 0], sizes = [8, 384], strides = [1, 1]} : vector<8x512xf32> to vector<8x384xf32>
    %23 = arith.negf %22 : vector<8x384xf32>
    %24 = math.exp %23 : vector<8x384xf32>
    %cst_22 = arith.constant 1.000000e+00 : f32
    %25 = vector.broadcast %cst_22 : f32 to vector<8x384xf32>
    %26 = arith.addf %25, %24 : vector<8x384xf32>
    %27 = arith.divf %25, %26 : vector<8x384xf32>
    %28 = vector.extract_strided_slice %27 {offsets = [0, 0], sizes = [8, 128], strides = [1, 1]} : vector<8x384xf32> to vector<8x128xf32>
    %29 = vector.extract_strided_slice %27 {offsets = [0, 128], sizes = [8, 128], strides = [1, 1]} : vector<8x384xf32> to vector<8x128xf32>
    %30 = vector.extract_strided_slice %27 {offsets = [0, 256], sizes = [8, 128], strides = [1, 1]} : vector<8x384xf32> to vector<8x128xf32>
    %31 = vector.extract_strided_slice %21 {offsets = [0, 384], sizes = [8, 128], strides = [1, 1]} : vector<8x512xf32> to vector<8x128xf32>
    %32 = math.tanh %31 : vector<8x128xf32>
    %33 = arith.mulf %29, %15 : vector<8x128xf32>
    %34 = arith.mulf %28, %32 : vector<8x128xf32>
    %35 = arith.addf %33, %34 : vector<8x128xf32>
    %36 = math.tanh %35 : vector<8x128xf32>
    %37 = arith.mulf %30, %36 : vector<8x128xf32>
    %38 = arith.truncf %37 : vector<8x128xf32> to vector<8x128xbf16>
    %c0_23 = arith.constant 0 : index
    %c0_24 = arith.constant 0 : index
    %c0_25 = arith.constant 0 : index
    %39 = vector.load %arg12[%c0_23, %c0_24, %c0_25] : memref<1x8x256xbf16, #tpu.memory_space<vmem>>, vector<1x8x128xbf16>
    %40 = vector.shape_cast %39 : vector<1x8x128xbf16> to vector<8x128xbf16>
    %41 = vector.shape_cast %38 : vector<8x128xbf16> to vector<1x8x128xbf16>
    tpu.vector_store %arg12[%c0_23, %c0_24, %c0_25], %41 {strides = array<i32>} : memref<1x8x256xbf16, #tpu.memory_space<vmem>>, vector<1x8x128xbf16>,
    %c0_26 = arith.constant 0 : index
    %c0_27 = arith.constant 0 : index
    %c0_28 = arith.constant 0 : index
    %42 = vector.load %arg13[%c0_26, %c0_27, %c0_28] : memref<2x8x128xf32, #tpu.memory_space<vmem>>, vector<1x8x128xf32>
    %43 = vector.shape_cast %42 : vector<1x8x128xf32> to vector<8x128xf32>
    %44 = vector.shape_cast %35 : vector<8x128xf32> to vector<1x8x128xf32>
    tpu.vector_store %arg13[%c0_26, %c0_27, %c0_28], %44 {strides = array<i32>} : memref<2x8x128xf32, #tpu.memory_space<vmem>>, vector<1x8x128xf32>,
    %c0_29 = arith.constant 0 : index
    %c0_30 = arith.constant 0 : index
    %c0_31 = arith.constant 0 : index
    %45 = vector.load %arg12[%c0_29, %c0_30, %c0_31] : memref<1x8x256xbf16, #tpu.memory_space<vmem>>, vector<1x8x256xbf16>
    %46 = vector.shape_cast %45 : vector<1x8x256xbf16> to vector<8x256xbf16>
    %c1 = arith.constant 1 : index
    %c0_32 = arith.constant 0 : index
    %c0_33 = arith.constant 0 : index
    %47 = vector.load %arg13[%c1, %c0_32, %c0_33] : memref<2x8x128xf32, #tpu.memory_space<vmem>>, vector<1x8x128xf32>
    %48 = vector.shape_cast %47 : vector<1x8x128xf32> to vector<8x128xf32>
    %c0_34 = arith.constant 0 : index
    %c0_35 = arith.constant 0 : index
    %c0_36 = arith.constant 0 : index
    %49 = vector.load %arg6[%c0_34, %c0_35, %c0_36] : memref<1x256x512xbf16, #tpu.memory_space<vmem>>, vector<1x256x512xbf16>
    %50 = vector.shape_cast %49 : vector<1x256x512xbf16> to vector<256x512xbf16>
    %cst_37 = arith.constant dense<0.000000e+00> : vector<8x512xf32>
    %51 = tpu.matmul %46, %50, %cst_37 {dimension_numbers = #tpu.dot_dimension_numbers<[1], [0], [0], [1], [0, 0, 1, 1], [], []>} : vector<8x256xbf16>, vector<256x512xbf16>, vector<8x512xf32> -> vector<8x512xf32>
    %c0_38 = arith.constant 0 : index
    %c0_39 = arith.constant 0 : index
    %c0_40 = arith.constant 0 : index
    %52 = vector.load %arg7[%c0_38, %c0_39, %c0_40] : memref<1x1x512xf32, #tpu.memory_space<vmem>>, vector<1x1x512xf32>
    %53 = vector.shape_cast %52 : vector<1x1x512xf32> to vector<1x512xf32>
    %54 = vector.broadcast %53 : vector<1x512xf32> to vector<8x512xf32>
    %55 = arith.addf %51, %54 : vector<8x512xf32>
    %56 = vector.extract_strided_slice %55 {offsets = [0, 0], sizes = [8, 384], strides = [1, 1]} : vector<8x512xf32> to vector<8x384xf32>
    %57 = arith.negf %56 : vector<8x384xf32>
    %58 = math.exp %57 : vector<8x384xf32>
    %cst_41 = arith.constant 1.000000e+00 : f32
    %59 = vector.broadcast %cst_41 : f32 to vector<8x384xf32>
    %60 = arith.addf %59, %58 : vector<8x384xf32>
    %61 = arith.divf %59, %60 : vector<8x384xf32>
    %62 = vector.extract_strided_slice %61 {offsets = [0, 0], sizes = [8, 128], strides = [1, 1]} : vector<8x384xf32> to vector<8x128xf32>
    %63 = vector.extract_strided_slice %61 {offsets = [0, 128], sizes = [8, 128], strides = [1, 1]} : vector<8x384xf32> to vector<8x128xf32>
    %64 = vector.extract_strided_slice %61 {offsets = [0, 256], sizes = [8, 128], strides = [1, 1]} : vector<8x384xf32> to vector<8x128xf32>
    %65 = vector.extract_strided_slice %55 {offsets = [0, 384], sizes = [8, 128], strides = [1, 1]} : vector<8x512xf32> to vector<8x128xf32>
    %66 = math.tanh %65 : vector<8x128xf32>
    %67 = arith.mulf %63, %48 : vector<8x128xf32>
    %68 = arith.mulf %62, %66 : vector<8x128xf32>
    %69 = arith.addf %67, %68 : vector<8x128xf32>
    %70 = math.tanh %69 : vector<8x128xf32>
    %71 = arith.mulf %64, %70 : vector<8x128xf32>
    %72 = arith.truncf %71 : vector<8x128xf32> to vector<8x128xbf16>
    %c0_42 = arith.constant 0 : index
    %c0_43 = arith.constant 0 : index
    %c128 = arith.constant 128 : index
    %73 = vector.load %arg12[%c0_42, %c0_43, %c128] : memref<1x8x256xbf16, #tpu.memory_space<vmem>>, vector<1x8x128xbf16>
    %74 = vector.shape_cast %73 : vector<1x8x128xbf16> to vector<8x128xbf16>
    %75 = vector.shape_cast %72 : vector<8x128xbf16> to vector<1x8x128xbf16>
    tpu.vector_store %arg12[%c0_42, %c0_43, %c128], %75 {strides = array<i32>} : memref<1x8x256xbf16, #tpu.memory_space<vmem>>, vector<1x8x128xbf16>,
    %c1_44 = arith.constant 1 : index
    %c0_45 = arith.constant 0 : index
    %c0_46 = arith.constant 0 : index
    %76 = vector.load %arg13[%c1_44, %c0_45, %c0_46] : memref<2x8x128xf32, #tpu.memory_space<vmem>>, vector<1x8x128xf32>
    %77 = vector.shape_cast %76 : vector<1x8x128xf32> to vector<8x128xf32>
    %78 = vector.shape_cast %69 : vector<8x128xf32> to vector<1x8x128xf32>
    tpu.vector_store %arg13[%c1_44, %c0_45, %c0_46], %78 {strides = array<i32>} : memref<2x8x128xf32, #tpu.memory_space<vmem>>, vector<1x8x128xf32>,
    %c1_i32 = arith.constant 1 : i32
    %c0_47 = arith.constant 0 : index
    %c0_48 = arith.constant 0 : index
    %c0_49 = arith.constant 0 : index
    %79 = vector.load %arg12[%c0_47, %c0_48, %c0_49] : memref<1x8x256xbf16, #tpu.memory_space<vmem>>, vector<1x8x128xbf16>
    %80 = vector.shape_cast %79 : vector<1x8x128xbf16> to vector<8x128xbf16>
    %c0_50 = arith.constant 0 : index
    %c0_51 = arith.constant 0 : index
    %c0_52 = arith.constant 0 : index
    %81 = vector.load %arg13[%c0_50, %c0_51, %c0_52] : memref<2x8x128xf32, #tpu.memory_space<vmem>>, vector<1x8x128xf32>
    %82 = vector.shape_cast %81 : vector<1x8x128xf32> to vector<8x128xf32>
    %83 = arith.index_cast %c1_i32 : i32 to index
    %c0_53 = arith.constant 0 : index
    %c0_54 = arith.constant 0 : index
    %84 = vector.load %arg11[%83, %c0_53, %c0_54] : memref<8x8x512xf32, #tpu.memory_space<vmem>>, vector<1x8x512xf32>
    %85 = vector.shape_cast %84 : vector<1x8x512xf32> to vector<8x512xf32>
    %c0_55 = arith.constant 0 : index
    %c0_56 = arith.constant 0 : index
    %86 = vector.load %arg5[%c0_55, %c0_56] : memref<128x512xbf16, #tpu.memory_space<vmem>>, vector<128x512xbf16>
    %cst_57 = arith.constant dense<0.000000e+00> : vector<8x512xf32>
    %87 = tpu.matmul %80, %86, %cst_57 {dimension_numbers = #tpu.dot_dimension_numbers<[1], [0], [0], [1], [0, 0, 1, 1], [], []>} : vector<8x128xbf16>, vector<128x512xbf16>, vector<8x512xf32> -> vector<8x512xf32>
    %88 = arith.addf %85, %87 : vector<8x512xf32>
    %89 = vector.extract_strided_slice %88 {offsets = [0, 0], sizes = [8, 384], strides = [1, 1]} : vector<8x512xf32> to vector<8x384xf32>
    %90 = arith.negf %89 : vector<8x384xf32>
    %91 = math.exp %90 : vector<8x384xf32>
    %cst_58 = arith.constant 1.000000e+00 : f32
    %92 = vector.broadcast %cst_58 : f32 to vector<8x384xf32>
    %93 = arith.addf %92, %91 : vector<8x384xf32>
    %94 = arith.divf %92, %93 : vector<8x384xf32>
    %95 = vector.extract_strided_slice %94 {offsets = [0, 0], sizes = [8, 128], strides = [1, 1]} : vector<8x384xf32> to vector<8x128xf32>
    %96 = vector.extract_strided_slice %94 {offsets = [0, 128], sizes = [8, 128], strides = [1, 1]} : vector<8x384xf32> to vector<8x128xf32>
    %97 = vector.extract_strided_slice %94 {offsets = [0, 256], sizes = [8, 128], strides = [1, 1]} : vector<8x384xf32> to vector<8x128xf32>
    %98 = vector.extract_strided_slice %88 {offsets = [0, 384], sizes = [8, 128], strides = [1, 1]} : vector<8x512xf32> to vector<8x128xf32>
    %99 = math.tanh %98 : vector<8x128xf32>
    %100 = arith.mulf %96, %82 : vector<8x128xf32>
    %101 = arith.mulf %95, %99 : vector<8x128xf32>
    %102 = arith.addf %100, %101 : vector<8x128xf32>
    %103 = math.tanh %102 : vector<8x128xf32>
    %104 = arith.mulf %97, %103 : vector<8x128xf32>
    %105 = arith.truncf %104 : vector<8x128xf32> to vector<8x128xbf16>
    %c0_59 = arith.constant 0 : index
    %c0_60 = arith.constant 0 : index
    %c0_61 = arith.constant 0 : index
    %106 = vector.load %arg12[%c0_59, %c0_60, %c0_61] : memref<1x8x256xbf16, #tpu.memory_space<vmem>>, vector<1x8x128xbf16>
    %107 = vector.shape_cast %106 : vector<1x8x128xbf16> to vector<8x128xbf16>
    %108 = vector.shape_cast %105 : vector<8x128xbf16> to vector<1x8x128xbf16>
    tpu.vector_store %arg12[%c0_59, %c0_60, %c0_61], %108 {strides = array<i32>} : memref<1x8x256xbf16, #tpu.memory_space<vmem>>, vector<1x8x128xbf16>,
    %c0_62 = arith.constant 0 : index
    %c0_63 = arith.constant 0 : index
    %c0_64 = arith.constant 0 : index
    %109 = vector.load %arg13[%c0_62, %c0_63, %c0_64] : memref<2x8x128xf32, #tpu.memory_space<vmem>>, vector<1x8x128xf32>
    %110 = vector.shape_cast %109 : vector<1x8x128xf32> to vector<8x128xf32>
    %111 = vector.shape_cast %102 : vector<8x128xf32> to vector<1x8x128xf32>
    tpu.vector_store %arg13[%c0_62, %c0_63, %c0_64], %111 {strides = array<i32>} : memref<2x8x128xf32, #tpu.memory_space<vmem>>, vector<1x8x128xf32>,
    %c0_65 = arith.constant 0 : index
    %c0_66 = arith.constant 0 : index
    %c0_67 = arith.constant 0 : index
    %112 = vector.load %arg12[%c0_65, %c0_66, %c0_67] : memref<1x8x256xbf16, #tpu.memory_space<vmem>>, vector<1x8x256xbf16>
    %113 = vector.shape_cast %112 : vector<1x8x256xbf16> to vector<8x256xbf16>
    %c1_68 = arith.constant 1 : index
    %c0_69 = arith.constant 0 : index
    %c0_70 = arith.constant 0 : index
    %114 = vector.load %arg13[%c1_68, %c0_69, %c0_70] : memref<2x8x128xf32, #tpu.memory_space<vmem>>, vector<1x8x128xf32>
    %115 = vector.shape_cast %114 : vector<1x8x128xf32> to vector<8x128xf32>
    %c0_71 = arith.constant 0 : index
    %c0_72 = arith.constant 0 : index
    %c0_73 = arith.constant 0 : index
    %116 = vector.load %arg6[%c0_71, %c0_72, %c0_73] : memref<1x256x512xbf16, #tpu.memory_space<vmem>>, vector<1x256x512xbf16>
    %117 = vector.shape_cast %116 : vector<1x256x512xbf16> to vector<256x512xbf16>
    %cst_74 = arith.constant dense<0.000000e+00> : vector<8x512xf32>
    %118 = tpu.matmul %113, %117, %cst_74 {dimension_numbers = #tpu.dot_dimension_numbers<[1], [0], [0], [1], [0, 0, 1, 1], [], []>} : vector<8x256xbf16>, vector<256x512xbf16>, vector<8x512xf32> -> vector<8x512xf32>
    %c0_75 = arith.constant 0 : index
    %c0_76 = arith.constant 0 : index
    %c0_77 = arith.constant 0 : index
    %119 = vector.load %arg7[%c0_75, %c0_76, %c0_77] : memref<1x1x512xf32, #tpu.memory_space<vmem>>, vector<1x1x512xf32>
    %120 = vector.shape_cast %119 : vector<1x1x512xf32> to vector<1x512xf32>
    %121 = vector.broadcast %120 : vector<1x512xf32> to vector<8x512xf32>
    %122 = arith.addf %118, %121 : vector<8x512xf32>
    %123 = vector.extract_strided_slice %122 {offsets = [0, 0], sizes = [8, 384], strides = [1, 1]} : vector<8x512xf32> to vector<8x384xf32>
    %124 = arith.negf %123 : vector<8x384xf32>
    %125 = math.exp %124 : vector<8x384xf32>
    %cst_78 = arith.constant 1.000000e+00 : f32
    %126 = vector.broadcast %cst_78 : f32 to vector<8x384xf32>
    %127 = arith.addf %126, %125 : vector<8x384xf32>
    %128 = arith.divf %126, %127 : vector<8x384xf32>
    %129 = vector.extract_strided_slice %128 {offsets = [0, 0], sizes = [8, 128], strides = [1, 1]} : vector<8x384xf32> to vector<8x128xf32>
    %130 = vector.extract_strided_slice %128 {offsets = [0, 128], sizes = [8, 128], strides = [1, 1]} : vector<8x384xf32> to vector<8x128xf32>
    %131 = vector.extract_strided_slice %128 {offsets = [0, 256], sizes = [8, 128], strides = [1, 1]} : vector<8x384xf32> to vector<8x128xf32>
    %132 = vector.extract_strided_slice %122 {offsets = [0, 384], sizes = [8, 128], strides = [1, 1]} : vector<8x512xf32> to vector<8x128xf32>
    %133 = math.tanh %132 : vector<8x128xf32>
    %134 = arith.mulf %130, %115 : vector<8x128xf32>
    %135 = arith.mulf %129, %133 : vector<8x128xf32>
    %136 = arith.addf %134, %135 : vector<8x128xf32>
    %137 = math.tanh %136 : vector<8x128xf32>
    %138 = arith.mulf %131, %137 : vector<8x128xf32>
    %139 = arith.truncf %138 : vector<8x128xf32> to vector<8x128xbf16>
    %c0_79 = arith.constant 0 : index
    %c0_80 = arith.constant 0 : index
    %c128_81 = arith.constant 128 : index
    %140 = vector.load %arg12[%c0_79, %c0_80, %c128_81] : memref<1x8x256xbf16, #tpu.memory_space<vmem>>, vector<1x8x128xbf16>
    %141 = vector.shape_cast %140 : vector<1x8x128xbf16> to vector<8x128xbf16>
    %142 = vector.shape_cast %139 : vector<8x128xbf16> to vector<1x8x128xbf16>
    tpu.vector_store %arg12[%c0_79, %c0_80, %c128_81], %142 {strides = array<i32>} : memref<1x8x256xbf16, #tpu.memory_space<vmem>>, vector<1x8x128xbf16>,
    %c1_82 = arith.constant 1 : index
    %c0_83 = arith.constant 0 : index
    %c0_84 = arith.constant 0 : index
    %143 = vector.load %arg13[%c1_82, %c0_83, %c0_84] : memref<2x8x128xf32, #tpu.memory_space<vmem>>, vector<1x8x128xf32>
    %144 = vector.shape_cast %143 : vector<1x8x128xf32> to vector<8x128xf32>
    %145 = vector.shape_cast %136 : vector<8x128xf32> to vector<1x8x128xf32>
    tpu.vector_store %arg13[%c1_82, %c0_83, %c0_84], %145 {strides = array<i32>} : memref<2x8x128xf32, #tpu.memory_space<vmem>>, vector<1x8x128xf32>,
    %c2_i32 = arith.constant 2 : i32
    %c0_85 = arith.constant 0 : index
    %c0_86 = arith.constant 0 : index
    %c0_87 = arith.constant 0 : index
    %146 = vector.load %arg12[%c0_85, %c0_86, %c0_87] : memref<1x8x256xbf16, #tpu.memory_space<vmem>>, vector<1x8x128xbf16>
    %147 = vector.shape_cast %146 : vector<1x8x128xbf16> to vector<8x128xbf16>
    %c0_88 = arith.constant 0 : index
    %c0_89 = arith.constant 0 : index
    %c0_90 = arith.constant 0 : index
    %148 = vector.load %arg13[%c0_88, %c0_89, %c0_90] : memref<2x8x128xf32, #tpu.memory_space<vmem>>, vector<1x8x128xf32>
    %149 = vector.shape_cast %148 : vector<1x8x128xf32> to vector<8x128xf32>
    %150 = arith.index_cast %c2_i32 : i32 to index
    %c0_91 = arith.constant 0 : index
    %c0_92 = arith.constant 0 : index
    %151 = vector.load %arg11[%150, %c0_91, %c0_92] : memref<8x8x512xf32, #tpu.memory_space<vmem>>, vector<1x8x512xf32>
    %152 = vector.shape_cast %151 : vector<1x8x512xf32> to vector<8x512xf32>
    %c0_93 = arith.constant 0 : index
    %c0_94 = arith.constant 0 : index
    %153 = vector.load %arg5[%c0_93, %c0_94] : memref<128x512xbf16, #tpu.memory_space<vmem>>, vector<128x512xbf16>
    %cst_95 = arith.constant dense<0.000000e+00> : vector<8x512xf32>
    %154 = tpu.matmul %147, %153, %cst_95 {dimension_numbers = #tpu.dot_dimension_numbers<[1], [0], [0], [1], [0, 0, 1, 1], [], []>} : vector<8x128xbf16>, vector<128x512xbf16>, vector<8x512xf32> -> vector<8x512xf32>
    %155 = arith.addf %152, %154 : vector<8x512xf32>
    %156 = vector.extract_strided_slice %155 {offsets = [0, 0], sizes = [8, 384], strides = [1, 1]} : vector<8x512xf32> to vector<8x384xf32>
    %157 = arith.negf %156 : vector<8x384xf32>
    %158 = math.exp %157 : vector<8x384xf32>
    %cst_96 = arith.constant 1.000000e+00 : f32
    %159 = vector.broadcast %cst_96 : f32 to vector<8x384xf32>
    %160 = arith.addf %159, %158 : vector<8x384xf32>
    %161 = arith.divf %159, %160 : vector<8x384xf32>
    %162 = vector.extract_strided_slice %161 {offsets = [0, 0], sizes = [8, 128], strides = [1, 1]} : vector<8x384xf32> to vector<8x128xf32>
    %163 = vector.extract_strided_slice %161 {offsets = [0, 128], sizes = [8, 128], strides = [1, 1]} : vector<8x384xf32> to vector<8x128xf32>
    %164 = vector.extract_strided_slice %161 {offsets = [0, 256], sizes = [8, 128], strides = [1, 1]} : vector<8x384xf32> to vector<8x128xf32>
    %165 = vector.extract_strided_slice %155 {offsets = [0, 384], sizes = [8, 128], strides = [1, 1]} : vector<8x512xf32> to vector<8x128xf32>
    %166 = math.tanh %165 : vector<8x128xf32>
    %167 = arith.mulf %163, %149 : vector<8x128xf32>
    %168 = arith.mulf %162, %166 : vector<8x128xf32>
    %169 = arith.addf %167, %168 : vector<8x128xf32>
    %170 = math.tanh %169 : vector<8x128xf32>
    %171 = arith.mulf %164, %170 : vector<8x128xf32>
    %172 = arith.truncf %171 : vector<8x128xf32> to vector<8x128xbf16>
    %c0_97 = arith.constant 0 : index
    %c0_98 = arith.constant 0 : index
    %c0_99 = arith.constant 0 : index
    %173 = vector.load %arg12[%c0_97, %c0_98, %c0_99] : memref<1x8x256xbf16, #tpu.memory_space<vmem>>, vector<1x8x128xbf16>
    %174 = vector.shape_cast %173 : vector<1x8x128xbf16> to vector<8x128xbf16>
    %175 = vector.shape_cast %172 : vector<8x128xbf16> to vector<1x8x128xbf16>
    tpu.vector_store %arg12[%c0_97, %c0_98, %c0_99], %175 {strides = array<i32>} : memref<1x8x256xbf16, #tpu.memory_space<vmem>>, vector<1x8x128xbf16>,
    %c0_100 = arith.constant 0 : index
    %c0_101 = arith.constant 0 : index
    %c0_102 = arith.constant 0 : index
    %176 = vector.load %arg13[%c0_100, %c0_101, %c0_102] : memref<2x8x128xf32, #tpu.memory_space<vmem>>, vector<1x8x128xf32>
    %177 = vector.shape_cast %176 : vector<1x8x128xf32> to vector<8x128xf32>
    %178 = vector.shape_cast %169 : vector<8x128xf32> to vector<1x8x128xf32>
    tpu.vector_store %arg13[%c0_100, %c0_101, %c0_102], %178 {strides = array<i32>} : memref<2x8x128xf32, #tpu.memory_space<vmem>>, vector<1x8x128xf32>,
    %c0_103 = arith.constant 0 : index
    %c0_104 = arith.constant 0 : index
    %c0_105 = arith.constant 0 : index
    %179 = vector.load %arg12[%c0_103, %c0_104, %c0_105] : memref<1x8x256xbf16, #tpu.memory_space<vmem>>, vector<1x8x256xbf16>
    %180 = vector.shape_cast %179 : vector<1x8x256xbf16> to vector<8x256xbf16>
    %c1_106 = arith.constant 1 : index
    %c0_107 = arith.constant 0 : index
    %c0_108 = arith.constant 0 : index
    %181 = vector.load %arg13[%c1_106, %c0_107, %c0_108] : memref<2x8x128xf32, #tpu.memory_space<vmem>>, vector<1x8x128xf32>
    %182 = vector.shape_cast %181 : vector<1x8x128xf32> to vector<8x128xf32>
    %c0_109 = arith.constant 0 : index
    %c0_110 = arith.constant 0 : index
    %c0_111 = arith.constant 0 : index
    %183 = vector.load %arg6[%c0_109, %c0_110, %c0_111] : memref<1x256x512xbf16, #tpu.memory_space<vmem>>, vector<1x256x512xbf16>
    %184 = vector.shape_cast %183 : vector<1x256x512xbf16> to vector<256x512xbf16>
    %cst_112 = arith.constant dense<0.000000e+00> : vector<8x512xf32>
    %185 = tpu.matmul %180, %184, %cst_112 {dimension_numbers = #tpu.dot_dimension_numbers<[1], [0], [0], [1], [0, 0, 1, 1], [], []>} : vector<8x256xbf16>, vector<256x512xbf16>, vector<8x512xf32> -> vector<8x512xf32>
    %c0_113 = arith.constant 0 : index
    %c0_114 = arith.constant 0 : index
    %c0_115 = arith.constant 0 : index
    %186 = vector.load %arg7[%c0_113, %c0_114, %c0_115] : memref<1x1x512xf32, #tpu.memory_space<vmem>>, vector<1x1x512xf32>
    %187 = vector.shape_cast %186 : vector<1x1x512xf32> to vector<1x512xf32>
    %188 = vector.broadcast %187 : vector<1x512xf32> to vector<8x512xf32>
    %189 = arith.addf %185, %188 : vector<8x512xf32>
    %190 = vector.extract_strided_slice %189 {offsets = [0, 0], sizes = [8, 384], strides = [1, 1]} : vector<8x512xf32> to vector<8x384xf32>
    %191 = arith.negf %190 : vector<8x384xf32>
    %192 = math.exp %191 : vector<8x384xf32>
    %cst_116 = arith.constant 1.000000e+00 : f32
    %193 = vector.broadcast %cst_116 : f32 to vector<8x384xf32>
    %194 = arith.addf %193, %192 : vector<8x384xf32>
    %195 = arith.divf %193, %194 : vector<8x384xf32>
    %196 = vector.extract_strided_slice %195 {offsets = [0, 0], sizes = [8, 128], strides = [1, 1]} : vector<8x384xf32> to vector<8x128xf32>
    %197 = vector.extract_strided_slice %195 {offsets = [0, 128], sizes = [8, 128], strides = [1, 1]} : vector<8x384xf32> to vector<8x128xf32>
    %198 = vector.extract_strided_slice %195 {offsets = [0, 256], sizes = [8, 128], strides = [1, 1]} : vector<8x384xf32> to vector<8x128xf32>
    %199 = vector.extract_strided_slice %189 {offsets = [0, 384], sizes = [8, 128], strides = [1, 1]} : vector<8x512xf32> to vector<8x128xf32>
    %200 = math.tanh %199 : vector<8x128xf32>
    %201 = arith.mulf %197, %182 : vector<8x128xf32>
    %202 = arith.mulf %196, %200 : vector<8x128xf32>
    %203 = arith.addf %201, %202 : vector<8x128xf32>
    %204 = math.tanh %203 : vector<8x128xf32>
    %205 = arith.mulf %198, %204 : vector<8x128xf32>
    %206 = arith.truncf %205 : vector<8x128xf32> to vector<8x128xbf16>
    %c0_117 = arith.constant 0 : index
    %c0_118 = arith.constant 0 : index
    %c128_119 = arith.constant 128 : index
    %207 = vector.load %arg12[%c0_117, %c0_118, %c128_119] : memref<1x8x256xbf16, #tpu.memory_space<vmem>>, vector<1x8x128xbf16>
    %208 = vector.shape_cast %207 : vector<1x8x128xbf16> to vector<8x128xbf16>
    %209 = vector.shape_cast %206 : vector<8x128xbf16> to vector<1x8x128xbf16>
    tpu.vector_store %arg12[%c0_117, %c0_118, %c128_119], %209 {strides = array<i32>} : memref<1x8x256xbf16, #tpu.memory_space<vmem>>, vector<1x8x128xbf16>,
    %c1_120 = arith.constant 1 : index
    %c0_121 = arith.constant 0 : index
    %c0_122 = arith.constant 0 : index
    %210 = vector.load %arg13[%c1_120, %c0_121, %c0_122] : memref<2x8x128xf32, #tpu.memory_space<vmem>>, vector<1x8x128xf32>
    %211 = vector.shape_cast %210 : vector<1x8x128xf32> to vector<8x128xf32>
    %212 = vector.shape_cast %203 : vector<8x128xf32> to vector<1x8x128xf32>
    tpu.vector_store %arg13[%c1_120, %c0_121, %c0_122], %212 {strides = array<i32>} : memref<2x8x128xf32, #tpu.memory_space<vmem>>, vector<1x8x128xf32>,
    %c3_i32 = arith.constant 3 : i32
    %c0_123 = arith.constant 0 : index
    %c0_124 = arith.constant 0 : index
    %c0_125 = arith.constant 0 : index
    %213 = vector.load %arg12[%c0_123, %c0_124, %c0_125] : memref<1x8x256xbf16, #tpu.memory_space<vmem>>, vector<1x8x128xbf16>
    %214 = vector.shape_cast %213 : vector<1x8x128xbf16> to vector<8x128xbf16>
    %c0_126 = arith.constant 0 : index
    %c0_127 = arith.constant 0 : index
    %c0_128 = arith.constant 0 : index
    %215 = vector.load %arg13[%c0_126, %c0_127, %c0_128] : memref<2x8x128xf32, #tpu.memory_space<vmem>>, vector<1x8x128xf32>
    %216 = vector.shape_cast %215 : vector<1x8x128xf32> to vector<8x128xf32>
    %217 = arith.index_cast %c3_i32 : i32 to index
    %c0_129 = arith.constant 0 : index
    %c0_130 = arith.constant 0 : index
    %218 = vector.load %arg11[%217, %c0_129, %c0_130] : memref<8x8x512xf32, #tpu.memory_space<vmem>>, vector<1x8x512xf32>
    %219 = vector.shape_cast %218 : vector<1x8x512xf32> to vector<8x512xf32>
    %c0_131 = arith.constant 0 : index
    %c0_132 = arith.constant 0 : index
    %220 = vector.load %arg5[%c0_131, %c0_132] : memref<128x512xbf16, #tpu.memory_space<vmem>>, vector<128x512xbf16>
    %cst_133 = arith.constant dense<0.000000e+00> : vector<8x512xf32>
    %221 = tpu.matmul %214, %220, %cst_133 {dimension_numbers = #tpu.dot_dimension_numbers<[1], [0], [0], [1], [0, 0, 1, 1], [], []>} : vector<8x128xbf16>, vector<128x512xbf16>, vector<8x512xf32> -> vector<8x512xf32>
    %222 = arith.addf %219, %221 : vector<8x512xf32>
    %223 = vector.extract_strided_slice %222 {offsets = [0, 0], sizes = [8, 384], strides = [1, 1]} : vector<8x512xf32> to vector<8x384xf32>
    %224 = arith.negf %223 : vector<8x384xf32>
    %225 = math.exp %224 : vector<8x384xf32>
    %cst_134 = arith.constant 1.000000e+00 : f32
    %226 = vector.broadcast %cst_134 : f32 to vector<8x384xf32>
    %227 = arith.addf %226, %225 : vector<8x384xf32>
    %228 = arith.divf %226, %227 : vector<8x384xf32>
    %229 = vector.extract_strided_slice %228 {offsets = [0, 0], sizes = [8, 128], strides = [1, 1]} : vector<8x384xf32> to vector<8x128xf32>
    %230 = vector.extract_strided_slice %228 {offsets = [0, 128], sizes = [8, 128], strides = [1, 1]} : vector<8x384xf32> to vector<8x128xf32>
    %231 = vector.extract_strided_slice %228 {offsets = [0, 256], sizes = [8, 128], strides = [1, 1]} : vector<8x384xf32> to vector<8x128xf32>
    %232 = vector.extract_strided_slice %222 {offsets = [0, 384], sizes = [8, 128], strides = [1, 1]} : vector<8x512xf32> to vector<8x128xf32>
    %233 = math.tanh %232 : vector<8x128xf32>
    %234 = arith.mulf %230, %216 : vector<8x128xf32>
    %235 = arith.mulf %229, %233 : vector<8x128xf32>
    %236 = arith.addf %234, %235 : vector<8x128xf32>
    %237 = math.tanh %236 : vector<8x128xf32>
    %238 = arith.mulf %231, %237 : vector<8x128xf32>
    %239 = arith.truncf %238 : vector<8x128xf32> to vector<8x128xbf16>
    %c0_135 = arith.constant 0 : index
    %c0_136 = arith.constant 0 : index
    %c0_137 = arith.constant 0 : index
    %240 = vector.load %arg12[%c0_135, %c0_136, %c0_137] : memref<1x8x256xbf16, #tpu.memory_space<vmem>>, vector<1x8x128xbf16>
    %241 = vector.shape_cast %240 : vector<1x8x128xbf16> to vector<8x128xbf16>
    %242 = vector.shape_cast %239 : vector<8x128xbf16> to vector<1x8x128xbf16>
    tpu.vector_store %arg12[%c0_135, %c0_136, %c0_137], %242 {strides = array<i32>} : memref<1x8x256xbf16, #tpu.memory_space<vmem>>, vector<1x8x128xbf16>,
    %c0_138 = arith.constant 0 : index
    %c0_139 = arith.constant 0 : index
    %c0_140 = arith.constant 0 : index
    %243 = vector.load %arg13[%c0_138, %c0_139, %c0_140] : memref<2x8x128xf32, #tpu.memory_space<vmem>>, vector<1x8x128xf32>
    %244 = vector.shape_cast %243 : vector<1x8x128xf32> to vector<8x128xf32>
    %245 = vector.shape_cast %236 : vector<8x128xf32> to vector<1x8x128xf32>
    tpu.vector_store %arg13[%c0_138, %c0_139, %c0_140], %245 {strides = array<i32>} : memref<2x8x128xf32, #tpu.memory_space<vmem>>, vector<1x8x128xf32>,
    %c0_141 = arith.constant 0 : index
    %c0_142 = arith.constant 0 : index
    %c0_143 = arith.constant 0 : index
    %246 = vector.load %arg12[%c0_141, %c0_142, %c0_143] : memref<1x8x256xbf16, #tpu.memory_space<vmem>>, vector<1x8x256xbf16>
    %247 = vector.shape_cast %246 : vector<1x8x256xbf16> to vector<8x256xbf16>
    %c1_144 = arith.constant 1 : index
    %c0_145 = arith.constant 0 : index
    %c0_146 = arith.constant 0 : index
    %248 = vector.load %arg13[%c1_144, %c0_145, %c0_146] : memref<2x8x128xf32, #tpu.memory_space<vmem>>, vector<1x8x128xf32>
    %249 = vector.shape_cast %248 : vector<1x8x128xf32> to vector<8x128xf32>
    %c0_147 = arith.constant 0 : index
    %c0_148 = arith.constant 0 : index
    %c0_149 = arith.constant 0 : index
    %250 = vector.load %arg6[%c0_147, %c0_148, %c0_149] : memref<1x256x512xbf16, #tpu.memory_space<vmem>>, vector<1x256x512xbf16>
    %251 = vector.shape_cast %250 : vector<1x256x512xbf16> to vector<256x512xbf16>
    %cst_150 = arith.constant dense<0.000000e+00> : vector<8x512xf32>
    %252 = tpu.matmul %247, %251, %cst_150 {dimension_numbers = #tpu.dot_dimension_numbers<[1], [0], [0], [1], [0, 0, 1, 1], [], []>} : vector<8x256xbf16>, vector<256x512xbf16>, vector<8x512xf32> -> vector<8x512xf32>
    %c0_151 = arith.constant 0 : index
    %c0_152 = arith.constant 0 : index
    %c0_153 = arith.constant 0 : index
    %253 = vector.load %arg7[%c0_151, %c0_152, %c0_153] : memref<1x1x512xf32, #tpu.memory_space<vmem>>, vector<1x1x512xf32>
    %254 = vector.shape_cast %253 : vector<1x1x512xf32> to vector<1x512xf32>
    %255 = vector.broadcast %254 : vector<1x512xf32> to vector<8x512xf32>
    %256 = arith.addf %252, %255 : vector<8x512xf32>
    %257 = vector.extract_strided_slice %256 {offsets = [0, 0], sizes = [8, 384], strides = [1, 1]} : vector<8x512xf32> to vector<8x384xf32>
    %258 = arith.negf %257 : vector<8x384xf32>
    %259 = math.exp %258 : vector<8x384xf32>
    %cst_154 = arith.constant 1.000000e+00 : f32
    %260 = vector.broadcast %cst_154 : f32 to vector<8x384xf32>
    %261 = arith.addf %260, %259 : vector<8x384xf32>
    %262 = arith.divf %260, %261 : vector<8x384xf32>
    %263 = vector.extract_strided_slice %262 {offsets = [0, 0], sizes = [8, 128], strides = [1, 1]} : vector<8x384xf32> to vector<8x128xf32>
    %264 = vector.extract_strided_slice %262 {offsets = [0, 128], sizes = [8, 128], strides = [1, 1]} : vector<8x384xf32> to vector<8x128xf32>
    %265 = vector.extract_strided_slice %262 {offsets = [0, 256], sizes = [8, 128], strides = [1, 1]} : vector<8x384xf32> to vector<8x128xf32>
    %266 = vector.extract_strided_slice %256 {offsets = [0, 384], sizes = [8, 128], strides = [1, 1]} : vector<8x512xf32> to vector<8x128xf32>
    %267 = math.tanh %266 : vector<8x128xf32>
    %268 = arith.mulf %264, %249 : vector<8x128xf32>
    %269 = arith.mulf %263, %267 : vector<8x128xf32>
    %270 = arith.addf %268, %269 : vector<8x128xf32>
    %271 = math.tanh %270 : vector<8x128xf32>
    %272 = arith.mulf %265, %271 : vector<8x128xf32>
    %273 = arith.truncf %272 : vector<8x128xf32> to vector<8x128xbf16>
    %c0_155 = arith.constant 0 : index
    %c0_156 = arith.constant 0 : index
    %c128_157 = arith.constant 128 : index
    %274 = vector.load %arg12[%c0_155, %c0_156, %c128_157] : memref<1x8x256xbf16, #tpu.memory_space<vmem>>, vector<1x8x128xbf16>
    %275 = vector.shape_cast %274 : vector<1x8x128xbf16> to vector<8x128xbf16>
    %276 = vector.shape_cast %273 : vector<8x128xbf16> to vector<1x8x128xbf16>
    tpu.vector_store %arg12[%c0_155, %c0_156, %c128_157], %276 {strides = array<i32>} : memref<1x8x256xbf16, #tpu.memory_space<vmem>>, vector<1x8x128xbf16>,
    %c1_158 = arith.constant 1 : index
    %c0_159 = arith.constant 0 : index
    %c0_160 = arith.constant 0 : index
    %277 = vector.load %arg13[%c1_158, %c0_159, %c0_160] : memref<2x8x128xf32, #tpu.memory_space<vmem>>, vector<1x8x128xf32>
    %278 = vector.shape_cast %277 : vector<1x8x128xf32> to vector<8x128xf32>
    %279 = vector.shape_cast %270 : vector<8x128xf32> to vector<1x8x128xf32>
    tpu.vector_store %arg13[%c1_158, %c0_159, %c0_160], %279 {strides = array<i32>} : memref<2x8x128xf32, #tpu.memory_space<vmem>>, vector<1x8x128xf32>,
    %c4_i32 = arith.constant 4 : i32
    %c0_161 = arith.constant 0 : index
    %c0_162 = arith.constant 0 : index
    %c0_163 = arith.constant 0 : index
    %280 = vector.load %arg12[%c0_161, %c0_162, %c0_163] : memref<1x8x256xbf16, #tpu.memory_space<vmem>>, vector<1x8x128xbf16>
    %281 = vector.shape_cast %280 : vector<1x8x128xbf16> to vector<8x128xbf16>
    %c0_164 = arith.constant 0 : index
    %c0_165 = arith.constant 0 : index
    %c0_166 = arith.constant 0 : index
    %282 = vector.load %arg13[%c0_164, %c0_165, %c0_166] : memref<2x8x128xf32, #tpu.memory_space<vmem>>, vector<1x8x128xf32>
    %283 = vector.shape_cast %282 : vector<1x8x128xf32> to vector<8x128xf32>
    %284 = arith.index_cast %c4_i32 : i32 to index
    %c0_167 = arith.constant 0 : index
    %c0_168 = arith.constant 0 : index
    %285 = vector.load %arg11[%284, %c0_167, %c0_168] : memref<8x8x512xf32, #tpu.memory_space<vmem>>, vector<1x8x512xf32>
    %286 = vector.shape_cast %285 : vector<1x8x512xf32> to vector<8x512xf32>
    %c0_169 = arith.constant 0 : index
    %c0_170 = arith.constant 0 : index
    %287 = vector.load %arg5[%c0_169, %c0_170] : memref<128x512xbf16, #tpu.memory_space<vmem>>, vector<128x512xbf16>
    %cst_171 = arith.constant dense<0.000000e+00> : vector<8x512xf32>
    %288 = tpu.matmul %281, %287, %cst_171 {dimension_numbers = #tpu.dot_dimension_numbers<[1], [0], [0], [1], [0, 0, 1, 1], [], []>} : vector<8x128xbf16>, vector<128x512xbf16>, vector<8x512xf32> -> vector<8x512xf32>
    %289 = arith.addf %286, %288 : vector<8x512xf32>
    %290 = vector.extract_strided_slice %289 {offsets = [0, 0], sizes = [8, 384], strides = [1, 1]} : vector<8x512xf32> to vector<8x384xf32>
    %291 = arith.negf %290 : vector<8x384xf32>
    %292 = math.exp %291 : vector<8x384xf32>
    %cst_172 = arith.constant 1.000000e+00 : f32
    %293 = vector.broadcast %cst_172 : f32 to vector<8x384xf32>
    %294 = arith.addf %293, %292 : vector<8x384xf32>
    %295 = arith.divf %293, %294 : vector<8x384xf32>
    %296 = vector.extract_strided_slice %295 {offsets = [0, 0], sizes = [8, 128], strides = [1, 1]} : vector<8x384xf32> to vector<8x128xf32>
    %297 = vector.extract_strided_slice %295 {offsets = [0, 128], sizes = [8, 128], strides = [1, 1]} : vector<8x384xf32> to vector<8x128xf32>
    %298 = vector.extract_strided_slice %295 {offsets = [0, 256], sizes = [8, 128], strides = [1, 1]} : vector<8x384xf32> to vector<8x128xf32>
    %299 = vector.extract_strided_slice %289 {offsets = [0, 384], sizes = [8, 128], strides = [1, 1]} : vector<8x512xf32> to vector<8x128xf32>
    %300 = math.tanh %299 : vector<8x128xf32>
    %301 = arith.mulf %297, %283 : vector<8x128xf32>
    %302 = arith.mulf %296, %300 : vector<8x128xf32>
    %303 = arith.addf %301, %302 : vector<8x128xf32>
    %304 = math.tanh %303 : vector<8x128xf32>
    %305 = arith.mulf %298, %304 : vector<8x128xf32>
    %306 = arith.truncf %305 : vector<8x128xf32> to vector<8x128xbf16>
    %c0_173 = arith.constant 0 : index
    %c0_174 = arith.constant 0 : index
    %c0_175 = arith.constant 0 : index
    %307 = vector.load %arg12[%c0_173, %c0_174, %c0_175] : memref<1x8x256xbf16, #tpu.memory_space<vmem>>, vector<1x8x128xbf16>
    %308 = vector.shape_cast %307 : vector<1x8x128xbf16> to vector<8x128xbf16>
    %309 = vector.shape_cast %306 : vector<8x128xbf16> to vector<1x8x128xbf16>
    tpu.vector_store %arg12[%c0_173, %c0_174, %c0_175], %309 {strides = array<i32>} : memref<1x8x256xbf16, #tpu.memory_space<vmem>>, vector<1x8x128xbf16>,
    %c0_176 = arith.constant 0 : index
    %c0_177 = arith.constant 0 : index
    %c0_178 = arith.constant 0 : index
    %310 = vector.load %arg13[%c0_176, %c0_177, %c0_178] : memref<2x8x128xf32, #tpu.memory_space<vmem>>, vector<1x8x128xf32>
    %311 = vector.shape_cast %310 : vector<1x8x128xf32> to vector<8x128xf32>
    %312 = vector.shape_cast %303 : vector<8x128xf32> to vector<1x8x128xf32>
    tpu.vector_store %arg13[%c0_176, %c0_177, %c0_178], %312 {strides = array<i32>} : memref<2x8x128xf32, #tpu.memory_space<vmem>>, vector<1x8x128xf32>,
    %c0_179 = arith.constant 0 : index
    %c0_180 = arith.constant 0 : index
    %c0_181 = arith.constant 0 : index
    %313 = vector.load %arg12[%c0_179, %c0_180, %c0_181] : memref<1x8x256xbf16, #tpu.memory_space<vmem>>, vector<1x8x256xbf16>
    %314 = vector.shape_cast %313 : vector<1x8x256xbf16> to vector<8x256xbf16>
    %c1_182 = arith.constant 1 : index
    %c0_183 = arith.constant 0 : index
    %c0_184 = arith.constant 0 : index
    %315 = vector.load %arg13[%c1_182, %c0_183, %c0_184] : memref<2x8x128xf32, #tpu.memory_space<vmem>>, vector<1x8x128xf32>
    %316 = vector.shape_cast %315 : vector<1x8x128xf32> to vector<8x128xf32>
    %c0_185 = arith.constant 0 : index
    %c0_186 = arith.constant 0 : index
    %c0_187 = arith.constant 0 : index
    %317 = vector.load %arg6[%c0_185, %c0_186, %c0_187] : memref<1x256x512xbf16, #tpu.memory_space<vmem>>, vector<1x256x512xbf16>
    %318 = vector.shape_cast %317 : vector<1x256x512xbf16> to vector<256x512xbf16>
    %cst_188 = arith.constant dense<0.000000e+00> : vector<8x512xf32>
    %319 = tpu.matmul %314, %318, %cst_188 {dimension_numbers = #tpu.dot_dimension_numbers<[1], [0], [0], [1], [0, 0, 1, 1], [], []>} : vector<8x256xbf16>, vector<256x512xbf16>, vector<8x512xf32> -> vector<8x512xf32>
    %c0_189 = arith.constant 0 : index
    %c0_190 = arith.constant 0 : index
    %c0_191 = arith.constant 0 : index
    %320 = vector.load %arg7[%c0_189, %c0_190, %c0_191] : memref<1x1x512xf32, #tpu.memory_space<vmem>>, vector<1x1x512xf32>
    %321 = vector.shape_cast %320 : vector<1x1x512xf32> to vector<1x512xf32>
    %322 = vector.broadcast %321 : vector<1x512xf32> to vector<8x512xf32>
    %323 = arith.addf %319, %322 : vector<8x512xf32>
    %324 = vector.extract_strided_slice %323 {offsets = [0, 0], sizes = [8, 384], strides = [1, 1]} : vector<8x512xf32> to vector<8x384xf32>
    %325 = arith.negf %324 : vector<8x384xf32>
    %326 = math.exp %325 : vector<8x384xf32>
    %cst_192 = arith.constant 1.000000e+00 : f32
    %327 = vector.broadcast %cst_192 : f32 to vector<8x384xf32>
    %328 = arith.addf %327, %326 : vector<8x384xf32>
    %329 = arith.divf %327, %328 : vector<8x384xf32>
    %330 = vector.extract_strided_slice %329 {offsets = [0, 0], sizes = [8, 128], strides = [1, 1]} : vector<8x384xf32> to vector<8x128xf32>
    %331 = vector.extract_strided_slice %329 {offsets = [0, 128], sizes = [8, 128], strides = [1, 1]} : vector<8x384xf32> to vector<8x128xf32>
    %332 = vector.extract_strided_slice %329 {offsets = [0, 256], sizes = [8, 128], strides = [1, 1]} : vector<8x384xf32> to vector<8x128xf32>
    %333 = vector.extract_strided_slice %323 {offsets = [0, 384], sizes = [8, 128], strides = [1, 1]} : vector<8x512xf32> to vector<8x128xf32>
    %334 = math.tanh %333 : vector<8x128xf32>
    %335 = arith.mulf %331, %316 : vector<8x128xf32>
    %336 = arith.mulf %330, %334 : vector<8x128xf32>
    %337 = arith.addf %335, %336 : vector<8x128xf32>
    %338 = math.tanh %337 : vector<8x128xf32>
    %339 = arith.mulf %332, %338 : vector<8x128xf32>
    %340 = arith.truncf %339 : vector<8x128xf32> to vector<8x128xbf16>
    %c0_193 = arith.constant 0 : index
    %c0_194 = arith.constant 0 : index
    %c128_195 = arith.constant 128 : index
    %341 = vector.load %arg12[%c0_193, %c0_194, %c128_195] : memref<1x8x256xbf16, #tpu.memory_space<vmem>>, vector<1x8x128xbf16>
    %342 = vector.shape_cast %341 : vector<1x8x128xbf16> to vector<8x128xbf16>
    %343 = vector.shape_cast %340 : vector<8x128xbf16> to vector<1x8x128xbf16>
    tpu.vector_store %arg12[%c0_193, %c0_194, %c128_195], %343 {strides = array<i32>} : memref<1x8x256xbf16, #tpu.memory_space<vmem>>, vector<1x8x128xbf16>,
    %c1_196 = arith.constant 1 : index
    %c0_197 = arith.constant 0 : index
    %c0_198 = arith.constant 0 : index
    %344 = vector.load %arg13[%c1_196, %c0_197, %c0_198] : memref<2x8x128xf32, #tpu.memory_space<vmem>>, vector<1x8x128xf32>
    %345 = vector.shape_cast %344 : vector<1x8x128xf32> to vector<8x128xf32>
    %346 = vector.shape_cast %337 : vector<8x128xf32> to vector<1x8x128xf32>
    tpu.vector_store %arg13[%c1_196, %c0_197, %c0_198], %346 {strides = array<i32>} : memref<2x8x128xf32, #tpu.memory_space<vmem>>, vector<1x8x128xf32>,
    %c5_i32 = arith.constant 5 : i32
    %c0_199 = arith.constant 0 : index
    %c0_200 = arith.constant 0 : index
    %c0_201 = arith.constant 0 : index
    %347 = vector.load %arg12[%c0_199, %c0_200, %c0_201] : memref<1x8x256xbf16, #tpu.memory_space<vmem>>, vector<1x8x128xbf16>
    %348 = vector.shape_cast %347 : vector<1x8x128xbf16> to vector<8x128xbf16>
    %c0_202 = arith.constant 0 : index
    %c0_203 = arith.constant 0 : index
    %c0_204 = arith.constant 0 : index
    %349 = vector.load %arg13[%c0_202, %c0_203, %c0_204] : memref<2x8x128xf32, #tpu.memory_space<vmem>>, vector<1x8x128xf32>
    %350 = vector.shape_cast %349 : vector<1x8x128xf32> to vector<8x128xf32>
    %351 = arith.index_cast %c5_i32 : i32 to index
    %c0_205 = arith.constant 0 : index
    %c0_206 = arith.constant 0 : index
    %352 = vector.load %arg11[%351, %c0_205, %c0_206] : memref<8x8x512xf32, #tpu.memory_space<vmem>>, vector<1x8x512xf32>
    %353 = vector.shape_cast %352 : vector<1x8x512xf32> to vector<8x512xf32>
    %c0_207 = arith.constant 0 : index
    %c0_208 = arith.constant 0 : index
    %354 = vector.load %arg5[%c0_207, %c0_208] : memref<128x512xbf16, #tpu.memory_space<vmem>>, vector<128x512xbf16>
    %cst_209 = arith.constant dense<0.000000e+00> : vector<8x512xf32>
    %355 = tpu.matmul %348, %354, %cst_209 {dimension_numbers = #tpu.dot_dimension_numbers<[1], [0], [0], [1], [0, 0, 1, 1], [], []>} : vector<8x128xbf16>, vector<128x512xbf16>, vector<8x512xf32> -> vector<8x512xf32>
    %356 = arith.addf %353, %355 : vector<8x512xf32>
    %357 = vector.extract_strided_slice %356 {offsets = [0, 0], sizes = [8, 384], strides = [1, 1]} : vector<8x512xf32> to vector<8x384xf32>
    %358 = arith.negf %357 : vector<8x384xf32>
    %359 = math.exp %358 : vector<8x384xf32>
    %cst_210 = arith.constant 1.000000e+00 : f32
    %360 = vector.broadcast %cst_210 : f32 to vector<8x384xf32>
    %361 = arith.addf %360, %359 : vector<8x384xf32>
    %362 = arith.divf %360, %361 : vector<8x384xf32>
    %363 = vector.extract_strided_slice %362 {offsets = [0, 0], sizes = [8, 128], strides = [1, 1]} : vector<8x384xf32> to vector<8x128xf32>
    %364 = vector.extract_strided_slice %362 {offsets = [0, 128], sizes = [8, 128], strides = [1, 1]} : vector<8x384xf32> to vector<8x128xf32>
    %365 = vector.extract_strided_slice %362 {offsets = [0, 256], sizes = [8, 128], strides = [1, 1]} : vector<8x384xf32> to vector<8x128xf32>
    %366 = vector.extract_strided_slice %356 {offsets = [0, 384], sizes = [8, 128], strides = [1, 1]} : vector<8x512xf32> to vector<8x128xf32>
    %367 = math.tanh %366 : vector<8x128xf32>
    %368 = arith.mulf %364, %350 : vector<8x128xf32>
    %369 = arith.mulf %363, %367 : vector<8x128xf32>
    %370 = arith.addf %368, %369 : vector<8x128xf32>
    %371 = math.tanh %370 : vector<8x128xf32>
    %372 = arith.mulf %365, %371 : vector<8x128xf32>
    %373 = arith.truncf %372 : vector<8x128xf32> to vector<8x128xbf16>
    %c0_211 = arith.constant 0 : index
    %c0_212 = arith.constant 0 : index
    %c0_213 = arith.constant 0 : index
    %374 = vector.load %arg12[%c0_211, %c0_212, %c0_213] : memref<1x8x256xbf16, #tpu.memory_space<vmem>>, vector<1x8x128xbf16>
    %375 = vector.shape_cast %374 : vector<1x8x128xbf16> to vector<8x128xbf16>
    %376 = vector.shape_cast %373 : vector<8x128xbf16> to vector<1x8x128xbf16>
    tpu.vector_store %arg12[%c0_211, %c0_212, %c0_213], %376 {strides = array<i32>} : memref<1x8x256xbf16, #tpu.memory_space<vmem>>, vector<1x8x128xbf16>,
    %c0_214 = arith.constant 0 : index
    %c0_215 = arith.constant 0 : index
    %c0_216 = arith.constant 0 : index
    %377 = vector.load %arg13[%c0_214, %c0_215, %c0_216] : memref<2x8x128xf32, #tpu.memory_space<vmem>>, vector<1x8x128xf32>
    %378 = vector.shape_cast %377 : vector<1x8x128xf32> to vector<8x128xf32>
    %379 = vector.shape_cast %370 : vector<8x128xf32> to vector<1x8x128xf32>
    tpu.vector_store %arg13[%c0_214, %c0_215, %c0_216], %379 {strides = array<i32>} : memref<2x8x128xf32, #tpu.memory_space<vmem>>, vector<1x8x128xf32>,
    %c0_217 = arith.constant 0 : index
    %c0_218 = arith.constant 0 : index
    %c0_219 = arith.constant 0 : index
    %380 = vector.load %arg12[%c0_217, %c0_218, %c0_219] : memref<1x8x256xbf16, #tpu.memory_space<vmem>>, vector<1x8x256xbf16>
    %381 = vector.shape_cast %380 : vector<1x8x256xbf16> to vector<8x256xbf16>
    %c1_220 = arith.constant 1 : index
    %c0_221 = arith.constant 0 : index
    %c0_222 = arith.constant 0 : index
    %382 = vector.load %arg13[%c1_220, %c0_221, %c0_222] : memref<2x8x128xf32, #tpu.memory_space<vmem>>, vector<1x8x128xf32>
    %383 = vector.shape_cast %382 : vector<1x8x128xf32> to vector<8x128xf32>
    %c0_223 = arith.constant 0 : index
    %c0_224 = arith.constant 0 : index
    %c0_225 = arith.constant 0 : index
    %384 = vector.load %arg6[%c0_223, %c0_224, %c0_225] : memref<1x256x512xbf16, #tpu.memory_space<vmem>>, vector<1x256x512xbf16>
    %385 = vector.shape_cast %384 : vector<1x256x512xbf16> to vector<256x512xbf16>
    %cst_226 = arith.constant dense<0.000000e+00> : vector<8x512xf32>
    %386 = tpu.matmul %381, %385, %cst_226 {dimension_numbers = #tpu.dot_dimension_numbers<[1], [0], [0], [1], [0, 0, 1, 1], [], []>} : vector<8x256xbf16>, vector<256x512xbf16>, vector<8x512xf32> -> vector<8x512xf32>
    %c0_227 = arith.constant 0 : index
    %c0_228 = arith.constant 0 : index
    %c0_229 = arith.constant 0 : index
    %387 = vector.load %arg7[%c0_227, %c0_228, %c0_229] : memref<1x1x512xf32, #tpu.memory_space<vmem>>, vector<1x1x512xf32>
    %388 = vector.shape_cast %387 : vector<1x1x512xf32> to vector<1x512xf32>
    %389 = vector.broadcast %388 : vector<1x512xf32> to vector<8x512xf32>
    %390 = arith.addf %386, %389 : vector<8x512xf32>
    %391 = vector.extract_strided_slice %390 {offsets = [0, 0], sizes = [8, 384], strides = [1, 1]} : vector<8x512xf32> to vector<8x384xf32>
    %392 = arith.negf %391 : vector<8x384xf32>
    %393 = math.exp %392 : vector<8x384xf32>
    %cst_230 = arith.constant 1.000000e+00 : f32
    %394 = vector.broadcast %cst_230 : f32 to vector<8x384xf32>
    %395 = arith.addf %394, %393 : vector<8x384xf32>
    %396 = arith.divf %394, %395 : vector<8x384xf32>
    %397 = vector.extract_strided_slice %396 {offsets = [0, 0], sizes = [8, 128], strides = [1, 1]} : vector<8x384xf32> to vector<8x128xf32>
    %398 = vector.extract_strided_slice %396 {offsets = [0, 128], sizes = [8, 128], strides = [1, 1]} : vector<8x384xf32> to vector<8x128xf32>
    %399 = vector.extract_strided_slice %396 {offsets = [0, 256], sizes = [8, 128], strides = [1, 1]} : vector<8x384xf32> to vector<8x128xf32>
    %400 = vector.extract_strided_slice %390 {offsets = [0, 384], sizes = [8, 128], strides = [1, 1]} : vector<8x512xf32> to vector<8x128xf32>
    %401 = math.tanh %400 : vector<8x128xf32>
    %402 = arith.mulf %398, %383 : vector<8x128xf32>
    %403 = arith.mulf %397, %401 : vector<8x128xf32>
    %404 = arith.addf %402, %403 : vector<8x128xf32>
    %405 = math.tanh %404 : vector<8x128xf32>
    %406 = arith.mulf %399, %405 : vector<8x128xf32>
    %407 = arith.truncf %406 : vector<8x128xf32> to vector<8x128xbf16>
    %c0_231 = arith.constant 0 : index
    %c0_232 = arith.constant 0 : index
    %c128_233 = arith.constant 128 : index
    %408 = vector.load %arg12[%c0_231, %c0_232, %c128_233] : memref<1x8x256xbf16, #tpu.memory_space<vmem>>, vector<1x8x128xbf16>
    %409 = vector.shape_cast %408 : vector<1x8x128xbf16> to vector<8x128xbf16>
    %410 = vector.shape_cast %407 : vector<8x128xbf16> to vector<1x8x128xbf16>
    tpu.vector_store %arg12[%c0_231, %c0_232, %c128_233], %410 {strides = array<i32>} : memref<1x8x256xbf16, #tpu.memory_space<vmem>>, vector<1x8x128xbf16>,
    %c1_234 = arith.constant 1 : index
    %c0_235 = arith.constant 0 : index
    %c0_236 = arith.constant 0 : index
    %411 = vector.load %arg13[%c1_234, %c0_235, %c0_236] : memref<2x8x128xf32, #tpu.memory_space<vmem>>, vector<1x8x128xf32>
    %412 = vector.shape_cast %411 : vector<1x8x128xf32> to vector<8x128xf32>
    %413 = vector.shape_cast %404 : vector<8x128xf32> to vector<1x8x128xf32>
    tpu.vector_store %arg13[%c1_234, %c0_235, %c0_236], %413 {strides = array<i32>} : memref<2x8x128xf32, #tpu.memory_space<vmem>>, vector<1x8x128xf32>,
    %c6_i32 = arith.constant 6 : i32
    %c0_237 = arith.constant 0 : index
    %c0_238 = arith.constant 0 : index
    %c0_239 = arith.constant 0 : index
    %414 = vector.load %arg12[%c0_237, %c0_238, %c0_239] : memref<1x8x256xbf16, #tpu.memory_space<vmem>>, vector<1x8x128xbf16>
    %415 = vector.shape_cast %414 : vector<1x8x128xbf16> to vector<8x128xbf16>
    %c0_240 = arith.constant 0 : index
    %c0_241 = arith.constant 0 : index
    %c0_242 = arith.constant 0 : index
    %416 = vector.load %arg13[%c0_240, %c0_241, %c0_242] : memref<2x8x128xf32, #tpu.memory_space<vmem>>, vector<1x8x128xf32>
    %417 = vector.shape_cast %416 : vector<1x8x128xf32> to vector<8x128xf32>
    %418 = arith.index_cast %c6_i32 : i32 to index
    %c0_243 = arith.constant 0 : index
    %c0_244 = arith.constant 0 : index
    %419 = vector.load %arg11[%418, %c0_243, %c0_244] : memref<8x8x512xf32, #tpu.memory_space<vmem>>, vector<1x8x512xf32>
    %420 = vector.shape_cast %419 : vector<1x8x512xf32> to vector<8x512xf32>
    %c0_245 = arith.constant 0 : index
    %c0_246 = arith.constant 0 : index
    %421 = vector.load %arg5[%c0_245, %c0_246] : memref<128x512xbf16, #tpu.memory_space<vmem>>, vector<128x512xbf16>
    %cst_247 = arith.constant dense<0.000000e+00> : vector<8x512xf32>
    %422 = tpu.matmul %415, %421, %cst_247 {dimension_numbers = #tpu.dot_dimension_numbers<[1], [0], [0], [1], [0, 0, 1, 1], [], []>} : vector<8x128xbf16>, vector<128x512xbf16>, vector<8x512xf32> -> vector<8x512xf32>
    %423 = arith.addf %420, %422 : vector<8x512xf32>
    %424 = vector.extract_strided_slice %423 {offsets = [0, 0], sizes = [8, 384], strides = [1, 1]} : vector<8x512xf32> to vector<8x384xf32>
    %425 = arith.negf %424 : vector<8x384xf32>
    %426 = math.exp %425 : vector<8x384xf32>
    %cst_248 = arith.constant 1.000000e+00 : f32
    %427 = vector.broadcast %cst_248 : f32 to vector<8x384xf32>
    %428 = arith.addf %427, %426 : vector<8x384xf32>
    %429 = arith.divf %427, %428 : vector<8x384xf32>
    %430 = vector.extract_strided_slice %429 {offsets = [0, 0], sizes = [8, 128], strides = [1, 1]} : vector<8x384xf32> to vector<8x128xf32>
    %431 = vector.extract_strided_slice %429 {offsets = [0, 128], sizes = [8, 128], strides = [1, 1]} : vector<8x384xf32> to vector<8x128xf32>
    %432 = vector.extract_strided_slice %429 {offsets = [0, 256], sizes = [8, 128], strides = [1, 1]} : vector<8x384xf32> to vector<8x128xf32>
    %433 = vector.extract_strided_slice %423 {offsets = [0, 384], sizes = [8, 128], strides = [1, 1]} : vector<8x512xf32> to vector<8x128xf32>
    %434 = math.tanh %433 : vector<8x128xf32>
    %435 = arith.mulf %431, %417 : vector<8x128xf32>
    %436 = arith.mulf %430, %434 : vector<8x128xf32>
    %437 = arith.addf %435, %436 : vector<8x128xf32>
    %438 = math.tanh %437 : vector<8x128xf32>
    %439 = arith.mulf %432, %438 : vector<8x128xf32>
    %440 = arith.truncf %439 : vector<8x128xf32> to vector<8x128xbf16>
    %c0_249 = arith.constant 0 : index
    %c0_250 = arith.constant 0 : index
    %c0_251 = arith.constant 0 : index
    %441 = vector.load %arg12[%c0_249, %c0_250, %c0_251] : memref<1x8x256xbf16, #tpu.memory_space<vmem>>, vector<1x8x128xbf16>
    %442 = vector.shape_cast %441 : vector<1x8x128xbf16> to vector<8x128xbf16>
    %443 = vector.shape_cast %440 : vector<8x128xbf16> to vector<1x8x128xbf16>
    tpu.vector_store %arg12[%c0_249, %c0_250, %c0_251], %443 {strides = array<i32>} : memref<1x8x256xbf16, #tpu.memory_space<vmem>>, vector<1x8x128xbf16>,
    %c0_252 = arith.constant 0 : index
    %c0_253 = arith.constant 0 : index
    %c0_254 = arith.constant 0 : index
    %444 = vector.load %arg13[%c0_252, %c0_253, %c0_254] : memref<2x8x128xf32, #tpu.memory_space<vmem>>, vector<1x8x128xf32>
    %445 = vector.shape_cast %444 : vector<1x8x128xf32> to vector<8x128xf32>
    %446 = vector.shape_cast %437 : vector<8x128xf32> to vector<1x8x128xf32>
    tpu.vector_store %arg13[%c0_252, %c0_253, %c0_254], %446 {strides = array<i32>} : memref<2x8x128xf32, #tpu.memory_space<vmem>>, vector<1x8x128xf32>,
    %c0_255 = arith.constant 0 : index
    %c0_256 = arith.constant 0 : index
    %c0_257 = arith.constant 0 : index
    %447 = vector.load %arg12[%c0_255, %c0_256, %c0_257] : memref<1x8x256xbf16, #tpu.memory_space<vmem>>, vector<1x8x256xbf16>
    %448 = vector.shape_cast %447 : vector<1x8x256xbf16> to vector<8x256xbf16>
    %c1_258 = arith.constant 1 : index
    %c0_259 = arith.constant 0 : index
    %c0_260 = arith.constant 0 : index
    %449 = vector.load %arg13[%c1_258, %c0_259, %c0_260] : memref<2x8x128xf32, #tpu.memory_space<vmem>>, vector<1x8x128xf32>
    %450 = vector.shape_cast %449 : vector<1x8x128xf32> to vector<8x128xf32>
    %c0_261 = arith.constant 0 : index
    %c0_262 = arith.constant 0 : index
    %c0_263 = arith.constant 0 : index
    %451 = vector.load %arg6[%c0_261, %c0_262, %c0_263] : memref<1x256x512xbf16, #tpu.memory_space<vmem>>, vector<1x256x512xbf16>
    %452 = vector.shape_cast %451 : vector<1x256x512xbf16> to vector<256x512xbf16>
    %cst_264 = arith.constant dense<0.000000e+00> : vector<8x512xf32>
    %453 = tpu.matmul %448, %452, %cst_264 {dimension_numbers = #tpu.dot_dimension_numbers<[1], [0], [0], [1], [0, 0, 1, 1], [], []>} : vector<8x256xbf16>, vector<256x512xbf16>, vector<8x512xf32> -> vector<8x512xf32>
    %c0_265 = arith.constant 0 : index
    %c0_266 = arith.constant 0 : index
    %c0_267 = arith.constant 0 : index
    %454 = vector.load %arg7[%c0_265, %c0_266, %c0_267] : memref<1x1x512xf32, #tpu.memory_space<vmem>>, vector<1x1x512xf32>
    %455 = vector.shape_cast %454 : vector<1x1x512xf32> to vector<1x512xf32>
    %456 = vector.broadcast %455 : vector<1x512xf32> to vector<8x512xf32>
    %457 = arith.addf %453, %456 : vector<8x512xf32>
    %458 = vector.extract_strided_slice %457 {offsets = [0, 0], sizes = [8, 384], strides = [1, 1]} : vector<8x512xf32> to vector<8x384xf32>
    %459 = arith.negf %458 : vector<8x384xf32>
    %460 = math.exp %459 : vector<8x384xf32>
    %cst_268 = arith.constant 1.000000e+00 : f32
    %461 = vector.broadcast %cst_268 : f32 to vector<8x384xf32>
    %462 = arith.addf %461, %460 : vector<8x384xf32>
    %463 = arith.divf %461, %462 : vector<8x384xf32>
    %464 = vector.extract_strided_slice %463 {offsets = [0, 0], sizes = [8, 128], strides = [1, 1]} : vector<8x384xf32> to vector<8x128xf32>
    %465 = vector.extract_strided_slice %463 {offsets = [0, 128], sizes = [8, 128], strides = [1, 1]} : vector<8x384xf32> to vector<8x128xf32>
    %466 = vector.extract_strided_slice %463 {offsets = [0, 256], sizes = [8, 128], strides = [1, 1]} : vector<8x384xf32> to vector<8x128xf32>
    %467 = vector.extract_strided_slice %457 {offsets = [0, 384], sizes = [8, 128], strides = [1, 1]} : vector<8x512xf32> to vector<8x128xf32>
    %468 = math.tanh %467 : vector<8x128xf32>
    %469 = arith.mulf %465, %450 : vector<8x128xf32>
    %470 = arith.mulf %464, %468 : vector<8x128xf32>
    %471 = arith.addf %469, %470 : vector<8x128xf32>
    %472 = math.tanh %471 : vector<8x128xf32>
    %473 = arith.mulf %466, %472 : vector<8x128xf32>
    %474 = arith.truncf %473 : vector<8x128xf32> to vector<8x128xbf16>
    %c0_269 = arith.constant 0 : index
    %c0_270 = arith.constant 0 : index
    %c128_271 = arith.constant 128 : index
    %475 = vector.load %arg12[%c0_269, %c0_270, %c128_271] : memref<1x8x256xbf16, #tpu.memory_space<vmem>>, vector<1x8x128xbf16>
    %476 = vector.shape_cast %475 : vector<1x8x128xbf16> to vector<8x128xbf16>
    %477 = vector.shape_cast %474 : vector<8x128xbf16> to vector<1x8x128xbf16>
    tpu.vector_store %arg12[%c0_269, %c0_270, %c128_271], %477 {strides = array<i32>} : memref<1x8x256xbf16, #tpu.memory_space<vmem>>, vector<1x8x128xbf16>,
    %c1_272 = arith.constant 1 : index
    %c0_273 = arith.constant 0 : index
    %c0_274 = arith.constant 0 : index
    %478 = vector.load %arg13[%c1_272, %c0_273, %c0_274] : memref<2x8x128xf32, #tpu.memory_space<vmem>>, vector<1x8x128xf32>
    %479 = vector.shape_cast %478 : vector<1x8x128xf32> to vector<8x128xf32>
    %480 = vector.shape_cast %471 : vector<8x128xf32> to vector<1x8x128xf32>
    tpu.vector_store %arg13[%c1_272, %c0_273, %c0_274], %480 {strides = array<i32>} : memref<2x8x128xf32, #tpu.memory_space<vmem>>, vector<1x8x128xf32>,
    %c7_i32 = arith.constant 7 : i32
    %c0_275 = arith.constant 0 : index
    %c0_276 = arith.constant 0 : index
    %c0_277 = arith.constant 0 : index
    %481 = vector.load %arg12[%c0_275, %c0_276, %c0_277] : memref<1x8x256xbf16, #tpu.memory_space<vmem>>, vector<1x8x128xbf16>
    %482 = vector.shape_cast %481 : vector<1x8x128xbf16> to vector<8x128xbf16>
    %c0_278 = arith.constant 0 : index
    %c0_279 = arith.constant 0 : index
    %c0_280 = arith.constant 0 : index
    %483 = vector.load %arg13[%c0_278, %c0_279, %c0_280] : memref<2x8x128xf32, #tpu.memory_space<vmem>>, vector<1x8x128xf32>
    %484 = vector.shape_cast %483 : vector<1x8x128xf32> to vector<8x128xf32>
    %485 = arith.index_cast %c7_i32 : i32 to index
    %c0_281 = arith.constant 0 : index
    %c0_282 = arith.constant 0 : index
    %486 = vector.load %arg11[%485, %c0_281, %c0_282] : memref<8x8x512xf32, #tpu.memory_space<vmem>>, vector<1x8x512xf32>
    %487 = vector.shape_cast %486 : vector<1x8x512xf32> to vector<8x512xf32>
    %c0_283 = arith.constant 0 : index
    %c0_284 = arith.constant 0 : index
    %488 = vector.load %arg5[%c0_283, %c0_284] : memref<128x512xbf16, #tpu.memory_space<vmem>>, vector<128x512xbf16>
    %cst_285 = arith.constant dense<0.000000e+00> : vector<8x512xf32>
    %489 = tpu.matmul %482, %488, %cst_285 {dimension_numbers = #tpu.dot_dimension_numbers<[1], [0], [0], [1], [0, 0, 1, 1], [], []>} : vector<8x128xbf16>, vector<128x512xbf16>, vector<8x512xf32> -> vector<8x512xf32>
    %490 = arith.addf %487, %489 : vector<8x512xf32>
    %491 = vector.extract_strided_slice %490 {offsets = [0, 0], sizes = [8, 384], strides = [1, 1]} : vector<8x512xf32> to vector<8x384xf32>
    %492 = arith.negf %491 : vector<8x384xf32>
    %493 = math.exp %492 : vector<8x384xf32>
    %cst_286 = arith.constant 1.000000e+00 : f32
    %494 = vector.broadcast %cst_286 : f32 to vector<8x384xf32>
    %495 = arith.addf %494, %493 : vector<8x384xf32>
    %496 = arith.divf %494, %495 : vector<8x384xf32>
    %497 = vector.extract_strided_slice %496 {offsets = [0, 0], sizes = [8, 128], strides = [1, 1]} : vector<8x384xf32> to vector<8x128xf32>
    %498 = vector.extract_strided_slice %496 {offsets = [0, 128], sizes = [8, 128], strides = [1, 1]} : vector<8x384xf32> to vector<8x128xf32>
    %499 = vector.extract_strided_slice %496 {offsets = [0, 256], sizes = [8, 128], strides = [1, 1]} : vector<8x384xf32> to vector<8x128xf32>
    %500 = vector.extract_strided_slice %490 {offsets = [0, 384], sizes = [8, 128], strides = [1, 1]} : vector<8x512xf32> to vector<8x128xf32>
    %501 = math.tanh %500 : vector<8x128xf32>
    %502 = arith.mulf %498, %484 : vector<8x128xf32>
    %503 = arith.mulf %497, %501 : vector<8x128xf32>
    %504 = arith.addf %502, %503 : vector<8x128xf32>
    %505 = math.tanh %504 : vector<8x128xf32>
    %506 = arith.mulf %499, %505 : vector<8x128xf32>
    %507 = arith.truncf %506 : vector<8x128xf32> to vector<8x128xbf16>
    %c0_287 = arith.constant 0 : index
    %c0_288 = arith.constant 0 : index
    %c0_289 = arith.constant 0 : index
    %508 = vector.load %arg12[%c0_287, %c0_288, %c0_289] : memref<1x8x256xbf16, #tpu.memory_space<vmem>>, vector<1x8x128xbf16>
    %509 = vector.shape_cast %508 : vector<1x8x128xbf16> to vector<8x128xbf16>
    %510 = vector.shape_cast %507 : vector<8x128xbf16> to vector<1x8x128xbf16>
    tpu.vector_store %arg12[%c0_287, %c0_288, %c0_289], %510 {strides = array<i32>} : memref<1x8x256xbf16, #tpu.memory_space<vmem>>, vector<1x8x128xbf16>,
    %c0_290 = arith.constant 0 : index
    %c0_291 = arith.constant 0 : index
    %c0_292 = arith.constant 0 : index
    %511 = vector.load %arg13[%c0_290, %c0_291, %c0_292] : memref<2x8x128xf32, #tpu.memory_space<vmem>>, vector<1x8x128xf32>
    %512 = vector.shape_cast %511 : vector<1x8x128xf32> to vector<8x128xf32>
    %513 = vector.shape_cast %504 : vector<8x128xf32> to vector<1x8x128xf32>
    tpu.vector_store %arg13[%c0_290, %c0_291, %c0_292], %513 {strides = array<i32>} : memref<2x8x128xf32, #tpu.memory_space<vmem>>, vector<1x8x128xf32>,
    %c0_293 = arith.constant 0 : index
    %c0_294 = arith.constant 0 : index
    %c0_295 = arith.constant 0 : index
    %514 = vector.load %arg12[%c0_293, %c0_294, %c0_295] : memref<1x8x256xbf16, #tpu.memory_space<vmem>>, vector<1x8x256xbf16>
    %515 = vector.shape_cast %514 : vector<1x8x256xbf16> to vector<8x256xbf16>
    %c1_296 = arith.constant 1 : index
    %c0_297 = arith.constant 0 : index
    %c0_298 = arith.constant 0 : index
    %516 = vector.load %arg13[%c1_296, %c0_297, %c0_298] : memref<2x8x128xf32, #tpu.memory_space<vmem>>, vector<1x8x128xf32>
    %517 = vector.shape_cast %516 : vector<1x8x128xf32> to vector<8x128xf32>
    %c0_299 = arith.constant 0 : index
    %c0_300 = arith.constant 0 : index
    %c0_301 = arith.constant 0 : index
    %518 = vector.load %arg6[%c0_299, %c0_300, %c0_301] : memref<1x256x512xbf16, #tpu.memory_space<vmem>>, vector<1x256x512xbf16>
    %519 = vector.shape_cast %518 : vector<1x256x512xbf16> to vector<256x512xbf16>
    %cst_302 = arith.constant dense<0.000000e+00> : vector<8x512xf32>
    %520 = tpu.matmul %515, %519, %cst_302 {dimension_numbers = #tpu.dot_dimension_numbers<[1], [0], [0], [1], [0, 0, 1, 1], [], []>} : vector<8x256xbf16>, vector<256x512xbf16>, vector<8x512xf32> -> vector<8x512xf32>
    %c0_303 = arith.constant 0 : index
    %c0_304 = arith.constant 0 : index
    %c0_305 = arith.constant 0 : index
    %521 = vector.load %arg7[%c0_303, %c0_304, %c0_305] : memref<1x1x512xf32, #tpu.memory_space<vmem>>, vector<1x1x512xf32>
    %522 = vector.shape_cast %521 : vector<1x1x512xf32> to vector<1x512xf32>
    %523 = vector.broadcast %522 : vector<1x512xf32> to vector<8x512xf32>
    %524 = arith.addf %520, %523 : vector<8x512xf32>
    %525 = vector.extract_strided_slice %524 {offsets = [0, 0], sizes = [8, 384], strides = [1, 1]} : vector<8x512xf32> to vector<8x384xf32>
    %526 = arith.negf %525 : vector<8x384xf32>
    %527 = math.exp %526 : vector<8x384xf32>
    %cst_306 = arith.constant 1.000000e+00 : f32
    %528 = vector.broadcast %cst_306 : f32 to vector<8x384xf32>
    %529 = arith.addf %528, %527 : vector<8x384xf32>
    %530 = arith.divf %528, %529 : vector<8x384xf32>
    %531 = vector.extract_strided_slice %530 {offsets = [0, 0], sizes = [8, 128], strides = [1, 1]} : vector<8x384xf32> to vector<8x128xf32>
    %532 = vector.extract_strided_slice %530 {offsets = [0, 128], sizes = [8, 128], strides = [1, 1]} : vector<8x384xf32> to vector<8x128xf32>
    %533 = vector.extract_strided_slice %530 {offsets = [0, 256], sizes = [8, 128], strides = [1, 1]} : vector<8x384xf32> to vector<8x128xf32>
    %534 = vector.extract_strided_slice %524 {offsets = [0, 384], sizes = [8, 128], strides = [1, 1]} : vector<8x512xf32> to vector<8x128xf32>
    %535 = math.tanh %534 : vector<8x128xf32>
    %536 = arith.mulf %532, %517 : vector<8x128xf32>
    %537 = arith.mulf %531, %535 : vector<8x128xf32>
    %538 = arith.addf %536, %537 : vector<8x128xf32>
    %539 = math.tanh %538 : vector<8x128xf32>
    %540 = arith.mulf %533, %539 : vector<8x128xf32>
    %541 = arith.truncf %540 : vector<8x128xf32> to vector<8x128xbf16>
    %c0_307 = arith.constant 0 : index
    %c0_308 = arith.constant 0 : index
    %c128_309 = arith.constant 128 : index
    %542 = vector.load %arg12[%c0_307, %c0_308, %c128_309] : memref<1x8x256xbf16, #tpu.memory_space<vmem>>, vector<1x8x128xbf16>
    %543 = vector.shape_cast %542 : vector<1x8x128xbf16> to vector<8x128xbf16>
    %544 = vector.shape_cast %541 : vector<8x128xbf16> to vector<1x8x128xbf16>
    tpu.vector_store %arg12[%c0_307, %c0_308, %c128_309], %544 {strides = array<i32>} : memref<1x8x256xbf16, #tpu.memory_space<vmem>>, vector<1x8x128xbf16>,
    %c1_310 = arith.constant 1 : index
    %c0_311 = arith.constant 0 : index
    %c0_312 = arith.constant 0 : index
    %545 = vector.load %arg13[%c1_310, %c0_311, %c0_312] : memref<2x8x128xf32, #tpu.memory_space<vmem>>, vector<1x8x128xf32>
    %546 = vector.shape_cast %545 : vector<1x8x128xf32> to vector<8x128xf32>
    %547 = vector.shape_cast %538 : vector<8x128xf32> to vector<1x8x128xf32>
    tpu.vector_store %arg13[%c1_310, %c0_311, %c0_312], %547 {strides = array<i32>} : memref<2x8x128xf32, #tpu.memory_space<vmem>>, vector<1x8x128xf32>,
    %c8_i32 = arith.constant 8 : i32
    %c0_i32_313 = arith.constant 0 : i32
    %548 = arith.cmpi eq, %arg1, %c0_i32_313 : i32
    %549 = arith.extui %548 : i1 to i32
    %c0_i32_314 = arith.constant 0 : i32
    %550 = arith.cmpi ne, %549, %c0_i32_314 : i32
    scf.if %550 {
      %c0_315 = arith.constant 0 : index
      %c0_316 = arith.constant 0 : index
      %c128_317 = arith.constant 128 : index
      %551 = vector.load %arg12[%c0_315, %c0_316, %c128_317] : memref<1x8x256xbf16, #tpu.memory_space<vmem>>, vector<1x8x128xbf16>
      %552 = vector.shape_cast %551 : vector<1x8x128xbf16> to vector<8x128xbf16>
      %c0_318 = arith.constant 0 : index
      %c0_319 = arith.constant 0 : index
      %553 = vector.load %arg8[%c0_318, %c0_319] : memref<128x128xbf16, #tpu.memory_space<vmem>>, vector<128x128xbf16>
      %cst_320 = arith.constant dense<0.000000e+00> : vector<8x128xf32>
      %554 = tpu.matmul %552, %553, %cst_320 {dimension_numbers = #tpu.dot_dimension_numbers<[1], [0], [0], [1], [0, 0, 1, 1], [], []>} : vector<8x128xbf16>, vector<128x128xbf16>, vector<8x128xf32> -> vector<8x128xf32>
      %c0_321 = arith.constant 0 : index
      %c0_322 = arith.constant 0 : index
      %555 = vector.load %arg9[%c0_321, %c0_322] : memref<1x128xf32, #tpu.memory_space<vmem>>, vector<1x128xf32>
      %556 = vector.broadcast %555 : vector<1x128xf32> to vector<8x128xf32>
      %557 = arith.addf %554, %556 : vector<8x128xf32>
      %c0_323 = arith.constant 0 : index
      %c0_324 = arith.constant 0 : index
      %558 = vector.load %arg10[%c0_323, %c0_324] : memref<8x128xf32, #tpu.memory_space<vmem>>, vector<8x128xf32>
      tpu.vector_store %arg10[%c0_323, %c0_324], %557 {strides = array<i32>} : memref<8x128xf32, #tpu.memory_space<vmem>>, vector<8x128xf32>,
    } else {
    }
    return
  }
  func.func @transform_0(%arg0: i32, %arg1: i32) -> (i32, i32, i32) {
    %c0_i32 = arith.constant 0 : i32
    %c0_i32_0 = arith.constant 0 : i32
    return %arg1, %arg0, %c0_i32 : i32, i32, i32
  }
  func.func @transform_1(%arg0: i32, %arg1: i32) -> (i32, i32) {
    %c0_i32 = arith.constant 0 : i32
    %c0_i32_0 = arith.constant 0 : i32
    %c0_i32_1 = arith.constant 0 : i32
    return %c0_i32, %c0_i32_0 : i32, i32
  }
  func.func @transform_2(%arg0: i32, %arg1: i32) -> (i32, i32) {
    %c0_i32 = arith.constant 0 : i32
    %c0_i32_0 = arith.constant 0 : i32
    %c0_i32_1 = arith.constant 0 : i32
    return %c0_i32, %c0_i32_0 : i32, i32
  }
  func.func @transform_3(%arg0: i32, %arg1: i32) -> (i32, i32) {
    %c0_i32 = arith.constant 0 : i32
    %c0_i32_0 = arith.constant 0 : i32
    %c0_i32_1 = arith.constant 0 : i32
    return %c0_i32, %c0_i32_0 : i32, i32
  }
  func.func @transform_4(%arg0: i32, %arg1: i32) -> (i32, i32, i32) {
    %c0_i32 = arith.constant 0 : i32
    %c0_i32_0 = arith.constant 0 : i32
    %c0_i32_1 = arith.constant 0 : i32
    %c0_i32_2 = arith.constant 0 : i32
    return %c0_i32, %c0_i32_0, %c0_i32_1 : i32, i32, i32
  }
  func.func @transform_5(%arg0: i32, %arg1: i32) -> (i32, i32, i32) {
    %c0_i32 = arith.constant 0 : i32
    %c0_i32_0 = arith.constant 0 : i32
    %c0_i32_1 = arith.constant 0 : i32
    %c0_i32_2 = arith.constant 0 : i32
    return %c0_i32, %c0_i32_0, %c0_i32_1 : i32, i32, i32
  }
  func.func @transform_6(%arg0: i32, %arg1: i32) -> (i32, i32) {
    %c0_i32 = arith.constant 0 : i32
    %c0_i32_0 = arith.constant 0 : i32
    %c0_i32_1 = arith.constant 0 : i32
    return %c0_i32, %c0_i32_0 : i32, i32
  }
  func.func @transform_7(%arg0: i32, %arg1: i32) -> (i32, i32) {
    %c0_i32 = arith.constant 0 : i32
    %c0_i32_0 = arith.constant 0 : i32
    %c0_i32_1 = arith.constant 0 : i32
    return %c0_i32, %c0_i32_0 : i32, i32
  }
  func.func @transform_8(%arg0: i32, %arg1: i32) -> (i32, i32) {
    %c0_i32 = arith.constant 0 : i32
    %c0_i32_0 = arith.constant 0 : i32
    return %arg0, %c0_i32 : i32, i32
  }
}

</mosaic_0001>

<llo_original>
// kernel: lstm_model_forward.1
$region0: #{lstm_model_forward.1}
  #allocation0 [shape = 'u32[]', space=smem, size = 0x4, offset = 0x4, fixed_abs, tag = 'smem constant byte address 0x4 - core index']
  #allocation1 [shape = 'u32[144,128]{1,0:T(1,128)}', space=vmem, size = 0x12000, scoped, tag = 'internal scratch']
  #allocation2 [shape = 'f32[8,8,512]{2,1,0:T(8,128)}', space=vmem, size = 0x20000, scoped, tag = 'scratch operand']
  #allocation3 [shape = 'bf16[1,8,256]{2,1,0:T(8,128)(2,1)}', space=vmem, size = 0x1000, scoped, tag = 'scratch operand']
  #allocation4 [shape = 'f32[2,8,128]{2,1,0:T(8,128)}', space=vmem, size = 0x2000, scoped, tag = 'scratch operand']
  %s0 = inlined_call_operand.vmem [shape: bf16[8,8,128], index: 0, kind: input, shape index: {}]
  %s1 = inlined_call_operand.hbm [shape: bf16[128,512], index: 1, kind: input, shape index: {}]
  %s2 = inlined_call_operand.vmem [shape: f32[1,512], index: 2, kind: input, shape index: {}]
  %s3 = inlined_call_operand.hbm [shape: bf16[128,512], index: 3, kind: input, shape index: {}]
  %s4 = inlined_call_operand.hbm [shape: bf16[1,256,512], index: 4, kind: input, shape index: {}]
  %s5 = inlined_call_operand.vmem [shape: f32[1,1,512], index: 5, kind: input, shape index: {}]
  %s6 = inlined_call_operand.vmem [shape: bf16[128,128], index: 6, kind: input, shape index: {}]
  %s7 = inlined_call_operand.vmem [shape: f32[1,128], index: 7, kind: input, shape index: {}]
  %s8 = inlined_call_operand.vmem [shape: f32[8,128], index: 8, kind: output, shape index: {}]
  %s9 = sld [smem:[#allocation0]]
  $region62: #{lstm_model_forward.1} parent=0
    _
  %s11 = ssub.s32 1, %s9
  %s12 = scalar_select 0, %s11, %s9
  $region1: #{lstm_model_forward.1} parent=0
    #allocation5 [shape = 'u8[131072]{0}', space=vmem, size = 0x20000, scoped, tag = 'input window, operand 1, single buffered']
    #allocation6 [shape = 's32[1]{0}', space=sflag, size = 0x4, scoped, tag = 'scoped memory for lstm_model_forward.1']
    #allocation7 [shape = 'u8[131072]{0}', space=vmem, size = 0x20000, scoped, tag = 'input window, operand 3, single buffered']
    #allocation8 [shape = 's32[1]{0}', space=sflag, size = 0x4, scoped, tag = 'scoped memory for lstm_model_forward.1']
    #allocation9 [shape = 'u8[262144]{0}', space=vmem, size = 0x40000, scoped, tag = 'input window, operand 4, single buffered']
    %13 = vsyncpa [#allocation6], 0
    %14 = vsyncpa [#allocation8], 0
    // Predicated region
    $region2: #{lstm_model_forward.1} parent=1 // pred_check
      _
    $region3: #{lstm_model_forward.1} parent=1 // pred_check_branch
      %16 = sbr.rel (0) target = $region5
    $region4: #{lstm_model_forward.1} parent=1 // pred_region
      _
    $region5: #{lstm_model_forward.1} parent=1 // pred_fallthru
      _
    // Predicated region
    $region6: #{lstm_model_forward.1} parent=1 // pred_check
      _
    $region7: #{lstm_model_forward.1} parent=1 // pred_check_branch
      %18 = sbr.rel (0) target = $region9
    $region8: #{lstm_model_forward.1} parent=1 // pred_region
      %s20 = ssub.s32 4096, 4096
      %21 = vsyncadd [#allocation6], %s20
      %s22 = sshll.u32 [#allocation5], 4
      %s23 = int_to_ptr.vmem [resolvable:$true] %s22
      %28 = dma.hbm_to_vmem [thread:$0]  %s1, 4096, %s23, [#allocation6], 256, 256, 16
    $region9: #{lstm_model_forward.1} parent=1 // pred_fallthru
      _
    // Predicated region
    $region10: #{lstm_model_forward.1} parent=1 // pred_check
      _
    $region11: #{lstm_model_forward.1} parent=1 // pred_check_branch
      %30 = sbr.rel (0) target = $region13
    $region12: #{lstm_model_forward.1} parent=1 // pred_region
      _
    $region13: #{lstm_model_forward.1} parent=1 // pred_fallthru
      _
    // Predicated region
    $region14: #{lstm_model_forward.1} parent=1 // pred_check
      _
    $region15: #{lstm_model_forward.1} parent=1 // pred_check_branch
      %32 = sbr.rel (0) target = $region17
    $region16: #{lstm_model_forward.1} parent=1 // pred_region
      %s34 = ssub.s32 4096, 4096
      %35 = vsyncadd [#allocation8], %s34
      %s36 = sshll.u32 [#allocation7], 4
      %s37 = int_to_ptr.vmem [resolvable:$true] %s36
      %42 = dma.hbm_to_vmem [thread:$0]  %s3, 4096, %s37, [#allocation8], 256, 256, 16
    $region17: #{lstm_model_forward.1} parent=1 // pred_fallthru
      _
    // Predicated region
    $region18: #{lstm_model_forward.1} parent=1 // pred_check
      _
    $region19: #{lstm_model_forward.1} parent=1 // pred_check_branch
      %44 = sbr.rel (0) target = $region21
    $region20: #{lstm_model_forward.1} parent=1 // pred_region
      %s46 = ssub.s32 8192, 8192
      %47 = vsyncadd [#allocation8], %s46
      %s48 = sshll.u32 [#allocation9], 4
      %s49 = int_to_ptr.vmem [resolvable:$true] %s48
      %54 = dma.hbm_to_vmem [thread:$0]  %s4, 8192, %s49, [#allocation8], 256, 256, 16
    $region21: #{lstm_model_forward.1} parent=1 // pred_fallthru
      _
    // Predicated region
    $region22: #{lstm_model_forward.1} parent=1 // pred_check
      _
    $region23: #{lstm_model_forward.1} parent=1 // pred_check_branch
      %56 = sbr.rel (0) target = $region25
    $region24: #{lstm_model_forward.1} parent=1 // pred_region
      _
    $region25: #{lstm_model_forward.1} parent=1 // pred_fallthru
      _
    // Predicated region
    $region26: #{lstm_model_forward.1} parent=1 // pred_check
      _
    $region27: #{lstm_model_forward.1} parent=1 // pred_check_branch
      %58 = sbr.rel (0) target = $region29
    $region28: #{lstm_model_forward.1} parent=1 // pred_region
      _
    $region29: #{lstm_model_forward.1} parent=1 // pred_fallthru
      _
    // Predicated region
    $region30: #{lstm_model_forward.1} parent=1 // pred_check
      _
    $region31: #{lstm_model_forward.1} parent=1 // pred_check_branch
      %60 = sbr.rel (0) target = $region33
    $region32: #{lstm_model_forward.1} parent=1 // pred_region
      _
    $region33: #{lstm_model_forward.1} parent=1 // pred_fallthru
      _
    // Predicated region
    $region34: #{lstm_model_forward.1} parent=1 // pred_check
      _
    $region35: #{lstm_model_forward.1} parent=1 // pred_check_branch
      %62 = sbr.rel (0) target = $region37
    $region36: #{lstm_model_forward.1} parent=1 // pred_region
      %63 = dma.done [#allocation6], 4096
    $region37: #{lstm_model_forward.1} parent=1 // pred_fallthru
      _
    // Predicated region
    $region38: #{lstm_model_forward.1} parent=1 // pred_check
      _
    $region39: #{lstm_model_forward.1} parent=1 // pred_check_branch
      %65 = sbr.rel (0) target = $region41
    $region40: #{lstm_model_forward.1} parent=1 // pred_region
      %66 = dma.done [#allocation8], 4096
    $region41: #{lstm_model_forward.1} parent=1 // pred_fallthru
      _
    // Predicated region
    $region42: #{lstm_model_forward.1} parent=1 // pred_check
      _
    $region43: #{lstm_model_forward.1} parent=1 // pred_check_branch
      %68 = sbr.rel (0) target = $region45
    $region44: #{lstm_model_forward.1} parent=1 // pred_region
      %69 = dma.done [#allocation8], 8192
    $region45: #{lstm_model_forward.1} parent=1 // pred_fallthru
      _
    %p71 = scmp.eq.s32.totalorder 0, 0
    // Predicated region
    $region46: #{lstm_model_forward.1} parent=1 // pred_check
      %p72 = pneg %p71
    $region47: #{lstm_model_forward.1} parent=1 // pred_check_branch
      %74 = sbr.rel (%p72) target = $region49
    $region48: #{lstm_model_forward.1} parent=1 // pred_region
      %75 = vst [vmem:[#allocation3] sm:$0xff] 0
      %76 = vst [vmem:[#allocation4] sm:$0xff] 0.0
      %77 = vst [vmem:[#allocation4 + $0x8] sm:$0xff] 0.0
    $region49: #{lstm_model_forward.1} parent=1 // pred_fallthru
      _
    %v78 = vld [vmem:[%s0] sm:$0xf]
    %v79 = vld [vmem:[%s0 + $0x4] sm:$0xf]
    %v80 = vld [vmem:[%s0 + $0x8] sm:$0xf]
    %v81 = vld [vmem:[%s0 + $0xc] sm:$0xf]
    %v82 = vld [vmem:[%s0 + $0x10] sm:$0xf]
    %v83 = vld [vmem:[%s0 + $0x14] sm:$0xf]
    %v84 = vld [vmem:[%s0 + $0x18] sm:$0xf]
    %v85 = vld [vmem:[%s0 + $0x1c] sm:$0xf]
    %v86 = vld [vmem:[#allocation5] sm:$0xff]
    %v87 = vld [vmem:[#allocation5 + $0x8] sm:$0xff]
    %v88 = vld [vmem:[#allocation5 + $0x10] sm:$0xff]
    %v89 = vld [vmem:[#allocation5 + $0x18] sm:$0xff]
    %v90 = vld [vmem:[#allocation5 + $0x20] sm:$0xff]
    %v91 = vld [vmem:[#allocation5 + $0x28] sm:$0xff]
    %v92 = vld [vmem:[#allocation5 + $0x30] sm:$0xff]
    %v93 = vld [vmem:[#allocation5 + $0x38] sm:$0xff]
    %v94 = vld [vmem:[#allocation5 + $0x40] sm:$0xff]
    %v95 = vld [vmem:[#allocation5 + $0x48] sm:$0xff]
    %v96 = vld [vmem:[#allocation5 + $0x50] sm:$0xff]
    %v97 = vld [vmem:[#allocation5 + $0x58] sm:$0xff]
    %v98 = vld [vmem:[#allocation5 + $0x60] sm:$0xff]
    %v99 = vld [vmem:[#allocation5 + $0x68] sm:$0xff]
    %v100 = vld [vmem:[#allocation5 + $0x70] sm:$0xff]
    %v101 = vld [vmem:[#allocation5 + $0x78] sm:$0xff]
    %v102 = vld [vmem:[#allocation5 + $0x80] sm:$0xff]
    %v103 = vld [vmem:[#allocation5 + $0x88] sm:$0xff]
    %v104 = vld [vmem:[#allocation5 + $0x90] sm:$0xff]
    %v105 = vld [vmem:[#allocation5 + $0x98] sm:$0xff]
    %v106 = vld [vmem:[#allocation5 + $0xa0] sm:$0xff]
    %v107 = vld [vmem:[#allocation5 + $0xa8] sm:$0xff]
    %v108 = vld [vmem:[#allocation5 + $0xb0] sm:$0xff]
    %v109 = vld [vmem:[#allocation5 + $0xb8] sm:$0xff]
    %v110 = vld [vmem:[#allocation5 + $0xc0] sm:$0xff]
    %v111 = vld [vmem:[#allocation5 + $0xc8] sm:$0xff]
    %v112 = vld [vmem:[#allocation5 + $0xd0] sm:$0xff]
    %v113 = vld [vmem:[#allocation5 + $0xd8] sm:$0xff]
    %v114 = vld [vmem:[#allocation5 + $0xe0] sm:$0xff]
    %v115 = vld [vmem:[#allocation5 + $0xe8] sm:$0xff]
    %v116 = vld [vmem:[#allocation5 + $0xf0] sm:$0xff]
    %v117 = vld [vmem:[#allocation5 + $0xf8] sm:$0xff]
    %v118 = vld [vmem:[%s2] sm:$0xf]
    %v120 = vlaneseq
    %v121 = vshrl.u32 %v120, 7
    %v122 = vsub.s32 0, %v121
    %v123 = vrot.slane %v118, %v122
    %v124 = vlaneseq
    %v125 = vshrl.u32 %v124, 7
    %v126 = vsub.s32 1, %v125
    %v127 = vrot.slane %v118, %v126
    %v128 = vlaneseq
    %v129 = vshrl.u32 %v128, 7
    %v130 = vsub.s32 2, %v129
    %v131 = vrot.slane %v118, %v130
    %v132 = vlaneseq
    %v133 = vshrl.u32 %v132, 7
    %v134 = vsub.s32 3, %v133
    %v135 = vrot.slane %v118, %v134
    %v148 = vunpack.c.l.b16 %v78
    %v149 = vunpack.c.l.b16 %v79
    %v150 = vunpack.c.l.b16 %v80
    %v151 = vunpack.c.l.b16 %v81
    %v152 = vunpack.c.l.b16 %v82
    %v153 = vunpack.c.l.b16 %v83
    %v154 = vunpack.c.l.b16 %v84
    %v155 = vunpack.c.l.b16 %v85
    %v156 = vpack.c.b16 %v149, %v148
    %v157 = vpack.c.b16 %v151, %v150
    %v158 = vpack.c.b16 %v153, %v152
    %v159 = vpack.c.b16 %v155, %v154
    %v196 = vunpack.c.l.b16 %v86
    %v197 = vunpack.c.h.b16 %v86
    %v198 = vunpack.c.l.b16 %v87
    %v199 = vunpack.c.h.b16 %v87
    %v200 = vunpack.c.l.b16 %v88
    %v201 = vunpack.c.h.b16 %v88
    %v202 = vunpack.c.l.b16 %v89
    %v203 = vunpack.c.h.b16 %v89
    %v204 = vunpack.c.l.b16 %v90
    %v205 = vunpack.c.h.b16 %v90
    %v206 = vunpack.c.l.b16 %v91
    %v207 = vunpack.c.h.b16 %v91
    %v208 = vunpack.c.l.b16 %v92
    %v209 = vunpack.c.h.b16 %v92
    %v210 = vunpack.c.l.b16 %v93
    %v211 = vunpack.c.h.b16 %v93
    %v212 = vunpack.c.l.b16 %v94
    %v213 = vunpack.c.h.b16 %v94
    %v214 = vunpack.c.l.b16 %v95
    %v215 = vunpack.c.h.b16 %v95
    %v216 = vunpack.c.l.b16 %v96
    %v217 = vunpack.c.h.b16 %v96
    %v218 = vunpack.c.l.b16 %v97
    %v219 = vunpack.c.h.b16 %v97
    %v220 = vunpack.c.l.b16 %v98
    %v221 = vunpack.c.h.b16 %v98
    %v222 = vunpack.c.l.b16 %v99
    %v223 = vunpack.c.h.b16 %v99
    %v224 = vunpack.c.l.b16 %v100
    %v225 = vunpack.c.h.b16 %v100
    %v226 = vunpack.c.l.b16 %v101
    %v227 = vunpack.c.h.b16 %v101
    %v228 = vunpack.c.l.b16 %v102
    %v229 = vunpack.c.h.b16 %v102
    %v230 = vunpack.c.l.b16 %v103
    %v231 = vunpack.c.h.b16 %v103
    %v232 = vunpack.c.l.b16 %v104
    %v233 = vunpack.c.h.b16 %v104
    %v234 = vunpack.c.l.b16 %v105
    %v235 = vunpack.c.h.b16 %v105
    %v236 = vunpack.c.l.b16 %v106
    %v237 = vunpack.c.h.b16 %v106
    %v238 = vunpack.c.l.b16 %v107
    %v239 = vunpack.c.h.b16 %v107
    %v240 = vunpack.c.l.b16 %v108
    %v241 = vunpack.c.h.b16 %v108
    %v242 = vunpack.c.l.b16 %v109
    %v243 = vunpack.c.h.b16 %v109
    %v244 = vunpack.c.l.b16 %v110
    %v245 = vunpack.c.h.b16 %v110
    %v246 = vunpack.c.l.b16 %v111
    %v247 = vunpack.c.h.b16 %v111
    %v248 = vunpack.c.l.b16 %v112
    %v249 = vunpack.c.h.b16 %v112
    %v250 = vunpack.c.l.b16 %v113
    %v251 = vunpack.c.h.b16 %v113
    %v252 = vunpack.c.l.b16 %v114
    %v253 = vunpack.c.h.b16 %v114
    %v254 = vunpack.c.l.b16 %v115
    %v255 = vunpack.c.h.b16 %v115
    %v256 = vunpack.c.l.b16 %v116
    %v257 = vunpack.c.h.b16 %v116
    %v258 = vunpack.c.l.b16 %v117
    %v259 = vunpack.c.h.b16 %v117
    %v260 = vpack.c.b16 %v200, %v196
    %v261 = vpack.c.b16 %v201, %v197
    %v262 = vpack.c.b16 %v202, %v198
    %v263 = vpack.c.b16 %v203, %v199
    %v264 = vpack.c.b16 %v208, %v204
    %v265 = vpack.c.b16 %v209, %v205
    %v266 = vpack.c.b16 %v210, %v206
    %v267 = vpack.c.b16 %v211, %v207
    %v268 = vpack.c.b16 %v216, %v212
    %v269 = vpack.c.b16 %v217, %v213
    %v270 = vpack.c.b16 %v218, %v214
    %v271 = vpack.c.b16 %v219, %v215
    %v272 = vpack.c.b16 %v224, %v220
    %v273 = vpack.c.b16 %v225, %v221
    %v274 = vpack.c.b16 %v226, %v222
    %v275 = vpack.c.b16 %v227, %v223
    %v276 = vpack.c.b16 %v232, %v228
    %v277 = vpack.c.b16 %v233, %v229
    %v278 = vpack.c.b16 %v234, %v230
    %v279 = vpack.c.b16 %v235, %v231
    %v280 = vpack.c.b16 %v240, %v236
    %v281 = vpack.c.b16 %v241, %v237
    %v282 = vpack.c.b16 %v242, %v238
    %v283 = vpack.c.b16 %v243, %v239
    %v284 = vpack.c.b16 %v248, %v244
    %v285 = vpack.c.b16 %v249, %v245
    %v286 = vpack.c.b16 %v250, %v246
    %v287 = vpack.c.b16 %v251, %v247
    %v288 = vpack.c.b16 %v256, %v252
    %v289 = vpack.c.b16 %v257, %v253
    %v290 = vpack.c.b16 %v258, %v254
    %v291 = vpack.c.b16 %v259, %v255
    %324 = vmatprep.subr.bf16.mxu0 %v261
    %325 = vmatpush1.bf16.msra.mxu0 %v260
    %326 = vmatprep.subr.bf16.mxu0 %v265
    %327 = vmatpush1.bf16.msra.mxu0 %v264
    %328 = vmatprep.subr.bf16.mxu0 %v269
    %329 = vmatpush1.bf16.msra.mxu0 %v268
    %330 = vmatprep.subr.bf16.mxu0 %v273
    %331 = vmatpush1.bf16.msra.mxu0 %v272
    %332 = vmatprep.subr.bf16.mxu0 %v277
    %333 = vmatpush1.bf16.msra.mxu0 %v276
    %334 = vmatprep.subr.bf16.mxu0 %v281
    %335 = vmatpush1.bf16.msra.mxu0 %v280
    %336 = vmatprep.subr.bf16.mxu0 %v285
    %337 = vmatpush1.bf16.msra.mxu0 %v284
    %338 = vmatprep.subr.bf16.mxu0 %v289
    %339 = vmatpush1.bf16.msra.mxu0 %v288
    %340 = vmatprep.subr.bf16.mxu0 0
    %341 = vmatpush1.bf16.msra.mxu0 0
    %342 = vmatprep.subr.bf16.mxu0 0
    %343 = vmatpush1.bf16.msra.mxu0 0
    %344 = vmatprep.subr.bf16.mxu0 0
    %345 = vmatpush1.bf16.msra.mxu0 0
    %346 = vmatprep.subr.bf16.mxu0 0
    %347 = vmatpush1.bf16.msra.mxu0 0
    %348 = vmatprep.subr.bf16.mxu0 0
    %349 = vmatpush1.bf16.msra.mxu0 0
    %350 = vmatprep.subr.bf16.mxu0 0
    %351 = vmatpush1.bf16.msra.mxu0 0
    %352 = vmatprep.subr.bf16.mxu0 0
    %353 = vmatpush1.bf16.msra.mxu0 0
    %354 = vmatprep.subr.bf16.mxu0 0
    %355 = vmatpush1.bf16.msra.mxu0 0
    %356 = vmatprep.mubr.bf16.mxu0 0
    %357 = vmatmul.mubr.bf16.gmra.mrb[0].mxu0 %v156
    %v358 = vpop.f32.mrb[0].mxu0
    %v359 = vadd.f32 %v123, %v358
    %v360 = vpop.f32.mrb[0].mxu0
    %v361 = vadd.f32 %v127, %v360
    %v362 = vpop.f32.mrb[0].mxu0
    %v363 = vadd.f32 %v123, %v362
    %v364 = vpop.f32.mrb[0].mxu0
    %v365 = vadd.f32 %v127, %v364
    %366 = vmatprep.mubr.bf16.mxu0 0
    %367 = vmatmul.mubr.bf16.gmra.mrb[0].mxu0 %v157
    %v368 = vpop.f32.mrb[0].mxu0
    %v369 = vadd.f32 %v123, %v368
    %v370 = vpop.f32.mrb[0].mxu0
    %v371 = vadd.f32 %v127, %v370
    %v372 = vpop.f32.mrb[0].mxu0
    %v373 = vadd.f32 %v123, %v372
    %v374 = vpop.f32.mrb[0].mxu0
    %v375 = vadd.f32 %v127, %v374
    %376 = vmatprep.mubr.bf16.mxu0 0
    %377 = vmatmul.mubr.bf16.gmra.mrb[0].mxu0 %v158
    %v378 = vpop.f32.mrb[0].mxu0
    %v379 = vadd.f32 %v123, %v378
    %v380 = vpop.f32.mrb[0].mxu0
    %v381 = vadd.f32 %v127, %v380
    %v382 = vpop.f32.mrb[0].mxu0
    %v383 = vadd.f32 %v123, %v382
    %v384 = vpop.f32.mrb[0].mxu0
    %v385 = vadd.f32 %v127, %v384
    %386 = vmatprep.mubr.bf16.mxu0 0
    %387 = vmatmul.mubr.bf16.gmra.mrb[0].mxu0 %v159
    %v388 = vpop.f32.mrb[0].mxu0
    %v389 = vadd.f32 %v123, %v388
    %v390 = vpop.f32.mrb[0].mxu0
    %v391 = vadd.f32 %v127, %v390
    %v392 = vpop.f32.mrb[0].mxu0
    %v393 = vadd.f32 %v123, %v392
    %v394 = vpop.f32.mrb[0].mxu0
    %v395 = vadd.f32 %v127, %v394
    %396 = vdwg.mxu0
    %397 = vmatprep.subr.bf16.mxu0 %v263
    %398 = vmatpush1.bf16.msra.mxu0 %v262
    %399 = vmatprep.subr.bf16.mxu0 %v267
    %400 = vmatpush1.bf16.msra.mxu0 %v266
    %401 = vmatprep.subr.bf16.mxu0 %v271
    %402 = vmatpush1.bf16.msra.mxu0 %v270
    %403 = vmatprep.subr.bf16.mxu0 %v275
    %404 = vmatpush1.bf16.msra.mxu0 %v274
    %405 = vmatprep.subr.bf16.mxu0 %v279
    %406 = vmatpush1.bf16.msra.mxu0 %v278
    %407 = vmatprep.subr.bf16.mxu0 %v283
    %408 = vmatpush1.bf16.msra.mxu0 %v282
    %409 = vmatprep.subr.bf16.mxu0 %v287
    %410 = vmatpush1.bf16.msra.mxu0 %v286
    %411 = vmatprep.subr.bf16.mxu0 %v291
    %412 = vmatpush1.bf16.msra.mxu0 %v290
    %413 = vmatprep.subr.bf16.mxu0 0
    %414 = vmatpush1.bf16.msra.mxu0 0
    %415 = vmatprep.subr.bf16.mxu0 0
    %416 = vmatpush1.bf16.msra.mxu0 0
    %417 = vmatprep.subr.bf16.mxu0 0
    %418 = vmatpush1.bf16.msra.mxu0 0
    %419 = vmatprep.subr.bf16.mxu0 0
    %420 = vmatpush1.bf16.msra.mxu0 0
    %421 = vmatprep.subr.bf16.mxu0 0
    %422 = vmatpush1.bf16.msra.mxu0 0
    %423 = vmatprep.subr.bf16.mxu0 0
    %424 = vmatpush1.bf16.msra.mxu0 0
    %425 = vmatprep.subr.bf16.mxu0 0
    %426 = vmatpush1.bf16.msra.mxu0 0
    %427 = vmatprep.subr.bf16.mxu0 0
    %428 = vmatpush1.bf16.msra.mxu0 0
    %429 = vmatprep.mubr.bf16.mxu0 0
    %430 = vmatmul.mubr.bf16.gmra.mrb[0].mxu0 %v156
    %v431 = vpop.f32.mrb[0].mxu0
    %v432 = vadd.f32 %v131, %v431
    %v433 = vpop.f32.mrb[0].mxu0
    %v434 = vadd.f32 %v135, %v433
    %v435 = vpop.f32.mrb[0].mxu0
    %v436 = vadd.f32 %v131, %v435
    %v437 = vpop.f32.mrb[0].mxu0
    %v438 = vadd.f32 %v135, %v437
    %439 = vmatprep.mubr.bf16.mxu0 0
    %440 = vmatmul.mubr.bf16.gmra.mrb[0].mxu0 %v157
    %v441 = vpop.f32.mrb[0].mxu0
    %v442 = vadd.f32 %v131, %v441
    %v443 = vpop.f32.mrb[0].mxu0
    %v444 = vadd.f32 %v135, %v443
    %v445 = vpop.f32.mrb[0].mxu0
    %v446 = vadd.f32 %v131, %v445
    %v447 = vpop.f32.mrb[0].mxu0
    %v448 = vadd.f32 %v135, %v447
    %449 = vmatprep.mubr.bf16.mxu0 0
    %450 = vmatmul.mubr.bf16.gmra.mrb[0].mxu0 %v158
    %v451 = vpop.f32.mrb[0].mxu0
    %v452 = vadd.f32 %v131, %v451
    %v453 = vpop.f32.mrb[0].mxu0
    %v454 = vadd.f32 %v135, %v453
    %v455 = vpop.f32.mrb[0].mxu0
    %v456 = vadd.f32 %v131, %v455
    %v457 = vpop.f32.mrb[0].mxu0
    %v458 = vadd.f32 %v135, %v457
    %459 = vmatprep.mubr.bf16.mxu0 0
    %460 = vmatmul.mubr.bf16.gmra.mrb[0].mxu0 %v159
    %v461 = vpop.f32.mrb[0].mxu0
    %v462 = vadd.f32 %v131, %v461
    %v463 = vpop.f32.mrb[0].mxu0
    %v464 = vadd.f32 %v135, %v463
    %v465 = vpop.f32.mrb[0].mxu0
    %v466 = vadd.f32 %v131, %v465
    %v467 = vpop.f32.mrb[0].mxu0
    %v468 = vadd.f32 %v135, %v467
    %469 = vdwg.mxu0
    %470 = vst [vmem:[#allocation2] sm:$0xff] %v359
    %471 = vst [vmem:[#allocation2 + $0x8] sm:$0xff] %v361
    %472 = vst [vmem:[#allocation2 + $0x10] sm:$0xff] %v432
    %473 = vst [vmem:[#allocation2 + $0x18] sm:$0xff] %v434
    %474 = vst [vmem:[#allocation2 + $0x20] sm:$0xff] %v363
    %475 = vst [vmem:[#allocation2 + $0x28] sm:$0xff] %v365
    %476 = vst [vmem:[#allocation2 + $0x30] sm:$0xff] %v436
    %477 = vst [vmem:[#allocation2 + $0x38] sm:$0xff] %v438
    %478 = vst [vmem:[#allocation2 + $0x40] sm:$0xff] %v369
    %479 = vst [vmem:[#allocation2 + $0x48] sm:$0xff] %v371
    %480 = vst [vmem:[#allocation2 + $0x50] sm:$0xff] %v442
    %481 = vst [vmem:[#allocation2 + $0x58] sm:$0xff] %v444
    %482 = vst [vmem:[#allocation2 + $0x60] sm:$0xff] %v373
    %483 = vst [vmem:[#allocation2 + $0x68] sm:$0xff] %v375
    %484 = vst [vmem:[#allocation2 + $0x70] sm:$0xff] %v446
    %485 = vst [vmem:[#allocation2 + $0x78] sm:$0xff] %v448
    %486 = vst [vmem:[#allocation2 + $0x80] sm:$0xff] %v379
    %487 = vst [vmem:[#allocation2 + $0x88] sm:$0xff] %v381
    %488 = vst [vmem:[#allocation2 + $0x90] sm:$0xff] %v452
    %489 = vst [vmem:[#allocation2 + $0x98] sm:$0xff] %v454
    %490 = vst [vmem:[#allocation2 + $0xa0] sm:$0xff] %v383
    %491 = vst [vmem:[#allocation2 + $0xa8] sm:$0xff] %v385
    %492 = vst [vmem:[#allocation2 + $0xb0] sm:$0xff] %v456
    %493 = vst [vmem:[#allocation2 + $0xb8] sm:$0xff] %v458
    %494 = vst [vmem:[#allocation2 + $0xc0] sm:$0xff] %v389
    %495 = vst [vmem:[#allocation2 + $0xc8] sm:$0xff] %v391
    %496 = vst [vmem:[#allocation2 + $0xd0] sm:$0xff] %v462
    %497 = vst [vmem:[#allocation2 + $0xd8] sm:$0xff] %v464
    %498 = vst [vmem:[#allocation2 + $0xe0] sm:$0xff] %v393
    %499 = vst [vmem:[#allocation2 + $0xe8] sm:$0xff] %v395
    %500 = vst [vmem:[#allocation2 + $0xf0] sm:$0xff] %v466
    %501 = vst [vmem:[#allocation2 + $0xf8] sm:$0xff] %v468
    %v502 = vld [vmem:[#allocation3] sm:$0xf]
    %v503 = vld [vmem:[#allocation4] sm:$0xff]
    %v504 = vld [vmem:[#allocation2] sm:$0xff]
    %v505 = vld [vmem:[#allocation2 + $0x8] sm:$0xff]
    %v506 = vld [vmem:[#allocation2 + $0x10] sm:$0xff]
    %v507 = vld [vmem:[#allocation2 + $0x18] sm:$0xff]
    %v508 = vld [vmem:[#allocation7] sm:$0xff]
    %v509 = vld [vmem:[#allocation7 + $0x8] sm:$0xff]
    %v510 = vld [vmem:[#allocation7 + $0x10] sm:$0xff]
    %v511 = vld [vmem:[#allocation7 + $0x18] sm:$0xff]
    %v512 = vld [vmem:[#allocation7 + $0x20] sm:$0xff]
    %v513 = vld [vmem:[#allocation7 + $0x28] sm:$0xff]
    %v514 = vld [vmem:[#allocation7 + $0x30] sm:$0xff]
    %v515 = vld [vmem:[#allocation7 + $0x38] sm:$0xff]
    %v516 = vld [vmem:[#allocation7 + $0x40] sm:$0xff]
    %v517 = vld [vmem:[#allocation7 + $0x48] sm:$0xff]
    %v518 = vld [vmem:[#allocation7 + $0x50] sm:$0xff]
    %v519 = vld [vmem:[#allocation7 + $0x58] sm:$0xff]
    %v520 = vld [vmem:[#allocation7 + $0x60] sm:$0xff]
    %v521 = vld [vmem:[#allocation7 + $0x68] sm:$0xff]
    %v522 = vld [vmem:[#allocation7 + $0x70] sm:$0xff]
    %v523 = vld [vmem:[#allocation7 + $0x78] sm:$0xff]
    %v524 = vld [vmem:[#allocation7 + $0x80] sm:$0xff]
    %v525 = vld [vmem:[#allocation7 + $0x88] sm:$0xff]
    %v526 = vld [vmem:[#allocation7 + $0x90] sm:$0xff]
    %v527 = vld [vmem:[#allocation7 + $0x98] sm:$0xff]
    %v528 = vld [vmem:[#allocation7 + $0xa0] sm:$0xff]
    %v529 = vld [vmem:[#allocation7 + $0xa8] sm:$0xff]
    %v530 = vld [vmem:[#allocation7 + $0xb0] sm:$0xff]
    %v531 = vld [vmem:[#allocation7 + $0xb8] sm:$0xff]
    %v532 = vld [vmem:[#allocation7 + $0xc0] sm:$0xff]
    %v533 = vld [vmem:[#allocation7 + $0xc8] sm:$0xff]
    %v534 = vld [vmem:[#allocation7 + $0xd0] sm:$0xff]
    %v535 = vld [vmem:[#allocation7 + $0xd8] sm:$0xff]
    %v536 = vld [vmem:[#allocation7 + $0xe0] sm:$0xff]
    %v537 = vld [vmem:[#allocation7 + $0xe8] sm:$0xff]
    %v538 = vld [vmem:[#allocation7 + $0xf0] sm:$0xff]
    %v539 = vld [vmem:[#allocation7 + $0xf8] sm:$0xff]
    %v572 = vunpack.c.l.b16 %v508
    %v573 = vunpack.c.h.b16 %v508
    %v574 = vunpack.c.l.b16 %v509
    %v575 = vunpack.c.h.b16 %v509
    %v576 = vunpack.c.l.b16 %v510
    %v577 = vunpack.c.h.b16 %v510
    %v578 = vunpack.c.l.b16 %v511
    %v579 = vunpack.c.h.b16 %v511
    %v580 = vunpack.c.l.b16 %v512
    %v581 = vunpack.c.h.b16 %v512
    %v582 = vunpack.c.l.b16 %v513
    %v583 = vunpack.c.h.b16 %v513
    %v584 = vunpack.c.l.b16 %v514
    %v585 = vunpack.c.h.b16 %v514
    %v586 = vunpack.c.l.b16 %v515
    %v587 = vunpack.c.h.b16 %v515
    %v588 = vunpack.c.l.b16 %v516
    %v589 = vunpack.c.h.b16 %v516
    %v590 = vunpack.c.l.b16 %v517
    %v591 = vunpack.c.h.b16 %v517
    %v592 = vunpack.c.l.b16 %v518
    %v593 = vunpack.c.h.b16 %v518
    %v594 = vunpack.c.l.b16 %v519
    %v595 = vunpack.c.h.b16 %v519
    %v596 = vunpack.c.l.b16 %v520
    %v597 = vunpack.c.h.b16 %v520
    %v598 = vunpack.c.l.b16 %v521
    %v599 = vunpack.c.h.b16 %v521
    %v600 = vunpack.c.l.b16 %v522
    %v601 = vunpack.c.h.b16 %v522
    %v602 = vunpack.c.l.b16 %v523
    %v603 = vunpack.c.h.b16 %v523
    %v604 = vunpack.c.l.b16 %v524
    %v605 = vunpack.c.h.b16 %v524
    %v606 = vunpack.c.l.b16 %v525
    %v607 = vunpack.c.h.b16 %v525
    %v608 = vunpack.c.l.b16 %v526
    %v609 = vunpack.c.h.b16 %v526
    %v610 = vunpack.c.l.b16 %v527
    %v611 = vunpack.c.h.b16 %v527
    %v612 = vunpack.c.l.b16 %v528
    %v613 = vunpack.c.h.b16 %v528
    %v614 = vunpack.c.l.b16 %v529
    %v615 = vunpack.c.h.b16 %v529
    %v616 = vunpack.c.l.b16 %v530
    %v617 = vunpack.c.h.b16 %v530
    %v618 = vunpack.c.l.b16 %v531
    %v619 = vunpack.c.h.b16 %v531
    %v620 = vunpack.c.l.b16 %v532
    %v621 = vunpack.c.h.b16 %v532
    %v622 = vunpack.c.l.b16 %v533
    %v623 = vunpack.c.h.b16 %v533
    %v624 = vunpack.c.l.b16 %v534
    %v625 = vunpack.c.h.b16 %v534
    %v626 = vunpack.c.l.b16 %v535
    %v627 = vunpack.c.h.b16 %v535
    %v628 = vunpack.c.l.b16 %v536
    %v629 = vunpack.c.h.b16 %v536
    %v630 = vunpack.c.l.b16 %v537
    %v631 = vunpack.c.h.b16 %v537
    %v632 = vunpack.c.l.b16 %v538
    %v633 = vunpack.c.h.b16 %v538
    %v634 = vunpack.c.l.b16 %v539
    %v635 = vunpack.c.h.b16 %v539
    %v636 = vpack.c.b16 %v576, %v572
    %v637 = vpack.c.b16 %v577, %v573
    %v638 = vpack.c.b16 %v578, %v574
    %v639 = vpack.c.b16 %v579, %v575
    %v640 = vpack.c.b16 %v584, %v580
    %v641 = vpack.c.b16 %v585, %v581
    %v642 = vpack.c.b16 %v586, %v582
    %v643 = vpack.c.b16 %v587, %v583
    %v644 = vpack.c.b16 %v592, %v588
    %v645 = vpack.c.b16 %v593, %v589
    %v646 = vpack.c.b16 %v594, %v590
    %v647 = vpack.c.b16 %v595, %v591
    %v648 = vpack.c.b16 %v600, %v596
    %v649 = vpack.c.b16 %v601, %v597
    %v650 = vpack.c.b16 %v602, %v598
    %v651 = vpack.c.b16 %v603, %v599
    %v652 = vpack.c.b16 %v608, %v604
    %v653 = vpack.c.b16 %v609, %v605
    %v654 = vpack.c.b16 %v610, %v606
    %v655 = vpack.c.b16 %v611, %v607
    %v656 = vpack.c.b16 %v616, %v612
    %v657 = vpack.c.b16 %v617, %v613
    %v658 = vpack.c.b16 %v618, %v614
    %v659 = vpack.c.b16 %v619, %v615
    %v660 = vpack.c.b16 %v624, %v620
    %v661 = vpack.c.b16 %v625, %v621
    %v662 = vpack.c.b16 %v626, %v622
    %v663 = vpack.c.b16 %v627, %v623
    %v664 = vpack.c.b16 %v632, %v628
    %v665 = vpack.c.b16 %v633, %v629
    %v666 = vpack.c.b16 %v634, %v630
    %v667 = vpack.c.b16 %v635, %v631
    %700 = vmatprep.subr.bf16.mxu0 %v637
    %701 = vmatpush1.bf16.msra.mxu0 %v636
    %702 = vmatprep.subr.bf16.mxu0 %v641
    %703 = vmatpush1.bf16.msra.mxu0 %v640
    %704 = vmatprep.subr.bf16.mxu0 %v645
    %705 = vmatpush1.bf16.msra.mxu0 %v644
    %706 = vmatprep.subr.bf16.mxu0 %v649
    %707 = vmatpush1.bf16.msra.mxu0 %v648
    %708 = vmatprep.subr.bf16.mxu0 %v653
    %709 = vmatpush1.bf16.msra.mxu0 %v652
    %710 = vmatprep.subr.bf16.mxu0 %v657
    %711 = vmatpush1.bf16.msra.mxu0 %v656
    %712 = vmatprep.subr.bf16.mxu0 %v661
    %713 = vmatpush1.bf16.msra.mxu0 %v660
    %714 = vmatprep.subr.bf16.mxu0 %v665
    %715 = vmatpush1.bf16.msra.mxu0 %v664
    %716 = vmatprep.subr.bf16.mxu0 0
    %717 = vmatpush1.bf16.msra.mxu0 0
    %718 = vmatprep.subr.bf16.mxu0 0
    %719 = vmatpush1.bf16.msra.mxu0 0
    %720 = vmatprep.subr.bf16.mxu0 0
    %721 = vmatpush1.bf16.msra.mxu0 0
    %722 = vmatprep.subr.bf16.mxu0 0
    %723 = vmatpush1.bf16.msra.mxu0 0
    %724 = vmatprep.subr.bf16.mxu0 0
    %725 = vmatpush1.bf16.msra.mxu0 0
    %726 = vmatprep.subr.bf16.mxu0 0
    %727 = vmatpush1.bf16.msra.mxu0 0
    %728 = vmatprep.subr.bf16.mxu0 0
    %729 = vmatpush1.bf16.msra.mxu0 0
    %730 = vmatprep.subr.bf16.mxu0 0
    %731 = vmatpush1.bf16.msra.mxu0 0
    %732 = vmatprep.mubr.bf16.mxu0 0
    %733 = vmatmul.mubr.bf16.gmra.mrb[0].mxu0 %v502
    %v734 = vpop.f32.mrb[0].mxu0
    %v735 = vadd.f32 0.0, %v734
    %v736 = vpop.f32.mrb[0].mxu0
    %v737 = vadd.f32 0.0, %v736
    %v738 = vpop.f32.mrb[0].mxu0
    %v739 = vpop.f32.mrb[0].mxu0
    %740 = vdwg.mxu0
    %741 = vmatprep.subr.bf16.mxu0 %v639
    %742 = vmatpush1.bf16.msra.mxu0 %v638
    %743 = vmatprep.subr.bf16.mxu0 %v643
    %744 = vmatpush1.bf16.msra.mxu0 %v642
    %745 = vmatprep.subr.bf16.mxu0 %v647
    %746 = vmatpush1.bf16.msra.mxu0 %v646
    %747 = vmatprep.subr.bf16.mxu0 %v651
    %748 = vmatpush1.bf16.msra.mxu0 %v650
    %749 = vmatprep.subr.bf16.mxu0 %v655
    %750 = vmatpush1.bf16.msra.mxu0 %v654
    %751 = vmatprep.subr.bf16.mxu0 %v659
    %752 = vmatpush1.bf16.msra.mxu0 %v658
    %753 = vmatprep.subr.bf16.mxu0 %v663
    %754 = vmatpush1.bf16.msra.mxu0 %v662
    %755 = vmatprep.subr.bf16.mxu0 %v667
    %756 = vmatpush1.bf16.msra.mxu0 %v666
    %757 = vmatprep.subr.bf16.mxu0 0
    %758 = vmatpush1.bf16.msra.mxu0 0
    %759 = vmatprep.subr.bf16.mxu0 0
    %760 = vmatpush1.bf16.msra.mxu0 0
    %761 = vmatprep.subr.bf16.mxu0 0
    %762 = vmatpush1.bf16.msra.mxu0 0
    %763 = vmatprep.subr.bf16.mxu0 0
    %764 = vmatpush1.bf16.msra.mxu0 0
    %765 = vmatprep.subr.bf16.mxu0 0
    %766 = vmatpush1.bf16.msra.mxu0 0
    %767 = vmatprep.subr.bf16.mxu0 0
    %768 = vmatpush1.bf16.msra.mxu0 0
    %769 = vmatprep.subr.bf16.mxu0 0
    %770 = vmatpush1.bf16.msra.mxu0 0
    %771 = vmatprep.subr.bf16.mxu0 0
    %772 = vmatpush1.bf16.msra.mxu0 0
    %773 = vmatprep.mubr.bf16.mxu0 0
    %774 = vmatmul.mubr.bf16.gmra.mrb[0].mxu0 %v502
    %v775 = vpop.f32.mrb[0].mxu0
    %v776 = vadd.f32 0.0, %v775
    %v777 = vpop.f32.mrb[0].mxu0
    %v778 = vadd.f32 0.0, %v777
    %v779 = vpop.f32.mrb[0].mxu0
    %v780 = vpop.f32.mrb[0].mxu0
    %781 = vdwg.mxu0
    %v782 = vadd.f32 %v504, %v735
    %v783 = vadd.f32 %v505, %v737
    %v784 = vadd.f32 %v506, %v776
    %v785 = vadd.f32 %v507, %v778
    %v786 = vxor.u32 %v782, 2147483648
    %v787 = vxor.u32 %v783, 2147483648
    %v788 = vxor.u32 %v784, 2147483648
    %v789 = vmul.f32 %v786, 1.442695
    %v790 = vpow.pop %v789
    %v791 = vmul.f32 %v787, 1.442695
    %v792 = vpow.pop %v791
    %v793 = vmul.f32 %v788, 1.442695
    %v794 = vpow.pop %v793
    %v795 = vadd.f32 %v790, 1.0
    %v796 = vadd.f32 %v792, 1.0
    %v797 = vadd.f32 %v794, 1.0
    %v798 = vrcp.pop %v795
    %v799 = vmul.f32 1.0, %v798
    %v800 = vrcp.pop %v796
    %v801 = vmul.f32 1.0, %v800
    %v802 = vrcp.pop %v797
    %v803 = vmul.f32 1.0, %v802
    %v804 = vtanh.pop %v785
    %v805 = vmul.f32 %v801, %v503
    %v806 = vmul.f32 %v799, %v804
    %v807 = vadd.f32 %v805, %v806
    %v808 = vtanh.pop %v807
    %v809 = vmul.f32 %v803, %v808
    %v810 = vpack.c.bf16 %v809, %v809
    %811 = vst [vmem:[#allocation3] sm:$0xf] %v810
    %812 = vst [vmem:[#allocation4] sm:$0xff] %v807
    %v813 = vld [vmem:[#allocation3] sm:$0xff]
    %s814 = scalar_lea.vmem [#allocation4], 8
    %v815 = vld [vmem:[%s814] sm:$0xff]
    %v816 = vld [vmem:[#allocation9] sm:$0xff]
    %v817 = vld [vmem:[#allocation9 + $0x8] sm:$0xff]
    %v818 = vld [vmem:[#allocation9 + $0x10] sm:$0xff]
    %v819 = vld [vmem:[#allocation9 + $0x18] sm:$0xff]
    %v820 = vld [vmem:[#allocation9 + $0x20] sm:$0xff]
    %v821 = vld [vmem:[#allocation9 + $0x28] sm:$0xff]
    %v822 = vld [vmem:[#allocation9 + $0x30] sm:$0xff]
    %v823 = vld [vmem:[#allocation9 + $0x38] sm:$0xff]
    %v824 = vld [vmem:[#allocation9 + $0x40] sm:$0xff]
    %v825 = vld [vmem:[#allocation9 + $0x48] sm:$0xff]
    %v826 = vld [vmem:[#allocation9 + $0x50] sm:$0xff]
    %v827 = vld [vmem:[#allocation9 + $0x58] sm:$0xff]
    %v828 = vld [vmem:[#allocation9 + $0x60] sm:$0xff]
    %v829 = vld [vmem:[#allocation9 + $0x68] sm:$0xff]
    %v830 = vld [vmem:[#allocation9 + $0x70] sm:$0xff]
    %v831 = vld [vmem:[#allocation9 + $0x78] sm:$0xff]
    %v832 = vld [vmem:[#allocation9 + $0x80] sm:$0xff]
    %v833 = vld [vmem:[#allocation9 + $0x88] sm:$0xff]
    %v834 = vld [vmem:[#allocation9 + $0x90] sm:$0xff]
    %v835 = vld [vmem:[#allocation9 + $0x98] sm:$0xff]
    %v836 = vld [vmem:[#allocation9 + $0xa0] sm:$0xff]
    %v837 = vld [vmem:[#allocation9 + $0xa8] sm:$0xff]
    %v838 = vld [vmem:[#allocation9 + $0xb0] sm:$0xff]
    %v839 = vld [vmem:[#allocation9 + $0xb8] sm:$0xff]
    %v840 = vld [vmem:[#allocation9 + $0xc0] sm:$0xff]
    %v841 = vld [vmem:[#allocation9 + $0xc8] sm:$0xff]
    %v842 = vld [vmem:[#allocation9 + $0xd0] sm:$0xff]
    %v843 = vld [vmem:[#allocation9 + $0xd8] sm:$0xff]
    %v844 = vld [vmem:[#allocation9 + $0xe0] sm:$0xff]
    %v845 = vld [vmem:[#allocation9 + $0xe8] sm:$0xff]
    %v846 = vld [vmem:[#allocation9 + $0xf0] sm:$0xff]
    %v847 = vld [vmem:[#allocation9 + $0xf8] sm:$0xff]
    %v848 = vld [vmem:[#allocation9 + $0x100] sm:$0xff]
    %v849 = vld [vmem:[#allocation9 + $0x108] sm:$0xff]
    %v850 = vld [vmem:[#allocation9 + $0x110] sm:$0xff]
    %v851 = vld [vmem:[#allocation9 + $0x118] sm:$0xff]
    %v852 = vld [vmem:[#allocation9 + $0x120] sm:$0xff]
    %v853 = vld [vmem:[#allocation9 + $0x128] sm:$0xff]
    %v854 = vld [vmem:[#allocation9 + $0x130] sm:$0xff]
    %v855 = vld [vmem:[#allocation9 + $0x138] sm:$0xff]
    %v856 = vld [vmem:[#allocation9 + $0x140] sm:$0xff]
    %v857 = vld [vmem:[#allocation9 + $0x148] sm:$0xff]
    %v858 = vld [vmem:[#allocation9 + $0x150] sm:$0xff]
    %v859 = vld [vmem:[#allocation9 + $0x158] sm:$0xff]
    %v860 = vld [vmem:[#allocation9 + $0x160] sm:$0xff]
    %v861 = vld [vmem:[#allocation9 + $0x168] sm:$0xff]
    %v862 = vld [vmem:[#allocation9 + $0x170] sm:$0xff]
    %v863 = vld [vmem:[#allocation9 + $0x178] sm:$0xff]
    %v864 = vld [vmem:[#allocation9 + $0x180] sm:$0xff]
    %v865 = vld [vmem:[#allocation9 + $0x188] sm:$0xff]
    %v866 = vld [vmem:[#allocation9 + $0x190] sm:$0xff]
    %v867 = vld [vmem:[#allocation9 + $0x198] sm:$0xff]
    %v868 = vld [vmem:[#allocation9 + $0x1a0] sm:$0xff]
    %v869 = vld [vmem:[#allocation9 + $0x1a8] sm:$0xff]
    %v870 = vld [vmem:[#allocation9 + $0x1b0] sm:$0xff]
    %v871 = vld [vmem:[#allocation9 + $0x1b8] sm:$0xff]
    %v872 = vld [vmem:[#allocation9 + $0x1c0] sm:$0xff]
    %v873 = vld [vmem:[#allocation9 + $0x1c8] sm:$0xff]
    %v874 = vld [vmem:[#allocation9 + $0x1d0] sm:$0xff]
    %v875 = vld [vmem:[#allocation9 + $0x1d8] sm:$0xff]
    %v876 = vld [vmem:[#allocation9 + $0x1e0] sm:$0xff]
    %v877 = vld [vmem:[#allocation9 + $0x1e8] sm:$0xff]
    %v878 = vld [vmem:[#allocation9 + $0x1f0] sm:$0xff]
    %v879 = vld [vmem:[#allocation9 + $0x1f8] sm:$0xff]
    %v880 = vld [vmem:[%s5] sm:$0xf]
    %v882 = vlaneseq
    %v883 = vshrl.u32 %v882, 7
    %v884 = vsub.s32 0, %v883
    %v885 = vrot.slane %v880, %v884
    %v886 = vlaneseq
    %v887 = vshrl.u32 %v886, 7
    %v888 = vsub.s32 1, %v887
    %v889 = vrot.slane %v880, %v888
    %v890 = vlaneseq
    %v891 = vshrl.u32 %v890, 7
    %v892 = vsub.s32 2, %v891
    %v893 = vrot.slane %v880, %v892
    %v894 = vlaneseq
    %v895 = vshrl.u32 %v894, 7
    %v896 = vsub.s32 3, %v895
    %v897 = vrot.slane %v880, %v896
    %v903 = vunpack.c.l.b16 %v813
    %v904 = vunpack.c.h.b16 %v813
    %v905 = vpack.c.b16 %v903, %v903
    %v906 = vpack.c.b16 %v904, %v904
    %v973 = vunpack.c.l.b16 %v816
    %v974 = vunpack.c.h.b16 %v816
    %v975 = vunpack.c.l.b16 %v817
    %v976 = vunpack.c.h.b16 %v817
    %v977 = vunpack.c.l.b16 %v818
    %v978 = vunpack.c.h.b16 %v818
    %v979 = vunpack.c.l.b16 %v819
    %v980 = vunpack.c.h.b16 %v819
    %v981 = vunpack.c.l.b16 %v820
    %v982 = vunpack.c.h.b16 %v820
    %v983 = vunpack.c.l.b16 %v821
    %v984 = vunpack.c.h.b16 %v821
    %v985 = vunpack.c.l.b16 %v822
    %v986 = vunpack.c.h.b16 %v822
    %v987 = vunpack.c.l.b16 %v823
    %v988 = vunpack.c.h.b16 %v823
    %v989 = vunpack.c.l.b16 %v824
    %v990 = vunpack.c.h.b16 %v824
    %v991 = vunpack.c.l.b16 %v825
    %v992 = vunpack.c.h.b16 %v825
    %v993 = vunpack.c.l.b16 %v826
    %v994 = vunpack.c.h.b16 %v826
    %v995 = vunpack.c.l.b16 %v827
    %v996 = vunpack.c.h.b16 %v827
    %v997 = vunpack.c.l.b16 %v828
    %v998 = vunpack.c.h.b16 %v828
    %v999 = vunpack.c.l.b16 %v829
    %v1000 = vunpack.c.h.b16 %v829
    %v1001 = vunpack.c.l.b16 %v830
    %v1002 = vunpack.c.h.b16 %v830
    %v1003 = vunpack.c.l.b16 %v831
    %v1004 = vunpack.c.h.b16 %v831
    %v1005 = vunpack.c.l.b16 %v832
    %v1006 = vunpack.c.h.b16 %v832
    %v1007 = vunpack.c.l.b16 %v833
    %v1008 = vunpack.c.h.b16 %v833
    %v1009 = vunpack.c.l.b16 %v834
    %v1010 = vunpack.c.h.b16 %v834
    %v1011 = vunpack.c.l.b16 %v835
    %v1012 = vunpack.c.h.b16 %v835
    %v1013 = vunpack.c.l.b16 %v836
    %v1014 = vunpack.c.h.b16 %v836
    %v1015 = vunpack.c.l.b16 %v837
    %v1016 = vunpack.c.h.b16 %v837
    %v1017 = vunpack.c.l.b16 %v838
    %v1018 = vunpack.c.h.b16 %v838
    %v1019 = vunpack.c.l.b16 %v839
    %v1020 = vunpack.c.h.b16 %v839
    %v1021 = vunpack.c.l.b16 %v840
    %v1022 = vunpack.c.h.b16 %v840
    %v1023 = vunpack.c.l.b16 %v841
    %v1024 = vunpack.c.h.b16 %v841
    %v1025 = vunpack.c.l.b16 %v842
    %v1026 = vunpack.c.h.b16 %v842
    %v1027 = vunpack.c.l.b16 %v843
    %v1028 = vunpack.c.h.b16 %v843
    %v1029 = vunpack.c.l.b16 %v844
    %v1030 = vunpack.c.h.b16 %v844
    %v1031 = vunpack.c.l.b16 %v845
    %v1032 = vunpack.c.h.b16 %v845
    %v1033 = vunpack.c.l.b16 %v846
    %v1034 = vunpack.c.h.b16 %v846
    %v1035 = vunpack.c.l.b16 %v847
    %v1036 = vunpack.c.h.b16 %v847
    %v1037 = vunpack.c.l.b16 %v848
    %v1038 = vunpack.c.h.b16 %v848
    %v1039 = vunpack.c.l.b16 %v849
    %v1040 = vunpack.c.h.b16 %v849
    %v1041 = vunpack.c.l.b16 %v850
    %v1042 = vunpack.c.h.b16 %v850
    %v1043 = vunpack.c.l.b16 %v851
    %v1044 = vunpack.c.h.b16 %v851
    %v1045 = vunpack.c.l.b16 %v852
    %v1046 = vunpack.c.h.b16 %v852
    %v1047 = vunpack.c.l.b16 %v853
    %v1048 = vunpack.c.h.b16 %v853
    %v1049 = vunpack.c.l.b16 %v854
    %v1050 = vunpack.c.h.b16 %v854
    %v1051 = vunpack.c.l.b16 %v855
    %v1052 = vunpack.c.h.b16 %v855
    %v1053 = vunpack.c.l.b16 %v856
    %v1054 = vunpack.c.h.b16 %v856
    %v1055 = vunpack.c.l.b16 %v857
    %v1056 = vunpack.c.h.b16 %v857
    %v1057 = vunpack.c.l.b16 %v858
    %v1058 = vunpack.c.h.b16 %v858
    %v1059 = vunpack.c.l.b16 %v859
    %v1060 = vunpack.c.h.b16 %v859
    %v1061 = vunpack.c.l.b16 %v860
    %v1062 = vunpack.c.h.b16 %v860
    %v1063 = vunpack.c.l.b16 %v861
    %v1064 = vunpack.c.h.b16 %v861
    %v1065 = vunpack.c.l.b16 %v862
    %v1066 = vunpack.c.h.b16 %v862
    %v1067 = vunpack.c.l.b16 %v863
    %v1068 = vunpack.c.h.b16 %v863
    %v1069 = vunpack.c.l.b16 %v864
    %v1070 = vunpack.c.h.b16 %v864
    %v1071 = vunpack.c.l.b16 %v865
    %v1072 = vunpack.c.h.b16 %v865
    %v1073 = vunpack.c.l.b16 %v866
    %v1074 = vunpack.c.h.b16 %v866
    %v1075 = vunpack.c.l.b16 %v867
    %v1076 = vunpack.c.h.b16 %v867
    %v1077 = vunpack.c.l.b16 %v868
    %v1078 = vunpack.c.h.b16 %v868
    %v1079 = vunpack.c.l.b16 %v869
    %v1080 = vunpack.c.h.b16 %v869
    %v1081 = vunpack.c.l.b16 %v870
    %v1082 = vunpack.c.h.b16 %v870
    %v1083 = vunpack.c.l.b16 %v871
    %v1084 = vunpack.c.h.b16 %v871
    %v1085 = vunpack.c.l.b16 %v872
    %v1086 = vunpack.c.h.b16 %v872
    %v1087 = vunpack.c.l.b16 %v873
    %v1088 = vunpack.c.h.b16 %v873
    %v1089 = vunpack.c.l.b16 %v874
    %v1090 = vunpack.c.h.b16 %v874
    %v1091 = vunpack.c.l.b16 %v875
    %v1092 = vunpack.c.h.b16 %v875
    %v1093 = vunpack.c.l.b16 %v876
    %v1094 = vunpack.c.h.b16 %v876
    %v1095 = vunpack.c.l.b16 %v877
    %v1096 = vunpack.c.h.b16 %v877
    %v1097 = vunpack.c.l.b16 %v878
    %v1098 = vunpack.c.h.b16 %v878
    %v1099 = vunpack.c.l.b16 %v879
    %v1100 = vunpack.c.h.b16 %v879
    %v1101 = vpack.c.b16 %v977, %v973
    %v1102 = vpack.c.b16 %v978, %v974
    %v1103 = vpack.c.b16 %v979, %v975
    %v1104 = vpack.c.b16 %v980, %v976
    %v1105 = vpack.c.b16 %v985, %v981
    %v1106 = vpack.c.b16 %v986, %v982
    %v1107 = vpack.c.b16 %v987, %v983
    %v1108 = vpack.c.b16 %v988, %v984
    %v1109 = vpack.c.b16 %v993, %v989
    %v1110 = vpack.c.b16 %v994, %v990
    %v1111 = vpack.c.b16 %v995, %v991
    %v1112 = vpack.c.b16 %v996, %v992
    %v1113 = vpack.c.b16 %v1001, %v997
    %v1114 = vpack.c.b16 %v1002, %v998
    %v1115 = vpack.c.b16 %v1003, %v999
    %v1116 = vpack.c.b16 %v1004, %v1000
    %v1117 = vpack.c.b16 %v1009, %v1005
    %v1118 = vpack.c.b16 %v1010, %v1006
    %v1119 = vpack.c.b16 %v1011, %v1007
    %v1120 = vpack.c.b16 %v1012, %v1008
    %v1121 = vpack.c.b16 %v1017, %v1013
    %v1122 = vpack.c.b16 %v1018, %v1014
    %v1123 = vpack.c.b16 %v1019, %v1015
    %v1124 = vpack.c.b16 %v1020, %v1016
    %v1125 = vpack.c.b16 %v1025, %v1021
    %v1126 = vpack.c.b16 %v1026, %v1022
    %v1127 = vpack.c.b16 %v1027, %v1023
    %v1128 = vpack.c.b16 %v1028, %v1024
    %v1129 = vpack.c.b16 %v1033, %v1029
    %v1130 = vpack.c.b16 %v1034, %v1030
    %v1131 = vpack.c.b16 %v1035, %v1031
    %v1132 = vpack.c.b16 %v1036, %v1032
    %v1133 = vpack.c.b16 %v1041, %v1037
    %v1134 = vpack.c.b16 %v1042, %v1038
    %v1135 = vpack.c.b16 %v1043, %v1039
    %v1136 = vpack.c.b16 %v1044, %v1040
    %v1137 = vpack.c.b16 %v1049, %v1045
    %v1138 = vpack.c.b16 %v1050, %v1046
    %v1139 = vpack.c.b16 %v1051, %v1047
    %v1140 = vpack.c.b16 %v1052, %v1048
    %v1141 = vpack.c.b16 %v1057, %v1053
    %v1142 = vpack.c.b16 %v1058, %v1054
    %v1143 = vpack.c.b16 %v1059, %v1055
    %v1144 = vpack.c.b16 %v1060, %v1056
    %v1145 = vpack.c.b16 %v1065, %v1061
    %v1146 = vpack.c.b16 %v1066, %v1062
    %v1147 = vpack.c.b16 %v1067, %v1063
    %v1148 = vpack.c.b16 %v1068, %v1064
    %v1149 = vpack.c.b16 %v1073, %v1069
    %v1150 = vpack.c.b16 %v1074, %v1070
    %v1151 = vpack.c.b16 %v1075, %v1071
    %v1152 = vpack.c.b16 %v1076, %v1072
    %v1153 = vpack.c.b16 %v1081, %v1077
    %v1154 = vpack.c.b16 %v1082, %v1078
    %v1155 = vpack.c.b16 %v1083, %v1079
    %v1156 = vpack.c.b16 %v1084, %v1080
    %v1157 = vpack.c.b16 %v1089, %v1085
    %v1158 = vpack.c.b16 %v1090, %v1086
    %v1159 = vpack.c.b16 %v1091, %v1087
    %v1160 = vpack.c.b16 %v1092, %v1088
    %v1161 = vpack.c.b16 %v1097, %v1093
    %v1162 = vpack.c.b16 %v1098, %v1094
    %v1163 = vpack.c.b16 %v1099, %v1095
    %v1164 = vpack.c.b16 %v1100, %v1096
    %1229 = vmatprep.subr.bf16.mxu0 %v1102
    %1230 = vmatpush1.bf16.msra.mxu0 %v1101
    %1231 = vmatprep.subr.bf16.mxu0 %v1106
    %1232 = vmatpush1.bf16.msra.mxu0 %v1105
    %1233 = vmatprep.subr.bf16.mxu0 %v1110
    %1234 = vmatpush1.bf16.msra.mxu0 %v1109
    %1235 = vmatprep.subr.bf16.mxu0 %v1114
    %1236 = vmatpush1.bf16.msra.mxu0 %v1113
    %1237 = vmatprep.subr.bf16.mxu0 %v1118
    %1238 = vmatpush1.bf16.msra.mxu0 %v1117
    %1239 = vmatprep.subr.bf16.mxu0 %v1122
    %1240 = vmatpush1.bf16.msra.mxu0 %v1121
    %1241 = vmatprep.subr.bf16.mxu0 %v1126
    %1242 = vmatpush1.bf16.msra.mxu0 %v1125
    %1243 = vmatprep.subr.bf16.mxu0 %v1130
    %1244 = vmatpush1.bf16.msra.mxu0 %v1129
    %1245 = vmatprep.subr.bf16.mxu0 %v1134
    %1246 = vmatpush1.bf16.msra.mxu0 %v1133
    %1247 = vmatprep.subr.bf16.mxu0 %v1138
    %1248 = vmatpush1.bf16.msra.mxu0 %v1137
    %1249 = vmatprep.subr.bf16.mxu0 %v1142
    %1250 = vmatpush1.bf16.msra.mxu0 %v1141
    %1251 = vmatprep.subr.bf16.mxu0 %v1146
    %1252 = vmatpush1.bf16.msra.mxu0 %v1145
    %1253 = vmatprep.subr.bf16.mxu0 %v1150
    %1254 = vmatpush1.bf16.msra.mxu0 %v1149
    %1255 = vmatprep.subr.bf16.mxu0 %v1154
    %1256 = vmatpush1.bf16.msra.mxu0 %v1153
    %1257 = vmatprep.subr.bf16.mxu0 %v1158
    %1258 = vmatpush1.bf16.msra.mxu0 %v1157
    %1259 = vmatprep.subr.bf16.mxu0 %v1162
    %1260 = vmatpush1.bf16.msra.mxu0 %v1161
    %1261 = vmatprep.mubr.bf16.mxu0 %v906
    %1262 = vmatmul.mubr.bf16.gmra.mrb[0].mxu0 %v905
    %v1263 = vpop.f32.mrb[0].mxu0
    %v1264 = vadd.f32 %v885, %v1263
    %v1265 = vpop.f32.mrb[0].mxu0
    %v1266 = vadd.f32 %v889, %v1265
    %v1267 = vpop.f32.mrb[0].mxu0
    %v1268 = vpop.f32.mrb[0].mxu0
    %1269 = vdwg.mxu0
    %1270 = vmatprep.subr.bf16.mxu0 %v1104
    %1271 = vmatpush1.bf16.msra.mxu0 %v1103
    %1272 = vmatprep.subr.bf16.mxu0 %v1108
    %1273 = vmatpush1.bf16.msra.mxu0 %v1107
    %1274 = vmatprep.subr.bf16.mxu0 %v1112
    %1275 = vmatpush1.bf16.msra.mxu0 %v1111
    %1276 = vmatprep.subr.bf16.mxu0 %v1116
    %1277 = vmatpush1.bf16.msra.mxu0 %v1115
    %1278 = vmatprep.subr.bf16.mxu0 %v1120
    %1279 = vmatpush1.bf16.msra.mxu0 %v1119
    %1280 = vmatprep.subr.bf16.mxu0 %v1124
    %1281 = vmatpush1.bf16.msra.mxu0 %v1123
    %1282 = vmatprep.subr.bf16.mxu0 %v1128
    %1283 = vmatpush1.bf16.msra.mxu0 %v1127
    %1284 = vmatprep.subr.bf16.mxu0 %v1132
    %1285 = vmatpush1.bf16.msra.mxu0 %v1131
    %1286 = vmatprep.subr.bf16.mxu0 %v1136
    %1287 = vmatpush1.bf16.msra.mxu0 %v1135
    %1288 = vmatprep.subr.bf16.mxu0 %v1140
    %1289 = vmatpush1.bf16.msra.mxu0 %v1139
    %1290 = vmatprep.subr.bf16.mxu0 %v1144
    %1291 = vmatpush1.bf16.msra.mxu0 %v1143
    %1292 = vmatprep.subr.bf16.mxu0 %v1148
    %1293 = vmatpush1.bf16.msra.mxu0 %v1147
    %1294 = vmatprep.subr.bf16.mxu0 %v1152
    %1295 = vmatpush1.bf16.msra.mxu0 %v1151
    %1296 = vmatprep.subr.bf16.mxu0 %v1156
    %1297 = vmatpush1.bf16.msra.mxu0 %v1155
    %1298 = vmatprep.subr.bf16.mxu0 %v1160
    %1299 = vmatpush1.bf16.msra.mxu0 %v1159
    %1300 = vmatprep.subr.bf16.mxu0 %v1164
    %1301 = vmatpush1.bf16.msra.mxu0 %v1163
    %1302 = vmatprep.mubr.bf16.mxu0 %v906
    %1303 = vmatmul.mubr.bf16.gmra.mrb[0].mxu0 %v905
    %v1304 = vpop.f32.mrb[0].mxu0
    %v1305 = vadd.f32 %v893, %v1304
    %v1306 = vpop.f32.mrb[0].mxu0
    %v1307 = vadd.f32 %v897, %v1306
    %v1308 = vpop.f32.mrb[0].mxu0
    %v1309 = vpop.f32.mrb[0].mxu0
    %1310 = vdwg.mxu0
    %v1311 = vxor.u32 %v1264, 2147483648
    %v1312 = vxor.u32 %v1266, 2147483648
    %v1313 = vxor.u32 %v1305, 2147483648
    %v1314 = vmul.f32 %v1311, 1.442695
    %v1315 = vpow.pop %v1314
    %v1316 = vmul.f32 %v1312, 1.442695
    %v1317 = vpow.pop %v1316
    %v1318 = vmul.f32 %v1313, 1.442695
    %v1319 = vpow.pop %v1318
    %v1320 = vadd.f32 %v1315, 1.0
    %v1321 = vadd.f32 %v1317, 1.0
    %v1322 = vadd.f32 %v1319, 1.0
    %v1323 = vrcp.pop %v1320
    %v1324 = vmul.f32 1.0, %v1323
    %v1325 = vrcp.pop %v1321
    %v1326 = vmul.f32 1.0, %v1325
    %v1327 = vrcp.pop %v1322
    %v1328 = vmul.f32 1.0, %v1327
    %v1329 = vtanh.pop %v1307
    %v1330 = vmul.f32 %v1326, %v815
    %v1331 = vmul.f32 %v1324, %v1329
    %v1332 = vadd.f32 %v1330, %v1331
    %v1333 = vtanh.pop %v1332
    %v1334 = vmul.f32 %v1328, %v1333
    %v1335 = vpack.c.bf16 %v1334, %v1334
    %1336 = vst [vmem:[#allocation3 + $0x4] sm:$0xf] %v1335
    %1337 = vst [vmem:[%s814] sm:$0xff] %v1332
    %v1338 = vld [vmem:[#allocation3] sm:$0xf]
    %v1339 = vld [vmem:[#allocation4] sm:$0xff]
    %s1340 = scalar_lea.vmem [#allocation2], 32
    %v1341 = vld [vmem:[%s1340] sm:$0xff]
    %v1342 = vld [vmem:[%s1340 + $0x8] sm:$0xff]
    %v1343 = vld [vmem:[%s1340 + $0x10] sm:$0xff]
    %v1344 = vld [vmem:[%s1340 + $0x18] sm:$0xff]
    %v1345 = vld [vmem:[#allocation7] sm:$0xff]
    %v1346 = vld [vmem:[#allocation7 + $0x8] sm:$0xff]
    %v1347 = vld [vmem:[#allocation7 + $0x10] sm:$0xff]
    %v1348 = vld [vmem:[#allocation7 + $0x18] sm:$0xff]
    %v1349 = vld [vmem:[#allocation7 + $0x20] sm:$0xff]
    %v1350 = vld [vmem:[#allocation7 + $0x28] sm:$0xff]
    %v1351 = vld [vmem:[#allocation7 + $0x30] sm:$0xff]
    %v1352 = vld [vmem:[#allocation7 + $0x38] sm:$0xff]
    %v1353 = vld [vmem:[#allocation7 + $0x40] sm:$0xff]
    %v1354 = vld [vmem:[#allocation7 + $0x48] sm:$0xff]
    %v1355 = vld [vmem:[#allocation7 + $0x50] sm:$0xff]
    %v1356 = vld [vmem:[#allocation7 + $0x58] sm:$0xff]
    %v1357 = vld [vmem:[#allocation7 + $0x60] sm:$0xff]
    %v1358 = vld [vmem:[#allocation7 + $0x68] sm:$0xff]
    %v1359 = vld [vmem:[#allocation7 + $0x70] sm:$0xff]
    %v1360 = vld [vmem:[#allocation7 + $0x78] sm:$0xff]
    %v1361 = vld [vmem:[#allocation7 + $0x80] sm:$0xff]
    %v1362 = vld [vmem:[#allocation7 + $0x88] sm:$0xff]
    %v1363 = vld [vmem:[#allocation7 + $0x90] sm:$0xff]
    %v1364 = vld [vmem:[#allocation7 + $0x98] sm:$0xff]
    %v1365 = vld [vmem:[#allocation7 + $0xa0] sm:$0xff]
    %v1366 = vld [vmem:[#allocation7 + $0xa8] sm:$0xff]
    %v1367 = vld [vmem:[#allocation7 + $0xb0] sm:$0xff]
    %v1368 = vld [vmem:[#allocation7 + $0xb8] sm:$0xff]
    %v1369 = vld [vmem:[#allocation7 + $0xc0] sm:$0xff]
    %v1370 = vld [vmem:[#allocation7 + $0xc8] sm:$0xff]
    %v1371 = vld [vmem:[#allocation7 + $0xd0] sm:$0xff]
    %v1372 = vld [vmem:[#allocation7 + $0xd8] sm:$0xff]
    %v1373 = vld [vmem:[#allocation7 + $0xe0] sm:$0xff]
    %v1374 = vld [vmem:[#allocation7 + $0xe8] sm:$0xff]
    %v1375 = vld [vmem:[#allocation7 + $0xf0] sm:$0xff]
    %v1376 = vld [vmem:[#allocation7 + $0xf8] sm:$0xff]
    %v1409 = vunpack.c.l.b16 %v1345
    %v1410 = vunpack.c.h.b16 %v1345
    %v1411 = vunpack.c.l.b16 %v1346
    %v1412 = vunpack.c.h.b16 %v1346
    %v1413 = vunpack.c.l.b16 %v1347
    %v1414 = vunpack.c.h.b16 %v1347
    %v1415 = vunpack.c.l.b16 %v1348
    %v1416 = vunpack.c.h.b16 %v1348
    %v1417 = vunpack.c.l.b16 %v1349
    %v1418 = vunpack.c.h.b16 %v1349
    %v1419 = vunpack.c.l.b16 %v1350
    %v1420 = vunpack.c.h.b16 %v1350
    %v1421 = vunpack.c.l.b16 %v1351
    %v1422 = vunpack.c.h.b16 %v1351
    %v1423 = vunpack.c.l.b16 %v1352
    %v1424 = vunpack.c.h.b16 %v1352
    %v1425 = vunpack.c.l.b16 %v1353
    %v1426 = vunpack.c.h.b16 %v1353
    %v1427 = vunpack.c.l.b16 %v1354
    %v1428 = vunpack.c.h.b16 %v1354
    %v1429 = vunpack.c.l.b16 %v1355
    %v1430 = vunpack.c.h.b16 %v1355
    %v1431 = vunpack.c.l.b16 %v1356
    %v1432 = vunpack.c.h.b16 %v1356
    %v1433 = vunpack.c.l.b16 %v1357
    %v1434 = vunpack.c.h.b16 %v1357
    %v1435 = vunpack.c.l.b16 %v1358
    %v1436 = vunpack.c.h.b16 %v1358
    %v1437 = vunpack.c.l.b16 %v1359
    %v1438 = vunpack.c.h.b16 %v1359
    %v1439 = vunpack.c.l.b16 %v1360
    %v1440 = vunpack.c.h.b16 %v1360
    %v1441 = vunpack.c.l.b16 %v1361
    %v1442 = vunpack.c.h.b16 %v1361
    %v1443 = vunpack.c.l.b16 %v1362
    %v1444 = vunpack.c.h.b16 %v1362
    %v1445 = vunpack.c.l.b16 %v1363
    %v1446 = vunpack.c.h.b16 %v1363
    %v1447 = vunpack.c.l.b16 %v1364
    %v1448 = vunpack.c.h.b16 %v1364
    %v1449 = vunpack.c.l.b16 %v1365
    %v1450 = vunpack.c.h.b16 %v1365
    %v1451 = vunpack.c.l.b16 %v1366
    %v1452 = vunpack.c.h.b16 %v1366
    %v1453 = vunpack.c.l.b16 %v1367
    %v1454 = vunpack.c.h.b16 %v1367
    %v1455 = vunpack.c.l.b16 %v1368
    %v1456 = vunpack.c.h.b16 %v1368
    %v1457 = vunpack.c.l.b16 %v1369
    %v1458 = vunpack.c.h.b16 %v1369
    %v1459 = vunpack.c.l.b16 %v1370
    %v1460 = vunpack.c.h.b16 %v1370
    %v1461 = vunpack.c.l.b16 %v1371
    %v1462 = vunpack.c.h.b16 %v1371
    %v1463 = vunpack.c.l.b16 %v1372
    %v1464 = vunpack.c.h.b16 %v1372
    %v1465 = vunpack.c.l.b16 %v1373
    %v1466 = vunpack.c.h.b16 %v1373
    %v1467 = vunpack.c.l.b16 %v1374
    %v1468 = vunpack.c.h.b16 %v1374
    %v1469 = vunpack.c.l.b16 %v1375
    %v1470 = vunpack.c.h.b16 %v1375
    %v1471 = vunpack.c.l.b16 %v1376
    %v1472 = vunpack.c.h.b16 %v1376
    %v1473 = vpack.c.b16 %v1413, %v1409
    %v1474 = vpack.c.b16 %v1414, %v1410
    %v1475 = vpack.c.b16 %v1415, %v1411
    %v1476 = vpack.c.b16 %v1416, %v1412
    %v1477 = vpack.c.b16 %v1421, %v1417
    %v1478 = vpack.c.b16 %v1422, %v1418
    %v1479 = vpack.c.b16 %v1423, %v1419
    %v1480 = vpack.c.b16 %v1424, %v1420
    %v1481 = vpack.c.b16 %v1429, %v1425
    %v1482 = vpack.c.b16 %v1430, %v1426
    %v1483 = vpack.c.b16 %v1431, %v1427
    %v1484 = vpack.c.b16 %v1432, %v1428
    %v1485 = vpack.c.b16 %v1437, %v1433
    %v1486 = vpack.c.b16 %v1438, %v1434
    %v1487 = vpack.c.b16 %v1439, %v1435
    %v1488 = vpack.c.b16 %v1440, %v1436
    %v1489 = vpack.c.b16 %v1445, %v1441
    %v1490 = vpack.c.b16 %v1446, %v1442
    %v1491 = vpack.c.b16 %v1447, %v1443
    %v1492 = vpack.c.b16 %v1448, %v1444
    %v1493 = vpack.c.b16 %v1453, %v1449
    %v1494 = vpack.c.b16 %v1454, %v1450
    %v1495 = vpack.c.b16 %v1455, %v1451
    %v1496 = vpack.c.b16 %v1456, %v1452
    %v1497 = vpack.c.b16 %v1461, %v1457
    %v1498 = vpack.c.b16 %v1462, %v1458
    %v1499 = vpack.c.b16 %v1463, %v1459
    %v1500 = vpack.c.b16 %v1464, %v1460
    %v1501 = vpack.c.b16 %v1469, %v1465
    %v1502 = vpack.c.b16 %v1470, %v1466
    %v1503 = vpack.c.b16 %v1471, %v1467
    %v1504 = vpack.c.b16 %v1472, %v1468
    %1537 = vmatprep.subr.bf16.mxu0 %v1474
    %1538 = vmatpush1.bf16.msra.mxu0 %v1473
    %1539 = vmatprep.subr.bf16.mxu0 %v1478
    %1540 = vmatpush1.bf16.msra.mxu0 %v1477
    %1541 = vmatprep.subr.bf16.mxu0 %v1482
    %1542 = vmatpush1.bf16.msra.mxu0 %v1481
    %1543 = vmatprep.subr.bf16.mxu0 %v1486
    %1544 = vmatpush1.bf16.msra.mxu0 %v1485
    %1545 = vmatprep.subr.bf16.mxu0 %v1490
    %1546 = vmatpush1.bf16.msra.mxu0 %v1489
    %1547 = vmatprep.subr.bf16.mxu0 %v1494
    %1548 = vmatpush1.bf16.msra.mxu0 %v1493
    %1549 = vmatprep.subr.bf16.mxu0 %v1498
    %1550 = vmatpush1.bf16.msra.mxu0 %v1497
    %1551 = vmatprep.subr.bf16.mxu0 %v1502
    %1552 = vmatpush1.bf16.msra.mxu0 %v1501
    %1553 = vmatprep.subr.bf16.mxu0 0
    %1554 = vmatpush1.bf16.msra.mxu0 0
    %1555 = vmatprep.subr.bf16.mxu0 0
    %1556 = vmatpush1.bf16.msra.mxu0 0
    %1557 = vmatprep.subr.bf16.mxu0 0
    %1558 = vmatpush1.bf16.msra.mxu0 0
    %1559 = vmatprep.subr.bf16.mxu0 0
    %1560 = vmatpush1.bf16.msra.mxu0 0
    %1561 = vmatprep.subr.bf16.mxu0 0
    %1562 = vmatpush1.bf16.msra.mxu0 0
    %1563 = vmatprep.subr.bf16.mxu0 0
    %1564 = vmatpush1.bf16.msra.mxu0 0
    %1565 = vmatprep.subr.bf16.mxu0 0
    %1566 = vmatpush1.bf16.msra.mxu0 0
    %1567 = vmatprep.subr.bf16.mxu0 0
    %1568 = vmatpush1.bf16.msra.mxu0 0
    %1569 = vmatprep.mubr.bf16.mxu0 0
    %1570 = vmatmul.mubr.bf16.gmra.mrb[0].mxu0 %v1338
    %v1571 = vpop.f32.mrb[0].mxu0
    %v1572 = vadd.f32 0.0, %v1571
    %v1573 = vpop.f32.mrb[0].mxu0
    %v1574 = vadd.f32 0.0, %v1573
    %v1575 = vpop.f32.mrb[0].mxu0
    %v1576 = vpop.f32.mrb[0].mxu0
    %1577 = vdwg.mxu0
    %1578 = vmatprep.subr.bf16.mxu0 %v1476
    %1579 = vmatpush1.bf16.msra.mxu0 %v1475
    %1580 = vmatprep.subr.bf16.mxu0 %v1480
    %1581 = vmatpush1.bf16.msra.mxu0 %v1479
    %1582 = vmatprep.subr.bf16.mxu0 %v1484
    %1583 = vmatpush1.bf16.msra.mxu0 %v1483
    %1584 = vmatprep.subr.bf16.mxu0 %v1488
    %1585 = vmatpush1.bf16.msra.mxu0 %v1487
    %1586 = vmatprep.subr.bf16.mxu0 %v1492
    %1587 = vmatpush1.bf16.msra.mxu0 %v1491
    %1588 = vmatprep.subr.bf16.mxu0 %v1496
    %1589 = vmatpush1.bf16.msra.mxu0 %v1495
    %1590 = vmatprep.subr.bf16.mxu0 %v1500
    %1591 = vmatpush1.bf16.msra.mxu0 %v1499
    %1592 = vmatprep.subr.bf16.mxu0 %v1504
    %1593 = vmatpush1.bf16.msra.mxu0 %v1503
    %1594 = vmatprep.subr.bf16.mxu0 0
    %1595 = vmatpush1.bf16.msra.mxu0 0
    %1596 = vmatprep.subr.bf16.mxu0 0
    %1597 = vmatpush1.bf16.msra.mxu0 0
    %1598 = vmatprep.subr.bf16.mxu0 0
    %1599 = vmatpush1.bf16.msra.mxu0 0
    %1600 = vmatprep.subr.bf16.mxu0 0
    %1601 = vmatpush1.bf16.msra.mxu0 0
    %1602 = vmatprep.subr.bf16.mxu0 0
    %1603 = vmatpush1.bf16.msra.mxu0 0
    %1604 = vmatprep.subr.bf16.mxu0 0
    %1605 = vmatpush1.bf16.msra.mxu0 0
    %1606 = vmatprep.subr.bf16.mxu0 0
    %1607 = vmatpush1.bf16.msra.mxu0 0
    %1608 = vmatprep.subr.bf16.mxu0 0
    %1609 = vmatpush1.bf16.msra.mxu0 0
    %1610 = vmatprep.mubr.bf16.mxu0 0
    %1611 = vmatmul.mubr.bf16.gmra.mrb[0].mxu0 %v1338
    %v1612 = vpop.f32.mrb[0].mxu0
    %v1613 = vadd.f32 0.0, %v1612
    %v1614 = vpop.f32.mrb[0].mxu0
    %v1615 = vadd.f32 0.0, %v1614
    %v1616 = vpop.f32.mrb[0].mxu0
    %v1617 = vpop.f32.mrb[0].mxu0
    %1618 = vdwg.mxu0
    %v1619 = vadd.f32 %v1341, %v1572
    %v1620 = vadd.f32 %v1342, %v1574
    %v1621 = vadd.f32 %v1343, %v1613
    %v1622 = vadd.f32 %v1344, %v1615
    %v1623 = vxor.u32 %v1619, 2147483648
    %v1624 = vxor.u32 %v1620, 2147483648
    %v1625 = vxor.u32 %v1621, 2147483648
    %v1626 = vmul.f32 %v1623, 1.442695
    %v1627 = vpow.pop %v1626
    %v1628 = vmul.f32 %v1624, 1.442695
    %v1629 = vpow.pop %v1628
    %v1630 = vmul.f32 %v1625, 1.442695
    %v1631 = vpow.pop %v1630
    %v1632 = vadd.f32 %v1627, 1.0
    %v1633 = vadd.f32 %v1629, 1.0
    %v1634 = vadd.f32 %v1631, 1.0
    %v1635 = vrcp.pop %v1632
    %v1636 = vmul.f32 1.0, %v1635
    %v1637 = vrcp.pop %v1633
    %v1638 = vmul.f32 1.0, %v1637
    %v1639 = vrcp.pop %v1634
    %v1640 = vmul.f32 1.0, %v1639
    %v1641 = vtanh.pop %v1622
    %v1642 = vmul.f32 %v1638, %v1339
    %v1643 = vmul.f32 %v1636, %v1641
    %v1644 = vadd.f32 %v1642, %v1643
    %v1645 = vtanh.pop %v1644
    %v1646 = vmul.f32 %v1640, %v1645
    %v1647 = vpack.c.bf16 %v1646, %v1646
    %1648 = vst [vmem:[#allocation3] sm:$0xf] %v1647
    %1649 = vst [vmem:[#allocation4] sm:$0xff] %v1644
    %v1650 = vld [vmem:[#allocation3] sm:$0xff]
    %v1651 = vld [vmem:[%s814] sm:$0xff]
    %v1652 = vld [vmem:[#allocation9] sm:$0xff]
    %v1653 = vld [vmem:[#allocation9 + $0x8] sm:$0xff]
    %v1654 = vld [vmem:[#allocation9 + $0x10] sm:$0xff]
    %v1655 = vld [vmem:[#allocation9 + $0x18] sm:$0xff]
    %v1656 = vld [vmem:[#allocation9 + $0x20] sm:$0xff]
    %v1657 = vld [vmem:[#allocation9 + $0x28] sm:$0xff]
    %v1658 = vld [vmem:[#allocation9 + $0x30] sm:$0xff]
    %v1659 = vld [vmem:[#allocation9 + $0x38] sm:$0xff]
    %v1660 = vld [vmem:[#allocation9 + $0x40] sm:$0xff]
    %v1661 = vld [vmem:[#allocation9 + $0x48] sm:$0xff]
    %v1662 = vld [vmem:[#allocation9 + $0x50] sm:$0xff]
    %v1663 = vld [vmem:[#allocation9 + $0x58] sm:$0xff]
    %v1664 = vld [vmem:[#allocation9 + $0x60] sm:$0xff]
    %v1665 = vld [vmem:[#allocation9 + $0x68] sm:$0xff]
    %v1666 = vld [vmem:[#allocation9 + $0x70] sm:$0xff]
    %v1667 = vld [vmem:[#allocation9 + $0x78] sm:$0xff]
    %v1668 = vld [vmem:[#allocation9 + $0x80] sm:$0xff]
    %v1669 = vld [vmem:[#allocation9 + $0x88] sm:$0xff]
    %v1670 = vld [vmem:[#allocation9 + $0x90] sm:$0xff]
    %v1671 = vld [vmem:[#allocation9 + $0x98] sm:$0xff]
    %v1672 = vld [vmem:[#allocation9 + $0xa0] sm:$0xff]
    %v1673 = vld [vmem:[#allocation9 + $0xa8] sm:$0xff]
    %v1674 = vld [vmem:[#allocation9 + $0xb0] sm:$0xff]
    %v1675 = vld [vmem:[#allocation9 + $0xb8] sm:$0xff]
    %v1676 = vld [vmem:[#allocation9 + $0xc0] sm:$0xff]
    %v1677 = vld [vmem:[#allocation9 + $0xc8] sm:$0xff]
    %v1678 = vld [vmem:[#allocation9 + $0xd0] sm:$0xff]
    %v1679 = vld [vmem:[#allocation9 + $0xd8] sm:$0xff]
    %v1680 = vld [vmem:[#allocation9 + $0xe0] sm:$0xff]
    %v1681 = vld [vmem:[#allocation9 + $0xe8] sm:$0xff]
    %v1682 = vld [vmem:[#allocation9 + $0xf0] sm:$0xff]
    %v1683 = vld [vmem:[#allocation9 + $0xf8] sm:$0xff]
    %v1684 = vld [vmem:[#allocation9 + $0x100] sm:$0xff]
    %v1685 = vld [vmem:[#allocation9 + $0x108] sm:$0xff]
    %v1686 = vld [vmem:[#allocation9 + $0x110] sm:$0xff]
    %v1687 = vld [vmem:[#allocation9 + $0x118] sm:$0xff]
    %v1688 = vld [vmem:[#allocation9 + $0x120] sm:$0xff]
    %v1689 = vld [vmem:[#allocation9 + $0x128] sm:$0xff]
    %v1690 = vld [vmem:[#allocation9 + $0x130] sm:$0xff]
    %v1691 = vld [vmem:[#allocation9 + $0x138] sm:$0xff]
    %v1692 = vld [vmem:[#allocation9 + $0x140] sm:$0xff]
    %v1693 = vld [vmem:[#allocation9 + $0x148] sm:$0xff]
    %v1694 = vld [vmem:[#allocation9 + $0x150] sm:$0xff]
    %v1695 = vld [vmem:[#allocation9 + $0x158] sm:$0xff]
    %v1696 = vld [vmem:[#allocation9 + $0x160] sm:$0xff]
    %v1697 = vld [vmem:[#allocation9 + $0x168] sm:$0xff]
    %v1698 = vld [vmem:[#allocation9 + $0x170] sm:$0xff]
    %v1699 = vld [vmem:[#allocation9 + $0x178] sm:$0xff]
    %v1700 = vld [vmem:[#allocation9 + $0x180] sm:$0xff]
    %v1701 = vld [vmem:[#allocation9 + $0x188] sm:$0xff]
    %v1702 = vld [vmem:[#allocation9 + $0x190] sm:$0xff]
    %v1703 = vld [vmem:[#allocation9 + $0x198] sm:$0xff]
    %v1704 = vld [vmem:[#allocation9 + $0x1a0] sm:$0xff]
    %v1705 = vld [vmem:[#allocation9 + $0x1a8] sm:$0xff]
    %v1706 = vld [vmem:[#allocation9 + $0x1b0] sm:$0xff]
    %v1707 = vld [vmem:[#allocation9 + $0x1b8] sm:$0xff]
    %v1708 = vld [vmem:[#allocation9 + $0x1c0] sm:$0xff]
    %v1709 = vld [vmem:[#allocation9 + $0x1c8] sm:$0xff]
    %v1710 = vld [vmem:[#allocation9 + $0x1d0] sm:$0xff]
    %v1711 = vld [vmem:[#allocation9 + $0x1d8] sm:$0xff]
    %v1712 = vld [vmem:[#allocation9 + $0x1e0] sm:$0xff]
    %v1713 = vld [vmem:[#allocation9 + $0x1e8] sm:$0xff]
    %v1714 = vld [vmem:[#allocation9 + $0x1f0] sm:$0xff]
    %v1715 = vld [vmem:[#allocation9 + $0x1f8] sm:$0xff]
    %v1716 = vld [vmem:[%s5] sm:$0xf]
    %v1718 = vlaneseq
    %v1719 = vshrl.u32 %v1718, 7
    %v1720 = vsub.s32 0, %v1719
    %v1721 = vrot.slane %v1716, %v1720
    %v1722 = vlaneseq
    %v1723 = vshrl.u32 %v1722, 7
    %v1724 = vsub.s32 1, %v1723
    %v1725 = vrot.slane %v1716, %v1724
    %v1726 = vlaneseq
    %v1727 = vshrl.u32 %v1726, 7
    %v1728 = vsub.s32 2, %v1727
    %v1729 = vrot.slane %v1716, %v1728
    %v1730 = vlaneseq
    %v1731 = vshrl.u32 %v1730, 7
    %v1732 = vsub.s32 3, %v1731
    %v1733 = vrot.slane %v1716, %v1732
    %v1739 = vunpack.c.l.b16 %v1650
    %v1740 = vunpack.c.h.b16 %v1650
    %v1741 = vpack.c.b16 %v1739, %v1739
    %v1742 = vpack.c.b16 %v1740, %v1740
    %v1809 = vunpack.c.l.b16 %v1652
    %v1810 = vunpack.c.h.b16 %v1652
    %v1811 = vunpack.c.l.b16 %v1653
    %v1812 = vunpack.c.h.b16 %v1653
    %v1813 = vunpack.c.l.b16 %v1654
    %v1814 = vunpack.c.h.b16 %v1654
    %v1815 = vunpack.c.l.b16 %v1655
    %v1816 = vunpack.c.h.b16 %v1655
    %v1817 = vunpack.c.l.b16 %v1656
    %v1818 = vunpack.c.h.b16 %v1656
    %v1819 = vunpack.c.l.b16 %v1657
    %v1820 = vunpack.c.h.b16 %v1657
    %v1821 = vunpack.c.l.b16 %v1658
    %v1822 = vunpack.c.h.b16 %v1658
    %v1823 = vunpack.c.l.b16 %v1659
    %v1824 = vunpack.c.h.b16 %v1659
    %v1825 = vunpack.c.l.b16 %v1660
    %v1826 = vunpack.c.h.b16 %v1660
    %v1827 = vunpack.c.l.b16 %v1661
    %v1828 = vunpack.c.h.b16 %v1661
    %v1829 = vunpack.c.l.b16 %v1662
    %v1830 = vunpack.c.h.b16 %v1662
    %v1831 = vunpack.c.l.b16 %v1663
    %v1832 = vunpack.c.h.b16 %v1663
    %v1833 = vunpack.c.l.b16 %v1664
    %v1834 = vunpack.c.h.b16 %v1664
    %v1835 = vunpack.c.l.b16 %v1665
    %v1836 = vunpack.c.h.b16 %v1665
    %v1837 = vunpack.c.l.b16 %v1666
    %v1838 = vunpack.c.h.b16 %v1666
    %v1839 = vunpack.c.l.b16 %v1667
    %v1840 = vunpack.c.h.b16 %v1667
    %v1841 = vunpack.c.l.b16 %v1668
    %v1842 = vunpack.c.h.b16 %v1668
    %v1843 = vunpack.c.l.b16 %v1669
    %v1844 = vunpack.c.h.b16 %v1669
    %v1845 = vunpack.c.l.b16 %v1670
    %v1846 = vunpack.c.h.b16 %v1670
    %v1847 = vunpack.c.l.b16 %v1671
    %v1848 = vunpack.c.h.b16 %v1671
    %v1849 = vunpack.c.l.b16 %v1672
    %v1850 = vunpack.c.h.b16 %v1672
    %v1851 = vunpack.c.l.b16 %v1673
    %v1852 = vunpack.c.h.b16 %v1673
    %v1853 = vunpack.c.l.b16 %v1674
    %v1854 = vunpack.c.h.b16 %v1674
    %v1855 = vunpack.c.l.b16 %v1675
    %v1856 = vunpack.c.h.b16 %v1675
    %v1857 = vunpack.c.l.b16 %v1676
    %v1858 = vunpack.c.h.b16 %v1676
    %v1859 = vunpack.c.l.b16 %v1677
    %v1860 = vunpack.c.h.b16 %v1677
    %v1861 = vunpack.c.l.b16 %v1678
    %v1862 = vunpack.c.h.b16 %v1678
    %v1863 = vunpack.c.l.b16 %v1679
    %v1864 = vunpack.c.h.b16 %v1679
    %v1865 = vunpack.c.l.b16 %v1680
    %v1866 = vunpack.c.h.b16 %v1680
    %v1867 = vunpack.c.l.b16 %v1681
    %v1868 = vunpack.c.h.b16 %v1681
    %v1869 = vunpack.c.l.b16 %v1682
    %v1870 = vunpack.c.h.b16 %v1682
    %v1871 = vunpack.c.l.b16 %v1683
    %v1872 = vunpack.c.h.b16 %v1683
    %v1873 = vunpack.c.l.b16 %v1684
    %v1874 = vunpack.c.h.b16 %v1684
    %v1875 = vunpack.c.l.b16 %v1685
    %v1876 = vunpack.c.h.b16 %v1685
    %v1877 = vunpack.c.l.b16 %v1686
    %v1878 = vunpack.c.h.b16 %v1686
    %v1879 = vunpack.c.l.b16 %v1687
    %v1880 = vunpack.c.h.b16 %v1687
    %v1881 = vunpack.c.l.b16 %v1688
    %v1882 = vunpack.c.h.b16 %v1688
    %v1883 = vunpack.c.l.b16 %v1689
    %v1884 = vunpack.c.h.b16 %v1689
    %v1885 = vunpack.c.l.b16 %v1690
    %v1886 = vunpack.c.h.b16 %v1690
    %v1887 = vunpack.c.l.b16 %v1691
    %v1888 = vunpack.c.h.b16 %v1691
    %v1889 = vunpack.c.l.b16 %v1692
    %v1890 = vunpack.c.h.b16 %v1692
    %v1891 = vunpack.c.l.b16 %v1693
    %v1892 = vunpack.c.h.b16 %v1693
    %v1893 = vunpack.c.l.b16 %v1694
    %v1894 = vunpack.c.h.b16 %v1694
    %v1895 = vunpack.c.l.b16 %v1695
    %v1896 = vunpack.c.h.b16 %v1695
    %v1897 = vunpack.c.l.b16 %v1696
    %v1898 = vunpack.c.h.b16 %v1696
    %v1899 = vunpack.c.l.b16 %v1697
    %v1900 = vunpack.c.h.b16 %v1697
    %v1901 = vunpack.c.l.b16 %v1698
    %v1902 = vunpack.c.h.b16 %v1698
    %v1903 = vunpack.c.l.b16 %v1699
    %v1904 = vunpack.c.h.b16 %v1699
    %v1905 = vunpack.c.l.b16 %v1700
    %v1906 = vunpack.c.h.b16 %v1700
    %v1907 = vunpack.c.l.b16 %v1701
    %v1908 = vunpack.c.h.b16 %v1701
    %v1909 = vunpack.c.l.b16 %v1702
    %v1910 = vunpack.c.h.b16 %v1702
    %v1911 = vunpack.c.l.b16 %v1703
    %v1912 = vunpack.c.h.b16 %v1703
    %v1913 = vunpack.c.l.b16 %v1704
    %v1914 = vunpack.c.h.b16 %v1704
    %v1915 = vunpack.c.l.b16 %v1705
    %v1916 = vunpack.c.h.b16 %v1705
    %v1917 = vunpack.c.l.b16 %v1706
    %v1918 = vunpack.c.h.b16 %v1706
    %v1919 = vunpack.c.l.b16 %v1707
    %v1920 = vunpack.c.h.b16 %v1707
    %v1921 = vunpack.c.l.b16 %v1708
    %v1922 = vunpack.c.h.b16 %v1708
    %v1923 = vunpack.c.l.b16 %v1709
    %v1924 = vunpack.c.h.b16 %v1709
    %v1925 = vunpack.c.l.b16 %v1710
    %v1926 = vunpack.c.h.b16 %v1710
    %v1927 = vunpack.c.l.b16 %v1711
    %v1928 = vunpack.c.h.b16 %v1711
    %v1929 = vunpack.c.l.b16 %v1712
    %v1930 = vunpack.c.h.b16 %v1712
    %v1931 = vunpack.c.l.b16 %v1713
    %v1932 = vunpack.c.h.b16 %v1713
    %v1933 = vunpack.c.l.b16 %v1714
    %v1934 = vunpack.c.h.b16 %v1714
    %v1935 = vunpack.c.l.b16 %v1715
    %v1936 = vunpack.c.h.b16 %v1715
    %v1937 = vpack.c.b16 %v1813, %v1809
    %v1938 = vpack.c.b16 %v1814, %v1810
    %v1939 = vpack.c.b16 %v1815, %v1811
    %v1940 = vpack.c.b16 %v1816, %v1812
    %v1941 = vpack.c.b16 %v1821, %v1817
    %v1942 = vpack.c.b16 %v1822, %v1818
    %v1943 = vpack.c.b16 %v1823, %v1819
    %v1944 = vpack.c.b16 %v1824, %v1820
    %v1945 = vpack.c.b16 %v1829, %v1825
    %v1946 = vpack.c.b16 %v1830, %v1826
    %v1947 = vpack.c.b16 %v1831, %v1827
    %v1948 = vpack.c.b16 %v1832, %v1828
    %v1949 = vpack.c.b16 %v1837, %v1833
    %v1950 = vpack.c.b16 %v1838, %v1834
    %v1951 = vpack.c.b16 %v1839, %v1835
    %v1952 = vpack.c.b16 %v1840, %v1836
    %v1953 = vpack.c.b16 %v1845, %v1841
    %v1954 = vpack.c.b16 %v1846, %v1842
    %v1955 = vpack.c.b16 %v1847, %v1843
    %v1956 = vpack.c.b16 %v1848, %v1844
    %v1957 = vpack.c.b16 %v1853, %v1849
    %v1958 = vpack.c.b16 %v1854, %v1850
    %v1959 = vpack.c.b16 %v1855, %v1851
    %v1960 = vpack.c.b16 %v1856, %v1852
    %v1961 = vpack.c.b16 %v1861, %v1857
    %v1962 = vpack.c.b16 %v1862, %v1858
    %v1963 = vpack.c.b16 %v1863, %v1859
    %v1964 = vpack.c.b16 %v1864, %v1860
    %v1965 = vpack.c.b16 %v1869, %v1865
    %v1966 = vpack.c.b16 %v1870, %v1866
    %v1967 = vpack.c.b16 %v1871, %v1867
    %v1968 = vpack.c.b16 %v1872, %v1868
    %v1969 = vpack.c.b16 %v1877, %v1873
    %v1970 = vpack.c.b16 %v1878, %v1874
    %v1971 = vpack.c.b16 %v1879, %v1875
    %v1972 = vpack.c.b16 %v1880, %v1876
    %v1973 = vpack.c.b16 %v1885, %v1881
    %v1974 = vpack.c.b16 %v1886, %v1882
    %v1975 = vpack.c.b16 %v1887, %v1883
    %v1976 = vpack.c.b16 %v1888, %v1884
    %v1977 = vpack.c.b16 %v1893, %v1889
    %v1978 = vpack.c.b16 %v1894, %v1890
    %v1979 = vpack.c.b16 %v1895, %v1891
    %v1980 = vpack.c.b16 %v1896, %v1892
    %v1981 = vpack.c.b16 %v1901, %v1897
    %v1982 = vpack.c.b16 %v1902, %v1898
    %v1983 = vpack.c.b16 %v1903, %v1899
    %v1984 = vpack.c.b16 %v1904, %v1900
    %v1985 = vpack.c.b16 %v1909, %v1905
    %v1986 = vpack.c.b16 %v1910, %v1906
    %v1987 = vpack.c.b16 %v1911, %v1907
    %v1988 = vpack.c.b16 %v1912, %v1908
    %v1989 = vpack.c.b16 %v1917, %v1913
    %v1990 = vpack.c.b16 %v1918, %v1914
    %v1991 = vpack.c.b16 %v1919, %v1915
    %v1992 = vpack.c.b16 %v1920, %v1916
    %v1993 = vpack.c.b16 %v1925, %v1921
    %v1994 = vpack.c.b16 %v1926, %v1922
    %v1995 = vpack.c.b16 %v1927, %v1923
    %v1996 = vpack.c.b16 %v1928, %v1924
    %v1997 = vpack.c.b16 %v1933, %v1929
    %v1998 = vpack.c.b16 %v1934, %v1930
    %v1999 = vpack.c.b16 %v1935, %v1931
    %v2000 = vpack.c.b16 %v1936, %v1932
    %2065 = vmatprep.subr.bf16.mxu0 %v1938
    %2066 = vmatpush1.bf16.msra.mxu0 %v1937
    %2067 = vmatprep.subr.bf16.mxu0 %v1942
    %2068 = vmatpush1.bf16.msra.mxu0 %v1941
    %2069 = vmatprep.subr.bf16.mxu0 %v1946
    %2070 = vmatpush1.bf16.msra.mxu0 %v1945
    %2071 = vmatprep.subr.bf16.mxu0 %v1950
    %2072 = vmatpush1.bf16.msra.mxu0 %v1949
    %2073 = vmatprep.subr.bf16.mxu0 %v1954
    %2074 = vmatpush1.bf16.msra.mxu0 %v1953
    %2075 = vmatprep.subr.bf16.mxu0 %v1958
    %2076 = vmatpush1.bf16.msra.mxu0 %v1957
    %2077 = vmatprep.subr.bf16.mxu0 %v1962
    %2078 = vmatpush1.bf16.msra.mxu0 %v1961
    %2079 = vmatprep.subr.bf16.mxu0 %v1966
    %2080 = vmatpush1.bf16.msra.mxu0 %v1965
    %2081 = vmatprep.subr.bf16.mxu0 %v1970
    %2082 = vmatpush1.bf16.msra.mxu0 %v1969
    %2083 = vmatprep.subr.bf16.mxu0 %v1974
    %2084 = vmatpush1.bf16.msra.mxu0 %v1973
    %2085 = vmatprep.subr.bf16.mxu0 %v1978
    %2086 = vmatpush1.bf16.msra.mxu0 %v1977
    %2087 = vmatprep.subr.bf16.mxu0 %v1982
    %2088 = vmatpush1.bf16.msra.mxu0 %v1981
    %2089 = vmatprep.subr.bf16.mxu0 %v1986
    %2090 = vmatpush1.bf16.msra.mxu0 %v1985
    %2091 = vmatprep.subr.bf16.mxu0 %v1990
    %2092 = vmatpush1.bf16.msra.mxu0 %v1989
    %2093 = vmatprep.subr.bf16.mxu0 %v1994
    %2094 = vmatpush1.bf16.msra.mxu0 %v1993
    %2095 = vmatprep.subr.bf16.mxu0 %v1998
    %2096 = vmatpush1.bf16.msra.mxu0 %v1997
    %2097 = vmatprep.mubr.bf16.mxu0 %v1742
    %2098 = vmatmul.mubr.bf16.gmra.mrb[0].mxu0 %v1741
    %v2099 = vpop.f32.mrb[0].mxu0
    %v2100 = vadd.f32 %v1721, %v2099
    %v2101 = vpop.f32.mrb[0].mxu0
    %v2102 = vadd.f32 %v1725, %v2101
    %v2103 = vpop.f32.mrb[0].mxu0
    %v2104 = vpop.f32.mrb[0].mxu0
    %2105 = vdwg.mxu0
    %2106 = vmatprep.subr.bf16.mxu0 %v1940
    %2107 = vmatpush1.bf16.msra.mxu0 %v1939
    %2108 = vmatprep.subr.bf16.mxu0 %v1944
    %2109 = vmatpush1.bf16.msra.mxu0 %v1943
    %2110 = vmatprep.subr.bf16.mxu0 %v1948
    %2111 = vmatpush1.bf16.msra.mxu0 %v1947
    %2112 = vmatprep.subr.bf16.mxu0 %v1952
    %2113 = vmatpush1.bf16.msra.mxu0 %v1951
    %2114 = vmatprep.subr.bf16.mxu0 %v1956
    %2115 = vmatpush1.bf16.msra.mxu0 %v1955
    %2116 = vmatprep.subr.bf16.mxu0 %v1960
    %2117 = vmatpush1.bf16.msra.mxu0 %v1959
    %2118 = vmatprep.subr.bf16.mxu0 %v1964
    %2119 = vmatpush1.bf16.msra.mxu0 %v1963
    %2120 = vmatprep.subr.bf16.mxu0 %v1968
    %2121 = vmatpush1.bf16.msra.mxu0 %v1967
    %2122 = vmatprep.subr.bf16.mxu0 %v1972
    %2123 = vmatpush1.bf16.msra.mxu0 %v1971
    %2124 = vmatprep.subr.bf16.mxu0 %v1976
    %2125 = vmatpush1.bf16.msra.mxu0 %v1975
    %2126 = vmatprep.subr.bf16.mxu0 %v1980
    %2127 = vmatpush1.bf16.msra.mxu0 %v1979
    %2128 = vmatprep.subr.bf16.mxu0 %v1984
    %2129 = vmatpush1.bf16.msra.mxu0 %v1983
    %2130 = vmatprep.subr.bf16.mxu0 %v1988
    %2131 = vmatpush1.bf16.msra.mxu0 %v1987
    %2132 = vmatprep.subr.bf16.mxu0 %v1992
    %2133 = vmatpush1.bf16.msra.mxu0 %v1991
    %2134 = vmatprep.subr.bf16.mxu0 %v1996
    %2135 = vmatpush1.bf16.msra.mxu0 %v1995
    %2136 = vmatprep.subr.bf16.mxu0 %v2000
    %2137 = vmatpush1.bf16.msra.mxu0 %v1999
    %2138 = vmatprep.mubr.bf16.mxu0 %v1742
    %2139 = vmatmul.mubr.bf16.gmra.mrb[0].mxu0 %v1741
    %v2140 = vpop.f32.mrb[0].mxu0
    %v2141 = vadd.f32 %v1729, %v2140
    %v2142 = vpop.f32.mrb[0].mxu0
    %v2143 = vadd.f32 %v1733, %v2142
    %v2144 = vpop.f32.mrb[0].mxu0
    %v2145 = vpop.f32.mrb[0].mxu0
    %2146 = vdwg.mxu0
    %v2147 = vxor.u32 %v2100, 2147483648
    %v2148 = vxor.u32 %v2102, 2147483648
    %v2149 = vxor.u32 %v2141, 2147483648
    %v2150 = vmul.f32 %v2147, 1.442695
    %v2151 = vpow.pop %v2150
    %v2152 = vmul.f32 %v2148, 1.442695
    %v2153 = vpow.pop %v2152
    %v2154 = vmul.f32 %v2149, 1.442695
    %v2155 = vpow.pop %v2154
    %v2156 = vadd.f32 %v2151, 1.0
    %v2157 = vadd.f32 %v2153, 1.0
    %v2158 = vadd.f32 %v2155, 1.0
    %v2159 = vrcp.pop %v2156
    %v2160 = vmul.f32 1.0, %v2159
    %v2161 = vrcp.pop %v2157
    %v2162 = vmul.f32 1.0, %v2161
    %v2163 = vrcp.pop %v2158
    %v2164 = vmul.f32 1.0, %v2163
    %v2165 = vtanh.pop %v2143
    %v2166 = vmul.f32 %v2162, %v1651
    %v2167 = vmul.f32 %v2160, %v2165
    %v2168 = vadd.f32 %v2166, %v2167
    %v2169 = vtanh.pop %v2168
    %v2170 = vmul.f32 %v2164, %v2169
    %v2171 = vpack.c.bf16 %v2170, %v2170
    %2172 = vst [vmem:[#allocation3 + $0x4] sm:$0xf] %v2171
    %2173 = vst [vmem:[%s814] sm:$0xff] %v2168
    %v2174 = vld [vmem:[#allocation3] sm:$0xf]
    %v2175 = vld [vmem:[#allocation4] sm:$0xff]
    %s2176 = scalar_lea.vmem [#allocation2], 64
    %v2177 = vld [vmem:[%s2176] sm:$0xff]
    %v2178 = vld [vmem:[%s2176 + $0x8] sm:$0xff]
    %v2179 = vld [vmem:[%s2176 + $0x10] sm:$0xff]
    %v2180 = vld [vmem:[%s2176 + $0x18] sm:$0xff]
    %v2181 = vld [vmem:[#allocation7] sm:$0xff]
    %v2182 = vld [vmem:[#allocation7 + $0x8] sm:$0xff]
    %v2183 = vld [vmem:[#allocation7 + $0x10] sm:$0xff]
    %v2184 = vld [vmem:[#allocation7 + $0x18] sm:$0xff]
    %v2185 = vld [vmem:[#allocation7 + $0x20] sm:$0xff]
    %v2186 = vld [vmem:[#allocation7 + $0x28] sm:$0xff]
    %v2187 = vld [vmem:[#allocation7 + $0x30] sm:$0xff]
    %v2188 = vld [vmem:[#allocation7 + $0x38] sm:$0xff]
    %v2189 = vld [vmem:[#allocation7 + $0x40] sm:$0xff]
    %v2190 = vld [vmem:[#allocation7 + $0x48] sm:$0xff]
    %v2191 = vld [vmem:[#allocation7 + $0x50] sm:$0xff]
    %v2192 = vld [vmem:[#allocation7 + $0x58] sm:$0xff]
    %v2193 = vld [vmem:[#allocation7 + $0x60] sm:$0xff]
    %v2194 = vld [vmem:[#allocation7 + $0x68] sm:$0xff]
    %v2195 = vld [vmem:[#allocation7 + $0x70] sm:$0xff]
    %v2196 = vld [vmem:[#allocation7 + $0x78] sm:$0xff]
    %v2197 = vld [vmem:[#allocation7 + $0x80] sm:$0xff]
    %v2198 = vld [vmem:[#allocation7 + $0x88] sm:$0xff]
    %v2199 = vld [vmem:[#allocation7 + $0x90] sm:$0xff]
    %v2200 = vld [vmem:[#allocation7 + $0x98] sm:$0xff]
    %v2201 = vld [vmem:[#allocation7 + $0xa0] sm:$0xff]
    %v2202 = vld [vmem:[#allocation7 + $0xa8] sm:$0xff]
    %v2203 = vld [vmem:[#allocation7 + $0xb0] sm:$0xff]
    %v2204 = vld [vmem:[#allocation7 + $0xb8] sm:$0xff]
    %v2205 = vld [vmem:[#allocation7 + $0xc0] sm:$0xff]
    %v2206 = vld [vmem:[#allocation7 + $0xc8] sm:$0xff]
    %v2207 = vld [vmem:[#allocation7 + $0xd0] sm:$0xff]
    %v2208 = vld [vmem:[#allocation7 + $0xd8] sm:$0xff]
    %v2209 = vld [vmem:[#allocation7 + $0xe0] sm:$0xff]
    %v2210 = vld [vmem:[#allocation7 + $0xe8] sm:$0xff]
    %v2211 = vld [vmem:[#allocation7 + $0xf0] sm:$0xff]
    %v2212 = vld [vmem:[#allocation7 + $0xf8] sm:$0xff]
    %v2245 = vunpack.c.l.b16 %v2181
    %v2246 = vunpack.c.h.b16 %v2181
    %v2247 = vunpack.c.l.b16 %v2182
    %v2248 = vunpack.c.h.b16 %v2182
    %v2249 = vunpack.c.l.b16 %v2183
    %v2250 = vunpack.c.h.b16 %v2183
    %v2251 = vunpack.c.l.b16 %v2184
    %v2252 = vunpack.c.h.b16 %v2184
    %v2253 = vunpack.c.l.b16 %v2185
    %v2254 = vunpack.c.h.b16 %v2185
    %v2255 = vunpack.c.l.b16 %v2186
    %v2256 = vunpack.c.h.b16 %v2186
    %v2257 = vunpack.c.l.b16 %v2187
    %v2258 = vunpack.c.h.b16 %v2187
    %v2259 = vunpack.c.l.b16 %v2188
    %v2260 = vunpack.c.h.b16 %v2188
    %v2261 = vunpack.c.l.b16 %v2189
    %v2262 = vunpack.c.h.b16 %v2189
    %v2263 = vunpack.c.l.b16 %v2190
    %v2264 = vunpack.c.h.b16 %v2190
    %v2265 = vunpack.c.l.b16 %v2191
    %v2266 = vunpack.c.h.b16 %v2191
    %v2267 = vunpack.c.l.b16 %v2192
    %v2268 = vunpack.c.h.b16 %v2192
    %v2269 = vunpack.c.l.b16 %v2193
    %v2270 = vunpack.c.h.b16 %v2193
    %v2271 = vunpack.c.l.b16 %v2194
    %v2272 = vunpack.c.h.b16 %v2194
    %v2273 = vunpack.c.l.b16 %v2195
    %v2274 = vunpack.c.h.b16 %v2195
    %v2275 = vunpack.c.l.b16 %v2196
    %v2276 = vunpack.c.h.b16 %v2196
    %v2277 = vunpack.c.l.b16 %v2197
    %v2278 = vunpack.c.h.b16 %v2197
    %v2279 = vunpack.c.l.b16 %v2198
    %v2280 = vunpack.c.h.b16 %v2198
    %v2281 = vunpack.c.l.b16 %v2199
    %v2282 = vunpack.c.h.b16 %v2199
    %v2283 = vunpack.c.l.b16 %v2200
    %v2284 = vunpack.c.h.b16 %v2200
    %v2285 = vunpack.c.l.b16 %v2201
    %v2286 = vunpack.c.h.b16 %v2201
    %v2287 = vunpack.c.l.b16 %v2202
    %v2288 = vunpack.c.h.b16 %v2202
    %v2289 = vunpack.c.l.b16 %v2203
    %v2290 = vunpack.c.h.b16 %v2203
    %v2291 = vunpack.c.l.b16 %v2204
    %v2292 = vunpack.c.h.b16 %v2204
    %v2293 = vunpack.c.l.b16 %v2205
    %v2294 = vunpack.c.h.b16 %v2205
    %v2295 = vunpack.c.l.b16 %v2206
    %v2296 = vunpack.c.h.b16 %v2206
    %v2297 = vunpack.c.l.b16 %v2207
    %v2298 = vunpack.c.h.b16 %v2207
    %v2299 = vunpack.c.l.b16 %v2208
    %v2300 = vunpack.c.h.b16 %v2208
    %v2301 = vunpack.c.l.b16 %v2209
    %v2302 = vunpack.c.h.b16 %v2209
    %v2303 = vunpack.c.l.b16 %v2210
    %v2304 = vunpack.c.h.b16 %v2210
    %v2305 = vunpack.c.l.b16 %v2211
    %v2306 = vunpack.c.h.b16 %v2211
    %v2307 = vunpack.c.l.b16 %v2212
    %v2308 = vunpack.c.h.b16 %v2212
    %v2309 = vpack.c.b16 %v2249, %v2245
    %v2310 = vpack.c.b16 %v2250, %v2246
    %v2311 = vpack.c.b16 %v2251, %v2247
    %v2312 = vpack.c.b16 %v2252, %v2248
    %v2313 = vpack.c.b16 %v2257, %v2253
    %v2314 = vpack.c.b16 %v2258, %v2254
    %v2315 = vpack.c.b16 %v2259, %v2255
    %v2316 = vpack.c.b16 %v2260, %v2256
    %v2317 = vpack.c.b16 %v2265, %v2261
    %v2318 = vpack.c.b16 %v2266, %v2262
    %v2319 = vpack.c.b16 %v2267, %v2263
    %v2320 = vpack.c.b16 %v2268, %v2264
    %v2321 = vpack.c.b16 %v2273, %v2269
    %v2322 = vpack.c.b16 %v2274, %v2270
    %v2323 = vpack.c.b16 %v2275, %v2271
    %v2324 = vpack.c.b16 %v2276, %v2272
    %v2325 = vpack.c.b16 %v2281, %v2277
    %v2326 = vpack.c.b16 %v2282, %v2278
    %v2327 = vpack.c.b16 %v2283, %v2279
    %v2328 = vpack.c.b16 %v2284, %v2280
    %v2329 = vpack.c.b16 %v2289, %v2285
    %v2330 = vpack.c.b16 %v2290, %v2286
    %v2331 = vpack.c.b16 %v2291, %v2287
    %v2332 = vpack.c.b16 %v2292, %v2288
    %v2333 = vpack.c.b16 %v2297, %v2293
    %v2334 = vpack.c.b16 %v2298, %v2294
    %v2335 = vpack.c.b16 %v2299, %v2295
    %v2336 = vpack.c.b16 %v2300, %v2296
    %v2337 = vpack.c.b16 %v2305, %v2301
    %v2338 = vpack.c.b16 %v2306, %v2302
    %v2339 = vpack.c.b16 %v2307, %v2303
    %v2340 = vpack.c.b16 %v2308, %v2304
    %2373 = vmatprep.subr.bf16.mxu0 %v2310
    %2374 = vmatpush1.bf16.msra.mxu0 %v2309
    %2375 = vmatprep.subr.bf16.mxu0 %v2314
    %2376 = vmatpush1.bf16.msra.mxu0 %v2313
    %2377 = vmatprep.subr.bf16.mxu0 %v2318
    %2378 = vmatpush1.bf16.msra.mxu0 %v2317
    %2379 = vmatprep.subr.bf16.mxu0 %v2322
    %2380 = vmatpush1.bf16.msra.mxu0 %v2321
    %2381 = vmatprep.subr.bf16.mxu0 %v2326
    %2382 = vmatpush1.bf16.msra.mxu0 %v2325
    %2383 = vmatprep.subr.bf16.mxu0 %v2330
    %2384 = vmatpush1.bf16.msra.mxu0 %v2329
    %2385 = vmatprep.subr.bf16.mxu0 %v2334
    %2386 = vmatpush1.bf16.msra.mxu0 %v2333
    %2387 = vmatprep.subr.bf16.mxu0 %v2338
    %2388 = vmatpush1.bf16.msra.mxu0 %v2337
    %2389 = vmatprep.subr.bf16.mxu0 0
    %2390 = vmatpush1.bf16.msra.mxu0 0
    %2391 = vmatprep.subr.bf16.mxu0 0
    %2392 = vmatpush1.bf16.msra.mxu0 0
    %2393 = vmatprep.subr.bf16.mxu0 0
    %2394 = vmatpush1.bf16.msra.mxu0 0
    %2395 = vmatprep.subr.bf16.mxu0 0
    %2396 = vmatpush1.bf16.msra.mxu0 0
    %2397 = vmatprep.subr.bf16.mxu0 0
    %2398 = vmatpush1.bf16.msra.mxu0 0
    %2399 = vmatprep.subr.bf16.mxu0 0
    %2400 = vmatpush1.bf16.msra.mxu0 0
    %2401 = vmatprep.subr.bf16.mxu0 0
    %2402 = vmatpush1.bf16.msra.mxu0 0
    %2403 = vmatprep.subr.bf16.mxu0 0
    %2404 = vmatpush1.bf16.msra.mxu0 0
    %2405 = vmatprep.mubr.bf16.mxu0 0
    %2406 = vmatmul.mubr.bf16.gmra.mrb[0].mxu0 %v2174
    %v2407 = vpop.f32.mrb[0].mxu0
    %v2408 = vadd.f32 0.0, %v2407
    %v2409 = vpop.f32.mrb[0].mxu0
    %v2410 = vadd.f32 0.0, %v2409
    %v2411 = vpop.f32.mrb[0].mxu0
    %v2412 = vpop.f32.mrb[0].mxu0
    %2413 = vdwg.mxu0
    %2414 = vmatprep.subr.bf16.mxu0 %v2312
    %2415 = vmatpush1.bf16.msra.mxu0 %v2311
    %2416 = vmatprep.subr.bf16.mxu0 %v2316
    %2417 = vmatpush1.bf16.msra.mxu0 %v2315
    %2418 = vmatprep.subr.bf16.mxu0 %v2320
    %2419 = vmatpush1.bf16.msra.mxu0 %v2319
    %2420 = vmatprep.subr.bf16.mxu0 %v2324
    %2421 = vmatpush1.bf16.msra.mxu0 %v2323
    %2422 = vmatprep.subr.bf16.mxu0 %v2328
    %2423 = vmatpush1.bf16.msra.mxu0 %v2327
    %2424 = vmatprep.subr.bf16.mxu0 %v2332
    %2425 = vmatpush1.bf16.msra.mxu0 %v2331
    %2426 = vmatprep.subr.bf16.mxu0 %v2336
    %2427 = vmatpush1.bf16.msra.mxu0 %v2335
    %2428 = vmatprep.subr.bf16.mxu0 %v2340
    %2429 = vmatpush1.bf16.msra.mxu0 %v2339
    %2430 = vmatprep.subr.bf16.mxu0 0
    %2431 = vmatpush1.bf16.msra.mxu0 0
    %2432 = vmatprep.subr.bf16.mxu0 0
    %2433 = vmatpush1.bf16.msra.mxu0 0
    %2434 = vmatprep.subr.bf16.mxu0 0
    %2435 = vmatpush1.bf16.msra.mxu0 0
    %2436 = vmatprep.subr.bf16.mxu0 0
    %2437 = vmatpush1.bf16.msra.mxu0 0
    %2438 = vmatprep.subr.bf16.mxu0 0
    %2439 = vmatpush1.bf16.msra.mxu0 0
    %2440 = vmatprep.subr.bf16.mxu0 0
    %2441 = vmatpush1.bf16.msra.mxu0 0
    %2442 = vmatprep.subr.bf16.mxu0 0
    %2443 = vmatpush1.bf16.msra.mxu0 0
    %2444 = vmatprep.subr.bf16.mxu0 0
    %2445 = vmatpush1.bf16.msra.mxu0 0
    %2446 = vmatprep.mubr.bf16.mxu0 0
    %2447 = vmatmul.mubr.bf16.gmra.mrb[0].mxu0 %v2174
    %v2448 = vpop.f32.mrb[0].mxu0
    %v2449 = vadd.f32 0.0, %v2448
    %v2450 = vpop.f32.mrb[0].mxu0
    %v2451 = vadd.f32 0.0, %v2450
    %v2452 = vpop.f32.mrb[0].mxu0
    %v2453 = vpop.f32.mrb[0].mxu0
    %2454 = vdwg.mxu0
    %v2455 = vadd.f32 %v2177, %v2408
    %v2456 = vadd.f32 %v2178, %v2410
    %v2457 = vadd.f32 %v2179, %v2449
    %v2458 = vadd.f32 %v2180, %v2451
    %v2459 = vxor.u32 %v2455, 2147483648
    %v2460 = vxor.u32 %v2456, 2147483648
    %v2461 = vxor.u32 %v2457, 2147483648
    %v2462 = vmul.f32 %v2459, 1.442695
    %v2463 = vpow.pop %v2462
    %v2464 = vmul.f32 %v2460, 1.442695
    %v2465 = vpow.pop %v2464
    %v2466 = vmul.f32 %v2461, 1.442695
    %v2467 = vpow.pop %v2466
    %v2468 = vadd.f32 %v2463, 1.0
    %v2469 = vadd.f32 %v2465, 1.0
    %v2470 = vadd.f32 %v2467, 1.0
    %v2471 = vrcp.pop %v2468
    %v2472 = vmul.f32 1.0, %v2471
    %v2473 = vrcp.pop %v2469
    %v2474 = vmul.f32 1.0, %v2473
    %v2475 = vrcp.pop %v2470
    %v2476 = vmul.f32 1.0, %v2475
    %v2477 = vtanh.pop %v2458
    %v2478 = vmul.f32 %v2474, %v2175
    %v2479 = vmul.f32 %v2472, %v2477
    %v2480 = vadd.f32 %v2478, %v2479
    %v2481 = vtanh.pop %v2480
    %v2482 = vmul.f32 %v2476, %v2481
    %v2483 = vpack.c.bf16 %v2482, %v2482
    %2484 = vst [vmem:[#allocation3] sm:$0xf] %v2483
    %2485 = vst [vmem:[#allocation4] sm:$0xff] %v2480
    %v2486 = vld [vmem:[#allocation3] sm:$0xff]
    %v2487 = vld [vmem:[%s814] sm:$0xff]
    %v2488 = vld [vmem:[#allocation9] sm:$0xff]
    %v2489 = vld [vmem:[#allocation9 + $0x8] sm:$0xff]
    %v2490 = vld [vmem:[#allocation9 + $0x10] sm:$0xff]
    %v2491 = vld [vmem:[#allocation9 + $0x18] sm:$0xff]
    %v2492 = vld [vmem:[#allocation9 + $0x20] sm:$0xff]
    %v2493 = vld [vmem:[#allocation9 + $0x28] sm:$0xff]
    %v2494 = vld [vmem:[#allocation9 + $0x30] sm:$0xff]
    %v2495 = vld [vmem:[#allocation9 + $0x38] sm:$0xff]
    %v2496 = vld [vmem:[#allocation9 + $0x40] sm:$0xff]
    %v2497 = vld [vmem:[#allocation9 + $0x48] sm:$0xff]
    %v2498 = vld [vmem:[#allocation9 + $0x50] sm:$0xff]
    %v2499 = vld [vmem:[#allocation9 + $0x58] sm:$0xff]
    %v2500 = vld [vmem:[#allocation9 + $0x60] sm:$0xff]
    %v2501 = vld [vmem:[#allocation9 + $0x68] sm:$0xff]
    %v2502 = vld [vmem:[#allocation9 + $0x70] sm:$0xff]
    %v2503 = vld [vmem:[#allocation9 + $0x78] sm:$0xff]
    %v2504 = vld [vmem:[#allocation9 + $0x80] sm:$0xff]
    %v2505 = vld [vmem:[#allocation9 + $0x88] sm:$0xff]
    %v2506 = vld [vmem:[#allocation9 + $0x90] sm:$0xff]
    %v2507 = vld [vmem:[#allocation9 + $0x98] sm:$0xff]
    %v2508 = vld [vmem:[#allocation9 + $0xa0] sm:$0xff]
    %v2509 = vld [vmem:[#allocation9 + $0xa8] sm:$0xff]
    %v2510 = vld [vmem:[#allocation9 + $0xb0] sm:$0xff]
    %v2511 = vld [vmem:[#allocation9 + $0xb8] sm:$0xff]
    %v2512 = vld [vmem:[#allocation9 + $0xc0] sm:$0xff]
    %v2513 = vld [vmem:[#allocation9 + $0xc8] sm:$0xff]
    %v2514 = vld [vmem:[#allocation9 + $0xd0] sm:$0xff]
    %v2515 = vld [vmem:[#allocation9 + $0xd8] sm:$0xff]
    %v2516 = vld [vmem:[#allocation9 + $0xe0] sm:$0xff]
    %v2517 = vld [vmem:[#allocation9 + $0xe8] sm:$0xff]
    %v2518 = vld [vmem:[#allocation9 + $0xf0] sm:$0xff]
    %v2519 = vld [vmem:[#allocation9 + $0xf8] sm:$0xff]
    %v2520 = vld [vmem:[#allocation9 + $0x100] sm:$0xff]
    %v2521 = vld [vmem:[#allocation9 + $0x108] sm:$0xff]
    %v2522 = vld [vmem:[#allocation9 + $0x110] sm:$0xff]
    %v2523 = vld [vmem:[#allocation9 + $0x118] sm:$0xff]
    %v2524 = vld [vmem:[#allocation9 + $0x120] sm:$0xff]
    %v2525 = vld [vmem:[#allocation9 + $0x128] sm:$0xff]
    %v2526 = vld [vmem:[#allocation9 + $0x130] sm:$0xff]
    %v2527 = vld [vmem:[#allocation9 + $0x138] sm:$0xff]
    %v2528 = vld [vmem:[#allocation9 + $0x140] sm:$0xff]
    %v2529 = vld [vmem:[#allocation9 + $0x148] sm:$0xff]
    %v2530 = vld [vmem:[#allocation9 + $0x150] sm:$0xff]
    %v2531 = vld [vmem:[#allocation9 + $0x158] sm:$0xff]
    %v2532 = vld [vmem:[#allocation9 + $0x160] sm:$0xff]
    %v2533 = vld [vmem:[#allocation9 + $0x168] sm:$0xff]
    %v2534 = vld [vmem:[#allocation9 + $0x170] sm:$0xff]
    %v2535 = vld [vmem:[#allocation9 + $0x178] sm:$0xff]
    %v2536 = vld [vmem:[#allocation9 + $0x180] sm:$0xff]
    %v2537 = vld [vmem:[#allocation9 + $0x188] sm:$0xff]
    %v2538 = vld [vmem:[#allocation9 + $0x190] sm:$0xff]
    %v2539 = vld [vmem:[#allocation9 + $0x198] sm:$0xff]
    %v2540 = vld [vmem:[#allocation9 + $0x1a0] sm:$0xff]
    %v2541 = vld [vmem:[#allocation9 + $0x1a8] sm:$0xff]
    %v2542 = vld [vmem:[#allocation9 + $0x1b0] sm:$0xff]
    %v2543 = vld [vmem:[#allocation9 + $0x1b8] sm:$0xff]
    %v2544 = vld [vmem:[#allocation9 + $0x1c0] sm:$0xff]
    %v2545 = vld [vmem:[#allocation9 + $0x1c8] sm:$0xff]
    %v2546 = vld [vmem:[#allocation9 + $0x1d0] sm:$0xff]
    %v2547 = vld [vmem:[#allocation9 + $0x1d8] sm:$0xff]
    %v2548 = vld [vmem:[#allocation9 + $0x1e0] sm:$0xff]
    %v2549 = vld [vmem:[#allocation9 + $0x1e8] sm:$0xff]
    %v2550 = vld [vmem:[#allocation9 + $0x1f0] sm:$0xff]
    %v2551 = vld [vmem:[#allocation9 + $0x1f8] sm:$0xff]
    %v2552 = vld [vmem:[%s5] sm:$0xf]
    %v2554 = vlaneseq
    %v2555 = vshrl.u32 %v2554, 7
    %v2556 = vsub.s32 0, %v2555
    %v2557 = vrot.slane %v2552, %v2556
    %v2558 = vlaneseq
    %v2559 = vshrl.u32 %v2558, 7
    %v2560 = vsub.s32 1, %v2559
    %v2561 = vrot.slane %v2552, %v2560
    %v2562 = vlaneseq
    %v2563 = vshrl.u32 %v2562, 7
    %v2564 = vsub.s32 2, %v2563
    %v2565 = vrot.slane %v2552, %v2564
    %v2566 = vlaneseq
    %v2567 = vshrl.u32 %v2566, 7
    %v2568 = vsub.s32 3, %v2567
    %v2569 = vrot.slane %v2552, %v2568
    %v2575 = vunpack.c.l.b16 %v2486
    %v2576 = vunpack.c.h.b16 %v2486
    %v2577 = vpack.c.b16 %v2575, %v2575
    %v2578 = vpack.c.b16 %v2576, %v2576
    %v2645 = vunpack.c.l.b16 %v2488
    %v2646 = vunpack.c.h.b16 %v2488
    %v2647 = vunpack.c.l.b16 %v2489
    %v2648 = vunpack.c.h.b16 %v2489
    %v2649 = vunpack.c.l.b16 %v2490
    %v2650 = vunpack.c.h.b16 %v2490
    %v2651 = vunpack.c.l.b16 %v2491
    %v2652 = vunpack.c.h.b16 %v2491
    %v2653 = vunpack.c.l.b16 %v2492
    %v2654 = vunpack.c.h.b16 %v2492
    %v2655 = vunpack.c.l.b16 %v2493
    %v2656 = vunpack.c.h.b16 %v2493
    %v2657 = vunpack.c.l.b16 %v2494
    %v2658 = vunpack.c.h.b16 %v2494
    %v2659 = vunpack.c.l.b16 %v2495
    %v2660 = vunpack.c.h.b16 %v2495
    %v2661 = vunpack.c.l.b16 %v2496
    %v2662 = vunpack.c.h.b16 %v2496
    %v2663 = vunpack.c.l.b16 %v2497
    %v2664 = vunpack.c.h.b16 %v2497
    %v2665 = vunpack.c.l.b16 %v2498
    %v2666 = vunpack.c.h.b16 %v2498
    %v2667 = vunpack.c.l.b16 %v2499
    %v2668 = vunpack.c.h.b16 %v2499
    %v2669 = vunpack.c.l.b16 %v2500
    %v2670 = vunpack.c.h.b16 %v2500
    %v2671 = vunpack.c.l.b16 %v2501
    %v2672 = vunpack.c.h.b16 %v2501
    %v2673 = vunpack.c.l.b16 %v2502
    %v2674 = vunpack.c.h.b16 %v2502
    %v2675 = vunpack.c.l.b16 %v2503
    %v2676 = vunpack.c.h.b16 %v2503
    %v2677 = vunpack.c.l.b16 %v2504
    %v2678 = vunpack.c.h.b16 %v2504
    %v2679 = vunpack.c.l.b16 %v2505
    %v2680 = vunpack.c.h.b16 %v2505
    %v2681 = vunpack.c.l.b16 %v2506
    %v2682 = vunpack.c.h.b16 %v2506
    %v2683 = vunpack.c.l.b16 %v2507
    %v2684 = vunpack.c.h.b16 %v2507
    %v2685 = vunpack.c.l.b16 %v2508
    %v2686 = vunpack.c.h.b16 %v2508
    %v2687 = vunpack.c.l.b16 %v2509
    %v2688 = vunpack.c.h.b16 %v2509
    %v2689 = vunpack.c.l.b16 %v2510
    %v2690 = vunpack.c.h.b16 %v2510
    %v2691 = vunpack.c.l.b16 %v2511
    %v2692 = vunpack.c.h.b16 %v2511
    %v2693 = vunpack.c.l.b16 %v2512
    %v2694 = vunpack.c.h.b16 %v2512
    %v2695 = vunpack.c.l.b16 %v2513
    %v2696 = vunpack.c.h.b16 %v2513
    %v2697 = vunpack.c.l.b16 %v2514
    %v2698 = vunpack.c.h.b16 %v2514
    %v2699 = vunpack.c.l.b16 %v2515
    %v2700 = vunpack.c.h.b16 %v2515
    %v2701 = vunpack.c.l.b16 %v2516
    %v2702 = vunpack.c.h.b16 %v2516
    %v2703 = vunpack.c.l.b16 %v2517
    %v2704 = vunpack.c.h.b16 %v2517
    %v2705 = vunpack.c.l.b16 %v2518
    %v2706 = vunpack.c.h.b16 %v2518
    %v2707 = vunpack.c.l.b16 %v2519
    %v2708 = vunpack.c.h.b16 %v2519
    %v2709 = vunpack.c.l.b16 %v2520
    %v2710 = vunpack.c.h.b16 %v2520
    %v2711 = vunpack.c.l.b16 %v2521
    %v2712 = vunpack.c.h.b16 %v2521
    %v2713 = vunpack.c.l.b16 %v2522
    %v2714 = vunpack.c.h.b16 %v2522
    %v2715 = vunpack.c.l.b16 %v2523
    %v2716 = vunpack.c.h.b16 %v2523
    %v2717 = vunpack.c.l.b16 %v2524
    %v2718 = vunpack.c.h.b16 %v2524
    %v2719 = vunpack.c.l.b16 %v2525
    %v2720 = vunpack.c.h.b16 %v2525
    %v2721 = vunpack.c.l.b16 %v2526
    %v2722 = vunpack.c.h.b16 %v2526
    %v2723 = vunpack.c.l.b16 %v2527
    %v2724 = vunpack.c.h.b16 %v2527
    %v2725 = vunpack.c.l.b16 %v2528
    %v2726 = vunpack.c.h.b16 %v2528
    %v2727 = vunpack.c.l.b16 %v2529
    %v2728 = vunpack.c.h.b16 %v2529
    %v2729 = vunpack.c.l.b16 %v2530
    %v2730 = vunpack.c.h.b16 %v2530
    %v2731 = vunpack.c.l.b16 %v2531
    %v2732 = vunpack.c.h.b16 %v2531
    %v2733 = vunpack.c.l.b16 %v2532
    %v2734 = vunpack.c.h.b16 %v2532
    %v2735 = vunpack.c.l.b16 %v2533
    %v2736 = vunpack.c.h.b16 %v2533
    %v2737 = vunpack.c.l.b16 %v2534
    %v2738 = vunpack.c.h.b16 %v2534
    %v2739 = vunpack.c.l.b16 %v2535
    %v2740 = vunpack.c.h.b16 %v2535
    %v2741 = vunpack.c.l.b16 %v2536
    %v2742 = vunpack.c.h.b16 %v2536
    %v2743 = vunpack.c.l.b16 %v2537
    %v2744 = vunpack.c.h.b16 %v2537
    %v2745 = vunpack.c.l.b16 %v2538
    %v2746 = vunpack.c.h.b16 %v2538
    %v2747 = vunpack.c.l.b16 %v2539
    %v2748 = vunpack.c.h.b16 %v2539
    %v2749 = vunpack.c.l.b16 %v2540
    %v2750 = vunpack.c.h.b16 %v2540
    %v2751 = vunpack.c.l.b16 %v2541
    %v2752 = vunpack.c.h.b16 %v2541
    %v2753 = vunpack.c.l.b16 %v2542
    %v2754 = vunpack.c.h.b16 %v2542
    %v2755 = vunpack.c.l.b16 %v2543
    %v2756 = vunpack.c.h.b16 %v2543
    %v2757 = vunpack.c.l.b16 %v2544
    %v2758 = vunpack.c.h.b16 %v2544
    %v2759 = vunpack.c.l.b16 %v2545
    %v2760 = vunpack.c.h.b16 %v2545
    %v2761 = vunpack.c.l.b16 %v2546
    %v2762 = vunpack.c.h.b16 %v2546
    %v2763 = vunpack.c.l.b16 %v2547
    %v2764 = vunpack.c.h.b16 %v2547
    %v2765 = vunpack.c.l.b16 %v2548
    %v2766 = vunpack.c.h.b16 %v2548
    %v2767 = vunpack.c.l.b16 %v2549
    %v2768 = vunpack.c.h.b16 %v2549
    %v2769 = vunpack.c.l.b16 %v2550
    %v2770 = vunpack.c.h.b16 %v2550
    %v2771 = vunpack.c.l.b16 %v2551
    %v2772 = vunpack.c.h.b16 %v2551
    %v2773 = vpack.c.b16 %v2649, %v2645
    %v2774 = vpack.c.b16 %v2650, %v2646
    %v2775 = vpack.c.b16 %v2651, %v2647
    %v2776 = vpack.c.b16 %v2652, %v2648
    %v2777 = vpack.c.b16 %v2657, %v2653
    %v2778 = vpack.c.b16 %v2658, %v2654
    %v2779 = vpack.c.b16 %v2659, %v2655
    %v2780 = vpack.c.b16 %v2660, %v2656
    %v2781 = vpack.c.b16 %v2665, %v2661
    %v2782 = vpack.c.b16 %v2666, %v2662
    %v2783 = vpack.c.b16 %v2667, %v2663
    %v2784 = vpack.c.b16 %v2668, %v2664
    %v2785 = vpack.c.b16 %v2673, %v2669
    %v2786 = vpack.c.b16 %v2674, %v2670
    %v2787 = vpack.c.b16 %v2675, %v2671
    %v2788 = vpack.c.b16 %v2676, %v2672
    %v2789 = vpack.c.b16 %v2681, %v2677
    %v2790 = vpack.c.b16 %v2682, %v2678
    %v2791 = vpack.c.b16 %v2683, %v2679
    %v2792 = vpack.c.b16 %v2684, %v2680
    %v2793 = vpack.c.b16 %v2689, %v2685
    %v2794 = vpack.c.b16 %v2690, %v2686
    %v2795 = vpack.c.b16 %v2691, %v2687
    %v2796 = vpack.c.b16 %v2692, %v2688
    %v2797 = vpack.c.b16 %v2697, %v2693
    %v2798 = vpack.c.b16 %v2698, %v2694
    %v2799 = vpack.c.b16 %v2699, %v2695
    %v2800 = vpack.c.b16 %v2700, %v2696
    %v2801 = vpack.c.b16 %v2705, %v2701
    %v2802 = vpack.c.b16 %v2706, %v2702
    %v2803 = vpack.c.b16 %v2707, %v2703
    %v2804 = vpack.c.b16 %v2708, %v2704
    %v2805 = vpack.c.b16 %v2713, %v2709
    %v2806 = vpack.c.b16 %v2714, %v2710
    %v2807 = vpack.c.b16 %v2715, %v2711
    %v2808 = vpack.c.b16 %v2716, %v2712
    %v2809 = vpack.c.b16 %v2721, %v2717
    %v2810 = vpack.c.b16 %v2722, %v2718
    %v2811 = vpack.c.b16 %v2723, %v2719
    %v2812 = vpack.c.b16 %v2724, %v2720
    %v2813 = vpack.c.b16 %v2729, %v2725
    %v2814 = vpack.c.b16 %v2730, %v2726
    %v2815 = vpack.c.b16 %v2731, %v2727
    %v2816 = vpack.c.b16 %v2732, %v2728
    %v2817 = vpack.c.b16 %v2737, %v2733
    %v2818 = vpack.c.b16 %v2738, %v2734
    %v2819 = vpack.c.b16 %v2739, %v2735
    %v2820 = vpack.c.b16 %v2740, %v2736
    %v2821 = vpack.c.b16 %v2745, %v2741
    %v2822 = vpack.c.b16 %v2746, %v2742
    %v2823 = vpack.c.b16 %v2747, %v2743
    %v2824 = vpack.c.b16 %v2748, %v2744
    %v2825 = vpack.c.b16 %v2753, %v2749
    %v2826 = vpack.c.b16 %v2754, %v2750
    %v2827 = vpack.c.b16 %v2755, %v2751
    %v2828 = vpack.c.b16 %v2756, %v2752
    %v2829 = vpack.c.b16 %v2761, %v2757
    %v2830 = vpack.c.b16 %v2762, %v2758
    %v2831 = vpack.c.b16 %v2763, %v2759
    %v2832 = vpack.c.b16 %v2764, %v2760
    %v2833 = vpack.c.b16 %v2769, %v2765
    %v2834 = vpack.c.b16 %v2770, %v2766
    %v2835 = vpack.c.b16 %v2771, %v2767
    %v2836 = vpack.c.b16 %v2772, %v2768
    %2901 = vmatprep.subr.bf16.mxu0 %v2774
    %2902 = vmatpush1.bf16.msra.mxu0 %v2773
    %2903 = vmatprep.subr.bf16.mxu0 %v2778
    %2904 = vmatpush1.bf16.msra.mxu0 %v2777
    %2905 = vmatprep.subr.bf16.mxu0 %v2782
    %2906 = vmatpush1.bf16.msra.mxu0 %v2781
    %2907 = vmatprep.subr.bf16.mxu0 %v2786
    %2908 = vmatpush1.bf16.msra.mxu0 %v2785
    %2909 = vmatprep.subr.bf16.mxu0 %v2790
    %2910 = vmatpush1.bf16.msra.mxu0 %v2789
    %2911 = vmatprep.subr.bf16.mxu0 %v2794
    %2912 = vmatpush1.bf16.msra.mxu0 %v2793
    %2913 = vmatprep.subr.bf16.mxu0 %v2798
    %2914 = vmatpush1.bf16.msra.mxu0 %v2797
    %2915 = vmatprep.subr.bf16.mxu0 %v2802
    %2916 = vmatpush1.bf16.msra.mxu0 %v2801
    %2917 = vmatprep.subr.bf16.mxu0 %v2806
    %2918 = vmatpush1.bf16.msra.mxu0 %v2805
    %2919 = vmatprep.subr.bf16.mxu0 %v2810
    %2920 = vmatpush1.bf16.msra.mxu0 %v2809
    %2921 = vmatprep.subr.bf16.mxu0 %v2814
    %2922 = vmatpush1.bf16.msra.mxu0 %v2813
    %2923 = vmatprep.subr.bf16.mxu0 %v2818
    %2924 = vmatpush1.bf16.msra.mxu0 %v2817
    %2925 = vmatprep.subr.bf16.mxu0 %v2822
    %2926 = vmatpush1.bf16.msra.mxu0 %v2821
    %2927 = vmatprep.subr.bf16.mxu0 %v2826
    %2928 = vmatpush1.bf16.msra.mxu0 %v2825
    %2929 = vmatprep.subr.bf16.mxu0 %v2830
    %2930 = vmatpush1.bf16.msra.mxu0 %v2829
    %2931 = vmatprep.subr.bf16.mxu0 %v2834
    %2932 = vmatpush1.bf16.msra.mxu0 %v2833
    %2933 = vmatprep.mubr.bf16.mxu0 %v2578
    %2934 = vmatmul.mubr.bf16.gmra.mrb[0].mxu0 %v2577
    %v2935 = vpop.f32.mrb[0].mxu0
    %v2936 = vadd.f32 %v2557, %v2935
    %v2937 = vpop.f32.mrb[0].mxu0
    %v2938 = vadd.f32 %v2561, %v2937
    %v2939 = vpop.f32.mrb[0].mxu0
    %v2940 = vpop.f32.mrb[0].mxu0
    %2941 = vdwg.mxu0
    %2942 = vmatprep.subr.bf16.mxu0 %v2776
    %2943 = vmatpush1.bf16.msra.mxu0 %v2775
    %2944 = vmatprep.subr.bf16.mxu0 %v2780
    %2945 = vmatpush1.bf16.msra.mxu0 %v2779
    %2946 = vmatprep.subr.bf16.mxu0 %v2784
    %2947 = vmatpush1.bf16.msra.mxu0 %v2783
    %2948 = vmatprep.subr.bf16.mxu0 %v2788
    %2949 = vmatpush1.bf16.msra.mxu0 %v2787
    %2950 = vmatprep.subr.bf16.mxu0 %v2792
    %2951 = vmatpush1.bf16.msra.mxu0 %v2791
    %2952 = vmatprep.subr.bf16.mxu0 %v2796
    %2953 = vmatpush1.bf16.msra.mxu0 %v2795
    %2954 = vmatprep.subr.bf16.mxu0 %v2800
    %2955 = vmatpush1.bf16.msra.mxu0 %v2799
    %2956 = vmatprep.subr.bf16.mxu0 %v2804
    %2957 = vmatpush1.bf16.msra.mxu0 %v2803
    %2958 = vmatprep.subr.bf16.mxu0 %v2808
    %2959 = vmatpush1.bf16.msra.mxu0 %v2807
    %2960 = vmatprep.subr.bf16.mxu0 %v2812
    %2961 = vmatpush1.bf16.msra.mxu0 %v2811
    %2962 = vmatprep.subr.bf16.mxu0 %v2816
    %2963 = vmatpush1.bf16.msra.mxu0 %v2815
    %2964 = vmatprep.subr.bf16.mxu0 %v2820
    %2965 = vmatpush1.bf16.msra.mxu0 %v2819
    %2966 = vmatprep.subr.bf16.mxu0 %v2824
    %2967 = vmatpush1.bf16.msra.mxu0 %v2823
    %2968 = vmatprep.subr.bf16.mxu0 %v2828
    %2969 = vmatpush1.bf16.msra.mxu0 %v2827
    %2970 = vmatprep.subr.bf16.mxu0 %v2832
    %2971 = vmatpush1.bf16.msra.mxu0 %v2831
    %2972 = vmatprep.subr.bf16.mxu0 %v2836
    %2973 = vmatpush1.bf16.msra.mxu0 %v2835
    %2974 = vmatprep.mubr.bf16.mxu0 %v2578
    %2975 = vmatmul.mubr.bf16.gmra.mrb[0].mxu0 %v2577
    %v2976 = vpop.f32.mrb[0].mxu0
    %v2977 = vadd.f32 %v2565, %v2976
    %v2978 = vpop.f32.mrb[0].mxu0
    %v2979 = vadd.f32 %v2569, %v2978
    %v2980 = vpop.f32.mrb[0].mxu0
    %v2981 = vpop.f32.mrb[0].mxu0
    %2982 = vdwg.mxu0
    %v2983 = vxor.u32 %v2936, 2147483648
    %v2984 = vxor.u32 %v2938, 2147483648
    %v2985 = vxor.u32 %v2977, 2147483648
    %v2986 = vmul.f32 %v2983, 1.442695
    %v2987 = vpow.pop %v2986
    %v2988 = vmul.f32 %v2984, 1.442695
    %v2989 = vpow.pop %v2988
    %v2990 = vmul.f32 %v2985, 1.442695
    %v2991 = vpow.pop %v2990
    %v2992 = vadd.f32 %v2987, 1.0
    %v2993 = vadd.f32 %v2989, 1.0
    %v2994 = vadd.f32 %v2991, 1.0
    %v2995 = vrcp.pop %v2992
    %v2996 = vmul.f32 1.0, %v2995
    %v2997 = vrcp.pop %v2993
    %v2998 = vmul.f32 1.0, %v2997
    %v2999 = vrcp.pop %v2994
    %v3000 = vmul.f32 1.0, %v2999
    %v3001 = vtanh.pop %v2979
    %v3002 = vmul.f32 %v2998, %v2487
    %v3003 = vmul.f32 %v2996, %v3001
    %v3004 = vadd.f32 %v3002, %v3003
    %v3005 = vtanh.pop %v3004
    %v3006 = vmul.f32 %v3000, %v3005
    %v3007 = vpack.c.bf16 %v3006, %v3006
    %3008 = vst [vmem:[#allocation3 + $0x4] sm:$0xf] %v3007
    %3009 = vst [vmem:[%s814] sm:$0xff] %v3004
    %v3010 = vld [vmem:[#allocation3] sm:$0xf]
    %v3011 = vld [vmem:[#allocation4] sm:$0xff]
    %s3012 = scalar_lea.vmem [#allocation2], 96
    %v3013 = vld [vmem:[%s3012] sm:$0xff]
    %v3014 = vld [vmem:[%s3012 + $0x8] sm:$0xff]
    %v3015 = vld [vmem:[%s3012 + $0x10] sm:$0xff]
    %v3016 = vld [vmem:[%s3012 + $0x18] sm:$0xff]
    %v3017 = vld [vmem:[#allocation7] sm:$0xff]
    %v3018 = vld [vmem:[#allocation7 + $0x8] sm:$0xff]
    %v3019 = vld [vmem:[#allocation7 + $0x10] sm:$0xff]
    %v3020 = vld [vmem:[#allocation7 + $0x18] sm:$0xff]
    %v3021 = vld [vmem:[#allocation7 + $0x20] sm:$0xff]
    %v3022 = vld [vmem:[#allocation7 + $0x28] sm:$0xff]
    %v3023 = vld [vmem:[#allocation7 + $0x30] sm:$0xff]
    %v3024 = vld [vmem:[#allocation7 + $0x38] sm:$0xff]
    %v3025 = vld [vmem:[#allocation7 + $0x40] sm:$0xff]
    %v3026 = vld [vmem:[#allocation7 + $0x48] sm:$0xff]
    %v3027 = vld [vmem:[#allocation7 + $0x50] sm:$0xff]
    %v3028 = vld [vmem:[#allocation7 + $0x58] sm:$0xff]
    %v3029 = vld [vmem:[#allocation7 + $0x60] sm:$0xff]
    %v3030 = vld [vmem:[#allocation7 + $0x68] sm:$0xff]
    %v3031 = vld [vmem:[#allocation7 + $0x70] sm:$0xff]
    %v3032 = vld [vmem:[#allocation7 + $0x78] sm:$0xff]
    %v3033 = vld [vmem:[#allocation7 + $0x80] sm:$0xff]
    %v3034 = vld [vmem:[#allocation7 + $0x88] sm:$0xff]
    %v3035 = vld [vmem:[#allocation7 + $0x90] sm:$0xff]
    %v3036 = vld [vmem:[#allocation7 + $0x98] sm:$0xff]
    %v3037 = vld [vmem:[#allocation7 + $0xa0] sm:$0xff]
    %v3038 = vld [vmem:[#allocation7 + $0xa8] sm:$0xff]
    %v3039 = vld [vmem:[#allocation7 + $0xb0] sm:$0xff]
    %v3040 = vld [vmem:[#allocation7 + $0xb8] sm:$0xff]
    %v3041 = vld [vmem:[#allocation7 + $0xc0] sm:$0xff]
    %v3042 = vld [vmem:[#allocation7 + $0xc8] sm:$0xff]
    %v3043 = vld [vmem:[#allocation7 + $0xd0] sm:$0xff]
    %v3044 = vld [vmem:[#allocation7 + $0xd8] sm:$0xff]
    %v3045 = vld [vmem:[#allocation7 + $0xe0] sm:$0xff]
    %v3046 = vld [vmem:[#allocation7 + $0xe8] sm:$0xff]
    %v3047 = vld [vmem:[#allocation7 + $0xf0] sm:$0xff]
    %v3048 = vld [vmem:[#allocation7 + $0xf8] sm:$0xff]
    %v3081 = vunpack.c.l.b16 %v3017
    %v3082 = vunpack.c.h.b16 %v3017
    %v3083 = vunpack.c.l.b16 %v3018
    %v3084 = vunpack.c.h.b16 %v3018
    %v3085 = vunpack.c.l.b16 %v3019
    %v3086 = vunpack.c.h.b16 %v3019
    %v3087 = vunpack.c.l.b16 %v3020
    %v3088 = vunpack.c.h.b16 %v3020
    %v3089 = vunpack.c.l.b16 %v3021
    %v3090 = vunpack.c.h.b16 %v3021
    %v3091 = vunpack.c.l.b16 %v3022
    %v3092 = vunpack.c.h.b16 %v3022
    %v3093 = vunpack.c.l.b16 %v3023
    %v3094 = vunpack.c.h.b16 %v3023
    %v3095 = vunpack.c.l.b16 %v3024
    %v3096 = vunpack.c.h.b16 %v3024
    %v3097 = vunpack.c.l.b16 %v3025
    %v3098 = vunpack.c.h.b16 %v3025
    %v3099 = vunpack.c.l.b16 %v3026
    %v3100 = vunpack.c.h.b16 %v3026
    %v3101 = vunpack.c.l.b16 %v3027
    %v3102 = vunpack.c.h.b16 %v3027
    %v3103 = vunpack.c.l.b16 %v3028
    %v3104 = vunpack.c.h.b16 %v3028
    %v3105 = vunpack.c.l.b16 %v3029
    %v3106 = vunpack.c.h.b16 %v3029
    %v3107 = vunpack.c.l.b16 %v3030
    %v3108 = vunpack.c.h.b16 %v3030
    %v3109 = vunpack.c.l.b16 %v3031
    %v3110 = vunpack.c.h.b16 %v3031
    %v3111 = vunpack.c.l.b16 %v3032
    %v3112 = vunpack.c.h.b16 %v3032
    %v3113 = vunpack.c.l.b16 %v3033
    %v3114 = vunpack.c.h.b16 %v3033
    %v3115 = vunpack.c.l.b16 %v3034
    %v3116 = vunpack.c.h.b16 %v3034
    %v3117 = vunpack.c.l.b16 %v3035
    %v3118 = vunpack.c.h.b16 %v3035
    %v3119 = vunpack.c.l.b16 %v3036
    %v3120 = vunpack.c.h.b16 %v3036
    %v3121 = vunpack.c.l.b16 %v3037
    %v3122 = vunpack.c.h.b16 %v3037
    %v3123 = vunpack.c.l.b16 %v3038
    %v3124 = vunpack.c.h.b16 %v3038
    %v3125 = vunpack.c.l.b16 %v3039
    %v3126 = vunpack.c.h.b16 %v3039
    %v3127 = vunpack.c.l.b16 %v3040
    %v3128 = vunpack.c.h.b16 %v3040
    %v3129 = vunpack.c.l.b16 %v3041
    %v3130 = vunpack.c.h.b16 %v3041
    %v3131 = vunpack.c.l.b16 %v3042
    %v3132 = vunpack.c.h.b16 %v3042
    %v3133 = vunpack.c.l.b16 %v3043
    %v3134 = vunpack.c.h.b16 %v3043
    %v3135 = vunpack.c.l.b16 %v3044
    %v3136 = vunpack.c.h.b16 %v3044
    %v3137 = vunpack.c.l.b16 %v3045
    %v3138 = vunpack.c.h.b16 %v3045
    %v3139 = vunpack.c.l.b16 %v3046
    %v3140 = vunpack.c.h.b16 %v3046
    %v3141 = vunpack.c.l.b16 %v3047
    %v3142 = vunpack.c.h.b16 %v3047
    %v3143 = vunpack.c.l.b16 %v3048
    %v3144 = vunpack.c.h.b16 %v3048
    %v3145 = vpack.c.b16 %v3085, %v3081
    %v3146 = vpack.c.b16 %v3086, %v3082
    %v3147 = vpack.c.b16 %v3087, %v3083
    %v3148 = vpack.c.b16 %v3088, %v3084
    %v3149 = vpack.c.b16 %v3093, %v3089
    %v3150 = vpack.c.b16 %v3094, %v3090
    %v3151 = vpack.c.b16 %v3095, %v3091
    %v3152 = vpack.c.b16 %v3096, %v3092
    %v3153 = vpack.c.b16 %v3101, %v3097
    %v3154 = vpack.c.b16 %v3102, %v3098
    %v3155 = vpack.c.b16 %v3103, %v3099
    %v3156 = vpack.c.b16 %v3104, %v3100
    %v3157 = vpack.c.b16 %v3109, %v3105
    %v3158 = vpack.c.b16 %v3110, %v3106
    %v3159 = vpack.c.b16 %v3111, %v3107
    %v3160 = vpack.c.b16 %v3112, %v3108
    %v3161 = vpack.c.b16 %v3117, %v3113
    %v3162 = vpack.c.b16 %v3118, %v3114
    %v3163 = vpack.c.b16 %v3119, %v3115
    %v3164 = vpack.c.b16 %v3120, %v3116
    %v3165 = vpack.c.b16 %v3125, %v3121
    %v3166 = vpack.c.b16 %v3126, %v3122
    %v3167 = vpack.c.b16 %v3127, %v3123
    %v3168 = vpack.c.b16 %v3128, %v3124
    %v3169 = vpack.c.b16 %v3133, %v3129
    %v3170 = vpack.c.b16 %v3134, %v3130
    %v3171 = vpack.c.b16 %v3135, %v3131
    %v3172 = vpack.c.b16 %v3136, %v3132
    %v3173 = vpack.c.b16 %v3141, %v3137
    %v3174 = vpack.c.b16 %v3142, %v3138
    %v3175 = vpack.c.b16 %v3143, %v3139
    %v3176 = vpack.c.b16 %v3144, %v3140
    %3209 = vmatprep.subr.bf16.mxu0 %v3146
    %3210 = vmatpush1.bf16.msra.mxu0 %v3145
    %3211 = vmatprep.subr.bf16.mxu0 %v3150
    %3212 = vmatpush1.bf16.msra.mxu0 %v3149
    %3213 = vmatprep.subr.bf16.mxu0 %v3154
    %3214 = vmatpush1.bf16.msra.mxu0 %v3153
    %3215 = vmatprep.subr.bf16.mxu0 %v3158
    %3216 = vmatpush1.bf16.msra.mxu0 %v3157
    %3217 = vmatprep.subr.bf16.mxu0 %v3162
    %3218 = vmatpush1.bf16.msra.mxu0 %v3161
    %3219 = vmatprep.subr.bf16.mxu0 %v3166
    %3220 = vmatpush1.bf16.msra.mxu0 %v3165
    %3221 = vmatprep.subr.bf16.mxu0 %v3170
    %3222 = vmatpush1.bf16.msra.mxu0 %v3169
    %3223 = vmatprep.subr.bf16.mxu0 %v3174
    %3224 = vmatpush1.bf16.msra.mxu0 %v3173
    %3225 = vmatprep.subr.bf16.mxu0 0
    %3226 = vmatpush1.bf16.msra.mxu0 0
    %3227 = vmatprep.subr.bf16.mxu0 0
    %3228 = vmatpush1.bf16.msra.mxu0 0
    %3229 = vmatprep.subr.bf16.mxu0 0
    %3230 = vmatpush1.bf16.msra.mxu0 0
    %3231 = vmatprep.subr.bf16.mxu0 0
    %3232 = vmatpush1.bf16.msra.mxu0 0
    %3233 = vmatprep.subr.bf16.mxu0 0
    %3234 = vmatpush1.bf16.msra.mxu0 0
    %3235 = vmatprep.subr.bf16.mxu0 0
    %3236 = vmatpush1.bf16.msra.mxu0 0
    %3237 = vmatprep.subr.bf16.mxu0 0
    %3238 = vmatpush1.bf16.msra.mxu0 0
    %3239 = vmatprep.subr.bf16.mxu0 0
    %3240 = vmatpush1.bf16.msra.mxu0 0
    %3241 = vmatprep.mubr.bf16.mxu0 0
    %3242 = vmatmul.mubr.bf16.gmra.mrb[0].mxu0 %v3010
    %v3243 = vpop.f32.mrb[0].mxu0
    %v3244 = vadd.f32 0.0, %v3243
    %v3245 = vpop.f32.mrb[0].mxu0
    %v3246 = vadd.f32 0.0, %v3245
    %v3247 = vpop.f32.mrb[0].mxu0
    %v3248 = vpop.f32.mrb[0].mxu0
    %3249 = vdwg.mxu0
    %3250 = vmatprep.subr.bf16.mxu0 %v3148
    %3251 = vmatpush1.bf16.msra.mxu0 %v3147
    %3252 = vmatprep.subr.bf16.mxu0 %v3152
    %3253 = vmatpush1.bf16.msra.mxu0 %v3151
    %3254 = vmatprep.subr.bf16.mxu0 %v3156
    %3255 = vmatpush1.bf16.msra.mxu0 %v3155
    %3256 = vmatprep.subr.bf16.mxu0 %v3160
    %3257 = vmatpush1.bf16.msra.mxu0 %v3159
    %3258 = vmatprep.subr.bf16.mxu0 %v3164
    %3259 = vmatpush1.bf16.msra.mxu0 %v3163
    %3260 = vmatprep.subr.bf16.mxu0 %v3168
    %3261 = vmatpush1.bf16.msra.mxu0 %v3167
    %3262 = vmatprep.subr.bf16.mxu0 %v3172
    %3263 = vmatpush1.bf16.msra.mxu0 %v3171
    %3264 = vmatprep.subr.bf16.mxu0 %v3176
    %3265 = vmatpush1.bf16.msra.mxu0 %v3175
    %3266 = vmatprep.subr.bf16.mxu0 0
    %3267 = vmatpush1.bf16.msra.mxu0 0
    %3268 = vmatprep.subr.bf16.mxu0 0
    %3269 = vmatpush1.bf16.msra.mxu0 0
    %3270 = vmatprep.subr.bf16.mxu0 0
    %3271 = vmatpush1.bf16.msra.mxu0 0
    %3272 = vmatprep.subr.bf16.mxu0 0
    %3273 = vmatpush1.bf16.msra.mxu0 0
    %3274 = vmatprep.subr.bf16.mxu0 0
    %3275 = vmatpush1.bf16.msra.mxu0 0
    %3276 = vmatprep.subr.bf16.mxu0 0
    %3277 = vmatpush1.bf16.msra.mxu0 0
    %3278 = vmatprep.subr.bf16.mxu0 0
    %3279 = vmatpush1.bf16.msra.mxu0 0
    %3280 = vmatprep.subr.bf16.mxu0 0
    %3281 = vmatpush1.bf16.msra.mxu0 0
    %3282 = vmatprep.mubr.bf16.mxu0 0
    %3283 = vmatmul.mubr.bf16.gmra.mrb[0].mxu0 %v3010
    %v3284 = vpop.f32.mrb[0].mxu0
    %v3285 = vadd.f32 0.0, %v3284
    %v3286 = vpop.f32.mrb[0].mxu0
    %v3287 = vadd.f32 0.0, %v3286
    %v3288 = vpop.f32.mrb[0].mxu0
    %v3289 = vpop.f32.mrb[0].mxu0
    %3290 = vdwg.mxu0
    %v3291 = vadd.f32 %v3013, %v3244
    %v3292 = vadd.f32 %v3014, %v3246
    %v3293 = vadd.f32 %v3015, %v3285
    %v3294 = vadd.f32 %v3016, %v3287
    %v3295 = vxor.u32 %v3291, 2147483648
    %v3296 = vxor.u32 %v3292, 2147483648
    %v3297 = vxor.u32 %v3293, 2147483648
    %v3298 = vmul.f32 %v3295, 1.442695
    %v3299 = vpow.pop %v3298
    %v3300 = vmul.f32 %v3296, 1.442695
    %v3301 = vpow.pop %v3300
    %v3302 = vmul.f32 %v3297, 1.442695
    %v3303 = vpow.pop %v3302
    %v3304 = vadd.f32 %v3299, 1.0
    %v3305 = vadd.f32 %v3301, 1.0
    %v3306 = vadd.f32 %v3303, 1.0
    %v3307 = vrcp.pop %v3304
    %v3308 = vmul.f32 1.0, %v3307
    %v3309 = vrcp.pop %v3305
    %v3310 = vmul.f32 1.0, %v3309
    %v3311 = vrcp.pop %v3306
    %v3312 = vmul.f32 1.0, %v3311
    %v3313 = vtanh.pop %v3294
    %v3314 = vmul.f32 %v3310, %v3011
    %v3315 = vmul.f32 %v3308, %v3313
    %v3316 = vadd.f32 %v3314, %v3315
    %v3317 = vtanh.pop %v3316
    %v3318 = vmul.f32 %v3312, %v3317
    %v3319 = vpack.c.bf16 %v3318, %v3318
    %3320 = vst [vmem:[#allocation3] sm:$0xf] %v3319
    %3321 = vst [vmem:[#allocation4] sm:$0xff] %v3316
    %v3322 = vld [vmem:[#allocation3] sm:$0xff]
    %v3323 = vld [vmem:[%s814] sm:$0xff]
    %v3324 = vld [vmem:[#allocation9] sm:$0xff]
    %v3325 = vld [vmem:[#allocation9 + $0x8] sm:$0xff]
    %v3326 = vld [vmem:[#allocation9 + $0x10] sm:$0xff]
    %v3327 = vld [vmem:[#allocation9 + $0x18] sm:$0xff]
    %v3328 = vld [vmem:[#allocation9 + $0x20] sm:$0xff]
    %v3329 = vld [vmem:[#allocation9 + $0x28] sm:$0xff]
    %v3330 = vld [vmem:[#allocation9 + $0x30] sm:$0xff]
    %v3331 = vld [vmem:[#allocation9 + $0x38] sm:$0xff]
    %v3332 = vld [vmem:[#allocation9 + $0x40] sm:$0xff]
    %v3333 = vld [vmem:[#allocation9 + $0x48] sm:$0xff]
    %v3334 = vld [vmem:[#allocation9 + $0x50] sm:$0xff]
    %v3335 = vld [vmem:[#allocation9 + $0x58] sm:$0xff]
    %v3336 = vld [vmem:[#allocation9 + $0x60] sm:$0xff]
    %v3337 = vld [vmem:[#allocation9 + $0x68] sm:$0xff]
    %v3338 = vld [vmem:[#allocation9 + $0x70] sm:$0xff]
    %v3339 = vld [vmem:[#allocation9 + $0x78] sm:$0xff]
    %v3340 = vld [vmem:[#allocation9 + $0x80] sm:$0xff]
    %v3341 = vld [vmem:[#allocation9 + $0x88] sm:$0xff]
    %v3342 = vld [vmem:[#allocation9 + $0x90] sm:$0xff]
    %v3343 = vld [vmem:[#allocation9 + $0x98] sm:$0xff]
    %v3344 = vld [vmem:[#allocation9 + $0xa0] sm:$0xff]
    %v3345 = vld [vmem:[#allocation9 + $0xa8] sm:$0xff]
    %v3346 = vld [vmem:[#allocation9 + $0xb0] sm:$0xff]
    %v3347 = vld [vmem:[#allocation9 + $0xb8] sm:$0xff]
    %v3348 = vld [vmem:[#allocation9 + $0xc0] sm:$0xff]
    %v3349 = vld [vmem:[#allocation9 + $0xc8] sm:$0xff]
    %v3350 = vld [vmem:[#allocation9 + $0xd0] sm:$0xff]
    %v3351 = vld [vmem:[#allocation9 + $0xd8] sm:$0xff]
    %v3352 = vld [vmem:[#allocation9 + $0xe0] sm:$0xff]
    %v3353 = vld [vmem:[#allocation9 + $0xe8] sm:$0xff]
    %v3354 = vld [vmem:[#allocation9 + $0xf0] sm:$0xff]
    %v3355 = vld [vmem:[#allocation9 + $0xf8] sm:$0xff]
    %v3356 = vld [vmem:[#allocation9 + $0x100] sm:$0xff]
    %v3357 = vld [vmem:[#allocation9 + $0x108] sm:$0xff]
    %v3358 = vld [vmem:[#allocation9 + $0x110] sm:$0xff]
    %v3359 = vld [vmem:[#allocation9 + $0x118] sm:$0xff]
    %v3360 = vld [vmem:[#allocation9 + $0x120] sm:$0xff]
    %v3361 = vld [vmem:[#allocation9 + $0x128] sm:$0xff]
    %v3362 = vld [vmem:[#allocation9 + $0x130] sm:$0xff]
    %v3363 = vld [vmem:[#allocation9 + $0x138] sm:$0xff]
    %v3364 = vld [vmem:[#allocation9 + $0x140] sm:$0xff]
    %v3365 = vld [vmem:[#allocation9 + $0x148] sm:$0xff]
    %v3366 = vld [vmem:[#allocation9 + $0x150] sm:$0xff]
    %v3367 = vld [vmem:[#allocation9 + $0x158] sm:$0xff]
    %v3368 = vld [vmem:[#allocation9 + $0x160] sm:$0xff]
    %v3369 = vld [vmem:[#allocation9 + $0x168] sm:$0xff]
    %v3370 = vld [vmem:[#allocation9 + $0x170] sm:$0xff]
    %v3371 = vld [vmem:[#allocation9 + $0x178] sm:$0xff]
    %v3372 = vld [vmem:[#allocation9 + $0x180] sm:$0xff]
    %v3373 = vld [vmem:[#allocation9 + $0x188] sm:$0xff]
    %v3374 = vld [vmem:[#allocation9 + $0x190] sm:$0xff]
    %v3375 = vld [vmem:[#allocation9 + $0x198] sm:$0xff]
    %v3376 = vld [vmem:[#allocation9 + $0x1a0] sm:$0xff]
    %v3377 = vld [vmem:[#allocation9 + $0x1a8] sm:$0xff]
    %v3378 = vld [vmem:[#allocation9 + $0x1b0] sm:$0xff]
    %v3379 = vld [vmem:[#allocation9 + $0x1b8] sm:$0xff]
    %v3380 = vld [vmem:[#allocation9 + $0x1c0] sm:$0xff]
    %v3381 = vld [vmem:[#allocation9 + $0x1c8] sm:$0xff]
    %v3382 = vld [vmem:[#allocation9 + $0x1d0] sm:$0xff]
    %v3383 = vld [vmem:[#allocation9 + $0x1d8] sm:$0xff]
    %v3384 = vld [vmem:[#allocation9 + $0x1e0] sm:$0xff]
    %v3385 = vld [vmem:[#allocation9 + $0x1e8] sm:$0xff]
    %v3386 = vld [vmem:[#allocation9 + $0x1f0] sm:$0xff]
    %v3387 = vld [vmem:[#allocation9 + $0x1f8] sm:$0xff]
    %v3388 = vld [vmem:[%s5] sm:$0xf]
    %v3390 = vlaneseq
    %v3391 = vshrl.u32 %v3390, 7
    %v3392 = vsub.s32 0, %v3391
    %v3393 = vrot.slane %v3388, %v3392
    %v3394 = vlaneseq
    %v3395 = vshrl.u32 %v3394, 7
    %v3396 = vsub.s32 1, %v3395
    %v3397 = vrot.slane %v3388, %v3396
    %v3398 = vlaneseq
    %v3399 = vshrl.u32 %v3398, 7
    %v3400 = vsub.s32 2, %v3399
    %v3401 = vrot.slane %v3388, %v3400
    %v3402 = vlaneseq
    %v3403 = vshrl.u32 %v3402, 7
    %v3404 = vsub.s32 3, %v3403
    %v3405 = vrot.slane %v3388, %v3404
    %v3411 = vunpack.c.l.b16 %v3322
    %v3412 = vunpack.c.h.b16 %v3322
    %v3413 = vpack.c.b16 %v3411, %v3411
    %v3414 = vpack.c.b16 %v3412, %v3412
    %v3481 = vunpack.c.l.b16 %v3324
    %v3482 = vunpack.c.h.b16 %v3324
    %v3483 = vunpack.c.l.b16 %v3325
    %v3484 = vunpack.c.h.b16 %v3325
    %v3485 = vunpack.c.l.b16 %v3326
    %v3486 = vunpack.c.h.b16 %v3326
    %v3487 = vunpack.c.l.b16 %v3327
    %v3488 = vunpack.c.h.b16 %v3327
    %v3489 = vunpack.c.l.b16 %v3328
    %v3490 = vunpack.c.h.b16 %v3328
    %v3491 = vunpack.c.l.b16 %v3329
    %v3492 = vunpack.c.h.b16 %v3329
    %v3493 = vunpack.c.l.b16 %v3330
    %v3494 = vunpack.c.h.b16 %v3330
    %v3495 = vunpack.c.l.b16 %v3331
    %v3496 = vunpack.c.h.b16 %v3331
    %v3497 = vunpack.c.l.b16 %v3332
    %v3498 = vunpack.c.h.b16 %v3332
    %v3499 = vunpack.c.l.b16 %v3333
    %v3500 = vunpack.c.h.b16 %v3333
    %v3501 = vunpack.c.l.b16 %v3334
    %v3502 = vunpack.c.h.b16 %v3334
    %v3503 = vunpack.c.l.b16 %v3335
    %v3504 = vunpack.c.h.b16 %v3335
    %v3505 = vunpack.c.l.b16 %v3336
    %v3506 = vunpack.c.h.b16 %v3336
    %v3507 = vunpack.c.l.b16 %v3337
    %v3508 = vunpack.c.h.b16 %v3337
    %v3509 = vunpack.c.l.b16 %v3338
    %v3510 = vunpack.c.h.b16 %v3338
    %v3511 = vunpack.c.l.b16 %v3339
    %v3512 = vunpack.c.h.b16 %v3339
    %v3513 = vunpack.c.l.b16 %v3340
    %v3514 = vunpack.c.h.b16 %v3340
    %v3515 = vunpack.c.l.b16 %v3341
    %v3516 = vunpack.c.h.b16 %v3341
    %v3517 = vunpack.c.l.b16 %v3342
    %v3518 = vunpack.c.h.b16 %v3342
    %v3519 = vunpack.c.l.b16 %v3343
    %v3520 = vunpack.c.h.b16 %v3343
    %v3521 = vunpack.c.l.b16 %v3344
    %v3522 = vunpack.c.h.b16 %v3344
    %v3523 = vunpack.c.l.b16 %v3345
    %v3524 = vunpack.c.h.b16 %v3345
    %v3525 = vunpack.c.l.b16 %v3346
    %v3526 = vunpack.c.h.b16 %v3346
    %v3527 = vunpack.c.l.b16 %v3347
    %v3528 = vunpack.c.h.b16 %v3347
    %v3529 = vunpack.c.l.b16 %v3348
    %v3530 = vunpack.c.h.b16 %v3348
    %v3531 = vunpack.c.l.b16 %v3349
    %v3532 = vunpack.c.h.b16 %v3349
    %v3533 = vunpack.c.l.b16 %v3350
    %v3534 = vunpack.c.h.b16 %v3350
    %v3535 = vunpack.c.l.b16 %v3351
    %v3536 = vunpack.c.h.b16 %v3351
    %v3537 = vunpack.c.l.b16 %v3352
    %v3538 = vunpack.c.h.b16 %v3352
    %v3539 = vunpack.c.l.b16 %v3353
    %v3540 = vunpack.c.h.b16 %v3353
    %v3541 = vunpack.c.l.b16 %v3354
    %v3542 = vunpack.c.h.b16 %v3354
    %v3543 = vunpack.c.l.b16 %v3355
    %v3544 = vunpack.c.h.b16 %v3355
    %v3545 = vunpack.c.l.b16 %v3356
    %v3546 = vunpack.c.h.b16 %v3356
    %v3547 = vunpack.c.l.b16 %v3357
    %v3548 = vunpack.c.h.b16 %v3357
    %v3549 = vunpack.c.l.b16 %v3358
    %v3550 = vunpack.c.h.b16 %v3358
    %v3551 = vunpack.c.l.b16 %v3359
    %v3552 = vunpack.c.h.b16 %v3359
    %v3553 = vunpack.c.l.b16 %v3360
    %v3554 = vunpack.c.h.b16 %v3360
    %v3555 = vunpack.c.l.b16 %v3361
    %v3556 = vunpack.c.h.b16 %v3361
    %v3557 = vunpack.c.l.b16 %v3362
    %v3558 = vunpack.c.h.b16 %v3362
    %v3559 = vunpack.c.l.b16 %v3363
    %v3560 = vunpack.c.h.b16 %v3363
    %v3561 = vunpack.c.l.b16 %v3364
    %v3562 = vunpack.c.h.b16 %v3364
    %v3563 = vunpack.c.l.b16 %v3365
    %v3564 = vunpack.c.h.b16 %v3365
    %v3565 = vunpack.c.l.b16 %v3366
    %v3566 = vunpack.c.h.b16 %v3366
    %v3567 = vunpack.c.l.b16 %v3367
    %v3568 = vunpack.c.h.b16 %v3367
    %v3569 = vunpack.c.l.b16 %v3368
    %v3570 = vunpack.c.h.b16 %v3368
    %v3571 = vunpack.c.l.b16 %v3369
    %v3572 = vunpack.c.h.b16 %v3369
    %v3573 = vunpack.c.l.b16 %v3370
    %v3574 = vunpack.c.h.b16 %v3370
    %v3575 = vunpack.c.l.b16 %v3371
    %v3576 = vunpack.c.h.b16 %v3371
    %v3577 = vunpack.c.l.b16 %v3372
    %v3578 = vunpack.c.h.b16 %v3372
    %v3579 = vunpack.c.l.b16 %v3373
    %v3580 = vunpack.c.h.b16 %v3373
    %v3581 = vunpack.c.l.b16 %v3374
    %v3582 = vunpack.c.h.b16 %v3374
    %v3583 = vunpack.c.l.b16 %v3375
    %v3584 = vunpack.c.h.b16 %v3375
    %v3585 = vunpack.c.l.b16 %v3376
    %v3586 = vunpack.c.h.b16 %v3376
    %v3587 = vunpack.c.l.b16 %v3377
    %v3588 = vunpack.c.h.b16 %v3377
    %v3589 = vunpack.c.l.b16 %v3378
    %v3590 = vunpack.c.h.b16 %v3378
    %v3591 = vunpack.c.l.b16 %v3379
    %v3592 = vunpack.c.h.b16 %v3379
    %v3593 = vunpack.c.l.b16 %v3380
    %v3594 = vunpack.c.h.b16 %v3380
    %v3595 = vunpack.c.l.b16 %v3381
    %v3596 = vunpack.c.h.b16 %v3381
    %v3597 = vunpack.c.l.b16 %v3382
    %v3598 = vunpack.c.h.b16 %v3382
    %v3599 = vunpack.c.l.b16 %v3383
    %v3600 = vunpack.c.h.b16 %v3383
    %v3601 = vunpack.c.l.b16 %v3384
    %v3602 = vunpack.c.h.b16 %v3384
    %v3603 = vunpack.c.l.b16 %v3385
    %v3604 = vunpack.c.h.b16 %v3385
    %v3605 = vunpack.c.l.b16 %v3386
    %v3606 = vunpack.c.h.b16 %v3386
    %v3607 = vunpack.c.l.b16 %v3387
    %v3608 = vunpack.c.h.b16 %v3387
    %v3609 = vpack.c.b16 %v3485, %v3481
    %v3610 = vpack.c.b16 %v3486, %v3482
    %v3611 = vpack.c.b16 %v3487, %v3483
    %v3612 = vpack.c.b16 %v3488, %v3484
    %v3613 = vpack.c.b16 %v3493, %v3489
    %v3614 = vpack.c.b16 %v3494, %v3490
    %v3615 = vpack.c.b16 %v3495, %v3491
    %v3616 = vpack.c.b16 %v3496, %v3492
    %v3617 = vpack.c.b16 %v3501, %v3497
    %v3618 = vpack.c.b16 %v3502, %v3498
    %v3619 = vpack.c.b16 %v3503, %v3499
    %v3620 = vpack.c.b16 %v3504, %v3500
    %v3621 = vpack.c.b16 %v3509, %v3505
    %v3622 = vpack.c.b16 %v3510, %v3506
    %v3623 = vpack.c.b16 %v3511, %v3507
    %v3624 = vpack.c.b16 %v3512, %v3508
    %v3625 = vpack.c.b16 %v3517, %v3513
    %v3626 = vpack.c.b16 %v3518, %v3514
    %v3627 = vpack.c.b16 %v3519, %v3515
    %v3628 = vpack.c.b16 %v3520, %v3516
    %v3629 = vpack.c.b16 %v3525, %v3521
    %v3630 = vpack.c.b16 %v3526, %v3522
    %v3631 = vpack.c.b16 %v3527, %v3523
    %v3632 = vpack.c.b16 %v3528, %v3524
    %v3633 = vpack.c.b16 %v3533, %v3529
    %v3634 = vpack.c.b16 %v3534, %v3530
    %v3635 = vpack.c.b16 %v3535, %v3531
    %v3636 = vpack.c.b16 %v3536, %v3532
    %v3637 = vpack.c.b16 %v3541, %v3537
    %v3638 = vpack.c.b16 %v3542, %v3538
    %v3639 = vpack.c.b16 %v3543, %v3539
    %v3640 = vpack.c.b16 %v3544, %v3540
    %v3641 = vpack.c.b16 %v3549, %v3545
    %v3642 = vpack.c.b16 %v3550, %v3546
    %v3643 = vpack.c.b16 %v3551, %v3547
    %v3644 = vpack.c.b16 %v3552, %v3548
    %v3645 = vpack.c.b16 %v3557, %v3553
    %v3646 = vpack.c.b16 %v3558, %v3554
    %v3647 = vpack.c.b16 %v3559, %v3555
    %v3648 = vpack.c.b16 %v3560, %v3556
    %v3649 = vpack.c.b16 %v3565, %v3561
    %v3650 = vpack.c.b16 %v3566, %v3562
    %v3651 = vpack.c.b16 %v3567, %v3563
    %v3652 = vpack.c.b16 %v3568, %v3564
    %v3653 = vpack.c.b16 %v3573, %v3569
    %v3654 = vpack.c.b16 %v3574, %v3570
    %v3655 = vpack.c.b16 %v3575, %v3571
    %v3656 = vpack.c.b16 %v3576, %v3572
    %v3657 = vpack.c.b16 %v3581, %v3577
    %v3658 = vpack.c.b16 %v3582, %v3578
    %v3659 = vpack.c.b16 %v3583, %v3579
    %v3660 = vpack.c.b16 %v3584, %v3580
    %v3661 = vpack.c.b16 %v3589, %v3585
    %v3662 = vpack.c.b16 %v3590, %v3586
    %v3663 = vpack.c.b16 %v3591, %v3587
    %v3664 = vpack.c.b16 %v3592, %v3588
    %v3665 = vpack.c.b16 %v3597, %v3593
    %v3666 = vpack.c.b16 %v3598, %v3594
    %v3667 = vpack.c.b16 %v3599, %v3595
    %v3668 = vpack.c.b16 %v3600, %v3596
    %v3669 = vpack.c.b16 %v3605, %v3601
    %v3670 = vpack.c.b16 %v3606, %v3602
    %v3671 = vpack.c.b16 %v3607, %v3603
    %v3672 = vpack.c.b16 %v3608, %v3604
    %3737 = vmatprep.subr.bf16.mxu0 %v3610
    %3738 = vmatpush1.bf16.msra.mxu0 %v3609
    %3739 = vmatprep.subr.bf16.mxu0 %v3614
    %3740 = vmatpush1.bf16.msra.mxu0 %v3613
    %3741 = vmatprep.subr.bf16.mxu0 %v3618
    %3742 = vmatpush1.bf16.msra.mxu0 %v3617
    %3743 = vmatprep.subr.bf16.mxu0 %v3622
    %3744 = vmatpush1.bf16.msra.mxu0 %v3621
    %3745 = vmatprep.subr.bf16.mxu0 %v3626
    %3746 = vmatpush1.bf16.msra.mxu0 %v3625
    %3747 = vmatprep.subr.bf16.mxu0 %v3630
    %3748 = vmatpush1.bf16.msra.mxu0 %v3629
    %3749 = vmatprep.subr.bf16.mxu0 %v3634
    %3750 = vmatpush1.bf16.msra.mxu0 %v3633
    %3751 = vmatprep.subr.bf16.mxu0 %v3638
    %3752 = vmatpush1.bf16.msra.mxu0 %v3637
    %3753 = vmatprep.subr.bf16.mxu0 %v3642
    %3754 = vmatpush1.bf16.msra.mxu0 %v3641
    %3755 = vmatprep.subr.bf16.mxu0 %v3646
    %3756 = vmatpush1.bf16.msra.mxu0 %v3645
    %3757 = vmatprep.subr.bf16.mxu0 %v3650
    %3758 = vmatpush1.bf16.msra.mxu0 %v3649
    %3759 = vmatprep.subr.bf16.mxu0 %v3654
    %3760 = vmatpush1.bf16.msra.mxu0 %v3653
    %3761 = vmatprep.subr.bf16.mxu0 %v3658
    %3762 = vmatpush1.bf16.msra.mxu0 %v3657
    %3763 = vmatprep.subr.bf16.mxu0 %v3662
    %3764 = vmatpush1.bf16.msra.mxu0 %v3661
    %3765 = vmatprep.subr.bf16.mxu0 %v3666
    %3766 = vmatpush1.bf16.msra.mxu0 %v3665
    %3767 = vmatprep.subr.bf16.mxu0 %v3670
    %3768 = vmatpush1.bf16.msra.mxu0 %v3669
    %3769 = vmatprep.mubr.bf16.mxu0 %v3414
    %3770 = vmatmul.mubr.bf16.gmra.mrb[0].mxu0 %v3413
    %v3771 = vpop.f32.mrb[0].mxu0
    %v3772 = vadd.f32 %v3393, %v3771
    %v3773 = vpop.f32.mrb[0].mxu0
    %v3774 = vadd.f32 %v3397, %v3773
    %v3775 = vpop.f32.mrb[0].mxu0
    %v3776 = vpop.f32.mrb[0].mxu0
    %3777 = vdwg.mxu0
    %3778 = vmatprep.subr.bf16.mxu0 %v3612
    %3779 = vmatpush1.bf16.msra.mxu0 %v3611
    %3780 = vmatprep.subr.bf16.mxu0 %v3616
    %3781 = vmatpush1.bf16.msra.mxu0 %v3615
    %3782 = vmatprep.subr.bf16.mxu0 %v3620
    %3783 = vmatpush1.bf16.msra.mxu0 %v3619
    %3784 = vmatprep.subr.bf16.mxu0 %v3624
    %3785 = vmatpush1.bf16.msra.mxu0 %v3623
    %3786 = vmatprep.subr.bf16.mxu0 %v3628
    %3787 = vmatpush1.bf16.msra.mxu0 %v3627
    %3788 = vmatprep.subr.bf16.mxu0 %v3632
    %3789 = vmatpush1.bf16.msra.mxu0 %v3631
    %3790 = vmatprep.subr.bf16.mxu0 %v3636
    %3791 = vmatpush1.bf16.msra.mxu0 %v3635
    %3792 = vmatprep.subr.bf16.mxu0 %v3640
    %3793 = vmatpush1.bf16.msra.mxu0 %v3639
    %3794 = vmatprep.subr.bf16.mxu0 %v3644
    %3795 = vmatpush1.bf16.msra.mxu0 %v3643
    %3796 = vmatprep.subr.bf16.mxu0 %v3648
    %3797 = vmatpush1.bf16.msra.mxu0 %v3647
    %3798 = vmatprep.subr.bf16.mxu0 %v3652
    %3799 = vmatpush1.bf16.msra.mxu0 %v3651
    %3800 = vmatprep.subr.bf16.mxu0 %v3656
    %3801 = vmatpush1.bf16.msra.mxu0 %v3655
    %3802 = vmatprep.subr.bf16.mxu0 %v3660
    %3803 = vmatpush1.bf16.msra.mxu0 %v3659
    %3804 = vmatprep.subr.bf16.mxu0 %v3664
    %3805 = vmatpush1.bf16.msra.mxu0 %v3663
    %3806 = vmatprep.subr.bf16.mxu0 %v3668
    %3807 = vmatpush1.bf16.msra.mxu0 %v3667
    %3808 = vmatprep.subr.bf16.mxu0 %v3672
    %3809 = vmatpush1.bf16.msra.mxu0 %v3671
    %3810 = vmatprep.mubr.bf16.mxu0 %v3414
    %3811 = vmatmul.mubr.bf16.gmra.mrb[0].mxu0 %v3413
    %v3812 = vpop.f32.mrb[0].mxu0
    %v3813 = vadd.f32 %v3401, %v3812
    %v3814 = vpop.f32.mrb[0].mxu0
    %v3815 = vadd.f32 %v3405, %v3814
    %v3816 = vpop.f32.mrb[0].mxu0
    %v3817 = vpop.f32.mrb[0].mxu0
    %3818 = vdwg.mxu0
    %v3819 = vxor.u32 %v3772, 2147483648
    %v3820 = vxor.u32 %v3774, 2147483648
    %v3821 = vxor.u32 %v3813, 2147483648
    %v3822 = vmul.f32 %v3819, 1.442695
    %v3823 = vpow.pop %v3822
    %v3824 = vmul.f32 %v3820, 1.442695
    %v3825 = vpow.pop %v3824
    %v3826 = vmul.f32 %v3821, 1.442695
    %v3827 = vpow.pop %v3826
    %v3828 = vadd.f32 %v3823, 1.0
    %v3829 = vadd.f32 %v3825, 1.0
    %v3830 = vadd.f32 %v3827, 1.0
    %v3831 = vrcp.pop %v3828
    %v3832 = vmul.f32 1.0, %v3831
    %v3833 = vrcp.pop %v3829
    %v3834 = vmul.f32 1.0, %v3833
    %v3835 = vrcp.pop %v3830
    %v3836 = vmul.f32 1.0, %v3835
    %v3837 = vtanh.pop %v3815
    %v3838 = vmul.f32 %v3834, %v3323
    %v3839 = vmul.f32 %v3832, %v3837
    %v3840 = vadd.f32 %v3838, %v3839
    %v3841 = vtanh.pop %v3840
    %v3842 = vmul.f32 %v3836, %v3841
    %v3843 = vpack.c.bf16 %v3842, %v3842
    %3844 = vst [vmem:[#allocation3 + $0x4] sm:$0xf] %v3843
    %3845 = vst [vmem:[%s814] sm:$0xff] %v3840
    %v3846 = vld [vmem:[#allocation3] sm:$0xf]
    %v3847 = vld [vmem:[#allocation4] sm:$0xff]
    %s3848 = scalar_lea.vmem [#allocation2], 128
    %v3849 = vld [vmem:[%s3848] sm:$0xff]
    %v3850 = vld [vmem:[%s3848 + $0x8] sm:$0xff]
    %v3851 = vld [vmem:[%s3848 + $0x10] sm:$0xff]
    %v3852 = vld [vmem:[%s3848 + $0x18] sm:$0xff]
    %v3853 = vld [vmem:[#allocation7] sm:$0xff]
    %v3854 = vld [vmem:[#allocation7 + $0x8] sm:$0xff]
    %v3855 = vld [vmem:[#allocation7 + $0x10] sm:$0xff]
    %v3856 = vld [vmem:[#allocation7 + $0x18] sm:$0xff]
    %v3857 = vld [vmem:[#allocation7 + $0x20] sm:$0xff]
    %v3858 = vld [vmem:[#allocation7 + $0x28] sm:$0xff]
    %v3859 = vld [vmem:[#allocation7 + $0x30] sm:$0xff]
    %v3860 = vld [vmem:[#allocation7 + $0x38] sm:$0xff]
    %v3861 = vld [vmem:[#allocation7 + $0x40] sm:$0xff]
    %v3862 = vld [vmem:[#allocation7 + $0x48] sm:$0xff]
    %v3863 = vld [vmem:[#allocation7 + $0x50] sm:$0xff]
    %v3864 = vld [vmem:[#allocation7 + $0x58] sm:$0xff]
    %v3865 = vld [vmem:[#allocation7 + $0x60] sm:$0xff]
    %v3866 = vld [vmem:[#allocation7 + $0x68] sm:$0xff]
    %v3867 = vld [vmem:[#allocation7 + $0x70] sm:$0xff]
    %v3868 = vld [vmem:[#allocation7 + $0x78] sm:$0xff]
    %v3869 = vld [vmem:[#allocation7 + $0x80] sm:$0xff]
    %v3870 = vld [vmem:[#allocation7 + $0x88] sm:$0xff]
    %v3871 = vld [vmem:[#allocation7 + $0x90] sm:$0xff]
    %v3872 = vld [vmem:[#allocation7 + $0x98] sm:$0xff]
    %v3873 = vld [vmem:[#allocation7 + $0xa0] sm:$0xff]
    %v3874 = vld [vmem:[#allocation7 + $0xa8] sm:$0xff]
    %v3875 = vld [vmem:[#allocation7 + $0xb0] sm:$0xff]
    %v3876 = vld [vmem:[#allocation7 + $0xb8] sm:$0xff]
    %v3877 = vld [vmem:[#allocation7 + $0xc0] sm:$0xff]
    %v3878 = vld [vmem:[#allocation7 + $0xc8] sm:$0xff]
    %v3879 = vld [vmem:[#allocation7 + $0xd0] sm:$0xff]
    %v3880 = vld [vmem:[#allocation7 + $0xd8] sm:$0xff]
    %v3881 = vld [vmem:[#allocation7 + $0xe0] sm:$0xff]
    %v3882 = vld [vmem:[#allocation7 + $0xe8] sm:$0xff]
    %v3883 = vld [vmem:[#allocation7 + $0xf0] sm:$0xff]
    %v3884 = vld [vmem:[#allocation7 + $0xf8] sm:$0xff]
    %v3917 = vunpack.c.l.b16 %v3853
    %v3918 = vunpack.c.h.b16 %v3853
    %v3919 = vunpack.c.l.b16 %v3854
    %v3920 = vunpack.c.h.b16 %v3854
    %v3921 = vunpack.c.l.b16 %v3855
    %v3922 = vunpack.c.h.b16 %v3855
    %v3923 = vunpack.c.l.b16 %v3856
    %v3924 = vunpack.c.h.b16 %v3856
    %v3925 = vunpack.c.l.b16 %v3857
    %v3926 = vunpack.c.h.b16 %v3857
    %v3927 = vunpack.c.l.b16 %v3858
    %v3928 = vunpack.c.h.b16 %v3858
    %v3929 = vunpack.c.l.b16 %v3859
    %v3930 = vunpack.c.h.b16 %v3859
    %v3931 = vunpack.c.l.b16 %v3860
    %v3932 = vunpack.c.h.b16 %v3860
    %v3933 = vunpack.c.l.b16 %v3861
    %v3934 = vunpack.c.h.b16 %v3861
    %v3935 = vunpack.c.l.b16 %v3862
    %v3936 = vunpack.c.h.b16 %v3862
    %v3937 = vunpack.c.l.b16 %v3863
    %v3938 = vunpack.c.h.b16 %v3863
    %v3939 = vunpack.c.l.b16 %v3864
    %v3940 = vunpack.c.h.b16 %v3864
    %v3941 = vunpack.c.l.b16 %v3865
    %v3942 = vunpack.c.h.b16 %v3865
    %v3943 = vunpack.c.l.b16 %v3866
    %v3944 = vunpack.c.h.b16 %v3866
    %v3945 = vunpack.c.l.b16 %v3867
    %v3946 = vunpack.c.h.b16 %v3867
    %v3947 = vunpack.c.l.b16 %v3868
    %v3948 = vunpack.c.h.b16 %v3868
    %v3949 = vunpack.c.l.b16 %v3869
    %v3950 = vunpack.c.h.b16 %v3869
    %v3951 = vunpack.c.l.b16 %v3870
    %v3952 = vunpack.c.h.b16 %v3870
    %v3953 = vunpack.c.l.b16 %v3871
    %v3954 = vunpack.c.h.b16 %v3871
    %v3955 = vunpack.c.l.b16 %v3872
    %v3956 = vunpack.c.h.b16 %v3872
    %v3957 = vunpack.c.l.b16 %v3873
    %v3958 = vunpack.c.h.b16 %v3873
    %v3959 = vunpack.c.l.b16 %v3874
    %v3960 = vunpack.c.h.b16 %v3874
    %v3961 = vunpack.c.l.b16 %v3875
    %v3962 = vunpack.c.h.b16 %v3875
    %v3963 = vunpack.c.l.b16 %v3876
    %v3964 = vunpack.c.h.b16 %v3876
    %v3965 = vunpack.c.l.b16 %v3877
    %v3966 = vunpack.c.h.b16 %v3877
    %v3967 = vunpack.c.l.b16 %v3878
    %v3968 = vunpack.c.h.b16 %v3878
    %v3969 = vunpack.c.l.b16 %v3879
    %v3970 = vunpack.c.h.b16 %v3879
    %v3971 = vunpack.c.l.b16 %v3880
    %v3972 = vunpack.c.h.b16 %v3880
    %v3973 = vunpack.c.l.b16 %v3881
    %v3974 = vunpack.c.h.b16 %v3881
    %v3975 = vunpack.c.l.b16 %v3882
    %v3976 = vunpack.c.h.b16 %v3882
    %v3977 = vunpack.c.l.b16 %v3883
    %v3978 = vunpack.c.h.b16 %v3883
    %v3979 = vunpack.c.l.b16 %v3884
    %v3980 = vunpack.c.h.b16 %v3884
    %v3981 = vpack.c.b16 %v3921, %v3917
    %v3982 = vpack.c.b16 %v3922, %v3918
    %v3983 = vpack.c.b16 %v3923, %v3919
    %v3984 = vpack.c.b16 %v3924, %v3920
    %v3985 = vpack.c.b16 %v3929, %v3925
    %v3986 = vpack.c.b16 %v3930, %v3926
    %v3987 = vpack.c.b16 %v3931, %v3927
    %v3988 = vpack.c.b16 %v3932, %v3928
    %v3989 = vpack.c.b16 %v3937, %v3933
    %v3990 = vpack.c.b16 %v3938, %v3934
    %v3991 = vpack.c.b16 %v3939, %v3935
    %v3992 = vpack.c.b16 %v3940, %v3936
    %v3993 = vpack.c.b16 %v3945, %v3941
    %v3994 = vpack.c.b16 %v3946, %v3942
    %v3995 = vpack.c.b16 %v3947, %v3943
    %v3996 = vpack.c.b16 %v3948, %v3944
    %v3997 = vpack.c.b16 %v3953, %v3949
    %v3998 = vpack.c.b16 %v3954, %v3950
    %v3999 = vpack.c.b16 %v3955, %v3951
    %v4000 = vpack.c.b16 %v3956, %v3952
    %v4001 = vpack.c.b16 %v3961, %v3957
    %v4002 = vpack.c.b16 %v3962, %v3958
    %v4003 = vpack.c.b16 %v3963, %v3959
    %v4004 = vpack.c.b16 %v3964, %v3960
    %v4005 = vpack.c.b16 %v3969, %v3965
    %v4006 = vpack.c.b16 %v3970, %v3966
    %v4007 = vpack.c.b16 %v3971, %v3967
    %v4008 = vpack.c.b16 %v3972, %v3968
    %v4009 = vpack.c.b16 %v3977, %v3973
    %v4010 = vpack.c.b16 %v3978, %v3974
    %v4011 = vpack.c.b16 %v3979, %v3975
    %v4012 = vpack.c.b16 %v3980, %v3976
    %4045 = vmatprep.subr.bf16.mxu0 %v3982
    %4046 = vmatpush1.bf16.msra.mxu0 %v3981
    %4047 = vmatprep.subr.bf16.mxu0 %v3986
    %4048 = vmatpush1.bf16.msra.mxu0 %v3985
    %4049 = vmatprep.subr.bf16.mxu0 %v3990
    %4050 = vmatpush1.bf16.msra.mxu0 %v3989
    %4051 = vmatprep.subr.bf16.mxu0 %v3994
    %4052 = vmatpush1.bf16.msra.mxu0 %v3993
    %4053 = vmatprep.subr.bf16.mxu0 %v3998
    %4054 = vmatpush1.bf16.msra.mxu0 %v3997
    %4055 = vmatprep.subr.bf16.mxu0 %v4002
    %4056 = vmatpush1.bf16.msra.mxu0 %v4001
    %4057 = vmatprep.subr.bf16.mxu0 %v4006
    %4058 = vmatpush1.bf16.msra.mxu0 %v4005
    %4059 = vmatprep.subr.bf16.mxu0 %v4010
    %4060 = vmatpush1.bf16.msra.mxu0 %v4009
    %4061 = vmatprep.subr.bf16.mxu0 0
    %4062 = vmatpush1.bf16.msra.mxu0 0
    %4063 = vmatprep.subr.bf16.mxu0 0
    %4064 = vmatpush1.bf16.msra.mxu0 0
    %4065 = vmatprep.subr.bf16.mxu0 0
    %4066 = vmatpush1.bf16.msra.mxu0 0
    %4067 = vmatprep.subr.bf16.mxu0 0
    %4068 = vmatpush1.bf16.msra.mxu0 0
    %4069 = vmatprep.subr.bf16.mxu0 0
    %4070 = vmatpush1.bf16.msra.mxu0 0
    %4071 = vmatprep.subr.bf16.mxu0 0
    %4072 = vmatpush1.bf16.msra.mxu0 0
    %4073 = vmatprep.subr.bf16.mxu0 0
    %4074 = vmatpush1.bf16.msra.mxu0 0
    %4075 = vmatprep.subr.bf16.mxu0 0
    %4076 = vmatpush1.bf16.msra.mxu0 0
    %4077 = vmatprep.mubr.bf16.mxu0 0
    %4078 = vmatmul.mubr.bf16.gmra.mrb[0].mxu0 %v3846
    %v4079 = vpop.f32.mrb[0].mxu0
    %v4080 = vadd.f32 0.0, %v4079
    %v4081 = vpop.f32.mrb[0].mxu0
    %v4082 = vadd.f32 0.0, %v4081
    %v4083 = vpop.f32.mrb[0].mxu0
    %v4084 = vpop.f32.mrb[0].mxu0
    %4085 = vdwg.mxu0
    %4086 = vmatprep.subr.bf16.mxu0 %v3984
    %4087 = vmatpush1.bf16.msra.mxu0 %v3983
    %4088 = vmatprep.subr.bf16.mxu0 %v3988
    %4089 = vmatpush1.bf16.msra.mxu0 %v3987
    %4090 = vmatprep.subr.bf16.mxu0 %v3992
    %4091 = vmatpush1.bf16.msra.mxu0 %v3991
    %4092 = vmatprep.subr.bf16.mxu0 %v3996
    %4093 = vmatpush1.bf16.msra.mxu0 %v3995
    %4094 = vmatprep.subr.bf16.mxu0 %v4000
    %4095 = vmatpush1.bf16.msra.mxu0 %v3999
    %4096 = vmatprep.subr.bf16.mxu0 %v4004
    %4097 = vmatpush1.bf16.msra.mxu0 %v4003
    %4098 = vmatprep.subr.bf16.mxu0 %v4008
    %4099 = vmatpush1.bf16.msra.mxu0 %v4007
    %4100 = vmatprep.subr.bf16.mxu0 %v4012
    %4101 = vmatpush1.bf16.msra.mxu0 %v4011
    %4102 = vmatprep.subr.bf16.mxu0 0
    %4103 = vmatpush1.bf16.msra.mxu0 0
    %4104 = vmatprep.subr.bf16.mxu0 0
    %4105 = vmatpush1.bf16.msra.mxu0 0
    %4106 = vmatprep.subr.bf16.mxu0 0
    %4107 = vmatpush1.bf16.msra.mxu0 0
    %4108 = vmatprep.subr.bf16.mxu0 0
    %4109 = vmatpush1.bf16.msra.mxu0 0
    %4110 = vmatprep.subr.bf16.mxu0 0
    %4111 = vmatpush1.bf16.msra.mxu0 0
    %4112 = vmatprep.subr.bf16.mxu0 0
    %4113 = vmatpush1.bf16.msra.mxu0 0
    %4114 = vmatprep.subr.bf16.mxu0 0
    %4115 = vmatpush1.bf16.msra.mxu0 0
    %4116 = vmatprep.subr.bf16.mxu0 0
    %4117 = vmatpush1.bf16.msra.mxu0 0
    %4118 = vmatprep.mubr.bf16.mxu0 0
    %4119 = vmatmul.mubr.bf16.gmra.mrb[0].mxu0 %v3846
    %v4120 = vpop.f32.mrb[0].mxu0
    %v4121 = vadd.f32 0.0, %v4120
    %v4122 = vpop.f32.mrb[0].mxu0
    %v4123 = vadd.f32 0.0, %v4122
    %v4124 = vpop.f32.mrb[0].mxu0
    %v4125 = vpop.f32.mrb[0].mxu0
    %4126 = vdwg.mxu0
    %v4127 = vadd.f32 %v3849, %v4080
    %v4128 = vadd.f32 %v3850, %v4082
    %v4129 = vadd.f32 %v3851, %v4121
    %v4130 = vadd.f32 %v3852, %v4123
    %v4131 = vxor.u32 %v4127, 2147483648
    %v4132 = vxor.u32 %v4128, 2147483648
    %v4133 = vxor.u32 %v4129, 2147483648
    %v4134 = vmul.f32 %v4131, 1.442695
    %v4135 = vpow.pop %v4134
    %v4136 = vmul.f32 %v4132, 1.442695
    %v4137 = vpow.pop %v4136
    %v4138 = vmul.f32 %v4133, 1.442695
    %v4139 = vpow.pop %v4138
    %v4140 = vadd.f32 %v4135, 1.0
    %v4141 = vadd.f32 %v4137, 1.0
    %v4142 = vadd.f32 %v4139, 1.0
    %v4143 = vrcp.pop %v4140
    %v4144 = vmul.f32 1.0, %v4143
    %v4145 = vrcp.pop %v4141
    %v4146 = vmul.f32 1.0, %v4145
    %v4147 = vrcp.pop %v4142
    %v4148 = vmul.f32 1.0, %v4147
    %v4149 = vtanh.pop %v4130
    %v4150 = vmul.f32 %v4146, %v3847
    %v4151 = vmul.f32 %v4144, %v4149
    %v4152 = vadd.f32 %v4150, %v4151
    %v4153 = vtanh.pop %v4152
    %v4154 = vmul.f32 %v4148, %v4153
    %v4155 = vpack.c.bf16 %v4154, %v4154
    %4156 = vst [vmem:[#allocation3] sm:$0xf] %v4155
    %4157 = vst [vmem:[#allocation4] sm:$0xff] %v4152
    %v4158 = vld [vmem:[#allocation3] sm:$0xff]
    %v4159 = vld [vmem:[%s814] sm:$0xff]
    %v4160 = vld [vmem:[#allocation9] sm:$0xff]
    %v4161 = vld [vmem:[#allocation9 + $0x8] sm:$0xff]
    %v4162 = vld [vmem:[#allocation9 + $0x10] sm:$0xff]
    %v4163 = vld [vmem:[#allocation9 + $0x18] sm:$0xff]
    %v4164 = vld [vmem:[#allocation9 + $0x20] sm:$0xff]
    %v4165 = vld [vmem:[#allocation9 + $0x28] sm:$0xff]
    %v4166 = vld [vmem:[#allocation9 + $0x30] sm:$0xff]
    %v4167 = vld [vmem:[#allocation9 + $0x38] sm:$0xff]
    %v4168 = vld [vmem:[#allocation9 + $0x40] sm:$0xff]
    %v4169 = vld [vmem:[#allocation9 + $0x48] sm:$0xff]
    %v4170 = vld [vmem:[#allocation9 + $0x50] sm:$0xff]
    %v4171 = vld [vmem:[#allocation9 + $0x58] sm:$0xff]
    %v4172 = vld [vmem:[#allocation9 + $0x60] sm:$0xff]
    %v4173 = vld [vmem:[#allocation9 + $0x68] sm:$0xff]
    %v4174 = vld [vmem:[#allocation9 + $0x70] sm:$0xff]
    %v4175 = vld [vmem:[#allocation9 + $0x78] sm:$0xff]
    %v4176 = vld [vmem:[#allocation9 + $0x80] sm:$0xff]
    %v4177 = vld [vmem:[#allocation9 + $0x88] sm:$0xff]
    %v4178 = vld [vmem:[#allocation9 + $0x90] sm:$0xff]
    %v4179 = vld [vmem:[#allocation9 + $0x98] sm:$0xff]
    %v4180 = vld [vmem:[#allocation9 + $0xa0] sm:$0xff]
    %v4181 = vld [vmem:[#allocation9 + $0xa8] sm:$0xff]
    %v4182 = vld [vmem:[#allocation9 + $0xb0] sm:$0xff]
    %v4183 = vld [vmem:[#allocation9 + $0xb8] sm:$0xff]
    %v4184 = vld [vmem:[#allocation9 + $0xc0] sm:$0xff]
    %v4185 = vld [vmem:[#allocation9 + $0xc8] sm:$0xff]
    %v4186 = vld [vmem:[#allocation9 + $0xd0] sm:$0xff]
    %v4187 = vld [vmem:[#allocation9 + $0xd8] sm:$0xff]
    %v4188 = vld [vmem:[#allocation9 + $0xe0] sm:$0xff]
    %v4189 = vld [vmem:[#allocation9 + $0xe8] sm:$0xff]
    %v4190 = vld [vmem:[#allocation9 + $0xf0] sm:$0xff]
    %v4191 = vld [vmem:[#allocation9 + $0xf8] sm:$0xff]
    %v4192 = vld [vmem:[#allocation9 + $0x100] sm:$0xff]
    %v4193 = vld [vmem:[#allocation9 + $0x108] sm:$0xff]
    %v4194 = vld [vmem:[#allocation9 + $0x110] sm:$0xff]
    %v4195 = vld [vmem:[#allocation9 + $0x118] sm:$0xff]
    %v4196 = vld [vmem:[#allocation9 + $0x120] sm:$0xff]
    %v4197 = vld [vmem:[#allocation9 + $0x128] sm:$0xff]
    %v4198 = vld [vmem:[#allocation9 + $0x130] sm:$0xff]
    %v4199 = vld [vmem:[#allocation9 + $0x138] sm:$0xff]
    %v4200 = vld [vmem:[#allocation9 + $0x140] sm:$0xff]
    %v4201 = vld [vmem:[#allocation9 + $0x148] sm:$0xff]
    %v4202 = vld [vmem:[#allocation9 + $0x150] sm:$0xff]
    %v4203 = vld [vmem:[#allocation9 + $0x158] sm:$0xff]
    %v4204 = vld [vmem:[#allocation9 + $0x160] sm:$0xff]
    %v4205 = vld [vmem:[#allocation9 + $0x168] sm:$0xff]
    %v4206 = vld [vmem:[#allocation9 + $0x170] sm:$0xff]
    %v4207 = vld [vmem:[#allocation9 + $0x178] sm:$0xff]
    %v4208 = vld [vmem:[#allocation9 + $0x180] sm:$0xff]
    %v4209 = vld [vmem:[#allocation9 + $0x188] sm:$0xff]
    %v4210 = vld [vmem:[#allocation9 + $0x190] sm:$0xff]
    %v4211 = vld [vmem:[#allocation9 + $0x198] sm:$0xff]
    %v4212 = vld [vmem:[#allocation9 + $0x1a0] sm:$0xff]
    %v4213 = vld [vmem:[#allocation9 + $0x1a8] sm:$0xff]
    %v4214 = vld [vmem:[#allocation9 + $0x1b0] sm:$0xff]
    %v4215 = vld [vmem:[#allocation9 + $0x1b8] sm:$0xff]
    %v4216 = vld [vmem:[#allocation9 + $0x1c0] sm:$0xff]
    %v4217 = vld [vmem:[#allocation9 + $0x1c8] sm:$0xff]
    %v4218 = vld [vmem:[#allocation9 + $0x1d0] sm:$0xff]
    %v4219 = vld [vmem:[#allocation9 + $0x1d8] sm:$0xff]
    %v4220 = vld [vmem:[#allocation9 + $0x1e0] sm:$0xff]
    %v4221 = vld [vmem:[#allocation9 + $0x1e8] sm:$0xff]
    %v4222 = vld [vmem:[#allocation9 + $0x1f0] sm:$0xff]
    %v4223 = vld [vmem:[#allocation9 + $0x1f8] sm:$0xff]
    %v4224 = vld [vmem:[%s5] sm:$0xf]
    %v4226 = vlaneseq
    %v4227 = vshrl.u32 %v4226, 7
    %v4228 = vsub.s32 0, %v4227
    %v4229 = vrot.slane %v4224, %v4228
    %v4230 = vlaneseq
    %v4231 = vshrl.u32 %v4230, 7
    %v4232 = vsub.s32 1, %v4231
    %v4233 = vrot.slane %v4224, %v4232
    %v4234 = vlaneseq
    %v4235 = vshrl.u32 %v4234, 7
    %v4236 = vsub.s32 2, %v4235
    %v4237 = vrot.slane %v4224, %v4236
    %v4238 = vlaneseq
    %v4239 = vshrl.u32 %v4238, 7
    %v4240 = vsub.s32 3, %v4239
    %v4241 = vrot.slane %v4224, %v4240
    %v4247 = vunpack.c.l.b16 %v4158
    %v4248 = vunpack.c.h.b16 %v4158
    %v4249 = vpack.c.b16 %v4247, %v4247
    %v4250 = vpack.c.b16 %v4248, %v4248
    %v4317 = vunpack.c.l.b16 %v4160
    %v4318 = vunpack.c.h.b16 %v4160
    %v4319 = vunpack.c.l.b16 %v4161
    %v4320 = vunpack.c.h.b16 %v4161
    %v4321 = vunpack.c.l.b16 %v4162
    %v4322 = vunpack.c.h.b16 %v4162
    %v4323 = vunpack.c.l.b16 %v4163
    %v4324 = vunpack.c.h.b16 %v4163
    %v4325 = vunpack.c.l.b16 %v4164
    %v4326 = vunpack.c.h.b16 %v4164
    %v4327 = vunpack.c.l.b16 %v4165
    %v4328 = vunpack.c.h.b16 %v4165
    %v4329 = vunpack.c.l.b16 %v4166
    %v4330 = vunpack.c.h.b16 %v4166
    %v4331 = vunpack.c.l.b16 %v4167
    %v4332 = vunpack.c.h.b16 %v4167
    %v4333 = vunpack.c.l.b16 %v4168
    %v4334 = vunpack.c.h.b16 %v4168
    %v4335 = vunpack.c.l.b16 %v4169
    %v4336 = vunpack.c.h.b16 %v4169
    %v4337 = vunpack.c.l.b16 %v4170
    %v4338 = vunpack.c.h.b16 %v4170
    %v4339 = vunpack.c.l.b16 %v4171
    %v4340 = vunpack.c.h.b16 %v4171
    %v4341 = vunpack.c.l.b16 %v4172
    %v4342 = vunpack.c.h.b16 %v4172
    %v4343 = vunpack.c.l.b16 %v4173
    %v4344 = vunpack.c.h.b16 %v4173
    %v4345 = vunpack.c.l.b16 %v4174
    %v4346 = vunpack.c.h.b16 %v4174
    %v4347 = vunpack.c.l.b16 %v4175
    %v4348 = vunpack.c.h.b16 %v4175
    %v4349 = vunpack.c.l.b16 %v4176
    %v4350 = vunpack.c.h.b16 %v4176
    %v4351 = vunpack.c.l.b16 %v4177
    %v4352 = vunpack.c.h.b16 %v4177
    %v4353 = vunpack.c.l.b16 %v4178
    %v4354 = vunpack.c.h.b16 %v4178
    %v4355 = vunpack.c.l.b16 %v4179
    %v4356 = vunpack.c.h.b16 %v4179
    %v4357 = vunpack.c.l.b16 %v4180
    %v4358 = vunpack.c.h.b16 %v4180
    %v4359 = vunpack.c.l.b16 %v4181
    %v4360 = vunpack.c.h.b16 %v4181
    %v4361 = vunpack.c.l.b16 %v4182
    %v4362 = vunpack.c.h.b16 %v4182
    %v4363 = vunpack.c.l.b16 %v4183
    %v4364 = vunpack.c.h.b16 %v4183
    %v4365 = vunpack.c.l.b16 %v4184
    %v4366 = vunpack.c.h.b16 %v4184
    %v4367 = vunpack.c.l.b16 %v4185
    %v4368 = vunpack.c.h.b16 %v4185
    %v4369 = vunpack.c.l.b16 %v4186
    %v4370 = vunpack.c.h.b16 %v4186
    %v4371 = vunpack.c.l.b16 %v4187
    %v4372 = vunpack.c.h.b16 %v4187
    %v4373 = vunpack.c.l.b16 %v4188
    %v4374 = vunpack.c.h.b16 %v4188
    %v4375 = vunpack.c.l.b16 %v4189
    %v4376 = vunpack.c.h.b16 %v4189
    %v4377 = vunpack.c.l.b16 %v4190
    %v4378 = vunpack.c.h.b16 %v4190
    %v4379 = vunpack.c.l.b16 %v4191
    %v4380 = vunpack.c.h.b16 %v4191
    %v4381 = vunpack.c.l.b16 %v4192
    %v4382 = vunpack.c.h.b16 %v4192
    %v4383 = vunpack.c.l.b16 %v4193
    %v4384 = vunpack.c.h.b16 %v4193
    %v4385 = vunpack.c.l.b16 %v4194
    %v4386 = vunpack.c.h.b16 %v4194
    %v4387 = vunpack.c.l.b16 %v4195
    %v4388 = vunpack.c.h.b16 %v4195
    %v4389 = vunpack.c.l.b16 %v4196
    %v4390 = vunpack.c.h.b16 %v4196
    %v4391 = vunpack.c.l.b16 %v4197
    %v4392 = vunpack.c.h.b16 %v4197
    %v4393 = vunpack.c.l.b16 %v4198
    %v4394 = vunpack.c.h.b16 %v4198
    %v4395 = vunpack.c.l.b16 %v4199
    %v4396 = vunpack.c.h.b16 %v4199
    %v4397 = vunpack.c.l.b16 %v4200
    %v4398 = vunpack.c.h.b16 %v4200
    %v4399 = vunpack.c.l.b16 %v4201
    %v4400 = vunpack.c.h.b16 %v4201
    %v4401 = vunpack.c.l.b16 %v4202
    %v4402 = vunpack.c.h.b16 %v4202
    %v4403 = vunpack.c.l.b16 %v4203
    %v4404 = vunpack.c.h.b16 %v4203
    %v4405 = vunpack.c.l.b16 %v4204
    %v4406 = vunpack.c.h.b16 %v4204
    %v4407 = vunpack.c.l.b16 %v4205
    %v4408 = vunpack.c.h.b16 %v4205
    %v4409 = vunpack.c.l.b16 %v4206
    %v4410 = vunpack.c.h.b16 %v4206
    %v4411 = vunpack.c.l.b16 %v4207
    %v4412 = vunpack.c.h.b16 %v4207
    %v4413 = vunpack.c.l.b16 %v4208
    %v4414 = vunpack.c.h.b16 %v4208
    %v4415 = vunpack.c.l.b16 %v4209
    %v4416 = vunpack.c.h.b16 %v4209
    %v4417 = vunpack.c.l.b16 %v4210
    %v4418 = vunpack.c.h.b16 %v4210
    %v4419 = vunpack.c.l.b16 %v4211
    %v4420 = vunpack.c.h.b16 %v4211
    %v4421 = vunpack.c.l.b16 %v4212
    %v4422 = vunpack.c.h.b16 %v4212
    %v4423 = vunpack.c.l.b16 %v4213
    %v4424 = vunpack.c.h.b16 %v4213
    %v4425 = vunpack.c.l.b16 %v4214
    %v4426 = vunpack.c.h.b16 %v4214
    %v4427 = vunpack.c.l.b16 %v4215
    %v4428 = vunpack.c.h.b16 %v4215
    %v4429 = vunpack.c.l.b16 %v4216
    %v4430 = vunpack.c.h.b16 %v4216
    %v4431 = vunpack.c.l.b16 %v4217
    %v4432 = vunpack.c.h.b16 %v4217
    %v4433 = vunpack.c.l.b16 %v4218
    %v4434 = vunpack.c.h.b16 %v4218
    %v4435 = vunpack.c.l.b16 %v4219
    %v4436 = vunpack.c.h.b16 %v4219
    %v4437 = vunpack.c.l.b16 %v4220
    %v4438 = vunpack.c.h.b16 %v4220
    %v4439 = vunpack.c.l.b16 %v4221
    %v4440 = vunpack.c.h.b16 %v4221
    %v4441 = vunpack.c.l.b16 %v4222
    %v4442 = vunpack.c.h.b16 %v4222
    %v4443 = vunpack.c.l.b16 %v4223
    %v4444 = vunpack.c.h.b16 %v4223
    %v4445 = vpack.c.b16 %v4321, %v4317
    %v4446 = vpack.c.b16 %v4322, %v4318
    %v4447 = vpack.c.b16 %v4323, %v4319
    %v4448 = vpack.c.b16 %v4324, %v4320
    %v4449 = vpack.c.b16 %v4329, %v4325
    %v4450 = vpack.c.b16 %v4330, %v4326
    %v4451 = vpack.c.b16 %v4331, %v4327
    %v4452 = vpack.c.b16 %v4332, %v4328
    %v4453 = vpack.c.b16 %v4337, %v4333
    %v4454 = vpack.c.b16 %v4338, %v4334
    %v4455 = vpack.c.b16 %v4339, %v4335
    %v4456 = vpack.c.b16 %v4340, %v4336
    %v4457 = vpack.c.b16 %v4345, %v4341
    %v4458 = vpack.c.b16 %v4346, %v4342
    %v4459 = vpack.c.b16 %v4347, %v4343
    %v4460 = vpack.c.b16 %v4348, %v4344
    %v4461 = vpack.c.b16 %v4353, %v4349
    %v4462 = vpack.c.b16 %v4354, %v4350
    %v4463 = vpack.c.b16 %v4355, %v4351
    %v4464 = vpack.c.b16 %v4356, %v4352
    %v4465 = vpack.c.b16 %v4361, %v4357
    %v4466 = vpack.c.b16 %v4362, %v4358
    %v4467 = vpack.c.b16 %v4363, %v4359
    %v4468 = vpack.c.b16 %v4364, %v4360
    %v4469 = vpack.c.b16 %v4369, %v4365
    %v4470 = vpack.c.b16 %v4370, %v4366
    %v4471 = vpack.c.b16 %v4371, %v4367
    %v4472 = vpack.c.b16 %v4372, %v4368
    %v4473 = vpack.c.b16 %v4377, %v4373
    %v4474 = vpack.c.b16 %v4378, %v4374
    %v4475 = vpack.c.b16 %v4379, %v4375
    %v4476 = vpack.c.b16 %v4380, %v4376
    %v4477 = vpack.c.b16 %v4385, %v4381
    %v4478 = vpack.c.b16 %v4386, %v4382
    %v4479 = vpack.c.b16 %v4387, %v4383
    %v4480 = vpack.c.b16 %v4388, %v4384
    %v4481 = vpack.c.b16 %v4393, %v4389
    %v4482 = vpack.c.b16 %v4394, %v4390
    %v4483 = vpack.c.b16 %v4395, %v4391
    %v4484 = vpack.c.b16 %v4396, %v4392
    %v4485 = vpack.c.b16 %v4401, %v4397
    %v4486 = vpack.c.b16 %v4402, %v4398
    %v4487 = vpack.c.b16 %v4403, %v4399
    %v4488 = vpack.c.b16 %v4404, %v4400
    %v4489 = vpack.c.b16 %v4409, %v4405
    %v4490 = vpack.c.b16 %v4410, %v4406
    %v4491 = vpack.c.b16 %v4411, %v4407
    %v4492 = vpack.c.b16 %v4412, %v4408
    %v4493 = vpack.c.b16 %v4417, %v4413
    %v4494 = vpack.c.b16 %v4418, %v4414
    %v4495 = vpack.c.b16 %v4419, %v4415
    %v4496 = vpack.c.b16 %v4420, %v4416
    %v4497 = vpack.c.b16 %v4425, %v4421
    %v4498 = vpack.c.b16 %v4426, %v4422
    %v4499 = vpack.c.b16 %v4427, %v4423
    %v4500 = vpack.c.b16 %v4428, %v4424
    %v4501 = vpack.c.b16 %v4433, %v4429
    %v4502 = vpack.c.b16 %v4434, %v4430
    %v4503 = vpack.c.b16 %v4435, %v4431
    %v4504 = vpack.c.b16 %v4436, %v4432
    %v4505 = vpack.c.b16 %v4441, %v4437
    %v4506 = vpack.c.b16 %v4442, %v4438
    %v4507 = vpack.c.b16 %v4443, %v4439
    %v4508 = vpack.c.b16 %v4444, %v4440
    %4573 = vmatprep.subr.bf16.mxu0 %v4446
    %4574 = vmatpush1.bf16.msra.mxu0 %v4445
    %4575 = vmatprep.subr.bf16.mxu0 %v4450
    %4576 = vmatpush1.bf16.msra.mxu0 %v4449
    %4577 = vmatprep.subr.bf16.mxu0 %v4454
    %4578 = vmatpush1.bf16.msra.mxu0 %v4453
    %4579 = vmatprep.subr.bf16.mxu0 %v4458
    %4580 = vmatpush1.bf16.msra.mxu0 %v4457
    %4581 = vmatprep.subr.bf16.mxu0 %v4462
    %4582 = vmatpush1.bf16.msra.mxu0 %v4461
    %4583 = vmatprep.subr.bf16.mxu0 %v4466
    %4584 = vmatpush1.bf16.msra.mxu0 %v4465
    %4585 = vmatprep.subr.bf16.mxu0 %v4470
    %4586 = vmatpush1.bf16.msra.mxu0 %v4469
    %4587 = vmatprep.subr.bf16.mxu0 %v4474
    %4588 = vmatpush1.bf16.msra.mxu0 %v4473
    %4589 = vmatprep.subr.bf16.mxu0 %v4478
    %4590 = vmatpush1.bf16.msra.mxu0 %v4477
    %4591 = vmatprep.subr.bf16.mxu0 %v4482
    %4592 = vmatpush1.bf16.msra.mxu0 %v4481
    %4593 = vmatprep.subr.bf16.mxu0 %v4486
    %4594 = vmatpush1.bf16.msra.mxu0 %v4485
    %4595 = vmatprep.subr.bf16.mxu0 %v4490
    %4596 = vmatpush1.bf16.msra.mxu0 %v4489
    %4597 = vmatprep.subr.bf16.mxu0 %v4494
    %4598 = vmatpush1.bf16.msra.mxu0 %v4493
    %4599 = vmatprep.subr.bf16.mxu0 %v4498
    %4600 = vmatpush1.bf16.msra.mxu0 %v4497
    %4601 = vmatprep.subr.bf16.mxu0 %v4502
    %4602 = vmatpush1.bf16.msra.mxu0 %v4501
    %4603 = vmatprep.subr.bf16.mxu0 %v4506
    %4604 = vmatpush1.bf16.msra.mxu0 %v4505
    %4605 = vmatprep.mubr.bf16.mxu0 %v4250
    %4606 = vmatmul.mubr.bf16.gmra.mrb[0].mxu0 %v4249
    %v4607 = vpop.f32.mrb[0].mxu0
    %v4608 = vadd.f32 %v4229, %v4607
    %v4609 = vpop.f32.mrb[0].mxu0
    %v4610 = vadd.f32 %v4233, %v4609
    %v4611 = vpop.f32.mrb[0].mxu0
    %v4612 = vpop.f32.mrb[0].mxu0
    %4613 = vdwg.mxu0
    %4614 = vmatprep.subr.bf16.mxu0 %v4448
    %4615 = vmatpush1.bf16.msra.mxu0 %v4447
    %4616 = vmatprep.subr.bf16.mxu0 %v4452
    %4617 = vmatpush1.bf16.msra.mxu0 %v4451
    %4618 = vmatprep.subr.bf16.mxu0 %v4456
    %4619 = vmatpush1.bf16.msra.mxu0 %v4455
    %4620 = vmatprep.subr.bf16.mxu0 %v4460
    %4621 = vmatpush1.bf16.msra.mxu0 %v4459
    %4622 = vmatprep.subr.bf16.mxu0 %v4464
    %4623 = vmatpush1.bf16.msra.mxu0 %v4463
    %4624 = vmatprep.subr.bf16.mxu0 %v4468
    %4625 = vmatpush1.bf16.msra.mxu0 %v4467
    %4626 = vmatprep.subr.bf16.mxu0 %v4472
    %4627 = vmatpush1.bf16.msra.mxu0 %v4471
    %4628 = vmatprep.subr.bf16.mxu0 %v4476
    %4629 = vmatpush1.bf16.msra.mxu0 %v4475
    %4630 = vmatprep.subr.bf16.mxu0 %v4480
    %4631 = vmatpush1.bf16.msra.mxu0 %v4479
    %4632 = vmatprep.subr.bf16.mxu0 %v4484
    %4633 = vmatpush1.bf16.msra.mxu0 %v4483
    %4634 = vmatprep.subr.bf16.mxu0 %v4488
    %4635 = vmatpush1.bf16.msra.mxu0 %v4487
    %4636 = vmatprep.subr.bf16.mxu0 %v4492
    %4637 = vmatpush1.bf16.msra.mxu0 %v4491
    %4638 = vmatprep.subr.bf16.mxu0 %v4496
    %4639 = vmatpush1.bf16.msra.mxu0 %v4495
    %4640 = vmatprep.subr.bf16.mxu0 %v4500
    %4641 = vmatpush1.bf16.msra.mxu0 %v4499
    %4642 = vmatprep.subr.bf16.mxu0 %v4504
    %4643 = vmatpush1.bf16.msra.mxu0 %v4503
    %4644 = vmatprep.subr.bf16.mxu0 %v4508
    %4645 = vmatpush1.bf16.msra.mxu0 %v4507
    %4646 = vmatprep.mubr.bf16.mxu0 %v4250
    %4647 = vmatmul.mubr.bf16.gmra.mrb[0].mxu0 %v4249
    %v4648 = vpop.f32.mrb[0].mxu0
    %v4649 = vadd.f32 %v4237, %v4648
    %v4650 = vpop.f32.mrb[0].mxu0
    %v4651 = vadd.f32 %v4241, %v4650
    %v4652 = vpop.f32.mrb[0].mxu0
    %v4653 = vpop.f32.mrb[0].mxu0
    %4654 = vdwg.mxu0
    %v4655 = vxor.u32 %v4608, 2147483648
    %v4656 = vxor.u32 %v4610, 2147483648
    %v4657 = vxor.u32 %v4649, 2147483648
    %v4658 = vmul.f32 %v4655, 1.442695
    %v4659 = vpow.pop %v4658
    %v4660 = vmul.f32 %v4656, 1.442695
    %v4661 = vpow.pop %v4660
    %v4662 = vmul.f32 %v4657, 1.442695
    %v4663 = vpow.pop %v4662
    %v4664 = vadd.f32 %v4659, 1.0
    %v4665 = vadd.f32 %v4661, 1.0
    %v4666 = vadd.f32 %v4663, 1.0
    %v4667 = vrcp.pop %v4664
    %v4668 = vmul.f32 1.0, %v4667
    %v4669 = vrcp.pop %v4665
    %v4670 = vmul.f32 1.0, %v4669
    %v4671 = vrcp.pop %v4666
    %v4672 = vmul.f32 1.0, %v4671
    %v4673 = vtanh.pop %v4651
    %v4674 = vmul.f32 %v4670, %v4159
    %v4675 = vmul.f32 %v4668, %v4673
    %v4676 = vadd.f32 %v4674, %v4675
    %v4677 = vtanh.pop %v4676
    %v4678 = vmul.f32 %v4672, %v4677
    %v4679 = vpack.c.bf16 %v4678, %v4678
    %4680 = vst [vmem:[#allocation3 + $0x4] sm:$0xf] %v4679
    %4681 = vst [vmem:[%s814] sm:$0xff] %v4676
    %v4682 = vld [vmem:[#allocation3] sm:$0xf]
    %v4683 = vld [vmem:[#allocation4] sm:$0xff]
    %s4684 = scalar_lea.vmem [#allocation2], 160
    %v4685 = vld [vmem:[%s4684] sm:$0xff]
    %v4686 = vld [vmem:[%s4684 + $0x8] sm:$0xff]
    %v4687 = vld [vmem:[%s4684 + $0x10] sm:$0xff]
    %v4688 = vld [vmem:[%s4684 + $0x18] sm:$0xff]
    %v4689 = vld [vmem:[#allocation7] sm:$0xff]
    %v4690 = vld [vmem:[#allocation7 + $0x8] sm:$0xff]
    %v4691 = vld [vmem:[#allocation7 + $0x10] sm:$0xff]
    %v4692 = vld [vmem:[#allocation7 + $0x18] sm:$0xff]
    %v4693 = vld [vmem:[#allocation7 + $0x20] sm:$0xff]
    %v4694 = vld [vmem:[#allocation7 + $0x28] sm:$0xff]
    %v4695 = vld [vmem:[#allocation7 + $0x30] sm:$0xff]
    %v4696 = vld [vmem:[#allocation7 + $0x38] sm:$0xff]
    %v4697 = vld [vmem:[#allocation7 + $0x40] sm:$0xff]
    %v4698 = vld [vmem:[#allocation7 + $0x48] sm:$0xff]
    %v4699 = vld [vmem:[#allocation7 + $0x50] sm:$0xff]
    %v4700 = vld [vmem:[#allocation7 + $0x58] sm:$0xff]
    %v4701 = vld [vmem:[#allocation7 + $0x60] sm:$0xff]
    %v4702 = vld [vmem:[#allocation7 + $0x68] sm:$0xff]
    %v4703 = vld [vmem:[#allocation7 + $0x70] sm:$0xff]
    %v4704 = vld [vmem:[#allocation7 + $0x78] sm:$0xff]
    %v4705 = vld [vmem:[#allocation7 + $0x80] sm:$0xff]
    %v4706 = vld [vmem:[#allocation7 + $0x88] sm:$0xff]
    %v4707 = vld [vmem:[#allocation7 + $0x90] sm:$0xff]
    %v4708 = vld [vmem:[#allocation7 + $0x98] sm:$0xff]
    %v4709 = vld [vmem:[#allocation7 + $0xa0] sm:$0xff]
    %v4710 = vld [vmem:[#allocation7 + $0xa8] sm:$0xff]
    %v4711 = vld [vmem:[#allocation7 + $0xb0] sm:$0xff]
    %v4712 = vld [vmem:[#allocation7 + $0xb8] sm:$0xff]
    %v4713 = vld [vmem:[#allocation7 + $0xc0] sm:$0xff]
    %v4714 = vld [vmem:[#allocation7 + $0xc8] sm:$0xff]
    %v4715 = vld [vmem:[#allocation7 + $0xd0] sm:$0xff]
    %v4716 = vld [vmem:[#allocation7 + $0xd8] sm:$0xff]
    %v4717 = vld [vmem:[#allocation7 + $0xe0] sm:$0xff]
    %v4718 = vld [vmem:[#allocation7 + $0xe8] sm:$0xff]
    %v4719 = vld [vmem:[#allocation7 + $0xf0] sm:$0xff]
    %v4720 = vld [vmem:[#allocation7 + $0xf8] sm:$0xff]
    %v4753 = vunpack.c.l.b16 %v4689
    %v4754 = vunpack.c.h.b16 %v4689
    %v4755 = vunpack.c.l.b16 %v4690
    %v4756 = vunpack.c.h.b16 %v4690
    %v4757 = vunpack.c.l.b16 %v4691
    %v4758 = vunpack.c.h.b16 %v4691
    %v4759 = vunpack.c.l.b16 %v4692
    %v4760 = vunpack.c.h.b16 %v4692
    %v4761 = vunpack.c.l.b16 %v4693
    %v4762 = vunpack.c.h.b16 %v4693
    %v4763 = vunpack.c.l.b16 %v4694
    %v4764 = vunpack.c.h.b16 %v4694
    %v4765 = vunpack.c.l.b16 %v4695
    %v4766 = vunpack.c.h.b16 %v4695
    %v4767 = vunpack.c.l.b16 %v4696
    %v4768 = vunpack.c.h.b16 %v4696
    %v4769 = vunpack.c.l.b16 %v4697
    %v4770 = vunpack.c.h.b16 %v4697
    %v4771 = vunpack.c.l.b16 %v4698
    %v4772 = vunpack.c.h.b16 %v4698
    %v4773 = vunpack.c.l.b16 %v4699
    %v4774 = vunpack.c.h.b16 %v4699
    %v4775 = vunpack.c.l.b16 %v4700
    %v4776 = vunpack.c.h.b16 %v4700
    %v4777 = vunpack.c.l.b16 %v4701
    %v4778 = vunpack.c.h.b16 %v4701
    %v4779 = vunpack.c.l.b16 %v4702
    %v4780 = vunpack.c.h.b16 %v4702
    %v4781 = vunpack.c.l.b16 %v4703
    %v4782 = vunpack.c.h.b16 %v4703
    %v4783 = vunpack.c.l.b16 %v4704
    %v4784 = vunpack.c.h.b16 %v4704
    %v4785 = vunpack.c.l.b16 %v4705
    %v4786 = vunpack.c.h.b16 %v4705
    %v4787 = vunpack.c.l.b16 %v4706
    %v4788 = vunpack.c.h.b16 %v4706
    %v4789 = vunpack.c.l.b16 %v4707
    %v4790 = vunpack.c.h.b16 %v4707
    %v4791 = vunpack.c.l.b16 %v4708
    %v4792 = vunpack.c.h.b16 %v4708
    %v4793 = vunpack.c.l.b16 %v4709
    %v4794 = vunpack.c.h.b16 %v4709
    %v4795 = vunpack.c.l.b16 %v4710
    %v4796 = vunpack.c.h.b16 %v4710
    %v4797 = vunpack.c.l.b16 %v4711
    %v4798 = vunpack.c.h.b16 %v4711
    %v4799 = vunpack.c.l.b16 %v4712
    %v4800 = vunpack.c.h.b16 %v4712
    %v4801 = vunpack.c.l.b16 %v4713
    %v4802 = vunpack.c.h.b16 %v4713
    %v4803 = vunpack.c.l.b16 %v4714
    %v4804 = vunpack.c.h.b16 %v4714
    %v4805 = vunpack.c.l.b16 %v4715
    %v4806 = vunpack.c.h.b16 %v4715
    %v4807 = vunpack.c.l.b16 %v4716
    %v4808 = vunpack.c.h.b16 %v4716
    %v4809 = vunpack.c.l.b16 %v4717
    %v4810 = vunpack.c.h.b16 %v4717
    %v4811 = vunpack.c.l.b16 %v4718
    %v4812 = vunpack.c.h.b16 %v4718
    %v4813 = vunpack.c.l.b16 %v4719
    %v4814 = vunpack.c.h.b16 %v4719
    %v4815 = vunpack.c.l.b16 %v4720
    %v4816 = vunpack.c.h.b16 %v4720
    %v4817 = vpack.c.b16 %v4757, %v4753
    %v4818 = vpack.c.b16 %v4758, %v4754
    %v4819 = vpack.c.b16 %v4759, %v4755
    %v4820 = vpack.c.b16 %v4760, %v4756
    %v4821 = vpack.c.b16 %v4765, %v4761
    %v4822 = vpack.c.b16 %v4766, %v4762
    %v4823 = vpack.c.b16 %v4767, %v4763
    %v4824 = vpack.c.b16 %v4768, %v4764
    %v4825 = vpack.c.b16 %v4773, %v4769
    %v4826 = vpack.c.b16 %v4774, %v4770
    %v4827 = vpack.c.b16 %v4775, %v4771
    %v4828 = vpack.c.b16 %v4776, %v4772
    %v4829 = vpack.c.b16 %v4781, %v4777
    %v4830 = vpack.c.b16 %v4782, %v4778
    %v4831 = vpack.c.b16 %v4783, %v4779
    %v4832 = vpack.c.b16 %v4784, %v4780
    %v4833 = vpack.c.b16 %v4789, %v4785
    %v4834 = vpack.c.b16 %v4790, %v4786
    %v4835 = vpack.c.b16 %v4791, %v4787
    %v4836 = vpack.c.b16 %v4792, %v4788
    %v4837 = vpack.c.b16 %v4797, %v4793
    %v4838 = vpack.c.b16 %v4798, %v4794
    %v4839 = vpack.c.b16 %v4799, %v4795
    %v4840 = vpack.c.b16 %v4800, %v4796
    %v4841 = vpack.c.b16 %v4805, %v4801
    %v4842 = vpack.c.b16 %v4806, %v4802
    %v4843 = vpack.c.b16 %v4807, %v4803
    %v4844 = vpack.c.b16 %v4808, %v4804
    %v4845 = vpack.c.b16 %v4813, %v4809
    %v4846 = vpack.c.b16 %v4814, %v4810
    %v4847 = vpack.c.b16 %v4815, %v4811
    %v4848 = vpack.c.b16 %v4816, %v4812
    %4881 = vmatprep.subr.bf16.mxu0 %v4818
    %4882 = vmatpush1.bf16.msra.mxu0 %v4817
    %4883 = vmatprep.subr.bf16.mxu0 %v4822
    %4884 = vmatpush1.bf16.msra.mxu0 %v4821
    %4885 = vmatprep.subr.bf16.mxu0 %v4826
    %4886 = vmatpush1.bf16.msra.mxu0 %v4825
    %4887 = vmatprep.subr.bf16.mxu0 %v4830
    %4888 = vmatpush1.bf16.msra.mxu0 %v4829
    %4889 = vmatprep.subr.bf16.mxu0 %v4834
    %4890 = vmatpush1.bf16.msra.mxu0 %v4833
    %4891 = vmatprep.subr.bf16.mxu0 %v4838
    %4892 = vmatpush1.bf16.msra.mxu0 %v4837
    %4893 = vmatprep.subr.bf16.mxu0 %v4842
    %4894 = vmatpush1.bf16.msra.mxu0 %v4841
    %4895 = vmatprep.subr.bf16.mxu0 %v4846
    %4896 = vmatpush1.bf16.msra.mxu0 %v4845
    %4897 = vmatprep.subr.bf16.mxu0 0
    %4898 = vmatpush1.bf16.msra.mxu0 0
    %4899 = vmatprep.subr.bf16.mxu0 0
    %4900 = vmatpush1.bf16.msra.mxu0 0
    %4901 = vmatprep.subr.bf16.mxu0 0
    %4902 = vmatpush1.bf16.msra.mxu0 0
    %4903 = vmatprep.subr.bf16.mxu0 0
    %4904 = vmatpush1.bf16.msra.mxu0 0
    %4905 = vmatprep.subr.bf16.mxu0 0
    %4906 = vmatpush1.bf16.msra.mxu0 0
    %4907 = vmatprep.subr.bf16.mxu0 0
    %4908 = vmatpush1.bf16.msra.mxu0 0
    %4909 = vmatprep.subr.bf16.mxu0 0
    %4910 = vmatpush1.bf16.msra.mxu0 0
    %4911 = vmatprep.subr.bf16.mxu0 0
    %4912 = vmatpush1.bf16.msra.mxu0 0
    %4913 = vmatprep.mubr.bf16.mxu0 0
    %4914 = vmatmul.mubr.bf16.gmra.mrb[0].mxu0 %v4682
    %v4915 = vpop.f32.mrb[0].mxu0
    %v4916 = vadd.f32 0.0, %v4915
    %v4917 = vpop.f32.mrb[0].mxu0
    %v4918 = vadd.f32 0.0, %v4917
    %v4919 = vpop.f32.mrb[0].mxu0
    %v4920 = vpop.f32.mrb[0].mxu0
    %4921 = vdwg.mxu0
    %4922 = vmatprep.subr.bf16.mxu0 %v4820
    %4923 = vmatpush1.bf16.msra.mxu0 %v4819
    %4924 = vmatprep.subr.bf16.mxu0 %v4824
    %4925 = vmatpush1.bf16.msra.mxu0 %v4823
    %4926 = vmatprep.subr.bf16.mxu0 %v4828
    %4927 = vmatpush1.bf16.msra.mxu0 %v4827
    %4928 = vmatprep.subr.bf16.mxu0 %v4832
    %4929 = vmatpush1.bf16.msra.mxu0 %v4831
    %4930 = vmatprep.subr.bf16.mxu0 %v4836
    %4931 = vmatpush1.bf16.msra.mxu0 %v4835
    %4932 = vmatprep.subr.bf16.mxu0 %v4840
    %4933 = vmatpush1.bf16.msra.mxu0 %v4839
    %4934 = vmatprep.subr.bf16.mxu0 %v4844
    %4935 = vmatpush1.bf16.msra.mxu0 %v4843
    %4936 = vmatprep.subr.bf16.mxu0 %v4848
    %4937 = vmatpush1.bf16.msra.mxu0 %v4847
    %4938 = vmatprep.subr.bf16.mxu0 0
    %4939 = vmatpush1.bf16.msra.mxu0 0
    %4940 = vmatprep.subr.bf16.mxu0 0
    %4941 = vmatpush1.bf16.msra.mxu0 0
    %4942 = vmatprep.subr.bf16.mxu0 0
    %4943 = vmatpush1.bf16.msra.mxu0 0
    %4944 = vmatprep.subr.bf16.mxu0 0
    %4945 = vmatpush1.bf16.msra.mxu0 0
    %4946 = vmatprep.subr.bf16.mxu0 0
    %4947 = vmatpush1.bf16.msra.mxu0 0
    %4948 = vmatprep.subr.bf16.mxu0 0
    %4949 = vmatpush1.bf16.msra.mxu0 0
    %4950 = vmatprep.subr.bf16.mxu0 0
    %4951 = vmatpush1.bf16.msra.mxu0 0
    %4952 = vmatprep.subr.bf16.mxu0 0
    %4953 = vmatpush1.bf16.msra.mxu0 0
    %4954 = vmatprep.mubr.bf16.mxu0 0
    %4955 = vmatmul.mubr.bf16.gmra.mrb[0].mxu0 %v4682
    %v4956 = vpop.f32.mrb[0].mxu0
    %v4957 = vadd.f32 0.0, %v4956
    %v4958 = vpop.f32.mrb[0].mxu0
    %v4959 = vadd.f32 0.0, %v4958
    %v4960 = vpop.f32.mrb[0].mxu0
    %v4961 = vpop.f32.mrb[0].mxu0
    %4962 = vdwg.mxu0
    %v4963 = vadd.f32 %v4685, %v4916
    %v4964 = vadd.f32 %v4686, %v4918
    %v4965 = vadd.f32 %v4687, %v4957
    %v4966 = vadd.f32 %v4688, %v4959
    %v4967 = vxor.u32 %v4963, 2147483648
    %v4968 = vxor.u32 %v4964, 2147483648
    %v4969 = vxor.u32 %v4965, 2147483648
    %v4970 = vmul.f32 %v4967, 1.442695
    %v4971 = vpow.pop %v4970
    %v4972 = vmul.f32 %v4968, 1.442695
    %v4973 = vpow.pop %v4972
    %v4974 = vmul.f32 %v4969, 1.442695
    %v4975 = vpow.pop %v4974
    %v4976 = vadd.f32 %v4971, 1.0
    %v4977 = vadd.f32 %v4973, 1.0
    %v4978 = vadd.f32 %v4975, 1.0
    %v4979 = vrcp.pop %v4976
    %v4980 = vmul.f32 1.0, %v4979
    %v4981 = vrcp.pop %v4977
    %v4982 = vmul.f32 1.0, %v4981
    %v4983 = vrcp.pop %v4978
    %v4984 = vmul.f32 1.0, %v4983
    %v4985 = vtanh.pop %v4966
    %v4986 = vmul.f32 %v4982, %v4683
    %v4987 = vmul.f32 %v4980, %v4985
    %v4988 = vadd.f32 %v4986, %v4987
    %v4989 = vtanh.pop %v4988
    %v4990 = vmul.f32 %v4984, %v4989
    %v4991 = vpack.c.bf16 %v4990, %v4990
    %4992 = vst [vmem:[#allocation3] sm:$0xf] %v4991
    %4993 = vst [vmem:[#allocation4] sm:$0xff] %v4988
    %v4994 = vld [vmem:[#allocation3] sm:$0xff]
    %v4995 = vld [vmem:[%s814] sm:$0xff]
    %v4996 = vld [vmem:[#allocation9] sm:$0xff]
    %v4997 = vld [vmem:[#allocation9 + $0x8] sm:$0xff]
    %v4998 = vld [vmem:[#allocation9 + $0x10] sm:$0xff]
    %v4999 = vld [vmem:[#allocation9 + $0x18] sm:$0xff]
    %v5000 = vld [vmem:[#allocation9 + $0x20] sm:$0xff]
    %v5001 = vld [vmem:[#allocation9 + $0x28] sm:$0xff]
    %v5002 = vld [vmem:[#allocation9 + $0x30] sm:$0xff]
    %v5003 = vld [vmem:[#allocation9 + $0x38] sm:$0xff]
    %v5004 = vld [vmem:[#allocation9 + $0x40] sm:$0xff]
    %v5005 = vld [vmem:[#allocation9 + $0x48] sm:$0xff]
    %v5006 = vld [vmem:[#allocation9 + $0x50] sm:$0xff]
    %v5007 = vld [vmem:[#allocation9 + $0x58] sm:$0xff]
    %v5008 = vld [vmem:[#allocation9 + $0x60] sm:$0xff]
    %v5009 = vld [vmem:[#allocation9 + $0x68] sm:$0xff]
    %v5010 = vld [vmem:[#allocation9 + $0x70] sm:$0xff]
    %v5011 = vld [vmem:[#allocation9 + $0x78] sm:$0xff]
    %v5012 = vld [vmem:[#allocation9 + $0x80] sm:$0xff]
    %v5013 = vld [vmem:[#allocation9 + $0x88] sm:$0xff]
    %v5014 = vld [vmem:[#allocation9 + $0x90] sm:$0xff]
    %v5015 = vld [vmem:[#allocation9 + $0x98] sm:$0xff]
    %v5016 = vld [vmem:[#allocation9 + $0xa0] sm:$0xff]
    %v5017 = vld [vmem:[#allocation9 + $0xa8] sm:$0xff]
    %v5018 = vld [vmem:[#allocation9 + $0xb0] sm:$0xff]
    %v5019 = vld [vmem:[#allocation9 + $0xb8] sm:$0xff]
    %v5020 = vld [vmem:[#allocation9 + $0xc0] sm:$0xff]
    %v5021 = vld [vmem:[#allocation9 + $0xc8] sm:$0xff]
    %v5022 = vld [vmem:[#allocation9 + $0xd0] sm:$0xff]
    %v5023 = vld [vmem:[#allocation9 + $0xd8] sm:$0xff]
    %v5024 = vld [vmem:[#allocation9 + $0xe0] sm:$0xff]
    %v5025 = vld [vmem:[#allocation9 + $0xe8] sm:$0xff]
    %v5026 = vld [vmem:[#allocation9 + $0xf0] sm:$0xff]
    %v5027 = vld [vmem:[#allocation9 + $0xf8] sm:$0xff]
    %v5028 = vld [vmem:[#allocation9 + $0x100] sm:$0xff]
    %v5029 = vld [vmem:[#allocation9 + $0x108] sm:$0xff]
    %v5030 = vld [vmem:[#allocation9 + $0x110] sm:$0xff]
    %v5031 = vld [vmem:[#allocation9 + $0x118] sm:$0xff]
    %v5032 = vld [vmem:[#allocation9 + $0x120] sm:$0xff]
    %v5033 = vld [vmem:[#allocation9 + $0x128] sm:$0xff]
    %v5034 = vld [vmem:[#allocation9 + $0x130] sm:$0xff]
    %v5035 = vld [vmem:[#allocation9 + $0x138] sm:$0xff]
    %v5036 = vld [vmem:[#allocation9 + $0x140] sm:$0xff]
    %v5037 = vld [vmem:[#allocation9 + $0x148] sm:$0xff]
    %v5038 = vld [vmem:[#allocation9 + $0x150] sm:$0xff]
    %v5039 = vld [vmem:[#allocation9 + $0x158] sm:$0xff]
    %v5040 = vld [vmem:[#allocation9 + $0x160] sm:$0xff]
    %v5041 = vld [vmem:[#allocation9 + $0x168] sm:$0xff]
    %v5042 = vld [vmem:[#allocation9 + $0x170] sm:$0xff]
    %v5043 = vld [vmem:[#allocation9 + $0x178] sm:$0xff]
    %v5044 = vld [vmem:[#allocation9 + $0x180] sm:$0xff]
    %v5045 = vld [vmem:[#allocation9 + $0x188] sm:$0xff]
    %v5046 = vld [vmem:[#allocation9 + $0x190] sm:$0xff]
    %v5047 = vld [vmem:[#allocation9 + $0x198] sm:$0xff]
    %v5048 = vld [vmem:[#allocation9 + $0x1a0] sm:$0xff]
    %v5049 = vld [vmem:[#allocation9 + $0x1a8] sm:$0xff]
    %v5050 = vld [vmem:[#allocation9 + $0x1b0] sm:$0xff]
    %v5051 = vld [vmem:[#allocation9 + $0x1b8] sm:$0xff]
    %v5052 = vld [vmem:[#allocation9 + $0x1c0] sm:$0xff]
    %v5053 = vld [vmem:[#allocation9 + $0x1c8] sm:$0xff]
    %v5054 = vld [vmem:[#allocation9 + $0x1d0] sm:$0xff]
    %v5055 = vld [vmem:[#allocation9 + $0x1d8] sm:$0xff]
    %v5056 = vld [vmem:[#allocation9 + $0x1e0] sm:$0xff]
    %v5057 = vld [vmem:[#allocation9 + $0x1e8] sm:$0xff]
    %v5058 = vld [vmem:[#allocation9 + $0x1f0] sm:$0xff]
    %v5059 = vld [vmem:[#allocation9 + $0x1f8] sm:$0xff]
    %v5060 = vld [vmem:[%s5] sm:$0xf]
    %v5062 = vlaneseq
    %v5063 = vshrl.u32 %v5062, 7
    %v5064 = vsub.s32 0, %v5063
    %v5065 = vrot.slane %v5060, %v5064
    %v5066 = vlaneseq
    %v5067 = vshrl.u32 %v5066, 7
    %v5068 = vsub.s32 1, %v5067
    %v5069 = vrot.slane %v5060, %v5068
    %v5070 = vlaneseq
    %v5071 = vshrl.u32 %v5070, 7
    %v5072 = vsub.s32 2, %v5071
    %v5073 = vrot.slane %v5060, %v5072
    %v5074 = vlaneseq
    %v5075 = vshrl.u32 %v5074, 7
    %v5076 = vsub.s32 3, %v5075
    %v5077 = vrot.slane %v5060, %v5076
    %v5083 = vunpack.c.l.b16 %v4994
    %v5084 = vunpack.c.h.b16 %v4994
    %v5085 = vpack.c.b16 %v5083, %v5083
    %v5086 = vpack.c.b16 %v5084, %v5084
    %v5153 = vunpack.c.l.b16 %v4996
    %v5154 = vunpack.c.h.b16 %v4996
    %v5155 = vunpack.c.l.b16 %v4997
    %v5156 = vunpack.c.h.b16 %v4997
    %v5157 = vunpack.c.l.b16 %v4998
    %v5158 = vunpack.c.h.b16 %v4998
    %v5159 = vunpack.c.l.b16 %v4999
    %v5160 = vunpack.c.h.b16 %v4999
    %v5161 = vunpack.c.l.b16 %v5000
    %v5162 = vunpack.c.h.b16 %v5000
    %v5163 = vunpack.c.l.b16 %v5001
    %v5164 = vunpack.c.h.b16 %v5001
    %v5165 = vunpack.c.l.b16 %v5002
    %v5166 = vunpack.c.h.b16 %v5002
    %v5167 = vunpack.c.l.b16 %v5003
    %v5168 = vunpack.c.h.b16 %v5003
    %v5169 = vunpack.c.l.b16 %v5004
    %v5170 = vunpack.c.h.b16 %v5004
    %v5171 = vunpack.c.l.b16 %v5005
    %v5172 = vunpack.c.h.b16 %v5005
    %v5173 = vunpack.c.l.b16 %v5006
    %v5174 = vunpack.c.h.b16 %v5006
    %v5175 = vunpack.c.l.b16 %v5007
    %v5176 = vunpack.c.h.b16 %v5007
    %v5177 = vunpack.c.l.b16 %v5008
    %v5178 = vunpack.c.h.b16 %v5008
    %v5179 = vunpack.c.l.b16 %v5009
    %v5180 = vunpack.c.h.b16 %v5009
    %v5181 = vunpack.c.l.b16 %v5010
    %v5182 = vunpack.c.h.b16 %v5010
    %v5183 = vunpack.c.l.b16 %v5011
    %v5184 = vunpack.c.h.b16 %v5011
    %v5185 = vunpack.c.l.b16 %v5012
    %v5186 = vunpack.c.h.b16 %v5012
    %v5187 = vunpack.c.l.b16 %v5013
    %v5188 = vunpack.c.h.b16 %v5013
    %v5189 = vunpack.c.l.b16 %v5014
    %v5190 = vunpack.c.h.b16 %v5014
    %v5191 = vunpack.c.l.b16 %v5015
    %v5192 = vunpack.c.h.b16 %v5015
    %v5193 = vunpack.c.l.b16 %v5016
    %v5194 = vunpack.c.h.b16 %v5016
    %v5195 = vunpack.c.l.b16 %v5017
    %v5196 = vunpack.c.h.b16 %v5017
    %v5197 = vunpack.c.l.b16 %v5018
    %v5198 = vunpack.c.h.b16 %v5018
    %v5199 = vunpack.c.l.b16 %v5019
    %v5200 = vunpack.c.h.b16 %v5019
    %v5201 = vunpack.c.l.b16 %v5020
    %v5202 = vunpack.c.h.b16 %v5020
    %v5203 = vunpack.c.l.b16 %v5021
    %v5204 = vunpack.c.h.b16 %v5021
    %v5205 = vunpack.c.l.b16 %v5022
    %v5206 = vunpack.c.h.b16 %v5022
    %v5207 = vunpack.c.l.b16 %v5023
    %v5208 = vunpack.c.h.b16 %v5023
    %v5209 = vunpack.c.l.b16 %v5024
    %v5210 = vunpack.c.h.b16 %v5024
    %v5211 = vunpack.c.l.b16 %v5025
    %v5212 = vunpack.c.h.b16 %v5025
    %v5213 = vunpack.c.l.b16 %v5026
    %v5214 = vunpack.c.h.b16 %v5026
    %v5215 = vunpack.c.l.b16 %v5027
    %v5216 = vunpack.c.h.b16 %v5027
    %v5217 = vunpack.c.l.b16 %v5028
    %v5218 = vunpack.c.h.b16 %v5028
    %v5219 = vunpack.c.l.b16 %v5029
    %v5220 = vunpack.c.h.b16 %v5029
    %v5221 = vunpack.c.l.b16 %v5030
    %v5222 = vunpack.c.h.b16 %v5030
    %v5223 = vunpack.c.l.b16 %v5031
    %v5224 = vunpack.c.h.b16 %v5031
    %v5225 = vunpack.c.l.b16 %v5032
    %v5226 = vunpack.c.h.b16 %v5032
    %v5227 = vunpack.c.l.b16 %v5033
    %v5228 = vunpack.c.h.b16 %v5033
    %v5229 = vunpack.c.l.b16 %v5034
    %v5230 = vunpack.c.h.b16 %v5034
    %v5231 = vunpack.c.l.b16 %v5035
    %v5232 = vunpack.c.h.b16 %v5035
    %v5233 = vunpack.c.l.b16 %v5036
    %v5234 = vunpack.c.h.b16 %v5036
    %v5235 = vunpack.c.l.b16 %v5037
    %v5236 = vunpack.c.h.b16 %v5037
    %v5237 = vunpack.c.l.b16 %v5038
    %v5238 = vunpack.c.h.b16 %v5038
    %v5239 = vunpack.c.l.b16 %v5039
    %v5240 = vunpack.c.h.b16 %v5039
    %v5241 = vunpack.c.l.b16 %v5040
    %v5242 = vunpack.c.h.b16 %v5040
    %v5243 = vunpack.c.l.b16 %v5041
    %v5244 = vunpack.c.h.b16 %v5041
    %v5245 = vunpack.c.l.b16 %v5042
    %v5246 = vunpack.c.h.b16 %v5042
    %v5247 = vunpack.c.l.b16 %v5043
    %v5248 = vunpack.c.h.b16 %v5043
    %v5249 = vunpack.c.l.b16 %v5044
    %v5250 = vunpack.c.h.b16 %v5044
    %v5251 = vunpack.c.l.b16 %v5045
    %v5252 = vunpack.c.h.b16 %v5045
    %v5253 = vunpack.c.l.b16 %v5046
    %v5254 = vunpack.c.h.b16 %v5046
    %v5255 = vunpack.c.l.b16 %v5047
    %v5256 = vunpack.c.h.b16 %v5047
    %v5257 = vunpack.c.l.b16 %v5048
    %v5258 = vunpack.c.h.b16 %v5048
    %v5259 = vunpack.c.l.b16 %v5049
    %v5260 = vunpack.c.h.b16 %v5049
    %v5261 = vunpack.c.l.b16 %v5050
    %v5262 = vunpack.c.h.b16 %v5050
    %v5263 = vunpack.c.l.b16 %v5051
    %v5264 = vunpack.c.h.b16 %v5051
    %v5265 = vunpack.c.l.b16 %v5052
    %v5266 = vunpack.c.h.b16 %v5052
    %v5267 = vunpack.c.l.b16 %v5053
    %v5268 = vunpack.c.h.b16 %v5053
    %v5269 = vunpack.c.l.b16 %v5054
    %v5270 = vunpack.c.h.b16 %v5054
    %v5271 = vunpack.c.l.b16 %v5055
    %v5272 = vunpack.c.h.b16 %v5055
    %v5273 = vunpack.c.l.b16 %v5056
    %v5274 = vunpack.c.h.b16 %v5056
    %v5275 = vunpack.c.l.b16 %v5057
    %v5276 = vunpack.c.h.b16 %v5057
    %v5277 = vunpack.c.l.b16 %v5058
    %v5278 = vunpack.c.h.b16 %v5058
    %v5279 = vunpack.c.l.b16 %v5059
    %v5280 = vunpack.c.h.b16 %v5059
    %v5281 = vpack.c.b16 %v5157, %v5153
    %v5282 = vpack.c.b16 %v5158, %v5154
    %v5283 = vpack.c.b16 %v5159, %v5155
    %v5284 = vpack.c.b16 %v5160, %v5156
    %v5285 = vpack.c.b16 %v5165, %v5161
    %v5286 = vpack.c.b16 %v5166, %v5162
    %v5287 = vpack.c.b16 %v5167, %v5163
    %v5288 = vpack.c.b16 %v5168, %v5164
    %v5289 = vpack.c.b16 %v5173, %v5169
    %v5290 = vpack.c.b16 %v5174, %v5170
    %v5291 = vpack.c.b16 %v5175, %v5171
    %v5292 = vpack.c.b16 %v5176, %v5172
    %v5293 = vpack.c.b16 %v5181, %v5177
    %v5294 = vpack.c.b16 %v5182, %v5178
    %v5295 = vpack.c.b16 %v5183, %v5179
    %v5296 = vpack.c.b16 %v5184, %v5180
    %v5297 = vpack.c.b16 %v5189, %v5185
    %v5298 = vpack.c.b16 %v5190, %v5186
    %v5299 = vpack.c.b16 %v5191, %v5187
    %v5300 = vpack.c.b16 %v5192, %v5188
    %v5301 = vpack.c.b16 %v5197, %v5193
    %v5302 = vpack.c.b16 %v5198, %v5194
    %v5303 = vpack.c.b16 %v5199, %v5195
    %v5304 = vpack.c.b16 %v5200, %v5196
    %v5305 = vpack.c.b16 %v5205, %v5201
    %v5306 = vpack.c.b16 %v5206, %v5202
    %v5307 = vpack.c.b16 %v5207, %v5203
    %v5308 = vpack.c.b16 %v5208, %v5204
    %v5309 = vpack.c.b16 %v5213, %v5209
    %v5310 = vpack.c.b16 %v5214, %v5210
    %v5311 = vpack.c.b16 %v5215, %v5211
    %v5312 = vpack.c.b16 %v5216, %v5212
    %v5313 = vpack.c.b16 %v5221, %v5217
    %v5314 = vpack.c.b16 %v5222, %v5218
    %v5315 = vpack.c.b16 %v5223, %v5219
    %v5316 = vpack.c.b16 %v5224, %v5220
    %v5317 = vpack.c.b16 %v5229, %v5225
    %v5318 = vpack.c.b16 %v5230, %v5226
    %v5319 = vpack.c.b16 %v5231, %v5227
    %v5320 = vpack.c.b16 %v5232, %v5228
    %v5321 = vpack.c.b16 %v5237, %v5233
    %v5322 = vpack.c.b16 %v5238, %v5234
    %v5323 = vpack.c.b16 %v5239, %v5235
    %v5324 = vpack.c.b16 %v5240, %v5236
    %v5325 = vpack.c.b16 %v5245, %v5241
    %v5326 = vpack.c.b16 %v5246, %v5242
    %v5327 = vpack.c.b16 %v5247, %v5243
    %v5328 = vpack.c.b16 %v5248, %v5244
    %v5329 = vpack.c.b16 %v5253, %v5249
    %v5330 = vpack.c.b16 %v5254, %v5250
    %v5331 = vpack.c.b16 %v5255, %v5251
    %v5332 = vpack.c.b16 %v5256, %v5252
    %v5333 = vpack.c.b16 %v5261, %v5257
    %v5334 = vpack.c.b16 %v5262, %v5258
    %v5335 = vpack.c.b16 %v5263, %v5259
    %v5336 = vpack.c.b16 %v5264, %v5260
    %v5337 = vpack.c.b16 %v5269, %v5265
    %v5338 = vpack.c.b16 %v5270, %v5266
    %v5339 = vpack.c.b16 %v5271, %v5267
    %v5340 = vpack.c.b16 %v5272, %v5268
    %v5341 = vpack.c.b16 %v5277, %v5273
    %v5342 = vpack.c.b16 %v5278, %v5274
    %v5343 = vpack.c.b16 %v5279, %v5275
    %v5344 = vpack.c.b16 %v5280, %v5276
    %5409 = vmatprep.subr.bf16.mxu0 %v5282
    %5410 = vmatpush1.bf16.msra.mxu0 %v5281
    %5411 = vmatprep.subr.bf16.mxu0 %v5286
    %5412 = vmatpush1.bf16.msra.mxu0 %v5285
    %5413 = vmatprep.subr.bf16.mxu0 %v5290
    %5414 = vmatpush1.bf16.msra.mxu0 %v5289
    %5415 = vmatprep.subr.bf16.mxu0 %v5294
    %5416 = vmatpush1.bf16.msra.mxu0 %v5293
    %5417 = vmatprep.subr.bf16.mxu0 %v5298
    %5418 = vmatpush1.bf16.msra.mxu0 %v5297
    %5419 = vmatprep.subr.bf16.mxu0 %v5302
    %5420 = vmatpush1.bf16.msra.mxu0 %v5301
    %5421 = vmatprep.subr.bf16.mxu0 %v5306
    %5422 = vmatpush1.bf16.msra.mxu0 %v5305
    %5423 = vmatprep.subr.bf16.mxu0 %v5310
    %5424 = vmatpush1.bf16.msra.mxu0 %v5309
    %5425 = vmatprep.subr.bf16.mxu0 %v5314
    %5426 = vmatpush1.bf16.msra.mxu0 %v5313
    %5427 = vmatprep.subr.bf16.mxu0 %v5318
    %5428 = vmatpush1.bf16.msra.mxu0 %v5317
    %5429 = vmatprep.subr.bf16.mxu0 %v5322
    %5430 = vmatpush1.bf16.msra.mxu0 %v5321
    %5431 = vmatprep.subr.bf16.mxu0 %v5326
    %5432 = vmatpush1.bf16.msra.mxu0 %v5325
    %5433 = vmatprep.subr.bf16.mxu0 %v5330
    %5434 = vmatpush1.bf16.msra.mxu0 %v5329
    %5435 = vmatprep.subr.bf16.mxu0 %v5334
    %5436 = vmatpush1.bf16.msra.mxu0 %v5333
    %5437 = vmatprep.subr.bf16.mxu0 %v5338
    %5438 = vmatpush1.bf16.msra.mxu0 %v5337
    %5439 = vmatprep.subr.bf16.mxu0 %v5342
    %5440 = vmatpush1.bf16.msra.mxu0 %v5341
    %5441 = vmatprep.mubr.bf16.mxu0 %v5086
    %5442 = vmatmul.mubr.bf16.gmra.mrb[0].mxu0 %v5085
    %v5443 = vpop.f32.mrb[0].mxu0
    %v5444 = vadd.f32 %v5065, %v5443
    %v5445 = vpop.f32.mrb[0].mxu0
    %v5446 = vadd.f32 %v5069, %v5445
    %v5447 = vpop.f32.mrb[0].mxu0
    %v5448 = vpop.f32.mrb[0].mxu0
    %5449 = vdwg.mxu0
    %5450 = vmatprep.subr.bf16.mxu0 %v5284
    %5451 = vmatpush1.bf16.msra.mxu0 %v5283
    %5452 = vmatprep.subr.bf16.mxu0 %v5288
    %5453 = vmatpush1.bf16.msra.mxu0 %v5287
    %5454 = vmatprep.subr.bf16.mxu0 %v5292
    %5455 = vmatpush1.bf16.msra.mxu0 %v5291
    %5456 = vmatprep.subr.bf16.mxu0 %v5296
    %5457 = vmatpush1.bf16.msra.mxu0 %v5295
    %5458 = vmatprep.subr.bf16.mxu0 %v5300
    %5459 = vmatpush1.bf16.msra.mxu0 %v5299
    %5460 = vmatprep.subr.bf16.mxu0 %v5304
    %5461 = vmatpush1.bf16.msra.mxu0 %v5303
    %5462 = vmatprep.subr.bf16.mxu0 %v5308
    %5463 = vmatpush1.bf16.msra.mxu0 %v5307
    %5464 = vmatprep.subr.bf16.mxu0 %v5312
    %5465 = vmatpush1.bf16.msra.mxu0 %v5311
    %5466 = vmatprep.subr.bf16.mxu0 %v5316
    %5467 = vmatpush1.bf16.msra.mxu0 %v5315
    %5468 = vmatprep.subr.bf16.mxu0 %v5320
    %5469 = vmatpush1.bf16.msra.mxu0 %v5319
    %5470 = vmatprep.subr.bf16.mxu0 %v5324
    %5471 = vmatpush1.bf16.msra.mxu0 %v5323
    %5472 = vmatprep.subr.bf16.mxu0 %v5328
    %5473 = vmatpush1.bf16.msra.mxu0 %v5327
    %5474 = vmatprep.subr.bf16.mxu0 %v5332
    %5475 = vmatpush1.bf16.msra.mxu0 %v5331
    %5476 = vmatprep.subr.bf16.mxu0 %v5336
    %5477 = vmatpush1.bf16.msra.mxu0 %v5335
    %5478 = vmatprep.subr.bf16.mxu0 %v5340
    %5479 = vmatpush1.bf16.msra.mxu0 %v5339
    %5480 = vmatprep.subr.bf16.mxu0 %v5344
    %5481 = vmatpush1.bf16.msra.mxu0 %v5343
    %5482 = vmatprep.mubr.bf16.mxu0 %v5086
    %5483 = vmatmul.mubr.bf16.gmra.mrb[0].mxu0 %v5085
    %v5484 = vpop.f32.mrb[0].mxu0
    %v5485 = vadd.f32 %v5073, %v5484
    %v5486 = vpop.f32.mrb[0].mxu0
    %v5487 = vadd.f32 %v5077, %v5486
    %v5488 = vpop.f32.mrb[0].mxu0
    %v5489 = vpop.f32.mrb[0].mxu0
    %5490 = vdwg.mxu0
    %v5491 = vxor.u32 %v5444, 2147483648
    %v5492 = vxor.u32 %v5446, 2147483648
    %v5493 = vxor.u32 %v5485, 2147483648
    %v5494 = vmul.f32 %v5491, 1.442695
    %v5495 = vpow.pop %v5494
    %v5496 = vmul.f32 %v5492, 1.442695
    %v5497 = vpow.pop %v5496
    %v5498 = vmul.f32 %v5493, 1.442695
    %v5499 = vpow.pop %v5498
    %v5500 = vadd.f32 %v5495, 1.0
    %v5501 = vadd.f32 %v5497, 1.0
    %v5502 = vadd.f32 %v5499, 1.0
    %v5503 = vrcp.pop %v5500
    %v5504 = vmul.f32 1.0, %v5503
    %v5505 = vrcp.pop %v5501
    %v5506 = vmul.f32 1.0, %v5505
    %v5507 = vrcp.pop %v5502
    %v5508 = vmul.f32 1.0, %v5507
    %v5509 = vtanh.pop %v5487
    %v5510 = vmul.f32 %v5506, %v4995
    %v5511 = vmul.f32 %v5504, %v5509
    %v5512 = vadd.f32 %v5510, %v5511
    %v5513 = vtanh.pop %v5512
    %v5514 = vmul.f32 %v5508, %v5513
    %v5515 = vpack.c.bf16 %v5514, %v5514
    %5516 = vst [vmem:[#allocation3 + $0x4] sm:$0xf] %v5515
    %5517 = vst [vmem:[%s814] sm:$0xff] %v5512
    %v5518 = vld [vmem:[#allocation3] sm:$0xf]
    %v5519 = vld [vmem:[#allocation4] sm:$0xff]
    %s5520 = scalar_lea.vmem [#allocation2], 192
    %v5521 = vld [vmem:[%s5520] sm:$0xff]
    %v5522 = vld [vmem:[%s5520 + $0x8] sm:$0xff]
    %v5523 = vld [vmem:[%s5520 + $0x10] sm:$0xff]
    %v5524 = vld [vmem:[%s5520 + $0x18] sm:$0xff]
    %v5525 = vld [vmem:[#allocation7] sm:$0xff]
    %v5526 = vld [vmem:[#allocation7 + $0x8] sm:$0xff]
    %v5527 = vld [vmem:[#allocation7 + $0x10] sm:$0xff]
    %v5528 = vld [vmem:[#allocation7 + $0x18] sm:$0xff]
    %v5529 = vld [vmem:[#allocation7 + $0x20] sm:$0xff]
    %v5530 = vld [vmem:[#allocation7 + $0x28] sm:$0xff]
    %v5531 = vld [vmem:[#allocation7 + $0x30] sm:$0xff]
    %v5532 = vld [vmem:[#allocation7 + $0x38] sm:$0xff]
    %v5533 = vld [vmem:[#allocation7 + $0x40] sm:$0xff]
    %v5534 = vld [vmem:[#allocation7 + $0x48] sm:$0xff]
    %v5535 = vld [vmem:[#allocation7 + $0x50] sm:$0xff]
    %v5536 = vld [vmem:[#allocation7 + $0x58] sm:$0xff]
    %v5537 = vld [vmem:[#allocation7 + $0x60] sm:$0xff]
    %v5538 = vld [vmem:[#allocation7 + $0x68] sm:$0xff]
    %v5539 = vld [vmem:[#allocation7 + $0x70] sm:$0xff]
    %v5540 = vld [vmem:[#allocation7 + $0x78] sm:$0xff]
    %v5541 = vld [vmem:[#allocation7 + $0x80] sm:$0xff]
    %v5542 = vld [vmem:[#allocation7 + $0x88] sm:$0xff]
    %v5543 = vld [vmem:[#allocation7 + $0x90] sm:$0xff]
    %v5544 = vld [vmem:[#allocation7 + $0x98] sm:$0xff]
    %v5545 = vld [vmem:[#allocation7 + $0xa0] sm:$0xff]
    %v5546 = vld [vmem:[#allocation7 + $0xa8] sm:$0xff]
    %v5547 = vld [vmem:[#allocation7 + $0xb0] sm:$0xff]
    %v5548 = vld [vmem:[#allocation7 + $0xb8] sm:$0xff]
    %v5549 = vld [vmem:[#allocation7 + $0xc0] sm:$0xff]
    %v5550 = vld [vmem:[#allocation7 + $0xc8] sm:$0xff]
    %v5551 = vld [vmem:[#allocation7 + $0xd0] sm:$0xff]
    %v5552 = vld [vmem:[#allocation7 + $0xd8] sm:$0xff]
    %v5553 = vld [vmem:[#allocation7 + $0xe0] sm:$0xff]
    %v5554 = vld [vmem:[#allocation7 + $0xe8] sm:$0xff]
    %v5555 = vld [vmem:[#allocation7 + $0xf0] sm:$0xff]
    %v5556 = vld [vmem:[#allocation7 + $0xf8] sm:$0xff]
    %v5589 = vunpack.c.l.b16 %v5525
    %v5590 = vunpack.c.h.b16 %v5525
    %v5591 = vunpack.c.l.b16 %v5526
    %v5592 = vunpack.c.h.b16 %v5526
    %v5593 = vunpack.c.l.b16 %v5527
    %v5594 = vunpack.c.h.b16 %v5527
    %v5595 = vunpack.c.l.b16 %v5528
    %v5596 = vunpack.c.h.b16 %v5528
    %v5597 = vunpack.c.l.b16 %v5529
    %v5598 = vunpack.c.h.b16 %v5529
    %v5599 = vunpack.c.l.b16 %v5530
    %v5600 = vunpack.c.h.b16 %v5530
    %v5601 = vunpack.c.l.b16 %v5531
    %v5602 = vunpack.c.h.b16 %v5531
    %v5603 = vunpack.c.l.b16 %v5532
    %v5604 = vunpack.c.h.b16 %v5532
    %v5605 = vunpack.c.l.b16 %v5533
    %v5606 = vunpack.c.h.b16 %v5533
    %v5607 = vunpack.c.l.b16 %v5534
    %v5608 = vunpack.c.h.b16 %v5534
    %v5609 = vunpack.c.l.b16 %v5535
    %v5610 = vunpack.c.h.b16 %v5535
    %v5611 = vunpack.c.l.b16 %v5536
    %v5612 = vunpack.c.h.b16 %v5536
    %v5613 = vunpack.c.l.b16 %v5537
    %v5614 = vunpack.c.h.b16 %v5537
    %v5615 = vunpack.c.l.b16 %v5538
    %v5616 = vunpack.c.h.b16 %v5538
    %v5617 = vunpack.c.l.b16 %v5539
    %v5618 = vunpack.c.h.b16 %v5539
    %v5619 = vunpack.c.l.b16 %v5540
    %v5620 = vunpack.c.h.b16 %v5540
    %v5621 = vunpack.c.l.b16 %v5541
    %v5622 = vunpack.c.h.b16 %v5541
    %v5623 = vunpack.c.l.b16 %v5542
    %v5624 = vunpack.c.h.b16 %v5542
    %v5625 = vunpack.c.l.b16 %v5543
    %v5626 = vunpack.c.h.b16 %v5543
    %v5627 = vunpack.c.l.b16 %v5544
    %v5628 = vunpack.c.h.b16 %v5544
    %v5629 = vunpack.c.l.b16 %v5545
    %v5630 = vunpack.c.h.b16 %v5545
    %v5631 = vunpack.c.l.b16 %v5546
    %v5632 = vunpack.c.h.b16 %v5546
    %v5633 = vunpack.c.l.b16 %v5547
    %v5634 = vunpack.c.h.b16 %v5547
    %v5635 = vunpack.c.l.b16 %v5548
    %v5636 = vunpack.c.h.b16 %v5548
    %v5637 = vunpack.c.l.b16 %v5549
    %v5638 = vunpack.c.h.b16 %v5549
    %v5639 = vunpack.c.l.b16 %v5550
    %v5640 = vunpack.c.h.b16 %v5550
    %v5641 = vunpack.c.l.b16 %v5551
    %v5642 = vunpack.c.h.b16 %v5551
    %v5643 = vunpack.c.l.b16 %v5552
    %v5644 = vunpack.c.h.b16 %v5552
    %v5645 = vunpack.c.l.b16 %v5553
    %v5646 = vunpack.c.h.b16 %v5553
    %v5647 = vunpack.c.l.b16 %v5554
    %v5648 = vunpack.c.h.b16 %v5554
    %v5649 = vunpack.c.l.b16 %v5555
    %v5650 = vunpack.c.h.b16 %v5555
    %v5651 = vunpack.c.l.b16 %v5556
    %v5652 = vunpack.c.h.b16 %v5556
    %v5653 = vpack.c.b16 %v5593, %v5589
    %v5654 = vpack.c.b16 %v5594, %v5590
    %v5655 = vpack.c.b16 %v5595, %v5591
    %v5656 = vpack.c.b16 %v5596, %v5592
    %v5657 = vpack.c.b16 %v5601, %v5597
    %v5658 = vpack.c.b16 %v5602, %v5598
    %v5659 = vpack.c.b16 %v5603, %v5599
    %v5660 = vpack.c.b16 %v5604, %v5600
    %v5661 = vpack.c.b16 %v5609, %v5605
    %v5662 = vpack.c.b16 %v5610, %v5606
    %v5663 = vpack.c.b16 %v5611, %v5607
    %v5664 = vpack.c.b16 %v5612, %v5608
    %v5665 = vpack.c.b16 %v5617, %v5613
    %v5666 = vpack.c.b16 %v5618, %v5614
    %v5667 = vpack.c.b16 %v5619, %v5615
    %v5668 = vpack.c.b16 %v5620, %v5616
    %v5669 = vpack.c.b16 %v5625, %v5621
    %v5670 = vpack.c.b16 %v5626, %v5622
    %v5671 = vpack.c.b16 %v5627, %v5623
    %v5672 = vpack.c.b16 %v5628, %v5624
    %v5673 = vpack.c.b16 %v5633, %v5629
    %v5674 = vpack.c.b16 %v5634, %v5630
    %v5675 = vpack.c.b16 %v5635, %v5631
    %v5676 = vpack.c.b16 %v5636, %v5632
    %v5677 = vpack.c.b16 %v5641, %v5637
    %v5678 = vpack.c.b16 %v5642, %v5638
    %v5679 = vpack.c.b16 %v5643, %v5639
    %v5680 = vpack.c.b16 %v5644, %v5640
    %v5681 = vpack.c.b16 %v5649, %v5645
    %v5682 = vpack.c.b16 %v5650, %v5646
    %v5683 = vpack.c.b16 %v5651, %v5647
    %v5684 = vpack.c.b16 %v5652, %v5648
    %5717 = vmatprep.subr.bf16.mxu0 %v5654
    %5718 = vmatpush1.bf16.msra.mxu0 %v5653
    %5719 = vmatprep.subr.bf16.mxu0 %v5658
    %5720 = vmatpush1.bf16.msra.mxu0 %v5657
    %5721 = vmatprep.subr.bf16.mxu0 %v5662
    %5722 = vmatpush1.bf16.msra.mxu0 %v5661
    %5723 = vmatprep.subr.bf16.mxu0 %v5666
    %5724 = vmatpush1.bf16.msra.mxu0 %v5665
    %5725 = vmatprep.subr.bf16.mxu0 %v5670
    %5726 = vmatpush1.bf16.msra.mxu0 %v5669
    %5727 = vmatprep.subr.bf16.mxu0 %v5674
    %5728 = vmatpush1.bf16.msra.mxu0 %v5673
    %5729 = vmatprep.subr.bf16.mxu0 %v5678
    %5730 = vmatpush1.bf16.msra.mxu0 %v5677
    %5731 = vmatprep.subr.bf16.mxu0 %v5682
    %5732 = vmatpush1.bf16.msra.mxu0 %v5681
    %5733 = vmatprep.subr.bf16.mxu0 0
    %5734 = vmatpush1.bf16.msra.mxu0 0
    %5735 = vmatprep.subr.bf16.mxu0 0
    %5736 = vmatpush1.bf16.msra.mxu0 0
    %5737 = vmatprep.subr.bf16.mxu0 0
    %5738 = vmatpush1.bf16.msra.mxu0 0
    %5739 = vmatprep.subr.bf16.mxu0 0
    %5740 = vmatpush1.bf16.msra.mxu0 0
    %5741 = vmatprep.subr.bf16.mxu0 0
    %5742 = vmatpush1.bf16.msra.mxu0 0
    %5743 = vmatprep.subr.bf16.mxu0 0
    %5744 = vmatpush1.bf16.msra.mxu0 0
    %5745 = vmatprep.subr.bf16.mxu0 0
    %5746 = vmatpush1.bf16.msra.mxu0 0
    %5747 = vmatprep.subr.bf16.mxu0 0
    %5748 = vmatpush1.bf16.msra.mxu0 0
    %5749 = vmatprep.mubr.bf16.mxu0 0
    %5750 = vmatmul.mubr.bf16.gmra.mrb[0].mxu0 %v5518
    %v5751 = vpop.f32.mrb[0].mxu0
    %v5752 = vadd.f32 0.0, %v5751
    %v5753 = vpop.f32.mrb[0].mxu0
    %v5754 = vadd.f32 0.0, %v5753
    %v5755 = vpop.f32.mrb[0].mxu0
    %v5756 = vpop.f32.mrb[0].mxu0
    %5757 = vdwg.mxu0
    %5758 = vmatprep.subr.bf16.mxu0 %v5656
    %5759 = vmatpush1.bf16.msra.mxu0 %v5655
    %5760 = vmatprep.subr.bf16.mxu0 %v5660
    %5761 = vmatpush1.bf16.msra.mxu0 %v5659
    %5762 = vmatprep.subr.bf16.mxu0 %v5664
    %5763 = vmatpush1.bf16.msra.mxu0 %v5663
    %5764 = vmatprep.subr.bf16.mxu0 %v5668
    %5765 = vmatpush1.bf16.msra.mxu0 %v5667
    %5766 = vmatprep.subr.bf16.mxu0 %v5672
    %5767 = vmatpush1.bf16.msra.mxu0 %v5671
    %5768 = vmatprep.subr.bf16.mxu0 %v5676
    %5769 = vmatpush1.bf16.msra.mxu0 %v5675
    %5770 = vmatprep.subr.bf16.mxu0 %v5680
    %5771 = vmatpush1.bf16.msra.mxu0 %v5679
    %5772 = vmatprep.subr.bf16.mxu0 %v5684
    %5773 = vmatpush1.bf16.msra.mxu0 %v5683
    %5774 = vmatprep.subr.bf16.mxu0 0
    %5775 = vmatpush1.bf16.msra.mxu0 0
    %5776 = vmatprep.subr.bf16.mxu0 0
    %5777 = vmatpush1.bf16.msra.mxu0 0
    %5778 = vmatprep.subr.bf16.mxu0 0
    %5779 = vmatpush1.bf16.msra.mxu0 0
    %5780 = vmatprep.subr.bf16.mxu0 0
    %5781 = vmatpush1.bf16.msra.mxu0 0
    %5782 = vmatprep.subr.bf16.mxu0 0
    %5783 = vmatpush1.bf16.msra.mxu0 0
    %5784 = vmatprep.subr.bf16.mxu0 0
    %5785 = vmatpush1.bf16.msra.mxu0 0
    %5786 = vmatprep.subr.bf16.mxu0 0
    %5787 = vmatpush1.bf16.msra.mxu0 0
    %5788 = vmatprep.subr.bf16.mxu0 0
    %5789 = vmatpush1.bf16.msra.mxu0 0
    %5790 = vmatprep.mubr.bf16.mxu0 0
    %5791 = vmatmul.mubr.bf16.gmra.mrb[0].mxu0 %v5518
    %v5792 = vpop.f32.mrb[0].mxu0
    %v5793 = vadd.f32 0.0, %v5792
    %v5794 = vpop.f32.mrb[0].mxu0
    %v5795 = vadd.f32 0.0, %v5794
    %v5796 = vpop.f32.mrb[0].mxu0
    %v5797 = vpop.f32.mrb[0].mxu0
    %5798 = vdwg.mxu0
    %v5799 = vadd.f32 %v5521, %v5752
    %v5800 = vadd.f32 %v5522, %v5754
    %v5801 = vadd.f32 %v5523, %v5793
    %v5802 = vadd.f32 %v5524, %v5795
    %v5803 = vxor.u32 %v5799, 2147483648
    %v5804 = vxor.u32 %v5800, 2147483648
    %v5805 = vxor.u32 %v5801, 2147483648
    %v5806 = vmul.f32 %v5803, 1.442695
    %v5807 = vpow.pop %v5806
    %v5808 = vmul.f32 %v5804, 1.442695
    %v5809 = vpow.pop %v5808
    %v5810 = vmul.f32 %v5805, 1.442695
    %v5811 = vpow.pop %v5810
    %v5812 = vadd.f32 %v5807, 1.0
    %v5813 = vadd.f32 %v5809, 1.0
    %v5814 = vadd.f32 %v5811, 1.0
    %v5815 = vrcp.pop %v5812
    %v5816 = vmul.f32 1.0, %v5815
    %v5817 = vrcp.pop %v5813
    %v5818 = vmul.f32 1.0, %v5817
    %v5819 = vrcp.pop %v5814
    %v5820 = vmul.f32 1.0, %v5819
    %v5821 = vtanh.pop %v5802
    %v5822 = vmul.f32 %v5818, %v5519
    %v5823 = vmul.f32 %v5816, %v5821
    %v5824 = vadd.f32 %v5822, %v5823
    %v5825 = vtanh.pop %v5824
    %v5826 = vmul.f32 %v5820, %v5825
    %v5827 = vpack.c.bf16 %v5826, %v5826
    %5828 = vst [vmem:[#allocation3] sm:$0xf] %v5827
    %5829 = vst [vmem:[#allocation4] sm:$0xff] %v5824
    %v5830 = vld [vmem:[#allocation3] sm:$0xff]
    %v5831 = vld [vmem:[%s814] sm:$0xff]
    %v5832 = vld [vmem:[#allocation9] sm:$0xff]
    %v5833 = vld [vmem:[#allocation9 + $0x8] sm:$0xff]
    %v5834 = vld [vmem:[#allocation9 + $0x10] sm:$0xff]
    %v5835 = vld [vmem:[#allocation9 + $0x18] sm:$0xff]
    %v5836 = vld [vmem:[#allocation9 + $0x20] sm:$0xff]
    %v5837 = vld [vmem:[#allocation9 + $0x28] sm:$0xff]
    %v5838 = vld [vmem:[#allocation9 + $0x30] sm:$0xff]
    %v5839 = vld [vmem:[#allocation9 + $0x38] sm:$0xff]
    %v5840 = vld [vmem:[#allocation9 + $0x40] sm:$0xff]
    %v5841 = vld [vmem:[#allocation9 + $0x48] sm:$0xff]
    %v5842 = vld [vmem:[#allocation9 + $0x50] sm:$0xff]
    %v5843 = vld [vmem:[#allocation9 + $0x58] sm:$0xff]
    %v5844 = vld [vmem:[#allocation9 + $0x60] sm:$0xff]
    %v5845 = vld [vmem:[#allocation9 + $0x68] sm:$0xff]
    %v5846 = vld [vmem:[#allocation9 + $0x70] sm:$0xff]
    %v5847 = vld [vmem:[#allocation9 + $0x78] sm:$0xff]
    %v5848 = vld [vmem:[#allocation9 + $0x80] sm:$0xff]
    %v5849 = vld [vmem:[#allocation9 + $0x88] sm:$0xff]
    %v5850 = vld [vmem:[#allocation9 + $0x90] sm:$0xff]
    %v5851 = vld [vmem:[#allocation9 + $0x98] sm:$0xff]
    %v5852 = vld [vmem:[#allocation9 + $0xa0] sm:$0xff]
    %v5853 = vld [vmem:[#allocation9 + $0xa8] sm:$0xff]
    %v5854 = vld [vmem:[#allocation9 + $0xb0] sm:$0xff]
    %v5855 = vld [vmem:[#allocation9 + $0xb8] sm:$0xff]
    %v5856 = vld [vmem:[#allocation9 + $0xc0] sm:$0xff]
    %v5857 = vld [vmem:[#allocation9 + $0xc8] sm:$0xff]
    %v5858 = vld [vmem:[#allocation9 + $0xd0] sm:$0xff]
    %v5859 = vld [vmem:[#allocation9 + $0xd8] sm:$0xff]
    %v5860 = vld [vmem:[#allocation9 + $0xe0] sm:$0xff]
    %v5861 = vld [vmem:[#allocation9 + $0xe8] sm:$0xff]
    %v5862 = vld [vmem:[#allocation9 + $0xf0] sm:$0xff]
    %v5863 = vld [vmem:[#allocation9 + $0xf8] sm:$0xff]
    %v5864 = vld [vmem:[#allocation9 + $0x100] sm:$0xff]
    %v5865 = vld [vmem:[#allocation9 + $0x108] sm:$0xff]
    %v5866 = vld [vmem:[#allocation9 + $0x110] sm:$0xff]
    %v5867 = vld [vmem:[#allocation9 + $0x118] sm:$0xff]
    %v5868 = vld [vmem:[#allocation9 + $0x120] sm:$0xff]
    %v5869 = vld [vmem:[#allocation9 + $0x128] sm:$0xff]
    %v5870 = vld [vmem:[#allocation9 + $0x130] sm:$0xff]
    %v5871 = vld [vmem:[#allocation9 + $0x138] sm:$0xff]
    %v5872 = vld [vmem:[#allocation9 + $0x140] sm:$0xff]
    %v5873 = vld [vmem:[#allocation9 + $0x148] sm:$0xff]
    %v5874 = vld [vmem:[#allocation9 + $0x150] sm:$0xff]
    %v5875 = vld [vmem:[#allocation9 + $0x158] sm:$0xff]
    %v5876 = vld [vmem:[#allocation9 + $0x160] sm:$0xff]
    %v5877 = vld [vmem:[#allocation9 + $0x168] sm:$0xff]
    %v5878 = vld [vmem:[#allocation9 + $0x170] sm:$0xff]
    %v5879 = vld [vmem:[#allocation9 + $0x178] sm:$0xff]
    %v5880 = vld [vmem:[#allocation9 + $0x180] sm:$0xff]
    %v5881 = vld [vmem:[#allocation9 + $0x188] sm:$0xff]
    %v5882 = vld [vmem:[#allocation9 + $0x190] sm:$0xff]
    %v5883 = vld [vmem:[#allocation9 + $0x198] sm:$0xff]
    %v5884 = vld [vmem:[#allocation9 + $0x1a0] sm:$0xff]
    %v5885 = vld [vmem:[#allocation9 + $0x1a8] sm:$0xff]
    %v5886 = vld [vmem:[#allocation9 + $0x1b0] sm:$0xff]
    %v5887 = vld [vmem:[#allocation9 + $0x1b8] sm:$0xff]
    %v5888 = vld [vmem:[#allocation9 + $0x1c0] sm:$0xff]
    %v5889 = vld [vmem:[#allocation9 + $0x1c8] sm:$0xff]
    %v5890 = vld [vmem:[#allocation9 + $0x1d0] sm:$0xff]
    %v5891 = vld [vmem:[#allocation9 + $0x1d8] sm:$0xff]
    %v5892 = vld [vmem:[#allocation9 + $0x1e0] sm:$0xff]
    %v5893 = vld [vmem:[#allocation9 + $0x1e8] sm:$0xff]
    %v5894 = vld [vmem:[#allocation9 + $0x1f0] sm:$0xff]
    %v5895 = vld [vmem:[#allocation9 + $0x1f8] sm:$0xff]
    %v5896 = vld [vmem:[%s5] sm:$0xf]
    %v5898 = vlaneseq
    %v5899 = vshrl.u32 %v5898, 7
    %v5900 = vsub.s32 0, %v5899
    %v5901 = vrot.slane %v5896, %v5900
    %v5902 = vlaneseq
    %v5903 = vshrl.u32 %v5902, 7
    %v5904 = vsub.s32 1, %v5903
    %v5905 = vrot.slane %v5896, %v5904
    %v5906 = vlaneseq
    %v5907 = vshrl.u32 %v5906, 7
    %v5908 = vsub.s32 2, %v5907
    %v5909 = vrot.slane %v5896, %v5908
    %v5910 = vlaneseq
    %v5911 = vshrl.u32 %v5910, 7
    %v5912 = vsub.s32 3, %v5911
    %v5913 = vrot.slane %v5896, %v5912
    %v5919 = vunpack.c.l.b16 %v5830
    %v5920 = vunpack.c.h.b16 %v5830
    %v5921 = vpack.c.b16 %v5919, %v5919
    %v5922 = vpack.c.b16 %v5920, %v5920
    %v5989 = vunpack.c.l.b16 %v5832
    %v5990 = vunpack.c.h.b16 %v5832
    %v5991 = vunpack.c.l.b16 %v5833
    %v5992 = vunpack.c.h.b16 %v5833
    %v5993 = vunpack.c.l.b16 %v5834
    %v5994 = vunpack.c.h.b16 %v5834
    %v5995 = vunpack.c.l.b16 %v5835
    %v5996 = vunpack.c.h.b16 %v5835
    %v5997 = vunpack.c.l.b16 %v5836
    %v5998 = vunpack.c.h.b16 %v5836
    %v5999 = vunpack.c.l.b16 %v5837
    %v6000 = vunpack.c.h.b16 %v5837
    %v6001 = vunpack.c.l.b16 %v5838
    %v6002 = vunpack.c.h.b16 %v5838
    %v6003 = vunpack.c.l.b16 %v5839
    %v6004 = vunpack.c.h.b16 %v5839
    %v6005 = vunpack.c.l.b16 %v5840
    %v6006 = vunpack.c.h.b16 %v5840
    %v6007 = vunpack.c.l.b16 %v5841
    %v6008 = vunpack.c.h.b16 %v5841
    %v6009 = vunpack.c.l.b16 %v5842
    %v6010 = vunpack.c.h.b16 %v5842
    %v6011 = vunpack.c.l.b16 %v5843
    %v6012 = vunpack.c.h.b16 %v5843
    %v6013 = vunpack.c.l.b16 %v5844
    %v6014 = vunpack.c.h.b16 %v5844
    %v6015 = vunpack.c.l.b16 %v5845
    %v6016 = vunpack.c.h.b16 %v5845
    %v6017 = vunpack.c.l.b16 %v5846
    %v6018 = vunpack.c.h.b16 %v5846
    %v6019 = vunpack.c.l.b16 %v5847
    %v6020 = vunpack.c.h.b16 %v5847
    %v6021 = vunpack.c.l.b16 %v5848
    %v6022 = vunpack.c.h.b16 %v5848
    %v6023 = vunpack.c.l.b16 %v5849
    %v6024 = vunpack.c.h.b16 %v5849
    %v6025 = vunpack.c.l.b16 %v5850
    %v6026 = vunpack.c.h.b16 %v5850
    %v6027 = vunpack.c.l.b16 %v5851
    %v6028 = vunpack.c.h.b16 %v5851
    %v6029 = vunpack.c.l.b16 %v5852
    %v6030 = vunpack.c.h.b16 %v5852
    %v6031 = vunpack.c.l.b16 %v5853
    %v6032 = vunpack.c.h.b16 %v5853
    %v6033 = vunpack.c.l.b16 %v5854
    %v6034 = vunpack.c.h.b16 %v5854
    %v6035 = vunpack.c.l.b16 %v5855
    %v6036 = vunpack.c.h.b16 %v5855
    %v6037 = vunpack.c.l.b16 %v5856
    %v6038 = vunpack.c.h.b16 %v5856
    %v6039 = vunpack.c.l.b16 %v5857
    %v6040 = vunpack.c.h.b16 %v5857
    %v6041 = vunpack.c.l.b16 %v5858
    %v6042 = vunpack.c.h.b16 %v5858
    %v6043 = vunpack.c.l.b16 %v5859
    %v6044 = vunpack.c.h.b16 %v5859
    %v6045 = vunpack.c.l.b16 %v5860
    %v6046 = vunpack.c.h.b16 %v5860
    %v6047 = vunpack.c.l.b16 %v5861
    %v6048 = vunpack.c.h.b16 %v5861
    %v6049 = vunpack.c.l.b16 %v5862
    %v6050 = vunpack.c.h.b16 %v5862
    %v6051 = vunpack.c.l.b16 %v5863
    %v6052 = vunpack.c.h.b16 %v5863
    %v6053 = vunpack.c.l.b16 %v5864
    %v6054 = vunpack.c.h.b16 %v5864
    %v6055 = vunpack.c.l.b16 %v5865
    %v6056 = vunpack.c.h.b16 %v5865
    %v6057 = vunpack.c.l.b16 %v5866
    %v6058 = vunpack.c.h.b16 %v5866
    %v6059 = vunpack.c.l.b16 %v5867
    %v6060 = vunpack.c.h.b16 %v5867
    %v6061 = vunpack.c.l.b16 %v5868
    %v6062 = vunpack.c.h.b16 %v5868
    %v6063 = vunpack.c.l.b16 %v5869
    %v6064 = vunpack.c.h.b16 %v5869
    %v6065 = vunpack.c.l.b16 %v5870
    %v6066 = vunpack.c.h.b16 %v5870
    %v6067 = vunpack.c.l.b16 %v5871
    %v6068 = vunpack.c.h.b16 %v5871
    %v6069 = vunpack.c.l.b16 %v5872
    %v6070 = vunpack.c.h.b16 %v5872
    %v6071 = vunpack.c.l.b16 %v5873
    %v6072 = vunpack.c.h.b16 %v5873
    %v6073 = vunpack.c.l.b16 %v5874
    %v6074 = vunpack.c.h.b16 %v5874
    %v6075 = vunpack.c.l.b16 %v5875
    %v6076 = vunpack.c.h.b16 %v5875
    %v6077 = vunpack.c.l.b16 %v5876
    %v6078 = vunpack.c.h.b16 %v5876
    %v6079 = vunpack.c.l.b16 %v5877
    %v6080 = vunpack.c.h.b16 %v5877
    %v6081 = vunpack.c.l.b16 %v5878
    %v6082 = vunpack.c.h.b16 %v5878
    %v6083 = vunpack.c.l.b16 %v5879
    %v6084 = vunpack.c.h.b16 %v5879
    %v6085 = vunpack.c.l.b16 %v5880
    %v6086 = vunpack.c.h.b16 %v5880
    %v6087 = vunpack.c.l.b16 %v5881
    %v6088 = vunpack.c.h.b16 %v5881
    %v6089 = vunpack.c.l.b16 %v5882
    %v6090 = vunpack.c.h.b16 %v5882
    %v6091 = vunpack.c.l.b16 %v5883
    %v6092 = vunpack.c.h.b16 %v5883
    %v6093 = vunpack.c.l.b16 %v5884
    %v6094 = vunpack.c.h.b16 %v5884
    %v6095 = vunpack.c.l.b16 %v5885
    %v6096 = vunpack.c.h.b16 %v5885
    %v6097 = vunpack.c.l.b16 %v5886
    %v6098 = vunpack.c.h.b16 %v5886
    %v6099 = vunpack.c.l.b16 %v5887
    %v6100 = vunpack.c.h.b16 %v5887
    %v6101 = vunpack.c.l.b16 %v5888
    %v6102 = vunpack.c.h.b16 %v5888
    %v6103 = vunpack.c.l.b16 %v5889
    %v6104 = vunpack.c.h.b16 %v5889
    %v6105 = vunpack.c.l.b16 %v5890
    %v6106 = vunpack.c.h.b16 %v5890
    %v6107 = vunpack.c.l.b16 %v5891
    %v6108 = vunpack.c.h.b16 %v5891
    %v6109 = vunpack.c.l.b16 %v5892
    %v6110 = vunpack.c.h.b16 %v5892
    %v6111 = vunpack.c.l.b16 %v5893
    %v6112 = vunpack.c.h.b16 %v5893
    %v6113 = vunpack.c.l.b16 %v5894
    %v6114 = vunpack.c.h.b16 %v5894
    %v6115 = vunpack.c.l.b16 %v5895
    %v6116 = vunpack.c.h.b16 %v5895
    %v6117 = vpack.c.b16 %v5993, %v5989
    %v6118 = vpack.c.b16 %v5994, %v5990
    %v6119 = vpack.c.b16 %v5995, %v5991
    %v6120 = vpack.c.b16 %v5996, %v5992
    %v6121 = vpack.c.b16 %v6001, %v5997
    %v6122 = vpack.c.b16 %v6002, %v5998
    %v6123 = vpack.c.b16 %v6003, %v5999
    %v6124 = vpack.c.b16 %v6004, %v6000
    %v6125 = vpack.c.b16 %v6009, %v6005
    %v6126 = vpack.c.b16 %v6010, %v6006
    %v6127 = vpack.c.b16 %v6011, %v6007
    %v6128 = vpack.c.b16 %v6012, %v6008
    %v6129 = vpack.c.b16 %v6017, %v6013
    %v6130 = vpack.c.b16 %v6018, %v6014
    %v6131 = vpack.c.b16 %v6019, %v6015
    %v6132 = vpack.c.b16 %v6020, %v6016
    %v6133 = vpack.c.b16 %v6025, %v6021
    %v6134 = vpack.c.b16 %v6026, %v6022
    %v6135 = vpack.c.b16 %v6027, %v6023
    %v6136 = vpack.c.b16 %v6028, %v6024
    %v6137 = vpack.c.b16 %v6033, %v6029
    %v6138 = vpack.c.b16 %v6034, %v6030
    %v6139 = vpack.c.b16 %v6035, %v6031
    %v6140 = vpack.c.b16 %v6036, %v6032
    %v6141 = vpack.c.b16 %v6041, %v6037
    %v6142 = vpack.c.b16 %v6042, %v6038
    %v6143 = vpack.c.b16 %v6043, %v6039
    %v6144 = vpack.c.b16 %v6044, %v6040
    %v6145 = vpack.c.b16 %v6049, %v6045
    %v6146 = vpack.c.b16 %v6050, %v6046
    %v6147 = vpack.c.b16 %v6051, %v6047
    %v6148 = vpack.c.b16 %v6052, %v6048
    %v6149 = vpack.c.b16 %v6057, %v6053
    %v6150 = vpack.c.b16 %v6058, %v6054
    %v6151 = vpack.c.b16 %v6059, %v6055
    %v6152 = vpack.c.b16 %v6060, %v6056
    %v6153 = vpack.c.b16 %v6065, %v6061
    %v6154 = vpack.c.b16 %v6066, %v6062
    %v6155 = vpack.c.b16 %v6067, %v6063
    %v6156 = vpack.c.b16 %v6068, %v6064
    %v6157 = vpack.c.b16 %v6073, %v6069
    %v6158 = vpack.c.b16 %v6074, %v6070
    %v6159 = vpack.c.b16 %v6075, %v6071
    %v6160 = vpack.c.b16 %v6076, %v6072
    %v6161 = vpack.c.b16 %v6081, %v6077
    %v6162 = vpack.c.b16 %v6082, %v6078
    %v6163 = vpack.c.b16 %v6083, %v6079
    %v6164 = vpack.c.b16 %v6084, %v6080
    %v6165 = vpack.c.b16 %v6089, %v6085
    %v6166 = vpack.c.b16 %v6090, %v6086
    %v6167 = vpack.c.b16 %v6091, %v6087
    %v6168 = vpack.c.b16 %v6092, %v6088
    %v6169 = vpack.c.b16 %v6097, %v6093
    %v6170 = vpack.c.b16 %v6098, %v6094
    %v6171 = vpack.c.b16 %v6099, %v6095
    %v6172 = vpack.c.b16 %v6100, %v6096
    %v6173 = vpack.c.b16 %v6105, %v6101
    %v6174 = vpack.c.b16 %v6106, %v6102
    %v6175 = vpack.c.b16 %v6107, %v6103
    %v6176 = vpack.c.b16 %v6108, %v6104
    %v6177 = vpack.c.b16 %v6113, %v6109
    %v6178 = vpack.c.b16 %v6114, %v6110
    %v6179 = vpack.c.b16 %v6115, %v6111
    %v6180 = vpack.c.b16 %v6116, %v6112
    %6245 = vmatprep.subr.bf16.mxu0 %v6118
    %6246 = vmatpush1.bf16.msra.mxu0 %v6117
    %6247 = vmatprep.subr.bf16.mxu0 %v6122
    %6248 = vmatpush1.bf16.msra.mxu0 %v6121
    %6249 = vmatprep.subr.bf16.mxu0 %v6126
    %6250 = vmatpush1.bf16.msra.mxu0 %v6125
    %6251 = vmatprep.subr.bf16.mxu0 %v6130
    %6252 = vmatpush1.bf16.msra.mxu0 %v6129
    %6253 = vmatprep.subr.bf16.mxu0 %v6134
    %6254 = vmatpush1.bf16.msra.mxu0 %v6133
    %6255 = vmatprep.subr.bf16.mxu0 %v6138
    %6256 = vmatpush1.bf16.msra.mxu0 %v6137
    %6257 = vmatprep.subr.bf16.mxu0 %v6142
    %6258 = vmatpush1.bf16.msra.mxu0 %v6141
    %6259 = vmatprep.subr.bf16.mxu0 %v6146
    %6260 = vmatpush1.bf16.msra.mxu0 %v6145
    %6261 = vmatprep.subr.bf16.mxu0 %v6150
    %6262 = vmatpush1.bf16.msra.mxu0 %v6149
    %6263 = vmatprep.subr.bf16.mxu0 %v6154
    %6264 = vmatpush1.bf16.msra.mxu0 %v6153
    %6265 = vmatprep.subr.bf16.mxu0 %v6158
    %6266 = vmatpush1.bf16.msra.mxu0 %v6157
    %6267 = vmatprep.subr.bf16.mxu0 %v6162
    %6268 = vmatpush1.bf16.msra.mxu0 %v6161
    %6269 = vmatprep.subr.bf16.mxu0 %v6166
    %6270 = vmatpush1.bf16.msra.mxu0 %v6165
    %6271 = vmatprep.subr.bf16.mxu0 %v6170
    %6272 = vmatpush1.bf16.msra.mxu0 %v6169
    %6273 = vmatprep.subr.bf16.mxu0 %v6174
    %6274 = vmatpush1.bf16.msra.mxu0 %v6173
    %6275 = vmatprep.subr.bf16.mxu0 %v6178
    %6276 = vmatpush1.bf16.msra.mxu0 %v6177
    %6277 = vmatprep.mubr.bf16.mxu0 %v5922
    %6278 = vmatmul.mubr.bf16.gmra.mrb[0].mxu0 %v5921
    %v6279 = vpop.f32.mrb[0].mxu0
    %v6280 = vadd.f32 %v5901, %v6279
    %v6281 = vpop.f32.mrb[0].mxu0
    %v6282 = vadd.f32 %v5905, %v6281
    %v6283 = vpop.f32.mrb[0].mxu0
    %v6284 = vpop.f32.mrb[0].mxu0
    %6285 = vdwg.mxu0
    %6286 = vmatprep.subr.bf16.mxu0 %v6120
    %6287 = vmatpush1.bf16.msra.mxu0 %v6119
    %6288 = vmatprep.subr.bf16.mxu0 %v6124
    %6289 = vmatpush1.bf16.msra.mxu0 %v6123
    %6290 = vmatprep.subr.bf16.mxu0 %v6128
    %6291 = vmatpush1.bf16.msra.mxu0 %v6127
    %6292 = vmatprep.subr.bf16.mxu0 %v6132
    %6293 = vmatpush1.bf16.msra.mxu0 %v6131
    %6294 = vmatprep.subr.bf16.mxu0 %v6136
    %6295 = vmatpush1.bf16.msra.mxu0 %v6135
    %6296 = vmatprep.subr.bf16.mxu0 %v6140
    %6297 = vmatpush1.bf16.msra.mxu0 %v6139
    %6298 = vmatprep.subr.bf16.mxu0 %v6144
    %6299 = vmatpush1.bf16.msra.mxu0 %v6143
    %6300 = vmatprep.subr.bf16.mxu0 %v6148
    %6301 = vmatpush1.bf16.msra.mxu0 %v6147
    %6302 = vmatprep.subr.bf16.mxu0 %v6152
    %6303 = vmatpush1.bf16.msra.mxu0 %v6151
    %6304 = vmatprep.subr.bf16.mxu0 %v6156
    %6305 = vmatpush1.bf16.msra.mxu0 %v6155
    %6306 = vmatprep.subr.bf16.mxu0 %v6160
    %6307 = vmatpush1.bf16.msra.mxu0 %v6159
    %6308 = vmatprep.subr.bf16.mxu0 %v6164
    %6309 = vmatpush1.bf16.msra.mxu0 %v6163
    %6310 = vmatprep.subr.bf16.mxu0 %v6168
    %6311 = vmatpush1.bf16.msra.mxu0 %v6167
    %6312 = vmatprep.subr.bf16.mxu0 %v6172
    %6313 = vmatpush1.bf16.msra.mxu0 %v6171
    %6314 = vmatprep.subr.bf16.mxu0 %v6176
    %6315 = vmatpush1.bf16.msra.mxu0 %v6175
    %6316 = vmatprep.subr.bf16.mxu0 %v6180
    %6317 = vmatpush1.bf16.msra.mxu0 %v6179
    %6318 = vmatprep.mubr.bf16.mxu0 %v5922
    %6319 = vmatmul.mubr.bf16.gmra.mrb[0].mxu0 %v5921
    %v6320 = vpop.f32.mrb[0].mxu0
    %v6321 = vadd.f32 %v5909, %v6320
    %v6322 = vpop.f32.mrb[0].mxu0
    %v6323 = vadd.f32 %v5913, %v6322
    %v6324 = vpop.f32.mrb[0].mxu0
    %v6325 = vpop.f32.mrb[0].mxu0
    %6326 = vdwg.mxu0
    %v6327 = vxor.u32 %v6280, 2147483648
    %v6328 = vxor.u32 %v6282, 2147483648
    %v6329 = vxor.u32 %v6321, 2147483648
    %v6330 = vmul.f32 %v6327, 1.442695
    %v6331 = vpow.pop %v6330
    %v6332 = vmul.f32 %v6328, 1.442695
    %v6333 = vpow.pop %v6332
    %v6334 = vmul.f32 %v6329, 1.442695
    %v6335 = vpow.pop %v6334
    %v6336 = vadd.f32 %v6331, 1.0
    %v6337 = vadd.f32 %v6333, 1.0
    %v6338 = vadd.f32 %v6335, 1.0
    %v6339 = vrcp.pop %v6336
    %v6340 = vmul.f32 1.0, %v6339
    %v6341 = vrcp.pop %v6337
    %v6342 = vmul.f32 1.0, %v6341
    %v6343 = vrcp.pop %v6338
    %v6344 = vmul.f32 1.0, %v6343
    %v6345 = vtanh.pop %v6323
    %v6346 = vmul.f32 %v6342, %v5831
    %v6347 = vmul.f32 %v6340, %v6345
    %v6348 = vadd.f32 %v6346, %v6347
    %v6349 = vtanh.pop %v6348
    %v6350 = vmul.f32 %v6344, %v6349
    %v6351 = vpack.c.bf16 %v6350, %v6350
    %6352 = vst [vmem:[#allocation3 + $0x4] sm:$0xf] %v6351
    %6353 = vst [vmem:[%s814] sm:$0xff] %v6348
    %v6354 = vld [vmem:[#allocation3] sm:$0xf]
    %v6355 = vld [vmem:[#allocation4] sm:$0xff]
    %s6356 = scalar_lea.vmem [#allocation2], 224
    %v6357 = vld [vmem:[%s6356] sm:$0xff]
    %v6358 = vld [vmem:[%s6356 + $0x8] sm:$0xff]
    %v6359 = vld [vmem:[%s6356 + $0x10] sm:$0xff]
    %v6360 = vld [vmem:[%s6356 + $0x18] sm:$0xff]
    %v6361 = vld [vmem:[#allocation7] sm:$0xff]
    %v6362 = vld [vmem:[#allocation7 + $0x8] sm:$0xff]
    %v6363 = vld [vmem:[#allocation7 + $0x10] sm:$0xff]
    %v6364 = vld [vmem:[#allocation7 + $0x18] sm:$0xff]
    %v6365 = vld [vmem:[#allocation7 + $0x20] sm:$0xff]
    %v6366 = vld [vmem:[#allocation7 + $0x28] sm:$0xff]
    %v6367 = vld [vmem:[#allocation7 + $0x30] sm:$0xff]
    %v6368 = vld [vmem:[#allocation7 + $0x38] sm:$0xff]
    %v6369 = vld [vmem:[#allocation7 + $0x40] sm:$0xff]
    %v6370 = vld [vmem:[#allocation7 + $0x48] sm:$0xff]
    %v6371 = vld [vmem:[#allocation7 + $0x50] sm:$0xff]
    %v6372 = vld [vmem:[#allocation7 + $0x58] sm:$0xff]
    %v6373 = vld [vmem:[#allocation7 + $0x60] sm:$0xff]
    %v6374 = vld [vmem:[#allocation7 + $0x68] sm:$0xff]
    %v6375 = vld [vmem:[#allocation7 + $0x70] sm:$0xff]
    %v6376 = vld [vmem:[#allocation7 + $0x78] sm:$0xff]
    %v6377 = vld [vmem:[#allocation7 + $0x80] sm:$0xff]
    %v6378 = vld [vmem:[#allocation7 + $0x88] sm:$0xff]
    %v6379 = vld [vmem:[#allocation7 + $0x90] sm:$0xff]
    %v6380 = vld [vmem:[#allocation7 + $0x98] sm:$0xff]
    %v6381 = vld [vmem:[#allocation7 + $0xa0] sm:$0xff]
    %v6382 = vld [vmem:[#allocation7 + $0xa8] sm:$0xff]
    %v6383 = vld [vmem:[#allocation7 + $0xb0] sm:$0xff]
    %v6384 = vld [vmem:[#allocation7 + $0xb8] sm:$0xff]
    %v6385 = vld [vmem:[#allocation7 + $0xc0] sm:$0xff]
    %v6386 = vld [vmem:[#allocation7 + $0xc8] sm:$0xff]
    %v6387 = vld [vmem:[#allocation7 + $0xd0] sm:$0xff]
    %v6388 = vld [vmem:[#allocation7 + $0xd8] sm:$0xff]
    %v6389 = vld [vmem:[#allocation7 + $0xe0] sm:$0xff]
    %v6390 = vld [vmem:[#allocation7 + $0xe8] sm:$0xff]
    %v6391 = vld [vmem:[#allocation7 + $0xf0] sm:$0xff]
    %v6392 = vld [vmem:[#allocation7 + $0xf8] sm:$0xff]
    %v6425 = vunpack.c.l.b16 %v6361
    %v6426 = vunpack.c.h.b16 %v6361
    %v6427 = vunpack.c.l.b16 %v6362
    %v6428 = vunpack.c.h.b16 %v6362
    %v6429 = vunpack.c.l.b16 %v6363
    %v6430 = vunpack.c.h.b16 %v6363
    %v6431 = vunpack.c.l.b16 %v6364
    %v6432 = vunpack.c.h.b16 %v6364
    %v6433 = vunpack.c.l.b16 %v6365
    %v6434 = vunpack.c.h.b16 %v6365
    %v6435 = vunpack.c.l.b16 %v6366
    %v6436 = vunpack.c.h.b16 %v6366
    %v6437 = vunpack.c.l.b16 %v6367
    %v6438 = vunpack.c.h.b16 %v6367
    %v6439 = vunpack.c.l.b16 %v6368
    %v6440 = vunpack.c.h.b16 %v6368
    %v6441 = vunpack.c.l.b16 %v6369
    %v6442 = vunpack.c.h.b16 %v6369
    %v6443 = vunpack.c.l.b16 %v6370
    %v6444 = vunpack.c.h.b16 %v6370
    %v6445 = vunpack.c.l.b16 %v6371
    %v6446 = vunpack.c.h.b16 %v6371
    %v6447 = vunpack.c.l.b16 %v6372
    %v6448 = vunpack.c.h.b16 %v6372
    %v6449 = vunpack.c.l.b16 %v6373
    %v6450 = vunpack.c.h.b16 %v6373
    %v6451 = vunpack.c.l.b16 %v6374
    %v6452 = vunpack.c.h.b16 %v6374
    %v6453 = vunpack.c.l.b16 %v6375
    %v6454 = vunpack.c.h.b16 %v6375
    %v6455 = vunpack.c.l.b16 %v6376
    %v6456 = vunpack.c.h.b16 %v6376
    %v6457 = vunpack.c.l.b16 %v6377
    %v6458 = vunpack.c.h.b16 %v6377
    %v6459 = vunpack.c.l.b16 %v6378
    %v6460 = vunpack.c.h.b16 %v6378
    %v6461 = vunpack.c.l.b16 %v6379
    %v6462 = vunpack.c.h.b16 %v6379
    %v6463 = vunpack.c.l.b16 %v6380
    %v6464 = vunpack.c.h.b16 %v6380
    %v6465 = vunpack.c.l.b16 %v6381
    %v6466 = vunpack.c.h.b16 %v6381
    %v6467 = vunpack.c.l.b16 %v6382
    %v6468 = vunpack.c.h.b16 %v6382
    %v6469 = vunpack.c.l.b16 %v6383
    %v6470 = vunpack.c.h.b16 %v6383
    %v6471 = vunpack.c.l.b16 %v6384
    %v6472 = vunpack.c.h.b16 %v6384
    %v6473 = vunpack.c.l.b16 %v6385
    %v6474 = vunpack.c.h.b16 %v6385
    %v6475 = vunpack.c.l.b16 %v6386
    %v6476 = vunpack.c.h.b16 %v6386
    %v6477 = vunpack.c.l.b16 %v6387
    %v6478 = vunpack.c.h.b16 %v6387
    %v6479 = vunpack.c.l.b16 %v6388
    %v6480 = vunpack.c.h.b16 %v6388
    %v6481 = vunpack.c.l.b16 %v6389
    %v6482 = vunpack.c.h.b16 %v6389
    %v6483 = vunpack.c.l.b16 %v6390
    %v6484 = vunpack.c.h.b16 %v6390
    %v6485 = vunpack.c.l.b16 %v6391
    %v6486 = vunpack.c.h.b16 %v6391
    %v6487 = vunpack.c.l.b16 %v6392
    %v6488 = vunpack.c.h.b16 %v6392
    %v6489 = vpack.c.b16 %v6429, %v6425
    %v6490 = vpack.c.b16 %v6430, %v6426
    %v6491 = vpack.c.b16 %v6431, %v6427
    %v6492 = vpack.c.b16 %v6432, %v6428
    %v6493 = vpack.c.b16 %v6437, %v6433
    %v6494 = vpack.c.b16 %v6438, %v6434
    %v6495 = vpack.c.b16 %v6439, %v6435
    %v6496 = vpack.c.b16 %v6440, %v6436
    %v6497 = vpack.c.b16 %v6445, %v6441
    %v6498 = vpack.c.b16 %v6446, %v6442
    %v6499 = vpack.c.b16 %v6447, %v6443
    %v6500 = vpack.c.b16 %v6448, %v6444
    %v6501 = vpack.c.b16 %v6453, %v6449
    %v6502 = vpack.c.b16 %v6454, %v6450
    %v6503 = vpack.c.b16 %v6455, %v6451
    %v6504 = vpack.c.b16 %v6456, %v6452
    %v6505 = vpack.c.b16 %v6461, %v6457
    %v6506 = vpack.c.b16 %v6462, %v6458
    %v6507 = vpack.c.b16 %v6463, %v6459
    %v6508 = vpack.c.b16 %v6464, %v6460
    %v6509 = vpack.c.b16 %v6469, %v6465
    %v6510 = vpack.c.b16 %v6470, %v6466
    %v6511 = vpack.c.b16 %v6471, %v6467
    %v6512 = vpack.c.b16 %v6472, %v6468
    %v6513 = vpack.c.b16 %v6477, %v6473
    %v6514 = vpack.c.b16 %v6478, %v6474
    %v6515 = vpack.c.b16 %v6479, %v6475
    %v6516 = vpack.c.b16 %v6480, %v6476
    %v6517 = vpack.c.b16 %v6485, %v6481
    %v6518 = vpack.c.b16 %v6486, %v6482
    %v6519 = vpack.c.b16 %v6487, %v6483
    %v6520 = vpack.c.b16 %v6488, %v6484
    %6553 = vmatprep.subr.bf16.mxu0 %v6490
    %6554 = vmatpush1.bf16.msra.mxu0 %v6489
    %6555 = vmatprep.subr.bf16.mxu0 %v6494
    %6556 = vmatpush1.bf16.msra.mxu0 %v6493
    %6557 = vmatprep.subr.bf16.mxu0 %v6498
    %6558 = vmatpush1.bf16.msra.mxu0 %v6497
    %6559 = vmatprep.subr.bf16.mxu0 %v6502
    %6560 = vmatpush1.bf16.msra.mxu0 %v6501
    %6561 = vmatprep.subr.bf16.mxu0 %v6506
    %6562 = vmatpush1.bf16.msra.mxu0 %v6505
    %6563 = vmatprep.subr.bf16.mxu0 %v6510
    %6564 = vmatpush1.bf16.msra.mxu0 %v6509
    %6565 = vmatprep.subr.bf16.mxu0 %v6514
    %6566 = vmatpush1.bf16.msra.mxu0 %v6513
    %6567 = vmatprep.subr.bf16.mxu0 %v6518
    %6568 = vmatpush1.bf16.msra.mxu0 %v6517
    %6569 = vmatprep.subr.bf16.mxu0 0
    %6570 = vmatpush1.bf16.msra.mxu0 0
    %6571 = vmatprep.subr.bf16.mxu0 0
    %6572 = vmatpush1.bf16.msra.mxu0 0
    %6573 = vmatprep.subr.bf16.mxu0 0
    %6574 = vmatpush1.bf16.msra.mxu0 0
    %6575 = vmatprep.subr.bf16.mxu0 0
    %6576 = vmatpush1.bf16.msra.mxu0 0
    %6577 = vmatprep.subr.bf16.mxu0 0
    %6578 = vmatpush1.bf16.msra.mxu0 0
    %6579 = vmatprep.subr.bf16.mxu0 0
    %6580 = vmatpush1.bf16.msra.mxu0 0
    %6581 = vmatprep.subr.bf16.mxu0 0
    %6582 = vmatpush1.bf16.msra.mxu0 0
    %6583 = vmatprep.subr.bf16.mxu0 0
    %6584 = vmatpush1.bf16.msra.mxu0 0
    %6585 = vmatprep.mubr.bf16.mxu0 0
    %6586 = vmatmul.mubr.bf16.gmra.mrb[0].mxu0 %v6354
    %v6587 = vpop.f32.mrb[0].mxu0
    %v6588 = vadd.f32 0.0, %v6587
    %v6589 = vpop.f32.mrb[0].mxu0
    %v6590 = vadd.f32 0.0, %v6589
    %v6591 = vpop.f32.mrb[0].mxu0
    %v6592 = vpop.f32.mrb[0].mxu0
    %6593 = vdwg.mxu0
    %6594 = vmatprep.subr.bf16.mxu0 %v6492
    %6595 = vmatpush1.bf16.msra.mxu0 %v6491
    %6596 = vmatprep.subr.bf16.mxu0 %v6496
    %6597 = vmatpush1.bf16.msra.mxu0 %v6495
    %6598 = vmatprep.subr.bf16.mxu0 %v6500
    %6599 = vmatpush1.bf16.msra.mxu0 %v6499
    %6600 = vmatprep.subr.bf16.mxu0 %v6504
    %6601 = vmatpush1.bf16.msra.mxu0 %v6503
    %6602 = vmatprep.subr.bf16.mxu0 %v6508
    %6603 = vmatpush1.bf16.msra.mxu0 %v6507
    %6604 = vmatprep.subr.bf16.mxu0 %v6512
    %6605 = vmatpush1.bf16.msra.mxu0 %v6511
    %6606 = vmatprep.subr.bf16.mxu0 %v6516
    %6607 = vmatpush1.bf16.msra.mxu0 %v6515
    %6608 = vmatprep.subr.bf16.mxu0 %v6520
    %6609 = vmatpush1.bf16.msra.mxu0 %v6519
    %6610 = vmatprep.subr.bf16.mxu0 0
    %6611 = vmatpush1.bf16.msra.mxu0 0
    %6612 = vmatprep.subr.bf16.mxu0 0
    %6613 = vmatpush1.bf16.msra.mxu0 0
    %6614 = vmatprep.subr.bf16.mxu0 0
    %6615 = vmatpush1.bf16.msra.mxu0 0
    %6616 = vmatprep.subr.bf16.mxu0 0
    %6617 = vmatpush1.bf16.msra.mxu0 0
    %6618 = vmatprep.subr.bf16.mxu0 0
    %6619 = vmatpush1.bf16.msra.mxu0 0
    %6620 = vmatprep.subr.bf16.mxu0 0
    %6621 = vmatpush1.bf16.msra.mxu0 0
    %6622 = vmatprep.subr.bf16.mxu0 0
    %6623 = vmatpush1.bf16.msra.mxu0 0
    %6624 = vmatprep.subr.bf16.mxu0 0
    %6625 = vmatpush1.bf16.msra.mxu0 0
    %6626 = vmatprep.mubr.bf16.mxu0 0
    %6627 = vmatmul.mubr.bf16.gmra.mrb[0].mxu0 %v6354
    %v6628 = vpop.f32.mrb[0].mxu0
    %v6629 = vadd.f32 0.0, %v6628
    %v6630 = vpop.f32.mrb[0].mxu0
    %v6631 = vadd.f32 0.0, %v6630
    %v6632 = vpop.f32.mrb[0].mxu0
    %v6633 = vpop.f32.mrb[0].mxu0
    %6634 = vdwg.mxu0
    %v6635 = vadd.f32 %v6357, %v6588
    %v6636 = vadd.f32 %v6358, %v6590
    %v6637 = vadd.f32 %v6359, %v6629
    %v6638 = vadd.f32 %v6360, %v6631
    %v6639 = vxor.u32 %v6635, 2147483648
    %v6640 = vxor.u32 %v6636, 2147483648
    %v6641 = vxor.u32 %v6637, 2147483648
    %v6642 = vmul.f32 %v6639, 1.442695
    %v6643 = vpow.pop %v6642
    %v6644 = vmul.f32 %v6640, 1.442695
    %v6645 = vpow.pop %v6644
    %v6646 = vmul.f32 %v6641, 1.442695
    %v6647 = vpow.pop %v6646
    %v6648 = vadd.f32 %v6643, 1.0
    %v6649 = vadd.f32 %v6645, 1.0
    %v6650 = vadd.f32 %v6647, 1.0
    %v6651 = vrcp.pop %v6648
    %v6652 = vmul.f32 1.0, %v6651
    %v6653 = vrcp.pop %v6649
    %v6654 = vmul.f32 1.0, %v6653
    %v6655 = vrcp.pop %v6650
    %v6656 = vmul.f32 1.0, %v6655
    %v6657 = vtanh.pop %v6638
    %v6658 = vmul.f32 %v6654, %v6355
    %v6659 = vmul.f32 %v6652, %v6657
    %v6660 = vadd.f32 %v6658, %v6659
    %v6661 = vtanh.pop %v6660
    %v6662 = vmul.f32 %v6656, %v6661
    %v6663 = vpack.c.bf16 %v6662, %v6662
    %6664 = vst [vmem:[#allocation3] sm:$0xf] %v6663
    %6665 = vst [vmem:[#allocation4] sm:$0xff] %v6660
    %v6666 = vld [vmem:[#allocation3] sm:$0xff]
    %v6667 = vld [vmem:[%s814] sm:$0xff]
    %v6668 = vld [vmem:[#allocation9] sm:$0xff]
    %v6669 = vld [vmem:[#allocation9 + $0x8] sm:$0xff]
    %v6670 = vld [vmem:[#allocation9 + $0x10] sm:$0xff]
    %v6671 = vld [vmem:[#allocation9 + $0x18] sm:$0xff]
    %v6672 = vld [vmem:[#allocation9 + $0x20] sm:$0xff]
    %v6673 = vld [vmem:[#allocation9 + $0x28] sm:$0xff]
    %v6674 = vld [vmem:[#allocation9 + $0x30] sm:$0xff]
    %v6675 = vld [vmem:[#allocation9 + $0x38] sm:$0xff]
    %v6676 = vld [vmem:[#allocation9 + $0x40] sm:$0xff]
    %v6677 = vld [vmem:[#allocation9 + $0x48] sm:$0xff]
    %v6678 = vld [vmem:[#allocation9 + $0x50] sm:$0xff]
    %v6679 = vld [vmem:[#allocation9 + $0x58] sm:$0xff]
    %v6680 = vld [vmem:[#allocation9 + $0x60] sm:$0xff]
    %v6681 = vld [vmem:[#allocation9 + $0x68] sm:$0xff]
    %v6682 = vld [vmem:[#allocation9 + $0x70] sm:$0xff]
    %v6683 = vld [vmem:[#allocation9 + $0x78] sm:$0xff]
    %v6684 = vld [vmem:[#allocation9 + $0x80] sm:$0xff]
    %v6685 = vld [vmem:[#allocation9 + $0x88] sm:$0xff]
    %v6686 = vld [vmem:[#allocation9 + $0x90] sm:$0xff]
    %v6687 = vld [vmem:[#allocation9 + $0x98] sm:$0xff]
    %v6688 = vld [vmem:[#allocation9 + $0xa0] sm:$0xff]
    %v6689 = vld [vmem:[#allocation9 + $0xa8] sm:$0xff]
    %v6690 = vld [vmem:[#allocation9 + $0xb0] sm:$0xff]
    %v6691 = vld [vmem:[#allocation9 + $0xb8] sm:$0xff]
    %v6692 = vld [vmem:[#allocation9 + $0xc0] sm:$0xff]
    %v6693 = vld [vmem:[#allocation9 + $0xc8] sm:$0xff]
    %v6694 = vld [vmem:[#allocation9 + $0xd0] sm:$0xff]
    %v6695 = vld [vmem:[#allocation9 + $0xd8] sm:$0xff]
    %v6696 = vld [vmem:[#allocation9 + $0xe0] sm:$0xff]
    %v6697 = vld [vmem:[#allocation9 + $0xe8] sm:$0xff]
    %v6698 = vld [vmem:[#allocation9 + $0xf0] sm:$0xff]
    %v6699 = vld [vmem:[#allocation9 + $0xf8] sm:$0xff]
    %v6700 = vld [vmem:[#allocation9 + $0x100] sm:$0xff]
    %v6701 = vld [vmem:[#allocation9 + $0x108] sm:$0xff]
    %v6702 = vld [vmem:[#allocation9 + $0x110] sm:$0xff]
    %v6703 = vld [vmem:[#allocation9 + $0x118] sm:$0xff]
    %v6704 = vld [vmem:[#allocation9 + $0x120] sm:$0xff]
    %v6705 = vld [vmem:[#allocation9 + $0x128] sm:$0xff]
    %v6706 = vld [vmem:[#allocation9 + $0x130] sm:$0xff]
    %v6707 = vld [vmem:[#allocation9 + $0x138] sm:$0xff]
    %v6708 = vld [vmem:[#allocation9 + $0x140] sm:$0xff]
    %v6709 = vld [vmem:[#allocation9 + $0x148] sm:$0xff]
    %v6710 = vld [vmem:[#allocation9 + $0x150] sm:$0xff]
    %v6711 = vld [vmem:[#allocation9 + $0x158] sm:$0xff]
    %v6712 = vld [vmem:[#allocation9 + $0x160] sm:$0xff]
    %v6713 = vld [vmem:[#allocation9 + $0x168] sm:$0xff]
    %v6714 = vld [vmem:[#allocation9 + $0x170] sm:$0xff]
    %v6715 = vld [vmem:[#allocation9 + $0x178] sm:$0xff]
    %v6716 = vld [vmem:[#allocation9 + $0x180] sm:$0xff]
    %v6717 = vld [vmem:[#allocation9 + $0x188] sm:$0xff]
    %v6718 = vld [vmem:[#allocation9 + $0x190] sm:$0xff]
    %v6719 = vld [vmem:[#allocation9 + $0x198] sm:$0xff]
    %v6720 = vld [vmem:[#allocation9 + $0x1a0] sm:$0xff]
    %v6721 = vld [vmem:[#allocation9 + $0x1a8] sm:$0xff]
    %v6722 = vld [vmem:[#allocation9 + $0x1b0] sm:$0xff]
    %v6723 = vld [vmem:[#allocation9 + $0x1b8] sm:$0xff]
    %v6724 = vld [vmem:[#allocation9 + $0x1c0] sm:$0xff]
    %v6725 = vld [vmem:[#allocation9 + $0x1c8] sm:$0xff]
    %v6726 = vld [vmem:[#allocation9 + $0x1d0] sm:$0xff]
    %v6727 = vld [vmem:[#allocation9 + $0x1d8] sm:$0xff]
    %v6728 = vld [vmem:[#allocation9 + $0x1e0] sm:$0xff]
    %v6729 = vld [vmem:[#allocation9 + $0x1e8] sm:$0xff]
    %v6730 = vld [vmem:[#allocation9 + $0x1f0] sm:$0xff]
    %v6731 = vld [vmem:[#allocation9 + $0x1f8] sm:$0xff]
    %v6732 = vld [vmem:[%s5] sm:$0xf]
    %v6734 = vlaneseq
    %v6735 = vshrl.u32 %v6734, 7
    %v6736 = vsub.s32 0, %v6735
    %v6737 = vrot.slane %v6732, %v6736
    %v6738 = vlaneseq
    %v6739 = vshrl.u32 %v6738, 7
    %v6740 = vsub.s32 1, %v6739
    %v6741 = vrot.slane %v6732, %v6740
    %v6742 = vlaneseq
    %v6743 = vshrl.u32 %v6742, 7
    %v6744 = vsub.s32 2, %v6743
    %v6745 = vrot.slane %v6732, %v6744
    %v6746 = vlaneseq
    %v6747 = vshrl.u32 %v6746, 7
    %v6748 = vsub.s32 3, %v6747
    %v6749 = vrot.slane %v6732, %v6748
    %v6755 = vunpack.c.l.b16 %v6666
    %v6756 = vunpack.c.h.b16 %v6666
    %v6757 = vpack.c.b16 %v6755, %v6755
    %v6758 = vpack.c.b16 %v6756, %v6756
    %v6825 = vunpack.c.l.b16 %v6668
    %v6826 = vunpack.c.h.b16 %v6668
    %v6827 = vunpack.c.l.b16 %v6669
    %v6828 = vunpack.c.h.b16 %v6669
    %v6829 = vunpack.c.l.b16 %v6670
    %v6830 = vunpack.c.h.b16 %v6670
    %v6831 = vunpack.c.l.b16 %v6671
    %v6832 = vunpack.c.h.b16 %v6671
    %v6833 = vunpack.c.l.b16 %v6672
    %v6834 = vunpack.c.h.b16 %v6672
    %v6835 = vunpack.c.l.b16 %v6673
    %v6836 = vunpack.c.h.b16 %v6673
    %v6837 = vunpack.c.l.b16 %v6674
    %v6838 = vunpack.c.h.b16 %v6674
    %v6839 = vunpack.c.l.b16 %v6675
    %v6840 = vunpack.c.h.b16 %v6675
    %v6841 = vunpack.c.l.b16 %v6676
    %v6842 = vunpack.c.h.b16 %v6676
    %v6843 = vunpack.c.l.b16 %v6677
    %v6844 = vunpack.c.h.b16 %v6677
    %v6845 = vunpack.c.l.b16 %v6678
    %v6846 = vunpack.c.h.b16 %v6678
    %v6847 = vunpack.c.l.b16 %v6679
    %v6848 = vunpack.c.h.b16 %v6679
    %v6849 = vunpack.c.l.b16 %v6680
    %v6850 = vunpack.c.h.b16 %v6680
    %v6851 = vunpack.c.l.b16 %v6681
    %v6852 = vunpack.c.h.b16 %v6681
    %v6853 = vunpack.c.l.b16 %v6682
    %v6854 = vunpack.c.h.b16 %v6682
    %v6855 = vunpack.c.l.b16 %v6683
    %v6856 = vunpack.c.h.b16 %v6683
    %v6857 = vunpack.c.l.b16 %v6684
    %v6858 = vunpack.c.h.b16 %v6684
    %v6859 = vunpack.c.l.b16 %v6685
    %v6860 = vunpack.c.h.b16 %v6685
    %v6861 = vunpack.c.l.b16 %v6686
    %v6862 = vunpack.c.h.b16 %v6686
    %v6863 = vunpack.c.l.b16 %v6687
    %v6864 = vunpack.c.h.b16 %v6687
    %v6865 = vunpack.c.l.b16 %v6688
    %v6866 = vunpack.c.h.b16 %v6688
    %v6867 = vunpack.c.l.b16 %v6689
    %v6868 = vunpack.c.h.b16 %v6689
    %v6869 = vunpack.c.l.b16 %v6690
    %v6870 = vunpack.c.h.b16 %v6690
    %v6871 = vunpack.c.l.b16 %v6691
    %v6872 = vunpack.c.h.b16 %v6691
    %v6873 = vunpack.c.l.b16 %v6692
    %v6874 = vunpack.c.h.b16 %v6692
    %v6875 = vunpack.c.l.b16 %v6693
    %v6876 = vunpack.c.h.b16 %v6693
    %v6877 = vunpack.c.l.b16 %v6694
    %v6878 = vunpack.c.h.b16 %v6694
    %v6879 = vunpack.c.l.b16 %v6695
    %v6880 = vunpack.c.h.b16 %v6695
    %v6881 = vunpack.c.l.b16 %v6696
    %v6882 = vunpack.c.h.b16 %v6696
    %v6883 = vunpack.c.l.b16 %v6697
    %v6884 = vunpack.c.h.b16 %v6697
    %v6885 = vunpack.c.l.b16 %v6698
    %v6886 = vunpack.c.h.b16 %v6698
    %v6887 = vunpack.c.l.b16 %v6699
    %v6888 = vunpack.c.h.b16 %v6699
    %v6889 = vunpack.c.l.b16 %v6700
    %v6890 = vunpack.c.h.b16 %v6700
    %v6891 = vunpack.c.l.b16 %v6701
    %v6892 = vunpack.c.h.b16 %v6701
    %v6893 = vunpack.c.l.b16 %v6702
    %v6894 = vunpack.c.h.b16 %v6702
    %v6895 = vunpack.c.l.b16 %v6703
    %v6896 = vunpack.c.h.b16 %v6703
    %v6897 = vunpack.c.l.b16 %v6704
    %v6898 = vunpack.c.h.b16 %v6704
    %v6899 = vunpack.c.l.b16 %v6705
    %v6900 = vunpack.c.h.b16 %v6705
    %v6901 = vunpack.c.l.b16 %v6706
    %v6902 = vunpack.c.h.b16 %v6706
    %v6903 = vunpack.c.l.b16 %v6707
    %v6904 = vunpack.c.h.b16 %v6707
    %v6905 = vunpack.c.l.b16 %v6708
    %v6906 = vunpack.c.h.b16 %v6708
    %v6907 = vunpack.c.l.b16 %v6709
    %v6908 = vunpack.c.h.b16 %v6709
    %v6909 = vunpack.c.l.b16 %v6710
    %v6910 = vunpack.c.h.b16 %v6710
    %v6911 = vunpack.c.l.b16 %v6711
    %v6912 = vunpack.c.h.b16 %v6711
    %v6913 = vunpack.c.l.b16 %v6712
    %v6914 = vunpack.c.h.b16 %v6712
    %v6915 = vunpack.c.l.b16 %v6713
    %v6916 = vunpack.c.h.b16 %v6713
    %v6917 = vunpack.c.l.b16 %v6714
    %v6918 = vunpack.c.h.b16 %v6714
    %v6919 = vunpack.c.l.b16 %v6715
    %v6920 = vunpack.c.h.b16 %v6715
    %v6921 = vunpack.c.l.b16 %v6716
    %v6922 = vunpack.c.h.b16 %v6716
    %v6923 = vunpack.c.l.b16 %v6717
    %v6924 = vunpack.c.h.b16 %v6717
    %v6925 = vunpack.c.l.b16 %v6718
    %v6926 = vunpack.c.h.b16 %v6718
    %v6927 = vunpack.c.l.b16 %v6719
    %v6928 = vunpack.c.h.b16 %v6719
    %v6929 = vunpack.c.l.b16 %v6720
    %v6930 = vunpack.c.h.b16 %v6720
    %v6931 = vunpack.c.l.b16 %v6721
    %v6932 = vunpack.c.h.b16 %v6721
    %v6933 = vunpack.c.l.b16 %v6722
    %v6934 = vunpack.c.h.b16 %v6722
    %v6935 = vunpack.c.l.b16 %v6723
    %v6936 = vunpack.c.h.b16 %v6723
    %v6937 = vunpack.c.l.b16 %v6724
    %v6938 = vunpack.c.h.b16 %v6724
    %v6939 = vunpack.c.l.b16 %v6725
    %v6940 = vunpack.c.h.b16 %v6725
    %v6941 = vunpack.c.l.b16 %v6726
    %v6942 = vunpack.c.h.b16 %v6726
    %v6943 = vunpack.c.l.b16 %v6727
    %v6944 = vunpack.c.h.b16 %v6727
    %v6945 = vunpack.c.l.b16 %v6728
    %v6946 = vunpack.c.h.b16 %v6728
    %v6947 = vunpack.c.l.b16 %v6729
    %v6948 = vunpack.c.h.b16 %v6729
    %v6949 = vunpack.c.l.b16 %v6730
    %v6950 = vunpack.c.h.b16 %v6730
    %v6951 = vunpack.c.l.b16 %v6731
    %v6952 = vunpack.c.h.b16 %v6731
    %v6953 = vpack.c.b16 %v6829, %v6825
    %v6954 = vpack.c.b16 %v6830, %v6826
    %v6955 = vpack.c.b16 %v6831, %v6827
    %v6956 = vpack.c.b16 %v6832, %v6828
    %v6957 = vpack.c.b16 %v6837, %v6833
    %v6958 = vpack.c.b16 %v6838, %v6834
    %v6959 = vpack.c.b16 %v6839, %v6835
    %v6960 = vpack.c.b16 %v6840, %v6836
    %v6961 = vpack.c.b16 %v6845, %v6841
    %v6962 = vpack.c.b16 %v6846, %v6842
    %v6963 = vpack.c.b16 %v6847, %v6843
    %v6964 = vpack.c.b16 %v6848, %v6844
    %v6965 = vpack.c.b16 %v6853, %v6849
    %v6966 = vpack.c.b16 %v6854, %v6850
    %v6967 = vpack.c.b16 %v6855, %v6851
    %v6968 = vpack.c.b16 %v6856, %v6852
    %v6969 = vpack.c.b16 %v6861, %v6857
    %v6970 = vpack.c.b16 %v6862, %v6858
    %v6971 = vpack.c.b16 %v6863, %v6859
    %v6972 = vpack.c.b16 %v6864, %v6860
    %v6973 = vpack.c.b16 %v6869, %v6865
    %v6974 = vpack.c.b16 %v6870, %v6866
    %v6975 = vpack.c.b16 %v6871, %v6867
    %v6976 = vpack.c.b16 %v6872, %v6868
    %v6977 = vpack.c.b16 %v6877, %v6873
    %v6978 = vpack.c.b16 %v6878, %v6874
    %v6979 = vpack.c.b16 %v6879, %v6875
    %v6980 = vpack.c.b16 %v6880, %v6876
    %v6981 = vpack.c.b16 %v6885, %v6881
    %v6982 = vpack.c.b16 %v6886, %v6882
    %v6983 = vpack.c.b16 %v6887, %v6883
    %v6984 = vpack.c.b16 %v6888, %v6884
    %v6985 = vpack.c.b16 %v6893, %v6889
    %v6986 = vpack.c.b16 %v6894, %v6890
    %v6987 = vpack.c.b16 %v6895, %v6891
    %v6988 = vpack.c.b16 %v6896, %v6892
    %v6989 = vpack.c.b16 %v6901, %v6897
    %v6990 = vpack.c.b16 %v6902, %v6898
    %v6991 = vpack.c.b16 %v6903, %v6899
    %v6992 = vpack.c.b16 %v6904, %v6900
    %v6993 = vpack.c.b16 %v6909, %v6905
    %v6994 = vpack.c.b16 %v6910, %v6906
    %v6995 = vpack.c.b16 %v6911, %v6907
    %v6996 = vpack.c.b16 %v6912, %v6908
    %v6997 = vpack.c.b16 %v6917, %v6913
    %v6998 = vpack.c.b16 %v6918, %v6914
    %v6999 = vpack.c.b16 %v6919, %v6915
    %v7000 = vpack.c.b16 %v6920, %v6916
    %v7001 = vpack.c.b16 %v6925, %v6921
    %v7002 = vpack.c.b16 %v6926, %v6922
    %v7003 = vpack.c.b16 %v6927, %v6923
    %v7004 = vpack.c.b16 %v6928, %v6924
    %v7005 = vpack.c.b16 %v6933, %v6929
    %v7006 = vpack.c.b16 %v6934, %v6930
    %v7007 = vpack.c.b16 %v6935, %v6931
    %v7008 = vpack.c.b16 %v6936, %v6932
    %v7009 = vpack.c.b16 %v6941, %v6937
    %v7010 = vpack.c.b16 %v6942, %v6938
    %v7011 = vpack.c.b16 %v6943, %v6939
    %v7012 = vpack.c.b16 %v6944, %v6940
    %v7013 = vpack.c.b16 %v6949, %v6945
    %v7014 = vpack.c.b16 %v6950, %v6946
    %v7015 = vpack.c.b16 %v6951, %v6947
    %v7016 = vpack.c.b16 %v6952, %v6948
    %7081 = vmatprep.subr.bf16.mxu0 %v6954
    %7082 = vmatpush1.bf16.msra.mxu0 %v6953
    %7083 = vmatprep.subr.bf16.mxu0 %v6958
    %7084 = vmatpush1.bf16.msra.mxu0 %v6957
    %7085 = vmatprep.subr.bf16.mxu0 %v6962
    %7086 = vmatpush1.bf16.msra.mxu0 %v6961
    %7087 = vmatprep.subr.bf16.mxu0 %v6966
    %7088 = vmatpush1.bf16.msra.mxu0 %v6965
    %7089 = vmatprep.subr.bf16.mxu0 %v6970
    %7090 = vmatpush1.bf16.msra.mxu0 %v6969
    %7091 = vmatprep.subr.bf16.mxu0 %v6974
    %7092 = vmatpush1.bf16.msra.mxu0 %v6973
    %7093 = vmatprep.subr.bf16.mxu0 %v6978
    %7094 = vmatpush1.bf16.msra.mxu0 %v6977
    %7095 = vmatprep.subr.bf16.mxu0 %v6982
    %7096 = vmatpush1.bf16.msra.mxu0 %v6981
    %7097 = vmatprep.subr.bf16.mxu0 %v6986
    %7098 = vmatpush1.bf16.msra.mxu0 %v6985
    %7099 = vmatprep.subr.bf16.mxu0 %v6990
    %7100 = vmatpush1.bf16.msra.mxu0 %v6989
    %7101 = vmatprep.subr.bf16.mxu0 %v6994
    %7102 = vmatpush1.bf16.msra.mxu0 %v6993
    %7103 = vmatprep.subr.bf16.mxu0 %v6998
    %7104 = vmatpush1.bf16.msra.mxu0 %v6997
    %7105 = vmatprep.subr.bf16.mxu0 %v7002
    %7106 = vmatpush1.bf16.msra.mxu0 %v7001
    %7107 = vmatprep.subr.bf16.mxu0 %v7006
    %7108 = vmatpush1.bf16.msra.mxu0 %v7005
    %7109 = vmatprep.subr.bf16.mxu0 %v7010
    %7110 = vmatpush1.bf16.msra.mxu0 %v7009
    %7111 = vmatprep.subr.bf16.mxu0 %v7014
    %7112 = vmatpush1.bf16.msra.mxu0 %v7013
    %7113 = vmatprep.mubr.bf16.mxu0 %v6758
    %7114 = vmatmul.mubr.bf16.gmra.mrb[0].mxu0 %v6757
    %v7115 = vpop.f32.mrb[0].mxu0
    %v7116 = vadd.f32 %v6737, %v7115
    %v7117 = vpop.f32.mrb[0].mxu0
    %v7118 = vadd.f32 %v6741, %v7117
    %v7119 = vpop.f32.mrb[0].mxu0
    %v7120 = vpop.f32.mrb[0].mxu0
    %7121 = vdwg.mxu0
    %7122 = vmatprep.subr.bf16.mxu0 %v6956
    %7123 = vmatpush1.bf16.msra.mxu0 %v6955
    %7124 = vmatprep.subr.bf16.mxu0 %v6960
    %7125 = vmatpush1.bf16.msra.mxu0 %v6959
    %7126 = vmatprep.subr.bf16.mxu0 %v6964
    %7127 = vmatpush1.bf16.msra.mxu0 %v6963
    %7128 = vmatprep.subr.bf16.mxu0 %v6968
    %7129 = vmatpush1.bf16.msra.mxu0 %v6967
    %7130 = vmatprep.subr.bf16.mxu0 %v6972
    %7131 = vmatpush1.bf16.msra.mxu0 %v6971
    %7132 = vmatprep.subr.bf16.mxu0 %v6976
    %7133 = vmatpush1.bf16.msra.mxu0 %v6975
    %7134 = vmatprep.subr.bf16.mxu0 %v6980
    %7135 = vmatpush1.bf16.msra.mxu0 %v6979
    %7136 = vmatprep.subr.bf16.mxu0 %v6984
    %7137 = vmatpush1.bf16.msra.mxu0 %v6983
    %7138 = vmatprep.subr.bf16.mxu0 %v6988
    %7139 = vmatpush1.bf16.msra.mxu0 %v6987
    %7140 = vmatprep.subr.bf16.mxu0 %v6992
    %7141 = vmatpush1.bf16.msra.mxu0 %v6991
    %7142 = vmatprep.subr.bf16.mxu0 %v6996
    %7143 = vmatpush1.bf16.msra.mxu0 %v6995
    %7144 = vmatprep.subr.bf16.mxu0 %v7000
    %7145 = vmatpush1.bf16.msra.mxu0 %v6999
    %7146 = vmatprep.subr.bf16.mxu0 %v7004
    %7147 = vmatpush1.bf16.msra.mxu0 %v7003
    %7148 = vmatprep.subr.bf16.mxu0 %v7008
    %7149 = vmatpush1.bf16.msra.mxu0 %v7007
    %7150 = vmatprep.subr.bf16.mxu0 %v7012
    %7151 = vmatpush1.bf16.msra.mxu0 %v7011
    %7152 = vmatprep.subr.bf16.mxu0 %v7016
    %7153 = vmatpush1.bf16.msra.mxu0 %v7015
    %7154 = vmatprep.mubr.bf16.mxu0 %v6758
    %7155 = vmatmul.mubr.bf16.gmra.mrb[0].mxu0 %v6757
    %v7156 = vpop.f32.mrb[0].mxu0
    %v7157 = vadd.f32 %v6745, %v7156
    %v7158 = vpop.f32.mrb[0].mxu0
    %v7159 = vadd.f32 %v6749, %v7158
    %v7160 = vpop.f32.mrb[0].mxu0
    %v7161 = vpop.f32.mrb[0].mxu0
    %7162 = vdwg.mxu0
    %v7163 = vxor.u32 %v7116, 2147483648
    %v7164 = vxor.u32 %v7118, 2147483648
    %v7165 = vxor.u32 %v7157, 2147483648
    %v7166 = vmul.f32 %v7163, 1.442695
    %v7167 = vpow.pop %v7166
    %v7168 = vmul.f32 %v7164, 1.442695
    %v7169 = vpow.pop %v7168
    %v7170 = vmul.f32 %v7165, 1.442695
    %v7171 = vpow.pop %v7170
    %v7172 = vadd.f32 %v7167, 1.0
    %v7173 = vadd.f32 %v7169, 1.0
    %v7174 = vadd.f32 %v7171, 1.0
    %v7175 = vrcp.pop %v7172
    %v7176 = vmul.f32 1.0, %v7175
    %v7177 = vrcp.pop %v7173
    %v7178 = vmul.f32 1.0, %v7177
    %v7179 = vrcp.pop %v7174
    %v7180 = vmul.f32 1.0, %v7179
    %v7181 = vtanh.pop %v7159
    %v7182 = vmul.f32 %v7178, %v6667
    %v7183 = vmul.f32 %v7176, %v7181
    %v7184 = vadd.f32 %v7182, %v7183
    %v7185 = vtanh.pop %v7184
    %v7186 = vmul.f32 %v7180, %v7185
    %v7187 = vpack.c.bf16 %v7186, %v7186
    %7188 = vst [vmem:[#allocation3 + $0x4] sm:$0xf] %v7187
    %7189 = vst [vmem:[%s814] sm:$0xff] %v7184
    // Predicated region
    $region50: #{lstm_model_forward.1} parent=1 // pred_check
      %p7190 = pneg %p71
    $region51: #{lstm_model_forward.1} parent=1 // pred_check_branch
      %7192 = sbr.rel (%p7190) target = $region53
    $region52: #{lstm_model_forward.1} parent=1 // pred_region
      %v7193 = vld [vmem:[#allocation3 + $0x4] sm:$0xf]
      %v7194 = vld [vmem:[%s6] sm:$0xf]
      %v7195 = vld [vmem:[%s6 + $0x4] sm:$0xf]
      %v7196 = vld [vmem:[%s6 + $0x8] sm:$0xf]
      %v7197 = vld [vmem:[%s6 + $0xc] sm:$0xf]
      %v7198 = vld [vmem:[%s6 + $0x10] sm:$0xf]
      %v7199 = vld [vmem:[%s6 + $0x14] sm:$0xf]
      %v7200 = vld [vmem:[%s6 + $0x18] sm:$0xf]
      %v7201 = vld [vmem:[%s6 + $0x1c] sm:$0xf]
      %v7202 = vld [vmem:[%s6 + $0x20] sm:$0xf]
      %v7203 = vld [vmem:[%s6 + $0x24] sm:$0xf]
      %v7204 = vld [vmem:[%s6 + $0x28] sm:$0xf]
      %v7205 = vld [vmem:[%s6 + $0x2c] sm:$0xf]
      %v7206 = vld [vmem:[%s6 + $0x30] sm:$0xf]
      %v7207 = vld [vmem:[%s6 + $0x34] sm:$0xf]
      %v7208 = vld [vmem:[%s6 + $0x38] sm:$0xf]
      %v7209 = vld [vmem:[%s6 + $0x3c] sm:$0xf]
      %v7210 = vld [vmem:[%s7] sm:$0x1]
      %v7212 = vlaneseq
      %v7213 = vshrl.u32 %v7212, 7
      %v7214 = vsub.s32 0, %v7213
      %v7215 = vrot.slane %v7210, %v7214
      %v7233 = vunpack.c.l.b16 %v7194
      %v7234 = vunpack.c.l.b16 %v7195
      %v7235 = vunpack.c.l.b16 %v7196
      %v7236 = vunpack.c.l.b16 %v7197
      %v7237 = vunpack.c.l.b16 %v7198
      %v7238 = vunpack.c.l.b16 %v7199
      %v7239 = vunpack.c.l.b16 %v7200
      %v7240 = vunpack.c.l.b16 %v7201
      %v7241 = vunpack.c.l.b16 %v7202
      %v7242 = vunpack.c.l.b16 %v7203
      %v7243 = vunpack.c.l.b16 %v7204
      %v7244 = vunpack.c.l.b16 %v7205
      %v7245 = vunpack.c.l.b16 %v7206
      %v7246 = vunpack.c.l.b16 %v7207
      %v7247 = vunpack.c.l.b16 %v7208
      %v7248 = vunpack.c.l.b16 %v7209
      %v7249 = vpack.c.b16 %v7234, %v7233
      %v7250 = vpack.c.b16 %v7236, %v7235
      %v7251 = vpack.c.b16 %v7238, %v7237
      %v7252 = vpack.c.b16 %v7240, %v7239
      %v7253 = vpack.c.b16 %v7242, %v7241
      %v7254 = vpack.c.b16 %v7244, %v7243
      %v7255 = vpack.c.b16 %v7246, %v7245
      %v7256 = vpack.c.b16 %v7248, %v7247
      %7265 = vmatprep.subr.bf16.mxu0 0
      %7266 = vmatpush1.bf16.msra.mxu0 %v7249
      %7267 = vmatprep.subr.bf16.mxu0 0
      %7268 = vmatpush1.bf16.msra.mxu0 %v7250
      %7269 = vmatprep.subr.bf16.mxu0 0
      %7270 = vmatpush1.bf16.msra.mxu0 %v7251
      %7271 = vmatprep.subr.bf16.mxu0 0
      %7272 = vmatpush1.bf16.msra.mxu0 %v7252
      %7273 = vmatprep.subr.bf16.mxu0 0
      %7274 = vmatpush1.bf16.msra.mxu0 %v7253
      %7275 = vmatprep.subr.bf16.mxu0 0
      %7276 = vmatpush1.bf16.msra.mxu0 %v7254
      %7277 = vmatprep.subr.bf16.mxu0 0
      %7278 = vmatpush1.bf16.msra.mxu0 %v7255
      %7279 = vmatprep.subr.bf16.mxu0 0
      %7280 = vmatpush1.bf16.msra.mxu0 %v7256
      %7281 = vmatprep.subr.bf16.mxu0 0
      %7282 = vmatpush1.bf16.msra.mxu0 0
      %7283 = vmatprep.subr.bf16.mxu0 0
      %7284 = vmatpush1.bf16.msra.mxu0 0
      %7285 = vmatprep.subr.bf16.mxu0 0
      %7286 = vmatpush1.bf16.msra.mxu0 0
      %7287 = vmatprep.subr.bf16.mxu0 0
      %7288 = vmatpush1.bf16.msra.mxu0 0
      %7289 = vmatprep.subr.bf16.mxu0 0
      %7290 = vmatpush1.bf16.msra.mxu0 0
      %7291 = vmatprep.subr.bf16.mxu0 0
      %7292 = vmatpush1.bf16.msra.mxu0 0
      %7293 = vmatprep.subr.bf16.mxu0 0
      %7294 = vmatpush1.bf16.msra.mxu0 0
      %7295 = vmatprep.subr.bf16.mxu0 0
      %7296 = vmatpush1.bf16.msra.mxu0 0
      %7297 = vmatprep.mubr.bf16.mxu0 0
      %7298 = vmatmul.mubr.bf16.gmra.mrb[0].mxu0 %v7193
      %v7299 = vpop.f32.mrb[0].mxu0
      %v7300 = vadd.f32 %v7215, %v7299
      %v7301 = vpop.f32.mrb[0].mxu0
      %v7302 = vpop.f32.mrb[0].mxu0
      %v7303 = vpop.f32.mrb[0].mxu0
      %7304 = vdwg.mxu0
      %7305 = vst [vmem:[%s8] sm:$0xff] %v7300
    $region53: #{lstm_model_forward.1} parent=1 // pred_fallthru
      _
    // Predicated region
    $region54: #{lstm_model_forward.1} parent=1 // pred_check
      _
    $region55: #{lstm_model_forward.1} parent=1 // pred_check_branch
      %7307 = sbr.rel (0) target = $region57
    $region56: #{lstm_model_forward.1} parent=1 // pred_region
      _
    $region57: #{lstm_model_forward.1} parent=1 // pred_fallthru
      _
    // Predicated region
    $region58: #{lstm_model_forward.1} parent=1 // pred_check
      _
    $region59: #{lstm_model_forward.1} parent=1 // pred_check_branch
      %7309 = sbr.rel (0) target = $region61
    $region60: #{lstm_model_forward.1} parent=1 // pred_region
      _
    $region61: #{lstm_model_forward.1} parent=1 // pred_fallthru
      _
    %7310 = vsyncpa [#allocation6], 1
    %7311 = vsyncpa [#allocation8], 1

</llo_original>
